<compile_context>
chip_gen: v7x
topology: tpu7x:2x2x1
jax: 0.10.0
libtpu: 0.0.40
codegen_flags: <defaults>
</compile_context>

<pallas_src>
import numpy as np
import jax
import jax.numpy as jnp
from jax.experimental import pallas as pl
from jax.experimental.pallas import tpu as pltpu

# ----------------------- FENet-consistent configuration -----------------------
WL = 12                                # quantizer word length  (FixedPoint wl)
FL = 8                                 # quantizer fractional length (FixedPoint fl)
FEATURES_BY_LAYER = [1, 1, 1, 1]       # 3 wavelet layers + final pooled feature
KERNEL_BY_LAYER   = [4, 4, 4]
STRIDE_BY_LAYER   = [2, 2, 2]
RELU_BY_LAYER     = [0, 0, 0]          # LeakyReLU(-1 / 2**0) == abs()
SLOPES = [-1.0 / (2.0 ** int(p)) for p in RELU_BY_LAYER]

BATCH = 2
N_CHANNELS = 4
N_SAMPLES = 16

SCALE = 2.0 ** FL
INV_SCALE = 2.0 ** (-FL)
QMAX_INT = 2.0 ** (WL - 1) - 1.0       # symmetric clamp, in the scaled (integer) domain
OUT_LANES = 128                        # lane-dense output tile width

# TODO(synk): only features_by_layer == 1 per layer is implemented (the FENet
# default); AdaptiveAvgPool1d(features > 1) would need segmented means.
# TODO(synk): dropout on the pass path and the intermediate-output caches /
# poolDivisor bookkeeping are inference no-ops / host-side side effects and are
# not translated.
# TODO(synk): the O(L^2) Toeplitz matmul is only sensible for small n_samples;
# for realistic L (~1k+) replace each Conv1d(1,1,k,s) with k shifted-scaled VPU
# FMAs (pltpu.roll / strided pl.ds) or tile the matmul over L_in so the dense
# weights stay inside v7x's 64 MiB VMEM.


def conv_out_len(L, k, s):
    pad_l = max(k - s, 0)
    pad_r = k - 1
    return (L + pad_l + pad_r - k) // s + 1


def toeplitz_weight(taps, L_in, k, s):
    """(L_in, L_out) W s.t. x @ W == Conv1d(1,1,k,stride=s,bias=False)(ConstantPad1d((k-s, k-1))(x))."""
    pad_l = max(k - s, 0)
    L_out = conv_out_len(L_in, k, s)
    W = np.zeros((L_in, L_out), dtype=np.float32)
    for t in range(L_out):
        for j in range(k):
            src = t * s + j - pad_l
            if 0 <= src < L_in:
                W[src, t] = float(taps[j])
    return W


def _quantize(v):
    """qtorch FixedPoint(wl, fl, clamp=True, symmetric=True), nearest rounding."""
    # TODO(synk): jnp.round is ties-to-even; qtorch 'nearest' may round ties away from zero.
    return jnp.clip(jnp.round(v * SCALE), -QMAX_INT, QMAX_INT) * INV_SCALE


def _activation(v, slope):
    if slope == -1.0:                   # default relu power 0: LeakyReLU(-1) == abs (1 VPU op)
        return jnp.abs(v)
    return jnp.where(v >= 0, v, slope * v)


# --------------------------------- kernel ------------------------------------
def _make_kernel(n_layers, slopes):
    def fenet_kernel(x_ref, *refs):
        out_ref = refs[-1]
        w_refs = refs[:n_layers]            # fused block-diag (pack*L_in, 2*pack*L_out) per layer
        p_refs = refs[n_layers:-1]          # n_layers+1 pooling matrices (pack*L_out, OUT_LANES)

        hi = jax.lax.Precision.HIGHEST
        pass_x = _quantize(x_ref[...])                       # quantize(x)
        acc = jnp.zeros(out_ref.shape, jnp.float32)          # scaled pooled features (lane-dense)

        for i in range(n_layers):
            w = w_refs[i][...]
            half = w.shape[1] // 2
            # fused feat+pass Conv1d for all packed rows: one MXU matmul per layer
            y = jnp.dot(pass_x, w, preferred_element_type=jnp.float32, precision=hi)
            feat = _activation(y[:, :half], slopes[i])
            # pooling matrix folds AdaptiveAvgPool1d(1)'s 1/L_out and the quantizer's
            # 2^FL, and scatters this layer's features into its own lane block.
            acc = acc + jnp.dot(feat, p_refs[i][...],
                                preferred_element_type=jnp.float32, precision=hi)
            pss = y[:, half:]
            if i == n_layers - 1:
                # final feature uses the un-quantized pass output of the last layer
                final = _activation(pss, slopes[-1])
                acc = acc + jnp.dot(final, p_refs[n_layers][...],
                                    preferred_element_type=jnp.float32, precision=hi)
            else:
                pass_x = _quantize(pss)     # dropout is identity at inference

        # quantize all feature columns at once; single unmasked 128-lane store
        out_ref[...] = jnp.clip(jnp.round(acc), -QMAX_INT, QMAX_INT) * INV_SCALE

    return fenet_kernel


# --------------------------------- wrapper ------------------------------------
def make_quantized_fenet_forward(weights, n_samples, single_buffer_weights=True):
    """Build a jitted forward for fixed conv taps and input length.

    The returned callable takes x of shape (batch*neural_channels, 1, n_samples)
    float32 and returns (batch*neural_channels, sum(features_by_layer)) float32.
    All host-side Toeplitz / pooling-matrix construction happens here, once.
    """
    n_layers = len(KERNEL_BY_LAYER)
    assert all(f == 1 for f in FEATURES_BY_LAYER)
    n_feats = sum(FEATURES_BY_LAYER)                 # == n_layers + 1

    # Lane packing: PACK logical rows share one 128-lane row when L divides 128.
    pack = 128 // n_samples if (n_samples <= 128 and 128 % n_samples == 0) else 1
    assert n_feats * pack <= OUT_LANES
    lanes_in = pack * n_samples

    w_cats, pools = [], []
    eye = np.eye(pack, dtype=np.float32)
    Lc = n_samples
    for i, (k, s) in enumerate(zip(KERNEL_BY_LAYER, STRIDE_BY_LAYER)):
        wf, wp = weights[i]
        Wf = toeplitz_weight(np.asarray(wf), Lc, k, s)
        Wp = toeplitz_weight(np.asarray(wp), Lc, k, s)
        L_out = Wf.shape[1]
        w_cats.append(jnp.asarray(np.concatenate(
            [np.kron(eye, Wf), np.kron(eye, Wp)], axis=1)))      # (pack*L_in, 2*pack*L_out)
        P = np.zeros((pack * L_out, OUT_LANES), np.float32)      # mean * 2^FL -> lane block i
        for j in range(pack):
            P[j * L_out:(j + 1) * L_out, i * pack + j] = SCALE / L_out
        pools.append(jnp.asarray(P))
        Lc = L_out
    Pf = np.zeros((pack * Lc, OUT_LANES), np.float32)            # final-feature lane block
    for j in range(pack):
        Pf[j * Lc:(j + 1) * Lc, n_layers * pack + j] = SCALE / Lc
    pools.append(jnp.asarray(Pf))

    kernel = _make_kernel(n_layers, SLOPES)
    const_elems = (sum(int(np.prod(w.shape)) for w in w_cats) +
                   sum(int(np.prod(p.shape)) for p in pools))

    if single_buffer_weights:
        def const_spec(shape):                                   # constant block -> 1 buffer
            return pl.BlockSpec(shape, lambda i: (0, 0), pipeline_mode=pl.Buffered(1))
        const_bufs = 1
    else:
        def const_spec(shape):
            return pl.BlockSpec(shape, lambda i: (0, 0))
        const_bufs = 2

    def forward(x):
        B, in_ch, L = x.shape
        assert in_ch == 1 and L == n_samples
        x2 = x.reshape(B, L)

        # Pad only to the packing granularity (no-op when B % pack == 0), then
        # lane-pack.  No full pad-to-tile of the batch axis.
        b_round = -(-B // pack) * pack
        if b_round != B:
            x2 = jnp.pad(x2, ((0, b_round - B), (0, 0)))
        xp = x2.reshape(b_round // pack, lanes_in)
        bp = xp.shape[0]

        # tb (nearly) divides the packed-row count; big tiles keep v5e/v6e out of
        # the per-step-overhead regime; >=2 steps keep both v7x TensorCores fed.
        bp8 = -(-bp // 8) * 8
        row_cap = 4096                                   # 4096 * 128 * 4B = 2 MiB x-tile
        nsteps = max(1, -(-bp8 // row_cap))
        if bp8 >= 16:
            nsteps = max(nsteps, 2)
        tb = 8 * (-(-bp8 // (8 * nsteps)))
        total = nsteps * tb                              # total < bp8 + 8*nsteps
        if total != bp:
            xp = jnp.pad(xp, ((0, total - bp), (0, 0)))  # < 8*nsteps rows of padding

        # explicit VMEM budget (double-buffered x/out tiles, 1- or 2-buffered
        # constants, headroom for y/feat/acc temporaries), clamped to v7x's 64 MiB
        x_tile, out_tile = tb * lanes_in * 4, tb * OUT_LANES * 4
        const_bytes = const_elems * 4 * const_bufs
        interm = tb * 4 * (lanes_in + OUT_LANES + 2 * max(int(w.shape[1]) for w in w_cats))
        vmem_limit = int(min(64 * 1024 * 1024,
                             max(4 * 1024 * 1024,
                                 2 * (2 * x_tile + 2 * out_tile + const_bytes + interm))))

        flops = 0
        for w in w_cats:
            flops += 2 * total * int(w.shape[0]) * int(w.shape[1])
        for p in pools:
            flops += 2 * total * int(p.shape[0]) * int(p.shape[1])
        cost = pl.CostEstimate(
            flops=flops, transcendentals=0,
            bytes_accessed=4 * (total * lanes_in + total * OUT_LANES + const_elems))

        out = pl.pallas_call(
            kernel,
            out_shape=jax.ShapeDtypeStruct((total, OUT_LANES), jnp.float32),
            grid_spec=pltpu.PrefetchScalarGridSpec(
                num_scalar_prefetch=0,
                grid=(nsteps,),
                in_specs=[pl.BlockSpec((tb, lanes_in), lambda i: (i, 0))]
                         + [const_spec(tuple(w.shape)) for w in w_cats]
                         + [const_spec(tuple(p.shape)) for p in pools],
                out_specs=pl.BlockSpec((tb, OUT_LANES), lambda i: (i, 0)),
            ),
            compiler_params=pltpu.CompilerParams(
                dimension_semantics=("parallel",),
                vmem_limit_bytes=vmem_limit),
            cost_estimate=cost,
        )(xp, *w_cats, *pools)

        # Un-pack lanes: lane = feature*pack + packed_row  ->  (rows, n_feats).
        feats = out[:bp, :n_feats * pack].reshape(bp, n_feats, pack)
        feats = jnp.transpose(feats, (0, 2, 1)).reshape(bp * pack, n_feats)
        return feats[:B]

    return jax.jit(forward)


# ------------------------- pure-JAX reference (check) -------------------------
def reference_forward(x, weights):
    B, _, L = x.shape
    pass_x = _quantize(x.reshape(B, L))
    feats = []
    Lc = L
    n_layers = len(KERNEL_BY_LAYER)
    pre_q = None
    for i, (k, s) in enumerate(zip(KERNEL_BY_LAYER, STRIDE_BY_LAYER)):
        wf, wp = weights[i]
        Wf = jnp.asarray(toeplitz_weight(np.asarray(wf), Lc, k, s))
        Wp = jnp.asarray(toeplitz_weight(np.asarray(wp), Lc, k, s))
        feat = _activation(pass_x @ Wf, SLOPES[i])
        pss = pass_x @ Wp
        feats.append(_quantize(jnp.mean(feat, axis=-1, keepdims=True)))
        if i == n_layers - 1:
            pre_q = pss
        pass_x = _quantize(pss)
        Lc = Wf.shape[1]
    final = _activation(pre_q, SLOPES[-1])
    feats.append(_quantize(jnp.mean(final, axis=-1, keepdims=True)))
    return jnp.concatenate(feats, axis=-1)


# ----------------------------------- main -------------------------------------
if __name__ == "__main__":
    key = jax.random.PRNGKey(0)
    n_layers = len(KERNEL_BY_LAYER)
    kx, *kws = jax.random.split(key, 1 + 2 * n_layers)

    B = BATCH * N_CHANNELS
    # QuantizedFENet.forward expects pre-reshaped (batch*channels, 1, n_samples)
    x = jax.random.normal(kx, (B, 1, N_SAMPLES), dtype=jnp.float32)

    # Deterministic Conv1d taps: torch weight shape (out_ch=1, in_ch=1, k) -> k taps.
    weights = []
    for i, k in enumerate(KERNEL_BY_LAYER):
        wf = jax.random.normal(kws[2 * i], (k,), dtype=jnp.float32) / np.sqrt(k)
        wp = jax.random.normal(kws[2 * i + 1], (k,), dtype=jnp.float32) / np.sqrt(k)
        weights.append((wf, wp))

    try:
        forward = make_quantized_fenet_forward(weights, N_SAMPLES)   # host work once
        out = jax.block_until_ready(forward(x))
    except Exception:
        # Fallback if this jax version rejects single-buffered constant inputs
        # (pipeline_mode=pl.Buffered(1)); identical semantics, default buffering.
        forward = make_quantized_fenet_forward(weights, N_SAMPLES,
                                               single_buffer_weights=False)
        out = jax.block_until_ready(forward(x))

    ref = reference_forward(x, weights)
    assert out.shape == (B, sum(FEATURES_BY_LAYER)), out.shape
    np.testing.assert_allclose(np.asarray(out), np.asarray(ref),
                               atol=2.0 ** -FL, rtol=0)
    print("KERNEL_OK")
</pallas_src>

<mosaic_0001>
module attributes {stable_mosaic.version = 11 : i64} {
  func.func @fenet_kernel(%arg0: i32, %arg1: memref<8x128xf32, #tpu.memory_space<vmem>>, %arg2: memref<128x144xf32, #tpu.memory_space<vmem>>, %arg3: memref<72x96xf32, #tpu.memory_space<vmem>>, %arg4: memref<48x64xf32, #tpu.memory_space<vmem>>, %arg5: memref<72x128xf32, #tpu.memory_space<vmem>>, %arg6: memref<48x128xf32, #tpu.memory_space<vmem>>, %arg7: memref<32x128xf32, #tpu.memory_space<vmem>>, %arg8: memref<32x128xf32, #tpu.memory_space<vmem>>, %arg9: memref<8x128xf32, #tpu.memory_space<vmem>>) attributes {dimension_semantics = [#tpu.dimension_semantics<parallel>], iteration_bounds = array<i64: 1>, scalar_prefetch = 0 : i64, scratch_operands = 0 : i64, tpu.core_type = #tpu.core_type<tc>, window_params = [{transform_indices = @transform_0, window_bounds = array<i64: 8, 128>}, {pipeline_mode = #tpu.pipeline_mode<synchronous>, transform_indices = @transform_1, window_bounds = array<i64: 128, 144>}, {pipeline_mode = #tpu.pipeline_mode<synchronous>, transform_indices = @transform_2, window_bounds = array<i64: 72, 96>}, {pipeline_mode = #tpu.pipeline_mode<synchronous>, transform_indices = @transform_3, window_bounds = array<i64: 48, 64>}, {pipeline_mode = #tpu.pipeline_mode<synchronous>, transform_indices = @transform_4, window_bounds = array<i64: 72, 128>}, {pipeline_mode = #tpu.pipeline_mode<synchronous>, transform_indices = @transform_5, window_bounds = array<i64: 48, 128>}, {pipeline_mode = #tpu.pipeline_mode<synchronous>, transform_indices = @transform_6, window_bounds = array<i64: 32, 128>}, {pipeline_mode = #tpu.pipeline_mode<synchronous>, transform_indices = @transform_7, window_bounds = array<i64: 32, 128>}, {transform_indices = @transform_8, window_bounds = array<i64: 8, 128>}]} {
    %c0 = arith.constant 0 : index
    %c0_0 = arith.constant 0 : index
    %0 = vector.load %arg1[%c0, %c0_0] : memref<8x128xf32, #tpu.memory_space<vmem>>, vector<8x128xf32>
    %cst = arith.constant 2.560000e+02 : f32
    %1 = vector.broadcast %cst : f32 to vector<8x128xf32>
    %2 = arith.mulf %0, %1 : vector<8x128xf32>
    %3 = math.roundeven %2 : vector<8x128xf32>
    %cst_1 = arith.constant -2.047000e+03 : f32
    %cst_2 = arith.constant 2.047000e+03 : f32
    %4 = vector.broadcast %cst_1 : f32 to vector<8x128xf32>
    %5 = arith.maximumf %4, %3 : vector<8x128xf32>
    %6 = vector.broadcast %cst_2 : f32 to vector<8x128xf32>
    %7 = arith.minimumf %6, %5 : vector<8x128xf32>
    %cst_3 = arith.constant 3.906250e-03 : f32
    %8 = vector.broadcast %cst_3 : f32 to vector<8x128xf32>
    %9 = arith.mulf %7, %8 : vector<8x128xf32>
    %cst_4 = arith.constant 0.000000e+00 : f32
    %10 = vector.broadcast %cst_4 : f32 to vector<8x128xf32>
    %c0_5 = arith.constant 0 : index
    %c0_6 = arith.constant 0 : index
    %11 = vector.load %arg2[%c0_5, %c0_6] : memref<128x144xf32, #tpu.memory_space<vmem>>, vector<128x144xf32>
    %cst_7 = arith.constant dense<0.000000e+00> : vector<8x144xf32>
    %12 = tpu.matmul %9, %11, %cst_7 {dimension_numbers = #tpu.dot_dimension_numbers<[1], [0], [0], [1], [0, 0, 1, 1], [], []>, precision = #tpu.contract_precision<fp32>} : vector<8x128xf32>, vector<128x144xf32>, vector<8x144xf32> -> vector<8x144xf32>
    %13 = vector.extract_strided_slice %12 {offsets = [0, 0], sizes = [8, 72], strides = [1, 1]} : vector<8x144xf32> to vector<8x72xf32>
    %14 = math.absf %13 : vector<8x72xf32>
    %c0_8 = arith.constant 0 : index
    %c0_9 = arith.constant 0 : index
    %15 = vector.load %arg5[%c0_8, %c0_9] : memref<72x128xf32, #tpu.memory_space<vmem>>, vector<72x128xf32>
    %cst_10 = arith.constant dense<0.000000e+00> : vector<8x128xf32>
    %16 = tpu.matmul %14, %15, %cst_10 {dimension_numbers = #tpu.dot_dimension_numbers<[1], [0], [0], [1], [0, 0, 1, 1], [], []>, precision = #tpu.contract_precision<fp32>} : vector<8x72xf32>, vector<72x128xf32>, vector<8x128xf32> -> vector<8x128xf32>
    %17 = arith.addf %10, %16 : vector<8x128xf32>
    %18 = vector.extract_strided_slice %12 {offsets = [0, 72], sizes = [8, 72], strides = [1, 1]} : vector<8x144xf32> to vector<8x72xf32>
    %cst_11 = arith.constant 2.560000e+02 : f32
    %19 = vector.broadcast %cst_11 : f32 to vector<8x72xf32>
    %20 = arith.mulf %18, %19 : vector<8x72xf32>
    %21 = math.roundeven %20 : vector<8x72xf32>
    %cst_12 = arith.constant -2.047000e+03 : f32
    %cst_13 = arith.constant 2.047000e+03 : f32
    %22 = vector.broadcast %cst_12 : f32 to vector<8x72xf32>
    %23 = arith.maximumf %22, %21 : vector<8x72xf32>
    %24 = vector.broadcast %cst_13 : f32 to vector<8x72xf32>
    %25 = arith.minimumf %24, %23 : vector<8x72xf32>
    %cst_14 = arith.constant 3.906250e-03 : f32
    %26 = vector.broadcast %cst_14 : f32 to vector<8x72xf32>
    %27 = arith.mulf %25, %26 : vector<8x72xf32>
    %c0_15 = arith.constant 0 : index
    %c0_16 = arith.constant 0 : index
    %28 = vector.load %arg3[%c0_15, %c0_16] : memref<72x96xf32, #tpu.memory_space<vmem>>, vector<72x96xf32>
    %cst_17 = arith.constant dense<0.000000e+00> : vector<8x96xf32>
    %29 = tpu.matmul %27, %28, %cst_17 {dimension_numbers = #tpu.dot_dimension_numbers<[1], [0], [0], [1], [0, 0, 1, 1], [], []>, precision = #tpu.contract_precision<fp32>} : vector<8x72xf32>, vector<72x96xf32>, vector<8x96xf32> -> vector<8x96xf32>
    %30 = vector.extract_strided_slice %29 {offsets = [0, 0], sizes = [8, 48], strides = [1, 1]} : vector<8x96xf32> to vector<8x48xf32>
    %31 = math.absf %30 : vector<8x48xf32>
    %c0_18 = arith.constant 0 : index
    %c0_19 = arith.constant 0 : index
    %32 = vector.load %arg6[%c0_18, %c0_19] : memref<48x128xf32, #tpu.memory_space<vmem>>, vector<48x128xf32>
    %cst_20 = arith.constant dense<0.000000e+00> : vector<8x128xf32>
    %33 = tpu.matmul %31, %32, %cst_20 {dimension_numbers = #tpu.dot_dimension_numbers<[1], [0], [0], [1], [0, 0, 1, 1], [], []>, precision = #tpu.contract_precision<fp32>} : vector<8x48xf32>, vector<48x128xf32>, vector<8x128xf32> -> vector<8x128xf32>
    %34 = arith.addf %17, %33 : vector<8x128xf32>
    %35 = vector.extract_strided_slice %29 {offsets = [0, 48], sizes = [8, 48], strides = [1, 1]} : vector<8x96xf32> to vector<8x48xf32>
    %cst_21 = arith.constant 2.560000e+02 : f32
    %36 = vector.broadcast %cst_21 : f32 to vector<8x48xf32>
    %37 = arith.mulf %35, %36 : vector<8x48xf32>
    %38 = math.roundeven %37 : vector<8x48xf32>
    %cst_22 = arith.constant -2.047000e+03 : f32
    %cst_23 = arith.constant 2.047000e+03 : f32
    %39 = vector.broadcast %cst_22 : f32 to vector<8x48xf32>
    %40 = arith.maximumf %39, %38 : vector<8x48xf32>
    %41 = vector.broadcast %cst_23 : f32 to vector<8x48xf32>
    %42 = arith.minimumf %41, %40 : vector<8x48xf32>
    %cst_24 = arith.constant 3.906250e-03 : f32
    %43 = vector.broadcast %cst_24 : f32 to vector<8x48xf32>
    %44 = arith.mulf %42, %43 : vector<8x48xf32>
    %c0_25 = arith.constant 0 : index
    %c0_26 = arith.constant 0 : index
    %45 = vector.load %arg4[%c0_25, %c0_26] : memref<48x64xf32, #tpu.memory_space<vmem>>, vector<48x64xf32>
    %cst_27 = arith.constant dense<0.000000e+00> : vector<8x64xf32>
    %46 = tpu.matmul %44, %45, %cst_27 {dimension_numbers = #tpu.dot_dimension_numbers<[1], [0], [0], [1], [0, 0, 1, 1], [], []>, precision = #tpu.contract_precision<fp32>} : vector<8x48xf32>, vector<48x64xf32>, vector<8x64xf32> -> vector<8x64xf32>
    %47 = vector.extract_strided_slice %46 {offsets = [0, 0], sizes = [8, 32], strides = [1, 1]} : vector<8x64xf32> to vector<8x32xf32>
    %48 = math.absf %47 : vector<8x32xf32>
    %c0_28 = arith.constant 0 : index
    %c0_29 = arith.constant 0 : index
    %49 = vector.load %arg7[%c0_28, %c0_29] : memref<32x128xf32, #tpu.memory_space<vmem>>, vector<32x128xf32>
    %cst_30 = arith.constant dense<0.000000e+00> : vector<8x128xf32>
    %50 = tpu.matmul %48, %49, %cst_30 {dimension_numbers = #tpu.dot_dimension_numbers<[1], [0], [0], [1], [0, 0, 1, 1], [], []>, precision = #tpu.contract_precision<fp32>} : vector<8x32xf32>, vector<32x128xf32>, vector<8x128xf32> -> vector<8x128xf32>
    %51 = arith.addf %34, %50 : vector<8x128xf32>
    %52 = vector.extract_strided_slice %46 {offsets = [0, 32], sizes = [8, 32], strides = [1, 1]} : vector<8x64xf32> to vector<8x32xf32>
    %53 = math.absf %52 : vector<8x32xf32>
    %c0_31 = arith.constant 0 : index
    %c0_32 = arith.constant 0 : index
    %54 = vector.load %arg8[%c0_31, %c0_32] : memref<32x128xf32, #tpu.memory_space<vmem>>, vector<32x128xf32>
    %cst_33 = arith.constant dense<0.000000e+00> : vector<8x128xf32>
    %55 = tpu.matmul %53, %54, %cst_33 {dimension_numbers = #tpu.dot_dimension_numbers<[1], [0], [0], [1], [0, 0, 1, 1], [], []>, precision = #tpu.contract_precision<fp32>} : vector<8x32xf32>, vector<32x128xf32>, vector<8x128xf32> -> vector<8x128xf32>
    %56 = arith.addf %51, %55 : vector<8x128xf32>
    %57 = math.roundeven %56 : vector<8x128xf32>
    %cst_34 = arith.constant -2.047000e+03 : f32
    %cst_35 = arith.constant 2.047000e+03 : f32
    %58 = vector.broadcast %cst_34 : f32 to vector<8x128xf32>
    %59 = arith.maximumf %58, %57 : vector<8x128xf32>
    %60 = vector.broadcast %cst_35 : f32 to vector<8x128xf32>
    %61 = arith.minimumf %60, %59 : vector<8x128xf32>
    %cst_36 = arith.constant 3.906250e-03 : f32
    %62 = vector.broadcast %cst_36 : f32 to vector<8x128xf32>
    %63 = arith.mulf %61, %62 : vector<8x128xf32>
    %c0_37 = arith.constant 0 : index
    %c0_38 = arith.constant 0 : index
    %64 = vector.load %arg9[%c0_37, %c0_38] : memref<8x128xf32, #tpu.memory_space<vmem>>, vector<8x128xf32>
    tpu.vector_store %arg9[%c0_37, %c0_38], %63 {strides = array<i32>} : memref<8x128xf32, #tpu.memory_space<vmem>>, vector<8x128xf32>,
    return
  }
  func.func @transform_0(%arg0: i32) -> (i32, i32) {
    %c0_i32 = arith.constant 0 : i32
    %c0_i32_0 = arith.constant 0 : i32
    return %arg0, %c0_i32 : i32, i32
  }
  func.func @transform_1(%arg0: i32) -> (i32, i32) {
    %c0_i32 = arith.constant 0 : i32
    %c0_i32_0 = arith.constant 0 : i32
    %c0_i32_1 = arith.constant 0 : i32
    return %c0_i32, %c0_i32_0 : i32, i32
  }
  func.func @transform_2(%arg0: i32) -> (i32, i32) {
    %c0_i32 = arith.constant 0 : i32
    %c0_i32_0 = arith.constant 0 : i32
    %c0_i32_1 = arith.constant 0 : i32
    return %c0_i32, %c0_i32_0 : i32, i32
  }
  func.func @transform_3(%arg0: i32) -> (i32, i32) {
    %c0_i32 = arith.constant 0 : i32
    %c0_i32_0 = arith.constant 0 : i32
    %c0_i32_1 = arith.constant 0 : i32
    return %c0_i32, %c0_i32_0 : i32, i32
  }
  func.func @transform_4(%arg0: i32) -> (i32, i32) {
    %c0_i32 = arith.constant 0 : i32
    %c0_i32_0 = arith.constant 0 : i32
    %c0_i32_1 = arith.constant 0 : i32
    return %c0_i32, %c0_i32_0 : i32, i32
  }
  func.func @transform_5(%arg0: i32) -> (i32, i32) {
    %c0_i32 = arith.constant 0 : i32
    %c0_i32_0 = arith.constant 0 : i32
    %c0_i32_1 = arith.constant 0 : i32
    return %c0_i32, %c0_i32_0 : i32, i32
  }
  func.func @transform_6(%arg0: i32) -> (i32, i32) {
    %c0_i32 = arith.constant 0 : i32
    %c0_i32_0 = arith.constant 0 : i32
    %c0_i32_1 = arith.constant 0 : i32
    return %c0_i32, %c0_i32_0 : i32, i32
  }
  func.func @transform_7(%arg0: i32) -> (i32, i32) {
    %c0_i32 = arith.constant 0 : i32
    %c0_i32_0 = arith.constant 0 : i32
    %c0_i32_1 = arith.constant 0 : i32
    return %c0_i32, %c0_i32_0 : i32, i32
  }
  func.func @transform_8(%arg0: i32) -> (i32, i32) {
    %c0_i32 = arith.constant 0 : i32
    %c0_i32_0 = arith.constant 0 : i32
    return %arg0, %c0_i32 : i32, i32
  }
}

module attributes {stable_mosaic.version = 11 : i64} {
  func.func @fenet_kernel(%arg0: i32, %arg1: memref<8x128xf32, #tpu.memory_space<vmem>>, %arg2: memref<128x144xf32, #tpu.memory_space<vmem>>, %arg3: memref<72x96xf32, #tpu.memory_space<vmem>>, %arg4: memref<48x64xf32, #tpu.memory_space<vmem>>, %arg5: memref<72x128xf32, #tpu.memory_space<vmem>>, %arg6: memref<48x128xf32, #tpu.memory_space<vmem>>, %arg7: memref<32x128xf32, #tpu.memory_space<vmem>>, %arg8: memref<32x128xf32, #tpu.memory_space<vmem>>, %arg9: memref<8x128xf32, #tpu.memory_space<vmem>>) attributes {dimension_semantics = [#tpu.dimension_semantics<parallel>], iteration_bounds = array<i64: 1>, scalar_prefetch = 0 : i64, scratch_operands = 0 : i64, tpu.core_type = #tpu.core_type<tc>, window_params = [{transform_indices = @transform_0, window_bounds = array<i64: 8, 128>}, {pipeline_mode = #tpu.pipeline_mode<synchronous>, transform_indices = @transform_1, window_bounds = array<i64: 128, 144>}, {pipeline_mode = #tpu.pipeline_mode<synchronous>, transform_indices = @transform_2, window_bounds = array<i64: 72, 96>}, {pipeline_mode = #tpu.pipeline_mode<synchronous>, transform_indices = @transform_3, window_bounds = array<i64: 48, 64>}, {pipeline_mode = #tpu.pipeline_mode<synchronous>, transform_indices = @transform_4, window_bounds = array<i64: 72, 128>}, {pipeline_mode = #tpu.pipeline_mode<synchronous>, transform_indices = @transform_5, window_bounds = array<i64: 48, 128>}, {pipeline_mode = #tpu.pipeline_mode<synchronous>, transform_indices = @transform_6, window_bounds = array<i64: 32, 128>}, {pipeline_mode = #tpu.pipeline_mode<synchronous>, transform_indices = @transform_7, window_bounds = array<i64: 32, 128>}, {transform_indices = @transform_8, window_bounds = array<i64: 8, 128>}]} {
    %c0 = arith.constant 0 : index
    %c0_0 = arith.constant 0 : index
    %0 = vector.load %arg1[%c0, %c0_0] : memref<8x128xf32, #tpu.memory_space<vmem>>, vector<8x128xf32>
    %cst = arith.constant 2.560000e+02 : f32
    %1 = vector.broadcast %cst : f32 to vector<8x128xf32>
    %2 = arith.mulf %0, %1 : vector<8x128xf32>
    %3 = math.roundeven %2 : vector<8x128xf32>
    %cst_1 = arith.constant -2.047000e+03 : f32
    %cst_2 = arith.constant 2.047000e+03 : f32
    %4 = vector.broadcast %cst_1 : f32 to vector<8x128xf32>
    %5 = arith.maximumf %4, %3 : vector<8x128xf32>
    %6 = vector.broadcast %cst_2 : f32 to vector<8x128xf32>
    %7 = arith.minimumf %6, %5 : vector<8x128xf32>
    %cst_3 = arith.constant 3.906250e-03 : f32
    %8 = vector.broadcast %cst_3 : f32 to vector<8x128xf32>
    %9 = arith.mulf %7, %8 : vector<8x128xf32>
    %cst_4 = arith.constant 0.000000e+00 : f32
    %10 = vector.broadcast %cst_4 : f32 to vector<8x128xf32>
    %c0_5 = arith.constant 0 : index
    %c0_6 = arith.constant 0 : index
    %11 = vector.load %arg2[%c0_5, %c0_6] : memref<128x144xf32, #tpu.memory_space<vmem>>, vector<128x144xf32>
    %cst_7 = arith.constant dense<0.000000e+00> : vector<8x144xf32>
    %12 = tpu.matmul %9, %11, %cst_7 {dimension_numbers = #tpu.dot_dimension_numbers<[1], [0], [0], [1], [0, 0, 1, 1], [], []>, precision = #tpu.contract_precision<fp32>} : vector<8x128xf32>, vector<128x144xf32>, vector<8x144xf32> -> vector<8x144xf32>
    %13 = vector.extract_strided_slice %12 {offsets = [0, 0], sizes = [8, 72], strides = [1, 1]} : vector<8x144xf32> to vector<8x72xf32>
    %14 = math.absf %13 : vector<8x72xf32>
    %c0_8 = arith.constant 0 : index
    %c0_9 = arith.constant 0 : index
    %15 = vector.load %arg5[%c0_8, %c0_9] : memref<72x128xf32, #tpu.memory_space<vmem>>, vector<72x128xf32>
    %cst_10 = arith.constant dense<0.000000e+00> : vector<8x128xf32>
    %16 = tpu.matmul %14, %15, %cst_10 {dimension_numbers = #tpu.dot_dimension_numbers<[1], [0], [0], [1], [0, 0, 1, 1], [], []>, precision = #tpu.contract_precision<fp32>} : vector<8x72xf32>, vector<72x128xf32>, vector<8x128xf32> -> vector<8x128xf32>
    %17 = arith.addf %10, %16 : vector<8x128xf32>
    %18 = vector.extract_strided_slice %12 {offsets = [0, 72], sizes = [8, 72], strides = [1, 1]} : vector<8x144xf32> to vector<8x72xf32>
    %cst_11 = arith.constant 2.560000e+02 : f32
    %19 = vector.broadcast %cst_11 : f32 to vector<8x72xf32>
    %20 = arith.mulf %18, %19 : vector<8x72xf32>
    %21 = math.roundeven %20 : vector<8x72xf32>
    %cst_12 = arith.constant -2.047000e+03 : f32
    %cst_13 = arith.constant 2.047000e+03 : f32
    %22 = vector.broadcast %cst_12 : f32 to vector<8x72xf32>
    %23 = arith.maximumf %22, %21 : vector<8x72xf32>
    %24 = vector.broadcast %cst_13 : f32 to vector<8x72xf32>
    %25 = arith.minimumf %24, %23 : vector<8x72xf32>
    %cst_14 = arith.constant 3.906250e-03 : f32
    %26 = vector.broadcast %cst_14 : f32 to vector<8x72xf32>
    %27 = arith.mulf %25, %26 : vector<8x72xf32>
    %c0_15 = arith.constant 0 : index
    %c0_16 = arith.constant 0 : index
    %28 = vector.load %arg3[%c0_15, %c0_16] : memref<72x96xf32, #tpu.memory_space<vmem>>, vector<72x96xf32>
    %cst_17 = arith.constant dense<0.000000e+00> : vector<8x96xf32>
    %29 = tpu.matmul %27, %28, %cst_17 {dimension_numbers = #tpu.dot_dimension_numbers<[1], [0], [0], [1], [0, 0, 1, 1], [], []>, precision = #tpu.contract_precision<fp32>} : vector<8x72xf32>, vector<72x96xf32>, vector<8x96xf32> -> vector<8x96xf32>
    %30 = vector.extract_strided_slice %29 {offsets = [0, 0], sizes = [8, 48], strides = [1, 1]} : vector<8x96xf32> to vector<8x48xf32>
    %31 = math.absf %30 : vector<8x48xf32>
    %c0_18 = arith.constant 0 : index
    %c0_19 = arith.constant 0 : index
    %32 = vector.load %arg6[%c0_18, %c0_19] : memref<48x128xf32, #tpu.memory_space<vmem>>, vector<48x128xf32>
    %cst_20 = arith.constant dense<0.000000e+00> : vector<8x128xf32>
    %33 = tpu.matmul %31, %32, %cst_20 {dimension_numbers = #tpu.dot_dimension_numbers<[1], [0], [0], [1], [0, 0, 1, 1], [], []>, precision = #tpu.contract_precision<fp32>} : vector<8x48xf32>, vector<48x128xf32>, vector<8x128xf32> -> vector<8x128xf32>
    %34 = arith.addf %17, %33 : vector<8x128xf32>
    %35 = vector.extract_strided_slice %29 {offsets = [0, 48], sizes = [8, 48], strides = [1, 1]} : vector<8x96xf32> to vector<8x48xf32>
    %cst_21 = arith.constant 2.560000e+02 : f32
    %36 = vector.broadcast %cst_21 : f32 to vector<8x48xf32>
    %37 = arith.mulf %35, %36 : vector<8x48xf32>
    %38 = math.roundeven %37 : vector<8x48xf32>
    %cst_22 = arith.constant -2.047000e+03 : f32
    %cst_23 = arith.constant 2.047000e+03 : f32
    %39 = vector.broadcast %cst_22 : f32 to vector<8x48xf32>
    %40 = arith.maximumf %39, %38 : vector<8x48xf32>
    %41 = vector.broadcast %cst_23 : f32 to vector<8x48xf32>
    %42 = arith.minimumf %41, %40 : vector<8x48xf32>
    %cst_24 = arith.constant 3.906250e-03 : f32
    %43 = vector.broadcast %cst_24 : f32 to vector<8x48xf32>
    %44 = arith.mulf %42, %43 : vector<8x48xf32>
    %c0_25 = arith.constant 0 : index
    %c0_26 = arith.constant 0 : index
    %45 = vector.load %arg4[%c0_25, %c0_26] : memref<48x64xf32, #tpu.memory_space<vmem>>, vector<48x64xf32>
    %cst_27 = arith.constant dense<0.000000e+00> : vector<8x64xf32>
    %46 = tpu.matmul %44, %45, %cst_27 {dimension_numbers = #tpu.dot_dimension_numbers<[1], [0], [0], [1], [0, 0, 1, 1], [], []>, precision = #tpu.contract_precision<fp32>} : vector<8x48xf32>, vector<48x64xf32>, vector<8x64xf32> -> vector<8x64xf32>
    %47 = vector.extract_strided_slice %46 {offsets = [0, 0], sizes = [8, 32], strides = [1, 1]} : vector<8x64xf32> to vector<8x32xf32>
    %48 = math.absf %47 : vector<8x32xf32>
    %c0_28 = arith.constant 0 : index
    %c0_29 = arith.constant 0 : index
    %49 = vector.load %arg7[%c0_28, %c0_29] : memref<32x128xf32, #tpu.memory_space<vmem>>, vector<32x128xf32>
    %cst_30 = arith.constant dense<0.000000e+00> : vector<8x128xf32>
    %50 = tpu.matmul %48, %49, %cst_30 {dimension_numbers = #tpu.dot_dimension_numbers<[1], [0], [0], [1], [0, 0, 1, 1], [], []>, precision = #tpu.contract_precision<fp32>} : vector<8x32xf32>, vector<32x128xf32>, vector<8x128xf32> -> vector<8x128xf32>
    %51 = arith.addf %34, %50 : vector<8x128xf32>
    %52 = vector.extract_strided_slice %46 {offsets = [0, 32], sizes = [8, 32], strides = [1, 1]} : vector<8x64xf32> to vector<8x32xf32>
    %53 = math.absf %52 : vector<8x32xf32>
    %c0_31 = arith.constant 0 : index
    %c0_32 = arith.constant 0 : index
    %54 = vector.load %arg8[%c0_31, %c0_32] : memref<32x128xf32, #tpu.memory_space<vmem>>, vector<32x128xf32>
    %cst_33 = arith.constant dense<0.000000e+00> : vector<8x128xf32>
    %55 = tpu.matmul %53, %54, %cst_33 {dimension_numbers = #tpu.dot_dimension_numbers<[1], [0], [0], [1], [0, 0, 1, 1], [], []>, precision = #tpu.contract_precision<fp32>} : vector<8x32xf32>, vector<32x128xf32>, vector<8x128xf32> -> vector<8x128xf32>
    %56 = arith.addf %51, %55 : vector<8x128xf32>
    %57 = math.roundeven %56 : vector<8x128xf32>
    %cst_34 = arith.constant -2.047000e+03 : f32
    %cst_35 = arith.constant 2.047000e+03 : f32
    %58 = vector.broadcast %cst_34 : f32 to vector<8x128xf32>
    %59 = arith.maximumf %58, %57 : vector<8x128xf32>
    %60 = vector.broadcast %cst_35 : f32 to vector<8x128xf32>
    %61 = arith.minimumf %60, %59 : vector<8x128xf32>
    %cst_36 = arith.constant 3.906250e-03 : f32
    %62 = vector.broadcast %cst_36 : f32 to vector<8x128xf32>
    %63 = arith.mulf %61, %62 : vector<8x128xf32>
    %c0_37 = arith.constant 0 : index
    %c0_38 = arith.constant 0 : index
    %64 = vector.load %arg9[%c0_37, %c0_38] : memref<8x128xf32, #tpu.memory_space<vmem>>, vector<8x128xf32>
    tpu.vector_store %arg9[%c0_37, %c0_38], %63 {strides = array<i32>} : memref<8x128xf32, #tpu.memory_space<vmem>>, vector<8x128xf32>,
    return
  }
  func.func @transform_0(%arg0: i32) -> (i32, i32) {
    %c0_i32 = arith.constant 0 : i32
    %c0_i32_0 = arith.constant 0 : i32
    return %arg0, %c0_i32 : i32, i32
  }
  func.func @transform_1(%arg0: i32) -> (i32, i32) {
    %c0_i32 = arith.constant 0 : i32
    %c0_i32_0 = arith.constant 0 : i32
    %c0_i32_1 = arith.constant 0 : i32
    return %c0_i32, %c0_i32_0 : i32, i32
  }
  func.func @transform_2(%arg0: i32) -> (i32, i32) {
    %c0_i32 = arith.constant 0 : i32
    %c0_i32_0 = arith.constant 0 : i32
    %c0_i32_1 = arith.constant 0 : i32
    return %c0_i32, %c0_i32_0 : i32, i32
  }
  func.func @transform_3(%arg0: i32) -> (i32, i32) {
    %c0_i32 = arith.constant 0 : i32
    %c0_i32_0 = arith.constant 0 : i32
    %c0_i32_1 = arith.constant 0 : i32
    return %c0_i32, %c0_i32_0 : i32, i32
  }
  func.func @transform_4(%arg0: i32) -> (i32, i32) {
    %c0_i32 = arith.constant 0 : i32
    %c0_i32_0 = arith.constant 0 : i32
    %c0_i32_1 = arith.constant 0 : i32
    return %c0_i32, %c0_i32_0 : i32, i32
  }
  func.func @transform_5(%arg0: i32) -> (i32, i32) {
    %c0_i32 = arith.constant 0 : i32
    %c0_i32_0 = arith.constant 0 : i32
    %c0_i32_1 = arith.constant 0 : i32
    return %c0_i32, %c0_i32_0 : i32, i32
  }
  func.func @transform_6(%arg0: i32) -> (i32, i32) {
    %c0_i32 = arith.constant 0 : i32
    %c0_i32_0 = arith.constant 0 : i32
    %c0_i32_1 = arith.constant 0 : i32
    return %c0_i32, %c0_i32_0 : i32, i32
  }
  func.func @transform_7(%arg0: i32) -> (i32, i32) {
    %c0_i32 = arith.constant 0 : i32
    %c0_i32_0 = arith.constant 0 : i32
    %c0_i32_1 = arith.constant 0 : i32
    return %c0_i32, %c0_i32_0 : i32, i32
  }
  func.func @transform_8(%arg0: i32) -> (i32, i32) {
    %c0_i32 = arith.constant 0 : i32
    %c0_i32_0 = arith.constant 0 : i32
    return %arg0, %c0_i32 : i32, i32
  }
}

</mosaic_0001>

<llo_original>
// kernel: forward.1
$region0: #{forward.1}
  #allocation0 [shape = 'u32[]', space=smem, size = 0x4, offset = 0x4, fixed_abs, tag = 'smem constant byte address 0x4 - core index']
  #allocation1 [shape = 'u32[144,128]{1,0:T(1,128)}', space=vmem, size = 0x12000, scoped, tag = 'internal scratch']
  %s0 = inlined_call_operand.vmem [shape: f32[8,128], index: 0, kind: input, shape index: {}]
  %s1 = inlined_call_operand.hbm [shape: f32[128,144], index: 1, kind: input, shape index: {}]
  %s2 = inlined_call_operand.hbm [shape: f32[72,96], index: 2, kind: input, shape index: {}]
  %s3 = inlined_call_operand.hbm [shape: f32[48,64], index: 3, kind: input, shape index: {}]
  %s4 = inlined_call_operand.hbm [shape: f32[72,128], index: 4, kind: input, shape index: {}]
  %s5 = inlined_call_operand.vmem [shape: f32[48,128], index: 5, kind: input, shape index: {}]
  %s6 = inlined_call_operand.hbm [shape: f32[32,128], index: 6, kind: input, shape index: {}]
  %s7 = inlined_call_operand.hbm [shape: f32[32,128], index: 7, kind: input, shape index: {}]
  %s8 = inlined_call_operand.vmem [shape: f32[8,128], index: 8, kind: output, shape index: {}]
  %s9 = sld [smem:[#allocation0]]
  $region66: #{forward.1} parent=0
    _
  %s11 = ssub.s32 1, %s9
  %s12 = scalar_select 0, %s11, %s9
  $region1: #{forward.1} parent=0
    #allocation2 [shape = 'u8[131072]{0}', space=vmem, size = 0x20000, scoped, tag = 'input window, operand 1, single buffered']
    #allocation3 [shape = 's32[1]{0}', space=sflag, size = 0x4, scoped, tag = 'scoped memory for forward.1']
    #allocation4 [shape = 'u8[36864]{0}', space=vmem, size = 0x9000, scoped, tag = 'input window, operand 2, single buffered']
    #allocation5 [shape = 's32[1]{0}', space=sflag, size = 0x4, scoped, tag = 'scoped memory for forward.1']
    #allocation6 [shape = 'u8[24576]{0}', space=vmem, size = 0x6000, scoped, tag = 'input window, operand 3, single buffered']
    #allocation7 [shape = 'u8[36864]{0}', space=vmem, size = 0x9000, scoped, tag = 'input window, operand 4, single buffered']
    #allocation8 [shape = 's32[1]{0}', space=sflag, size = 0x4, scoped, tag = 'scoped memory for forward.1']
    #allocation9 [shape = 'u8[16384]{0}', space=vmem, size = 0x4000, scoped, tag = 'input window, operand 6, single buffered']
    #allocation10 [shape = 'u8[16384]{0}', space=vmem, size = 0x4000, scoped, tag = 'input window, operand 7, single buffered']
    #allocation11 [shape = 's32[1]{0}', space=sflag, size = 0x4, scoped, tag = 'scoped memory for forward.1']
    %13 = vsyncpa [#allocation3], 0
    %14 = vsyncpa [#allocation5], 0
    %15 = vsyncpa [#allocation8], 0
    %16 = vsyncpa [#allocation11], 0
    // Predicated region
    $region2: #{forward.1} parent=1 // pred_check
      _
    $region3: #{forward.1} parent=1 // pred_check_branch
      %18 = sbr.rel (0) target = $region5
    $region4: #{forward.1} parent=1 // pred_region
      _
    $region5: #{forward.1} parent=1 // pred_fallthru
      _
    // Predicated region
    $region6: #{forward.1} parent=1 // pred_check
      _
    $region7: #{forward.1} parent=1 // pred_check_branch
      %20 = sbr.rel (0) target = $region9
    $region8: #{forward.1} parent=1 // pred_region
      %s22 = ssub.s32 4096, 4096
      %23 = vsyncadd [#allocation3], %s22
      %s24 = sshll.u32 [#allocation2], 4
      %s25 = int_to_ptr.vmem [resolvable:$true] %s24
      %30 = dma.hbm_to_vmem [thread:$0]  %s1, 4096, %s25, [#allocation3], 256, 256, 16
    $region9: #{forward.1} parent=1 // pred_fallthru
      _
    // Predicated region
    $region10: #{forward.1} parent=1 // pred_check
      _
    $region11: #{forward.1} parent=1 // pred_check_branch
      %32 = sbr.rel (0) target = $region13
    $region12: #{forward.1} parent=1 // pred_region
      %s34 = ssub.s32 1152, 1152
      %35 = vsyncadd [#allocation5], %s34
      %s36 = sshll.u32 [#allocation4], 4
      %s37 = int_to_ptr.vmem [resolvable:$true] %s36
      %42 = dma.hbm_to_vmem [thread:$0]  %s2, 1152, %s37, [#allocation5], 128, 128, 8
    $region13: #{forward.1} parent=1 // pred_fallthru
      _
    // Predicated region
    $region14: #{forward.1} parent=1 // pred_check
      _
    $region15: #{forward.1} parent=1 // pred_check_branch
      %44 = sbr.rel (0) target = $region17
    $region16: #{forward.1} parent=1 // pred_region
      %s46 = ssub.s32 768, 768
      %47 = vsyncadd [#allocation5], %s46
      %s48 = sshll.u32 [#allocation6], 4
      %s49 = int_to_ptr.vmem [resolvable:$true] %s48
      %54 = dma.hbm_to_vmem [thread:$0]  %s3, 768, %s49, [#allocation5], 128, 128, 8
    $region17: #{forward.1} parent=1 // pred_fallthru
      _
    // Predicated region
    $region18: #{forward.1} parent=1 // pred_check
      _
    $region19: #{forward.1} parent=1 // pred_check_branch
      %56 = sbr.rel (0) target = $region21
    $region20: #{forward.1} parent=1 // pred_region
      %s58 = ssub.s32 1152, 1152
      %59 = vsyncadd [#allocation8], %s58
      %s60 = sshll.u32 [#allocation7], 4
      %s61 = int_to_ptr.vmem [resolvable:$true] %s60
      %66 = dma.hbm_to_vmem [thread:$0]  %s4, 1152, %s61, [#allocation8], 128, 128, 8
    $region21: #{forward.1} parent=1 // pred_fallthru
      _
    // Predicated region
    $region22: #{forward.1} parent=1 // pred_check
      _
    $region23: #{forward.1} parent=1 // pred_check_branch
      %68 = sbr.rel (0) target = $region25
    $region24: #{forward.1} parent=1 // pred_region
      _
    $region25: #{forward.1} parent=1 // pred_fallthru
      _
    // Predicated region
    $region26: #{forward.1} parent=1 // pred_check
      _
    $region27: #{forward.1} parent=1 // pred_check_branch
      %70 = sbr.rel (0) target = $region29
    $region28: #{forward.1} parent=1 // pred_region
      %s72 = ssub.s32 512, 512
      %73 = vsyncadd [#allocation8], %s72
      %s74 = sshll.u32 [#allocation9], 4
      %s75 = int_to_ptr.vmem [resolvable:$true] %s74
      %80 = dma.hbm_to_vmem [thread:$0]  %s6, 512, %s75, [#allocation8], 128, 128, 8
    $region29: #{forward.1} parent=1 // pred_fallthru
      _
    // Predicated region
    $region30: #{forward.1} parent=1 // pred_check
      _
    $region31: #{forward.1} parent=1 // pred_check_branch
      %82 = sbr.rel (0) target = $region33
    $region32: #{forward.1} parent=1 // pred_region
      %s84 = ssub.s32 512, 512
      %85 = vsyncadd [#allocation11], %s84
      %s86 = sshll.u32 [#allocation10], 4
      %s87 = int_to_ptr.vmem [resolvable:$true] %s86
      %92 = dma.hbm_to_vmem [thread:$0]  %s7, 512, %s87, [#allocation11], 128, 128, 8
    $region33: #{forward.1} parent=1 // pred_fallthru
      _
    // Predicated region
    $region34: #{forward.1} parent=1 // pred_check
      _
    $region35: #{forward.1} parent=1 // pred_check_branch
      %94 = sbr.rel (0) target = $region37
    $region36: #{forward.1} parent=1 // pred_region
      %95 = dma.done [#allocation3], 4096
    $region37: #{forward.1} parent=1 // pred_fallthru
      _
    // Predicated region
    $region38: #{forward.1} parent=1 // pred_check
      _
    $region39: #{forward.1} parent=1 // pred_check_branch
      %97 = sbr.rel (0) target = $region41
    $region40: #{forward.1} parent=1 // pred_region
      %98 = dma.done [#allocation5], 1152
    $region41: #{forward.1} parent=1 // pred_fallthru
      _
    // Predicated region
    $region42: #{forward.1} parent=1 // pred_check
      _
    $region43: #{forward.1} parent=1 // pred_check_branch
      %100 = sbr.rel (0) target = $region45
    $region44: #{forward.1} parent=1 // pred_region
      %101 = dma.done [#allocation5], 768
    $region45: #{forward.1} parent=1 // pred_fallthru
      _
    // Predicated region
    $region46: #{forward.1} parent=1 // pred_check
      _
    $region47: #{forward.1} parent=1 // pred_check_branch
      %103 = sbr.rel (0) target = $region49
    $region48: #{forward.1} parent=1 // pred_region
      %104 = dma.done [#allocation8], 1152
    $region49: #{forward.1} parent=1 // pred_fallthru
      _
    // Predicated region
    $region50: #{forward.1} parent=1 // pred_check
      _
    $region51: #{forward.1} parent=1 // pred_check_branch
      %106 = sbr.rel (0) target = $region53
    $region52: #{forward.1} parent=1 // pred_region
      %107 = dma.done [#allocation8], 512
    $region53: #{forward.1} parent=1 // pred_fallthru
      _
    // Predicated region
    $region54: #{forward.1} parent=1 // pred_check
      _
    $region55: #{forward.1} parent=1 // pred_check_branch
      %109 = sbr.rel (0) target = $region57
    $region56: #{forward.1} parent=1 // pred_region
      %110 = dma.done [#allocation11], 512
    $region57: #{forward.1} parent=1 // pred_fallthru
      _
    %v111 = vld [vmem:[%s0] sm:$0xff]
    %v112 = vmul.f32 %v111, 256.0
    %v113 = vround.ne.pseudo %v112
    %v114 = vmax.f32 %v113, -2047.0
    %v115 = vmin.f32 %v114, 2047.0
    %v116 = vmul.f32 %v115, 0.00390625
    %v117 = vld [vmem:[#allocation2] sm:$0xff]
    %v118 = vld [vmem:[#allocation2 + $0x8] sm:$0xff]
    %v119 = vld [vmem:[#allocation2 + $0x10] sm:$0xff]
    %v120 = vld [vmem:[#allocation2 + $0x18] sm:$0xff]
    %v121 = vld [vmem:[#allocation2 + $0x20] sm:$0xff]
    %v122 = vld [vmem:[#allocation2 + $0x28] sm:$0xff]
    %v123 = vld [vmem:[#allocation2 + $0x30] sm:$0xff]
    %v124 = vld [vmem:[#allocation2 + $0x38] sm:$0xff]
    %v125 = vld [vmem:[#allocation2 + $0x40] sm:$0xff]
    %v126 = vld [vmem:[#allocation2 + $0x48] sm:$0xff]
    %v127 = vld [vmem:[#allocation2 + $0x50] sm:$0xff]
    %v128 = vld [vmem:[#allocation2 + $0x58] sm:$0xff]
    %v129 = vld [vmem:[#allocation2 + $0x60] sm:$0xff]
    %v130 = vld [vmem:[#allocation2 + $0x68] sm:$0xff]
    %v131 = vld [vmem:[#allocation2 + $0x70] sm:$0xff]
    %v132 = vld [vmem:[#allocation2 + $0x78] sm:$0xff]
    %v133 = vld [vmem:[#allocation2 + $0x80] sm:$0xff]
    %v134 = vld [vmem:[#allocation2 + $0x88] sm:$0xff]
    %v135 = vld [vmem:[#allocation2 + $0x90] sm:$0xff]
    %v136 = vld [vmem:[#allocation2 + $0x98] sm:$0xff]
    %v137 = vld [vmem:[#allocation2 + $0xa0] sm:$0xff]
    %v138 = vld [vmem:[#allocation2 + $0xa8] sm:$0xff]
    %v139 = vld [vmem:[#allocation2 + $0xb0] sm:$0xff]
    %v140 = vld [vmem:[#allocation2 + $0xb8] sm:$0xff]
    %v141 = vld [vmem:[#allocation2 + $0xc0] sm:$0xff]
    %v142 = vld [vmem:[#allocation2 + $0xc8] sm:$0xff]
    %v143 = vld [vmem:[#allocation2 + $0xd0] sm:$0xff]
    %v144 = vld [vmem:[#allocation2 + $0xd8] sm:$0xff]
    %v145 = vld [vmem:[#allocation2 + $0xe0] sm:$0xff]
    %v146 = vld [vmem:[#allocation2 + $0xe8] sm:$0xff]
    %v147 = vld [vmem:[#allocation2 + $0xf0] sm:$0xff]
    %v148 = vld [vmem:[#allocation2 + $0xf8] sm:$0xff]
    %v149 = vand.u32 %v118, 4294901760
    %150 = vmatprep.subr.mxu0 %v149
    %v151 = vand.u32 %v117, 4294901760
    %152 = vmatpush1.msra.mxu0 %v151
    %v153 = vand.u32 %v120, 4294901760
    %154 = vmatprep.subr.mxu0 %v153
    %v155 = vand.u32 %v119, 4294901760
    %156 = vmatpush1.msra.mxu0 %v155
    %v157 = vand.u32 %v122, 4294901760
    %158 = vmatprep.subr.mxu0 %v157
    %v159 = vand.u32 %v121, 4294901760
    %160 = vmatpush1.msra.mxu0 %v159
    %v161 = vand.u32 %v124, 4294901760
    %162 = vmatprep.subr.mxu0 %v161
    %v163 = vand.u32 %v123, 4294901760
    %164 = vmatpush1.msra.mxu0 %v163
    %v165 = vand.u32 %v126, 4294901760
    %166 = vmatprep.subr.mxu0 %v165
    %v167 = vand.u32 %v125, 4294901760
    %168 = vmatpush1.msra.mxu0 %v167
    %v169 = vand.u32 %v128, 4294901760
    %170 = vmatprep.subr.mxu0 %v169
    %v171 = vand.u32 %v127, 4294901760
    %172 = vmatpush1.msra.mxu0 %v171
    %v173 = vand.u32 %v130, 4294901760
    %174 = vmatprep.subr.mxu0 %v173
    %v175 = vand.u32 %v129, 4294901760
    %176 = vmatpush1.msra.mxu0 %v175
    %v177 = vand.u32 %v132, 4294901760
    %178 = vmatprep.subr.mxu0 %v177
    %v179 = vand.u32 %v131, 4294901760
    %180 = vmatpush1.msra.mxu0 %v179
    %v181 = vand.u32 %v134, 4294901760
    %182 = vmatprep.subr.mxu0 %v181
    %v183 = vand.u32 %v133, 4294901760
    %184 = vmatpush1.msra.mxu0 %v183
    %v185 = vand.u32 %v136, 4294901760
    %186 = vmatprep.subr.mxu0 %v185
    %v187 = vand.u32 %v135, 4294901760
    %188 = vmatpush1.msra.mxu0 %v187
    %v189 = vand.u32 %v138, 4294901760
    %190 = vmatprep.subr.mxu0 %v189
    %v191 = vand.u32 %v137, 4294901760
    %192 = vmatpush1.msra.mxu0 %v191
    %v193 = vand.u32 %v140, 4294901760
    %194 = vmatprep.subr.mxu0 %v193
    %v195 = vand.u32 %v139, 4294901760
    %196 = vmatpush1.msra.mxu0 %v195
    %v197 = vand.u32 %v142, 4294901760
    %198 = vmatprep.subr.mxu0 %v197
    %v199 = vand.u32 %v141, 4294901760
    %200 = vmatpush1.msra.mxu0 %v199
    %v201 = vand.u32 %v144, 4294901760
    %202 = vmatprep.subr.mxu0 %v201
    %v203 = vand.u32 %v143, 4294901760
    %204 = vmatpush1.msra.mxu0 %v203
    %v205 = vand.u32 %v146, 4294901760
    %206 = vmatprep.subr.mxu0 %v205
    %v207 = vand.u32 %v145, 4294901760
    %208 = vmatpush1.msra.mxu0 %v207
    %v209 = vand.u32 %v148, 4294901760
    %210 = vmatprep.subr.mxu0 %v209
    %v211 = vand.u32 %v147, 4294901760
    %212 = vmatpush1.msra.mxu0 %v211
    %213 = vmatprep.subr.mxu0 0.0
    %214 = vmatpush1.msra.mxu0 0.0
    %215 = vmatprep.subr.mxu0 0.0
    %216 = vmatpush1.msra.mxu0 0.0
    %217 = vmatprep.subr.mxu0 0.0
    %218 = vmatpush1.msra.mxu0 0.0
    %219 = vmatprep.subr.mxu0 0.0
    %220 = vmatpush1.msra.mxu0 0.0
    %221 = vmatprep.subr.mxu0 0.0
    %222 = vmatpush1.msra.mxu0 0.0
    %223 = vmatprep.subr.mxu0 0.0
    %224 = vmatpush1.msra.mxu0 0.0
    %225 = vmatprep.subr.mxu0 0.0
    %226 = vmatpush1.msra.mxu0 0.0
    %227 = vmatprep.subr.mxu0 0.0
    %228 = vmatpush1.msra.mxu0 0.0
    %229 = vmatprep.subr.mxu0 0.0
    %230 = vmatpush1.msra.mxu0 0.0
    %231 = vmatprep.subr.mxu0 0.0
    %232 = vmatpush1.msra.mxu0 0.0
    %233 = vmatprep.subr.mxu0 0.0
    %234 = vmatpush1.msra.mxu0 0.0
    %235 = vmatprep.subr.mxu0 0.0
    %236 = vmatpush1.msra.mxu0 0.0
    %237 = vmatprep.subr.mxu0 0.0
    %238 = vmatpush1.msra.mxu0 0.0
    %239 = vmatprep.subr.mxu0 0.0
    %240 = vmatpush1.msra.mxu0 0.0
    %241 = vmatprep.subr.mxu0 0.0
    %242 = vmatpush1.msra.mxu0 0.0
    %243 = vmatprep.subr.mxu0 0.0
    %244 = vmatpush1.msra.mxu0 0.0
    %245 = vmatprep.mubr.f32.mxu0 0.0
    %v246 = vand.u32 %v116, 4294901760
    %v247 = vsub.f32 %v116, %v246
    %v248 = vand.u32 %v247, 4294901760
    %v249 = vsub.f32 %v247, %v248
    %v250 = vand.u32 %v249, 4294901760
    %251 = vmatmul.mubr.f32.gmra.mrb[0].mxu0 %v250
    %v252 = vpop.f32.mrb[0].mxu0
    %v253 = vadd.f32 0.0, %v252
    %v254 = vpop.f32.mrb[0].mxu0
    %v255 = vadd.f32 0.0, %v254
    %256 = vdwg.mxu0
    %v257 = vand.u32 %v118, 4294901760
    %v258 = vsub.f32 %v118, %v257
    %v259 = vand.u32 %v258, 4294901760
    %v260 = vsub.f32 %v258, %v259
    %v261 = vand.u32 %v260, 4294901760
    %262 = vmatprep.subr.mxu0 %v261
    %v263 = vand.u32 %v117, 4294901760
    %v264 = vsub.f32 %v117, %v263
    %v265 = vand.u32 %v264, 4294901760
    %v266 = vsub.f32 %v264, %v265
    %v267 = vand.u32 %v266, 4294901760
    %268 = vmatpush1.msra.mxu0 %v267
    %v269 = vand.u32 %v120, 4294901760
    %v270 = vsub.f32 %v120, %v269
    %v271 = vand.u32 %v270, 4294901760
    %v272 = vsub.f32 %v270, %v271
    %v273 = vand.u32 %v272, 4294901760
    %274 = vmatprep.subr.mxu0 %v273
    %v275 = vand.u32 %v119, 4294901760
    %v276 = vsub.f32 %v119, %v275
    %v277 = vand.u32 %v276, 4294901760
    %v278 = vsub.f32 %v276, %v277
    %v279 = vand.u32 %v278, 4294901760
    %280 = vmatpush1.msra.mxu0 %v279
    %v281 = vand.u32 %v122, 4294901760
    %v282 = vsub.f32 %v122, %v281
    %v283 = vand.u32 %v282, 4294901760
    %v284 = vsub.f32 %v282, %v283
    %v285 = vand.u32 %v284, 4294901760
    %286 = vmatprep.subr.mxu0 %v285
    %v287 = vand.u32 %v121, 4294901760
    %v288 = vsub.f32 %v121, %v287
    %v289 = vand.u32 %v288, 4294901760
    %v290 = vsub.f32 %v288, %v289
    %v291 = vand.u32 %v290, 4294901760
    %292 = vmatpush1.msra.mxu0 %v291
    %v293 = vand.u32 %v124, 4294901760
    %v294 = vsub.f32 %v124, %v293
    %v295 = vand.u32 %v294, 4294901760
    %v296 = vsub.f32 %v294, %v295
    %v297 = vand.u32 %v296, 4294901760
    %298 = vmatprep.subr.mxu0 %v297
    %v299 = vand.u32 %v123, 4294901760
    %v300 = vsub.f32 %v123, %v299
    %v301 = vand.u32 %v300, 4294901760
    %v302 = vsub.f32 %v300, %v301
    %v303 = vand.u32 %v302, 4294901760
    %304 = vmatpush1.msra.mxu0 %v303
    %v305 = vand.u32 %v126, 4294901760
    %v306 = vsub.f32 %v126, %v305
    %v307 = vand.u32 %v306, 4294901760
    %v308 = vsub.f32 %v306, %v307
    %v309 = vand.u32 %v308, 4294901760
    %310 = vmatprep.subr.mxu0 %v309
    %v311 = vand.u32 %v125, 4294901760
    %v312 = vsub.f32 %v125, %v311
    %v313 = vand.u32 %v312, 4294901760
    %v314 = vsub.f32 %v312, %v313
    %v315 = vand.u32 %v314, 4294901760
    %316 = vmatpush1.msra.mxu0 %v315
    %v317 = vand.u32 %v128, 4294901760
    %v318 = vsub.f32 %v128, %v317
    %v319 = vand.u32 %v318, 4294901760
    %v320 = vsub.f32 %v318, %v319
    %v321 = vand.u32 %v320, 4294901760
    %322 = vmatprep.subr.mxu0 %v321
    %v323 = vand.u32 %v127, 4294901760
    %v324 = vsub.f32 %v127, %v323
    %v325 = vand.u32 %v324, 4294901760
    %v326 = vsub.f32 %v324, %v325
    %v327 = vand.u32 %v326, 4294901760
    %328 = vmatpush1.msra.mxu0 %v327
    %v329 = vand.u32 %v130, 4294901760
    %v330 = vsub.f32 %v130, %v329
    %v331 = vand.u32 %v330, 4294901760
    %v332 = vsub.f32 %v330, %v331
    %v333 = vand.u32 %v332, 4294901760
    %334 = vmatprep.subr.mxu0 %v333
    %v335 = vand.u32 %v129, 4294901760
    %v336 = vsub.f32 %v129, %v335
    %v337 = vand.u32 %v336, 4294901760
    %v338 = vsub.f32 %v336, %v337
    %v339 = vand.u32 %v338, 4294901760
    %340 = vmatpush1.msra.mxu0 %v339
    %v341 = vand.u32 %v132, 4294901760
    %v342 = vsub.f32 %v132, %v341
    %v343 = vand.u32 %v342, 4294901760
    %v344 = vsub.f32 %v342, %v343
    %v345 = vand.u32 %v344, 4294901760
    %346 = vmatprep.subr.mxu0 %v345
    %v347 = vand.u32 %v131, 4294901760
    %v348 = vsub.f32 %v131, %v347
    %v349 = vand.u32 %v348, 4294901760
    %v350 = vsub.f32 %v348, %v349
    %v351 = vand.u32 %v350, 4294901760
    %352 = vmatpush1.msra.mxu0 %v351
    %v353 = vand.u32 %v134, 4294901760
    %v354 = vsub.f32 %v134, %v353
    %v355 = vand.u32 %v354, 4294901760
    %v356 = vsub.f32 %v354, %v355
    %v357 = vand.u32 %v356, 4294901760
    %358 = vmatprep.subr.mxu0 %v357
    %v359 = vand.u32 %v133, 4294901760
    %v360 = vsub.f32 %v133, %v359
    %v361 = vand.u32 %v360, 4294901760
    %v362 = vsub.f32 %v360, %v361
    %v363 = vand.u32 %v362, 4294901760
    %364 = vmatpush1.msra.mxu0 %v363
    %v365 = vand.u32 %v136, 4294901760
    %v366 = vsub.f32 %v136, %v365
    %v367 = vand.u32 %v366, 4294901760
    %v368 = vsub.f32 %v366, %v367
    %v369 = vand.u32 %v368, 4294901760
    %370 = vmatprep.subr.mxu0 %v369
    %v371 = vand.u32 %v135, 4294901760
    %v372 = vsub.f32 %v135, %v371
    %v373 = vand.u32 %v372, 4294901760
    %v374 = vsub.f32 %v372, %v373
    %v375 = vand.u32 %v374, 4294901760
    %376 = vmatpush1.msra.mxu0 %v375
    %v377 = vand.u32 %v138, 4294901760
    %v378 = vsub.f32 %v138, %v377
    %v379 = vand.u32 %v378, 4294901760
    %v380 = vsub.f32 %v378, %v379
    %v381 = vand.u32 %v380, 4294901760
    %382 = vmatprep.subr.mxu0 %v381
    %v383 = vand.u32 %v137, 4294901760
    %v384 = vsub.f32 %v137, %v383
    %v385 = vand.u32 %v384, 4294901760
    %v386 = vsub.f32 %v384, %v385
    %v387 = vand.u32 %v386, 4294901760
    %388 = vmatpush1.msra.mxu0 %v387
    %v389 = vand.u32 %v140, 4294901760
    %v390 = vsub.f32 %v140, %v389
    %v391 = vand.u32 %v390, 4294901760
    %v392 = vsub.f32 %v390, %v391
    %v393 = vand.u32 %v392, 4294901760
    %394 = vmatprep.subr.mxu0 %v393
    %v395 = vand.u32 %v139, 4294901760
    %v396 = vsub.f32 %v139, %v395
    %v397 = vand.u32 %v396, 4294901760
    %v398 = vsub.f32 %v396, %v397
    %v399 = vand.u32 %v398, 4294901760
    %400 = vmatpush1.msra.mxu0 %v399
    %v401 = vand.u32 %v142, 4294901760
    %v402 = vsub.f32 %v142, %v401
    %v403 = vand.u32 %v402, 4294901760
    %v404 = vsub.f32 %v402, %v403
    %v405 = vand.u32 %v404, 4294901760
    %406 = vmatprep.subr.mxu0 %v405
    %v407 = vand.u32 %v141, 4294901760
    %v408 = vsub.f32 %v141, %v407
    %v409 = vand.u32 %v408, 4294901760
    %v410 = vsub.f32 %v408, %v409
    %v411 = vand.u32 %v410, 4294901760
    %412 = vmatpush1.msra.mxu0 %v411
    %v413 = vand.u32 %v144, 4294901760
    %v414 = vsub.f32 %v144, %v413
    %v415 = vand.u32 %v414, 4294901760
    %v416 = vsub.f32 %v414, %v415
    %v417 = vand.u32 %v416, 4294901760
    %418 = vmatprep.subr.mxu0 %v417
    %v419 = vand.u32 %v143, 4294901760
    %v420 = vsub.f32 %v143, %v419
    %v421 = vand.u32 %v420, 4294901760
    %v422 = vsub.f32 %v420, %v421
    %v423 = vand.u32 %v422, 4294901760
    %424 = vmatpush1.msra.mxu0 %v423
    %v425 = vand.u32 %v146, 4294901760
    %v426 = vsub.f32 %v146, %v425
    %v427 = vand.u32 %v426, 4294901760
    %v428 = vsub.f32 %v426, %v427
    %v429 = vand.u32 %v428, 4294901760
    %430 = vmatprep.subr.mxu0 %v429
    %v431 = vand.u32 %v145, 4294901760
    %v432 = vsub.f32 %v145, %v431
    %v433 = vand.u32 %v432, 4294901760
    %v434 = vsub.f32 %v432, %v433
    %v435 = vand.u32 %v434, 4294901760
    %436 = vmatpush1.msra.mxu0 %v435
    %v437 = vand.u32 %v148, 4294901760
    %v438 = vsub.f32 %v148, %v437
    %v439 = vand.u32 %v438, 4294901760
    %v440 = vsub.f32 %v438, %v439
    %v441 = vand.u32 %v440, 4294901760
    %442 = vmatprep.subr.mxu0 %v441
    %v443 = vand.u32 %v147, 4294901760
    %v444 = vsub.f32 %v147, %v443
    %v445 = vand.u32 %v444, 4294901760
    %v446 = vsub.f32 %v444, %v445
    %v447 = vand.u32 %v446, 4294901760
    %448 = vmatpush1.msra.mxu0 %v447
    %449 = vmatprep.subr.mxu0 0.0
    %450 = vmatpush1.msra.mxu0 0.0
    %451 = vmatprep.subr.mxu0 0.0
    %452 = vmatpush1.msra.mxu0 0.0
    %453 = vmatprep.subr.mxu0 0.0
    %454 = vmatpush1.msra.mxu0 0.0
    %455 = vmatprep.subr.mxu0 0.0
    %456 = vmatpush1.msra.mxu0 0.0
    %457 = vmatprep.subr.mxu0 0.0
    %458 = vmatpush1.msra.mxu0 0.0
    %459 = vmatprep.subr.mxu0 0.0
    %460 = vmatpush1.msra.mxu0 0.0
    %461 = vmatprep.subr.mxu0 0.0
    %462 = vmatpush1.msra.mxu0 0.0
    %463 = vmatprep.subr.mxu0 0.0
    %464 = vmatpush1.msra.mxu0 0.0
    %465 = vmatprep.subr.mxu0 0.0
    %466 = vmatpush1.msra.mxu0 0.0
    %467 = vmatprep.subr.mxu0 0.0
    %468 = vmatpush1.msra.mxu0 0.0
    %469 = vmatprep.subr.mxu0 0.0
    %470 = vmatpush1.msra.mxu0 0.0
    %471 = vmatprep.subr.mxu0 0.0
    %472 = vmatpush1.msra.mxu0 0.0
    %473 = vmatprep.subr.mxu0 0.0
    %474 = vmatpush1.msra.mxu0 0.0
    %475 = vmatprep.subr.mxu0 0.0
    %476 = vmatpush1.msra.mxu0 0.0
    %477 = vmatprep.subr.mxu0 0.0
    %478 = vmatpush1.msra.mxu0 0.0
    %479 = vmatprep.subr.mxu0 0.0
    %480 = vmatpush1.msra.mxu0 0.0
    %481 = vmatprep.mubr.f32.mxu0 0.0
    %v482 = vand.u32 %v116, 4294901760
    %483 = vmatmul.mubr.f32.gmra.mrb[0].mxu0 %v482
    %v484 = vpop.f32.mrb[0].mxu0
    %v485 = vadd.f32 %v253, %v484
    %v486 = vpop.f32.mrb[0].mxu0
    %v487 = vadd.f32 %v255, %v486
    %488 = vdwg.mxu0
    %v489 = vand.u32 %v118, 4294901760
    %v490 = vsub.f32 %v118, %v489
    %491 = vmatprep.subr.mxu0 %v490
    %v492 = vand.u32 %v117, 4294901760
    %v493 = vsub.f32 %v117, %v492
    %494 = vmatpush1.msra.mxu0 %v493
    %v495 = vand.u32 %v120, 4294901760
    %v496 = vsub.f32 %v120, %v495
    %497 = vmatprep.subr.mxu0 %v496
    %v498 = vand.u32 %v119, 4294901760
    %v499 = vsub.f32 %v119, %v498
    %500 = vmatpush1.msra.mxu0 %v499
    %v501 = vand.u32 %v122, 4294901760
    %v502 = vsub.f32 %v122, %v501
    %503 = vmatprep.subr.mxu0 %v502
    %v504 = vand.u32 %v121, 4294901760
    %v505 = vsub.f32 %v121, %v504
    %506 = vmatpush1.msra.mxu0 %v505
    %v507 = vand.u32 %v124, 4294901760
    %v508 = vsub.f32 %v124, %v507
    %509 = vmatprep.subr.mxu0 %v508
    %v510 = vand.u32 %v123, 4294901760
    %v511 = vsub.f32 %v123, %v510
    %512 = vmatpush1.msra.mxu0 %v511
    %v513 = vand.u32 %v126, 4294901760
    %v514 = vsub.f32 %v126, %v513
    %515 = vmatprep.subr.mxu0 %v514
    %v516 = vand.u32 %v125, 4294901760
    %v517 = vsub.f32 %v125, %v516
    %518 = vmatpush1.msra.mxu0 %v517
    %v519 = vand.u32 %v128, 4294901760
    %v520 = vsub.f32 %v128, %v519
    %521 = vmatprep.subr.mxu0 %v520
    %v522 = vand.u32 %v127, 4294901760
    %v523 = vsub.f32 %v127, %v522
    %524 = vmatpush1.msra.mxu0 %v523
    %v525 = vand.u32 %v130, 4294901760
    %v526 = vsub.f32 %v130, %v525
    %527 = vmatprep.subr.mxu0 %v526
    %v528 = vand.u32 %v129, 4294901760
    %v529 = vsub.f32 %v129, %v528
    %530 = vmatpush1.msra.mxu0 %v529
    %v531 = vand.u32 %v132, 4294901760
    %v532 = vsub.f32 %v132, %v531
    %533 = vmatprep.subr.mxu0 %v532
    %v534 = vand.u32 %v131, 4294901760
    %v535 = vsub.f32 %v131, %v534
    %536 = vmatpush1.msra.mxu0 %v535
    %v537 = vand.u32 %v134, 4294901760
    %v538 = vsub.f32 %v134, %v537
    %539 = vmatprep.subr.mxu0 %v538
    %v540 = vand.u32 %v133, 4294901760
    %v541 = vsub.f32 %v133, %v540
    %542 = vmatpush1.msra.mxu0 %v541
    %v543 = vand.u32 %v136, 4294901760
    %v544 = vsub.f32 %v136, %v543
    %545 = vmatprep.subr.mxu0 %v544
    %v546 = vand.u32 %v135, 4294901760
    %v547 = vsub.f32 %v135, %v546
    %548 = vmatpush1.msra.mxu0 %v547
    %v549 = vand.u32 %v138, 4294901760
    %v550 = vsub.f32 %v138, %v549
    %551 = vmatprep.subr.mxu0 %v550
    %v552 = vand.u32 %v137, 4294901760
    %v553 = vsub.f32 %v137, %v552
    %554 = vmatpush1.msra.mxu0 %v553
    %v555 = vand.u32 %v140, 4294901760
    %v556 = vsub.f32 %v140, %v555
    %557 = vmatprep.subr.mxu0 %v556
    %v558 = vand.u32 %v139, 4294901760
    %v559 = vsub.f32 %v139, %v558
    %560 = vmatpush1.msra.mxu0 %v559
    %v561 = vand.u32 %v142, 4294901760
    %v562 = vsub.f32 %v142, %v561
    %563 = vmatprep.subr.mxu0 %v562
    %v564 = vand.u32 %v141, 4294901760
    %v565 = vsub.f32 %v141, %v564
    %566 = vmatpush1.msra.mxu0 %v565
    %v567 = vand.u32 %v144, 4294901760
    %v568 = vsub.f32 %v144, %v567
    %569 = vmatprep.subr.mxu0 %v568
    %v570 = vand.u32 %v143, 4294901760
    %v571 = vsub.f32 %v143, %v570
    %572 = vmatpush1.msra.mxu0 %v571
    %v573 = vand.u32 %v146, 4294901760
    %v574 = vsub.f32 %v146, %v573
    %575 = vmatprep.subr.mxu0 %v574
    %v576 = vand.u32 %v145, 4294901760
    %v577 = vsub.f32 %v145, %v576
    %578 = vmatpush1.msra.mxu0 %v577
    %v579 = vand.u32 %v148, 4294901760
    %v580 = vsub.f32 %v148, %v579
    %581 = vmatprep.subr.mxu0 %v580
    %v582 = vand.u32 %v147, 4294901760
    %v583 = vsub.f32 %v147, %v582
    %584 = vmatpush1.msra.mxu0 %v583
    %585 = vmatprep.subr.mxu0 0.0
    %586 = vmatpush1.msra.mxu0 0.0
    %587 = vmatprep.subr.mxu0 0.0
    %588 = vmatpush1.msra.mxu0 0.0
    %589 = vmatprep.subr.mxu0 0.0
    %590 = vmatpush1.msra.mxu0 0.0
    %591 = vmatprep.subr.mxu0 0.0
    %592 = vmatpush1.msra.mxu0 0.0
    %593 = vmatprep.subr.mxu0 0.0
    %594 = vmatpush1.msra.mxu0 0.0
    %595 = vmatprep.subr.mxu0 0.0
    %596 = vmatpush1.msra.mxu0 0.0
    %597 = vmatprep.subr.mxu0 0.0
    %598 = vmatpush1.msra.mxu0 0.0
    %599 = vmatprep.subr.mxu0 0.0
    %600 = vmatpush1.msra.mxu0 0.0
    %601 = vmatprep.subr.mxu0 0.0
    %602 = vmatpush1.msra.mxu0 0.0
    %603 = vmatprep.subr.mxu0 0.0
    %604 = vmatpush1.msra.mxu0 0.0
    %605 = vmatprep.subr.mxu0 0.0
    %606 = vmatpush1.msra.mxu0 0.0
    %607 = vmatprep.subr.mxu0 0.0
    %608 = vmatpush1.msra.mxu0 0.0
    %609 = vmatprep.subr.mxu0 0.0
    %610 = vmatpush1.msra.mxu0 0.0
    %611 = vmatprep.subr.mxu0 0.0
    %612 = vmatpush1.msra.mxu0 0.0
    %613 = vmatprep.subr.mxu0 0.0
    %614 = vmatpush1.msra.mxu0 0.0
    %615 = vmatprep.subr.mxu0 0.0
    %616 = vmatpush1.msra.mxu0 0.0
    %617 = vmatprep.mubr.f32.mxu0 0.0
    %v618 = vand.u32 %v116, 4294901760
    %v619 = vsub.f32 %v116, %v618
    %620 = vmatmul.mubr.f32.gmra.mrb[0].mxu0 %v619
    %v621 = vpop.f32.mrb[0].mxu0
    %v622 = vadd.f32 %v485, %v621
    %v623 = vpop.f32.mrb[0].mxu0
    %v624 = vadd.f32 %v487, %v623
    %625 = vdwg.mxu0
    %v626 = vand.u32 %v118, 4294901760
    %627 = vmatprep.subr.mxu0 %v626
    %v628 = vand.u32 %v117, 4294901760
    %629 = vmatpush1.msra.mxu0 %v628
    %v630 = vand.u32 %v120, 4294901760
    %631 = vmatprep.subr.mxu0 %v630
    %v632 = vand.u32 %v119, 4294901760
    %633 = vmatpush1.msra.mxu0 %v632
    %v634 = vand.u32 %v122, 4294901760
    %635 = vmatprep.subr.mxu0 %v634
    %v636 = vand.u32 %v121, 4294901760
    %637 = vmatpush1.msra.mxu0 %v636
    %v638 = vand.u32 %v124, 4294901760
    %639 = vmatprep.subr.mxu0 %v638
    %v640 = vand.u32 %v123, 4294901760
    %641 = vmatpush1.msra.mxu0 %v640
    %v642 = vand.u32 %v126, 4294901760
    %643 = vmatprep.subr.mxu0 %v642
    %v644 = vand.u32 %v125, 4294901760
    %645 = vmatpush1.msra.mxu0 %v644
    %v646 = vand.u32 %v128, 4294901760
    %647 = vmatprep.subr.mxu0 %v646
    %v648 = vand.u32 %v127, 4294901760
    %649 = vmatpush1.msra.mxu0 %v648
    %v650 = vand.u32 %v130, 4294901760
    %651 = vmatprep.subr.mxu0 %v650
    %v652 = vand.u32 %v129, 4294901760
    %653 = vmatpush1.msra.mxu0 %v652
    %v654 = vand.u32 %v132, 4294901760
    %655 = vmatprep.subr.mxu0 %v654
    %v656 = vand.u32 %v131, 4294901760
    %657 = vmatpush1.msra.mxu0 %v656
    %v658 = vand.u32 %v134, 4294901760
    %659 = vmatprep.subr.mxu0 %v658
    %v660 = vand.u32 %v133, 4294901760
    %661 = vmatpush1.msra.mxu0 %v660
    %v662 = vand.u32 %v136, 4294901760
    %663 = vmatprep.subr.mxu0 %v662
    %v664 = vand.u32 %v135, 4294901760
    %665 = vmatpush1.msra.mxu0 %v664
    %v666 = vand.u32 %v138, 4294901760
    %667 = vmatprep.subr.mxu0 %v666
    %v668 = vand.u32 %v137, 4294901760
    %669 = vmatpush1.msra.mxu0 %v668
    %v670 = vand.u32 %v140, 4294901760
    %671 = vmatprep.subr.mxu0 %v670
    %v672 = vand.u32 %v139, 4294901760
    %673 = vmatpush1.msra.mxu0 %v672
    %v674 = vand.u32 %v142, 4294901760
    %675 = vmatprep.subr.mxu0 %v674
    %v676 = vand.u32 %v141, 4294901760
    %677 = vmatpush1.msra.mxu0 %v676
    %v678 = vand.u32 %v144, 4294901760
    %679 = vmatprep.subr.mxu0 %v678
    %v680 = vand.u32 %v143, 4294901760
    %681 = vmatpush1.msra.mxu0 %v680
    %v682 = vand.u32 %v146, 4294901760
    %683 = vmatprep.subr.mxu0 %v682
    %v684 = vand.u32 %v145, 4294901760
    %685 = vmatpush1.msra.mxu0 %v684
    %v686 = vand.u32 %v148, 4294901760
    %687 = vmatprep.subr.mxu0 %v686
    %v688 = vand.u32 %v147, 4294901760
    %689 = vmatpush1.msra.mxu0 %v688
    %690 = vmatprep.subr.mxu0 0.0
    %691 = vmatpush1.msra.mxu0 0.0
    %692 = vmatprep.subr.mxu0 0.0
    %693 = vmatpush1.msra.mxu0 0.0
    %694 = vmatprep.subr.mxu0 0.0
    %695 = vmatpush1.msra.mxu0 0.0
    %696 = vmatprep.subr.mxu0 0.0
    %697 = vmatpush1.msra.mxu0 0.0
    %698 = vmatprep.subr.mxu0 0.0
    %699 = vmatpush1.msra.mxu0 0.0
    %700 = vmatprep.subr.mxu0 0.0
    %701 = vmatpush1.msra.mxu0 0.0
    %702 = vmatprep.subr.mxu0 0.0
    %703 = vmatpush1.msra.mxu0 0.0
    %704 = vmatprep.subr.mxu0 0.0
    %705 = vmatpush1.msra.mxu0 0.0
    %706 = vmatprep.subr.mxu0 0.0
    %707 = vmatpush1.msra.mxu0 0.0
    %708 = vmatprep.subr.mxu0 0.0
    %709 = vmatpush1.msra.mxu0 0.0
    %710 = vmatprep.subr.mxu0 0.0
    %711 = vmatpush1.msra.mxu0 0.0
    %712 = vmatprep.subr.mxu0 0.0
    %713 = vmatpush1.msra.mxu0 0.0
    %714 = vmatprep.subr.mxu0 0.0
    %715 = vmatpush1.msra.mxu0 0.0
    %716 = vmatprep.subr.mxu0 0.0
    %717 = vmatpush1.msra.mxu0 0.0
    %718 = vmatprep.subr.mxu0 0.0
    %719 = vmatpush1.msra.mxu0 0.0
    %720 = vmatprep.subr.mxu0 0.0
    %721 = vmatpush1.msra.mxu0 0.0
    %722 = vmatprep.mubr.f32.mxu0 0.0
    %v723 = vand.u32 %v116, 4294901760
    %v724 = vsub.f32 %v116, %v723
    %v725 = vand.u32 %v724, 4294901760
    %726 = vmatmul.mubr.f32.gmra.mrb[0].mxu0 %v725
    %v727 = vpop.f32.mrb[0].mxu0
    %v728 = vadd.f32 %v622, %v727
    %v729 = vpop.f32.mrb[0].mxu0
    %v730 = vadd.f32 %v624, %v729
    %731 = vdwg.mxu0
    %v732 = vand.u32 %v118, 4294901760
    %v733 = vsub.f32 %v118, %v732
    %v734 = vand.u32 %v733, 4294901760
    %735 = vmatprep.subr.mxu0 %v734
    %v736 = vand.u32 %v117, 4294901760
    %v737 = vsub.f32 %v117, %v736
    %v738 = vand.u32 %v737, 4294901760
    %739 = vmatpush1.msra.mxu0 %v738
    %v740 = vand.u32 %v120, 4294901760
    %v741 = vsub.f32 %v120, %v740
    %v742 = vand.u32 %v741, 4294901760
    %743 = vmatprep.subr.mxu0 %v742
    %v744 = vand.u32 %v119, 4294901760
    %v745 = vsub.f32 %v119, %v744
    %v746 = vand.u32 %v745, 4294901760
    %747 = vmatpush1.msra.mxu0 %v746
    %v748 = vand.u32 %v122, 4294901760
    %v749 = vsub.f32 %v122, %v748
    %v750 = vand.u32 %v749, 4294901760
    %751 = vmatprep.subr.mxu0 %v750
    %v752 = vand.u32 %v121, 4294901760
    %v753 = vsub.f32 %v121, %v752
    %v754 = vand.u32 %v753, 4294901760
    %755 = vmatpush1.msra.mxu0 %v754
    %v756 = vand.u32 %v124, 4294901760
    %v757 = vsub.f32 %v124, %v756
    %v758 = vand.u32 %v757, 4294901760
    %759 = vmatprep.subr.mxu0 %v758
    %v760 = vand.u32 %v123, 4294901760
    %v761 = vsub.f32 %v123, %v760
    %v762 = vand.u32 %v761, 4294901760
    %763 = vmatpush1.msra.mxu0 %v762
    %v764 = vand.u32 %v126, 4294901760
    %v765 = vsub.f32 %v126, %v764
    %v766 = vand.u32 %v765, 4294901760
    %767 = vmatprep.subr.mxu0 %v766
    %v768 = vand.u32 %v125, 4294901760
    %v769 = vsub.f32 %v125, %v768
    %v770 = vand.u32 %v769, 4294901760
    %771 = vmatpush1.msra.mxu0 %v770
    %v772 = vand.u32 %v128, 4294901760
    %v773 = vsub.f32 %v128, %v772
    %v774 = vand.u32 %v773, 4294901760
    %775 = vmatprep.subr.mxu0 %v774
    %v776 = vand.u32 %v127, 4294901760
    %v777 = vsub.f32 %v127, %v776
    %v778 = vand.u32 %v777, 4294901760
    %779 = vmatpush1.msra.mxu0 %v778
    %v780 = vand.u32 %v130, 4294901760
    %v781 = vsub.f32 %v130, %v780
    %v782 = vand.u32 %v781, 4294901760
    %783 = vmatprep.subr.mxu0 %v782
    %v784 = vand.u32 %v129, 4294901760
    %v785 = vsub.f32 %v129, %v784
    %v786 = vand.u32 %v785, 4294901760
    %787 = vmatpush1.msra.mxu0 %v786
    %v788 = vand.u32 %v132, 4294901760
    %v789 = vsub.f32 %v132, %v788
    %v790 = vand.u32 %v789, 4294901760
    %791 = vmatprep.subr.mxu0 %v790
    %v792 = vand.u32 %v131, 4294901760
    %v793 = vsub.f32 %v131, %v792
    %v794 = vand.u32 %v793, 4294901760
    %795 = vmatpush1.msra.mxu0 %v794
    %v796 = vand.u32 %v134, 4294901760
    %v797 = vsub.f32 %v134, %v796
    %v798 = vand.u32 %v797, 4294901760
    %799 = vmatprep.subr.mxu0 %v798
    %v800 = vand.u32 %v133, 4294901760
    %v801 = vsub.f32 %v133, %v800
    %v802 = vand.u32 %v801, 4294901760
    %803 = vmatpush1.msra.mxu0 %v802
    %v804 = vand.u32 %v136, 4294901760
    %v805 = vsub.f32 %v136, %v804
    %v806 = vand.u32 %v805, 4294901760
    %807 = vmatprep.subr.mxu0 %v806
    %v808 = vand.u32 %v135, 4294901760
    %v809 = vsub.f32 %v135, %v808
    %v810 = vand.u32 %v809, 4294901760
    %811 = vmatpush1.msra.mxu0 %v810
    %v812 = vand.u32 %v138, 4294901760
    %v813 = vsub.f32 %v138, %v812
    %v814 = vand.u32 %v813, 4294901760
    %815 = vmatprep.subr.mxu0 %v814
    %v816 = vand.u32 %v137, 4294901760
    %v817 = vsub.f32 %v137, %v816
    %v818 = vand.u32 %v817, 4294901760
    %819 = vmatpush1.msra.mxu0 %v818
    %v820 = vand.u32 %v140, 4294901760
    %v821 = vsub.f32 %v140, %v820
    %v822 = vand.u32 %v821, 4294901760
    %823 = vmatprep.subr.mxu0 %v822
    %v824 = vand.u32 %v139, 4294901760
    %v825 = vsub.f32 %v139, %v824
    %v826 = vand.u32 %v825, 4294901760
    %827 = vmatpush1.msra.mxu0 %v826
    %v828 = vand.u32 %v142, 4294901760
    %v829 = vsub.f32 %v142, %v828
    %v830 = vand.u32 %v829, 4294901760
    %831 = vmatprep.subr.mxu0 %v830
    %v832 = vand.u32 %v141, 4294901760
    %v833 = vsub.f32 %v141, %v832
    %v834 = vand.u32 %v833, 4294901760
    %835 = vmatpush1.msra.mxu0 %v834
    %v836 = vand.u32 %v144, 4294901760
    %v837 = vsub.f32 %v144, %v836
    %v838 = vand.u32 %v837, 4294901760
    %839 = vmatprep.subr.mxu0 %v838
    %v840 = vand.u32 %v143, 4294901760
    %v841 = vsub.f32 %v143, %v840
    %v842 = vand.u32 %v841, 4294901760
    %843 = vmatpush1.msra.mxu0 %v842
    %v844 = vand.u32 %v146, 4294901760
    %v845 = vsub.f32 %v146, %v844
    %v846 = vand.u32 %v845, 4294901760
    %847 = vmatprep.subr.mxu0 %v846
    %v848 = vand.u32 %v145, 4294901760
    %v849 = vsub.f32 %v145, %v848
    %v850 = vand.u32 %v849, 4294901760
    %851 = vmatpush1.msra.mxu0 %v850
    %v852 = vand.u32 %v148, 4294901760
    %v853 = vsub.f32 %v148, %v852
    %v854 = vand.u32 %v853, 4294901760
    %855 = vmatprep.subr.mxu0 %v854
    %v856 = vand.u32 %v147, 4294901760
    %v857 = vsub.f32 %v147, %v856
    %v858 = vand.u32 %v857, 4294901760
    %859 = vmatpush1.msra.mxu0 %v858
    %860 = vmatprep.subr.mxu0 0.0
    %861 = vmatpush1.msra.mxu0 0.0
    %862 = vmatprep.subr.mxu0 0.0
    %863 = vmatpush1.msra.mxu0 0.0
    %864 = vmatprep.subr.mxu0 0.0
    %865 = vmatpush1.msra.mxu0 0.0
    %866 = vmatprep.subr.mxu0 0.0
    %867 = vmatpush1.msra.mxu0 0.0
    %868 = vmatprep.subr.mxu0 0.0
    %869 = vmatpush1.msra.mxu0 0.0
    %870 = vmatprep.subr.mxu0 0.0
    %871 = vmatpush1.msra.mxu0 0.0
    %872 = vmatprep.subr.mxu0 0.0
    %873 = vmatpush1.msra.mxu0 0.0
    %874 = vmatprep.subr.mxu0 0.0
    %875 = vmatpush1.msra.mxu0 0.0
    %876 = vmatprep.subr.mxu0 0.0
    %877 = vmatpush1.msra.mxu0 0.0
    %878 = vmatprep.subr.mxu0 0.0
    %879 = vmatpush1.msra.mxu0 0.0
    %880 = vmatprep.subr.mxu0 0.0
    %881 = vmatpush1.msra.mxu0 0.0
    %882 = vmatprep.subr.mxu0 0.0
    %883 = vmatpush1.msra.mxu0 0.0
    %884 = vmatprep.subr.mxu0 0.0
    %885 = vmatpush1.msra.mxu0 0.0
    %886 = vmatprep.subr.mxu0 0.0
    %887 = vmatpush1.msra.mxu0 0.0
    %888 = vmatprep.subr.mxu0 0.0
    %889 = vmatpush1.msra.mxu0 0.0
    %890 = vmatprep.subr.mxu0 0.0
    %891 = vmatpush1.msra.mxu0 0.0
    %892 = vmatprep.mubr.f32.mxu0 0.0
    %v893 = vand.u32 %v116, 4294901760
    %894 = vmatmul.mubr.f32.gmra.mrb[0].mxu0 %v893
    %v895 = vpop.f32.mrb[0].mxu0
    %v896 = vadd.f32 %v728, %v895
    %v897 = vpop.f32.mrb[0].mxu0
    %v898 = vadd.f32 %v730, %v897
    %899 = vdwg.mxu0
    %v900 = vand.u32 %v118, 4294901760
    %901 = vmatprep.subr.mxu0 %v900
    %v902 = vand.u32 %v117, 4294901760
    %903 = vmatpush1.msra.mxu0 %v902
    %v904 = vand.u32 %v120, 4294901760
    %905 = vmatprep.subr.mxu0 %v904
    %v906 = vand.u32 %v119, 4294901760
    %907 = vmatpush1.msra.mxu0 %v906
    %v908 = vand.u32 %v122, 4294901760
    %909 = vmatprep.subr.mxu0 %v908
    %v910 = vand.u32 %v121, 4294901760
    %911 = vmatpush1.msra.mxu0 %v910
    %v912 = vand.u32 %v124, 4294901760
    %913 = vmatprep.subr.mxu0 %v912
    %v914 = vand.u32 %v123, 4294901760
    %915 = vmatpush1.msra.mxu0 %v914
    %v916 = vand.u32 %v126, 4294901760
    %917 = vmatprep.subr.mxu0 %v916
    %v918 = vand.u32 %v125, 4294901760
    %919 = vmatpush1.msra.mxu0 %v918
    %v920 = vand.u32 %v128, 4294901760
    %921 = vmatprep.subr.mxu0 %v920
    %v922 = vand.u32 %v127, 4294901760
    %923 = vmatpush1.msra.mxu0 %v922
    %v924 = vand.u32 %v130, 4294901760
    %925 = vmatprep.subr.mxu0 %v924
    %v926 = vand.u32 %v129, 4294901760
    %927 = vmatpush1.msra.mxu0 %v926
    %v928 = vand.u32 %v132, 4294901760
    %929 = vmatprep.subr.mxu0 %v928
    %v930 = vand.u32 %v131, 4294901760
    %931 = vmatpush1.msra.mxu0 %v930
    %v932 = vand.u32 %v134, 4294901760
    %933 = vmatprep.subr.mxu0 %v932
    %v934 = vand.u32 %v133, 4294901760
    %935 = vmatpush1.msra.mxu0 %v934
    %v936 = vand.u32 %v136, 4294901760
    %937 = vmatprep.subr.mxu0 %v936
    %v938 = vand.u32 %v135, 4294901760
    %939 = vmatpush1.msra.mxu0 %v938
    %v940 = vand.u32 %v138, 4294901760
    %941 = vmatprep.subr.mxu0 %v940
    %v942 = vand.u32 %v137, 4294901760
    %943 = vmatpush1.msra.mxu0 %v942
    %v944 = vand.u32 %v140, 4294901760
    %945 = vmatprep.subr.mxu0 %v944
    %v946 = vand.u32 %v139, 4294901760
    %947 = vmatpush1.msra.mxu0 %v946
    %v948 = vand.u32 %v142, 4294901760
    %949 = vmatprep.subr.mxu0 %v948
    %v950 = vand.u32 %v141, 4294901760
    %951 = vmatpush1.msra.mxu0 %v950
    %v952 = vand.u32 %v144, 4294901760
    %953 = vmatprep.subr.mxu0 %v952
    %v954 = vand.u32 %v143, 4294901760
    %955 = vmatpush1.msra.mxu0 %v954
    %v956 = vand.u32 %v146, 4294901760
    %957 = vmatprep.subr.mxu0 %v956
    %v958 = vand.u32 %v145, 4294901760
    %959 = vmatpush1.msra.mxu0 %v958
    %v960 = vand.u32 %v148, 4294901760
    %961 = vmatprep.subr.mxu0 %v960
    %v962 = vand.u32 %v147, 4294901760
    %963 = vmatpush1.msra.mxu0 %v962
    %964 = vmatprep.subr.mxu0 0.0
    %965 = vmatpush1.msra.mxu0 0.0
    %966 = vmatprep.subr.mxu0 0.0
    %967 = vmatpush1.msra.mxu0 0.0
    %968 = vmatprep.subr.mxu0 0.0
    %969 = vmatpush1.msra.mxu0 0.0
    %970 = vmatprep.subr.mxu0 0.0
    %971 = vmatpush1.msra.mxu0 0.0
    %972 = vmatprep.subr.mxu0 0.0
    %973 = vmatpush1.msra.mxu0 0.0
    %974 = vmatprep.subr.mxu0 0.0
    %975 = vmatpush1.msra.mxu0 0.0
    %976 = vmatprep.subr.mxu0 0.0
    %977 = vmatpush1.msra.mxu0 0.0
    %978 = vmatprep.subr.mxu0 0.0
    %979 = vmatpush1.msra.mxu0 0.0
    %980 = vmatprep.subr.mxu0 0.0
    %981 = vmatpush1.msra.mxu0 0.0
    %982 = vmatprep.subr.mxu0 0.0
    %983 = vmatpush1.msra.mxu0 0.0
    %984 = vmatprep.subr.mxu0 0.0
    %985 = vmatpush1.msra.mxu0 0.0
    %986 = vmatprep.subr.mxu0 0.0
    %987 = vmatpush1.msra.mxu0 0.0
    %988 = vmatprep.subr.mxu0 0.0
    %989 = vmatpush1.msra.mxu0 0.0
    %990 = vmatprep.subr.mxu0 0.0
    %991 = vmatpush1.msra.mxu0 0.0
    %992 = vmatprep.subr.mxu0 0.0
    %993 = vmatpush1.msra.mxu0 0.0
    %994 = vmatprep.subr.mxu0 0.0
    %995 = vmatpush1.msra.mxu0 0.0
    %996 = vmatprep.mubr.f32.mxu0 0.0
    %v997 = vand.u32 %v116, 4294901760
    %998 = vmatmul.mubr.f32.gmra.mrb[0].mxu0 %v997
    %v999 = vpop.f32.mrb[0].mxu0
    %v1000 = vadd.f32 %v896, %v999
    %v1001 = vpop.f32.mrb[0].mxu0
    %v1002 = vadd.f32 %v898, %v1001
    %1003 = vdwg.mxu0
    %v1004 = vand.u32 2147483647, %v1000
    %v1005 = vld [vmem:[#allocation7] sm:$0xff]
    %v1006 = vld [vmem:[#allocation7 + $0x8] sm:$0xff]
    %v1007 = vld [vmem:[#allocation7 + $0x10] sm:$0xff]
    %v1008 = vld [vmem:[#allocation7 + $0x18] sm:$0xff]
    %v1009 = vld [vmem:[#allocation7 + $0x20] sm:$0xff]
    %v1010 = vld [vmem:[#allocation7 + $0x28] sm:$0xff]
    %v1011 = vld [vmem:[#allocation7 + $0x30] sm:$0xff]
    %v1012 = vld [vmem:[#allocation7 + $0x38] sm:$0xff]
    %v1013 = vld [vmem:[#allocation7 + $0x40] sm:$0xff]
    %v1014 = vmul.f32 %v1000, 256.0
    %v1015 = vmul.f32 %v1002, 256.0
    %v1016 = vround.ne.pseudo %v1014
    %v1017 = vround.ne.pseudo %v1015
    %v1018 = vmax.f32 %v1016, -2047.0
    %v1019 = vmax.f32 %v1017, -2047.0
    %v1020 = vmin.f32 %v1018, 2047.0
    %v1021 = vmin.f32 %v1019, 2047.0
    %v1022 = vmul.f32 %v1020, 0.00390625
    %v1023 = vmul.f32 %v1021, 0.00390625
    %v1024 = vld [vmem:[#allocation4] sm:$0xff]
    %v1025 = vld [vmem:[#allocation4 + $0x8] sm:$0xff]
    %v1026 = vld [vmem:[#allocation4 + $0x10] sm:$0xff]
    %v1027 = vld [vmem:[#allocation4 + $0x18] sm:$0xff]
    %v1028 = vld [vmem:[#allocation4 + $0x20] sm:$0xff]
    %v1029 = vld [vmem:[#allocation4 + $0x28] sm:$0xff]
    %v1030 = vld [vmem:[#allocation4 + $0x30] sm:$0xff]
    %v1031 = vld [vmem:[#allocation4 + $0x38] sm:$0xff]
    %v1032 = vld [vmem:[#allocation4 + $0x40] sm:$0xff]
    %1035 = vrot.lane.b32.xlu0 %v1022, 56
    %v1036 = vpop.permute.xlu0 %1035
    %1037 = vrot.lane.b32.xlu0 %v1023, 56
    %v1038 = vpop.permute.xlu0 %1037
    %vm1039 = vcmask 457728
    %v1040 = vsel %vm1039, %v1036, %v1038
    %vm1041 = vcmask 588800
    %v1042 = vsel %vm1041, %v1040, 0
    %1044 = vmatprep.subr.mxu0 0.0
    %v1045 = vand.u32 %v1024, 4294901760
    %1046 = vmatpush1.msra.mxu0 %v1045
    %1047 = vmatprep.subr.mxu0 0.0
    %v1048 = vand.u32 %v1025, 4294901760
    %1049 = vmatpush1.msra.mxu0 %v1048
    %1050 = vmatprep.subr.mxu0 0.0
    %v1051 = vand.u32 %v1026, 4294901760
    %1052 = vmatpush1.msra.mxu0 %v1051
    %1053 = vmatprep.subr.mxu0 0.0
    %v1054 = vand.u32 %v1027, 4294901760
    %1055 = vmatpush1.msra.mxu0 %v1054
    %1056 = vmatprep.subr.mxu0 0.0
    %v1057 = vand.u32 %v1028, 4294901760
    %1058 = vmatpush1.msra.mxu0 %v1057
    %1059 = vmatprep.subr.mxu0 0.0
    %v1060 = vand.u32 %v1029, 4294901760
    %1061 = vmatpush1.msra.mxu0 %v1060
    %1062 = vmatprep.subr.mxu0 0.0
    %v1063 = vand.u32 %v1030, 4294901760
    %1064 = vmatpush1.msra.mxu0 %v1063
    %1065 = vmatprep.subr.mxu0 0.0
    %v1066 = vand.u32 %v1031, 4294901760
    %1067 = vmatpush1.msra.mxu0 %v1066
    %1068 = vmatprep.subr.mxu0 0.0
    %v1069 = vand.u32 %v1032, 4294901760
    %1070 = vmatpush1.msra.mxu0 %v1069
    %1071 = vmatprep.subr.mxu0 0.0
    %1072 = vmatpush1.msra.mxu0 0.0
    %1073 = vmatprep.subr.mxu0 0.0
    %1074 = vmatpush1.msra.mxu0 0.0
    %1075 = vmatprep.subr.mxu0 0.0
    %1076 = vmatpush1.msra.mxu0 0.0
    %1077 = vmatprep.subr.mxu0 0.0
    %1078 = vmatpush1.msra.mxu0 0.0
    %1079 = vmatprep.subr.mxu0 0.0
    %1080 = vmatpush1.msra.mxu0 0.0
    %1081 = vmatprep.subr.mxu0 0.0
    %1082 = vmatpush1.msra.mxu0 0.0
    %1083 = vmatprep.subr.mxu0 0.0
    %1084 = vmatpush1.msra.mxu0 0.0
    %1085 = vmatprep.subr.mxu0 0.0
    %1086 = vmatpush1.msra.mxu0 0.0
    %1087 = vmatprep.subr.mxu0 0.0
    %1088 = vmatpush1.msra.mxu0 0.0
    %1089 = vmatprep.subr.mxu0 0.0
    %1090 = vmatpush1.msra.mxu0 0.0
    %1091 = vmatprep.subr.mxu0 0.0
    %1092 = vmatpush1.msra.mxu0 0.0
    %1093 = vmatprep.subr.mxu0 0.0
    %1094 = vmatpush1.msra.mxu0 0.0
    %1095 = vmatprep.subr.mxu0 0.0
    %1096 = vmatpush1.msra.mxu0 0.0
    %1097 = vmatprep.subr.mxu0 0.0
    %1098 = vmatpush1.msra.mxu0 0.0
    %1099 = vmatprep.subr.mxu0 0.0
    %1100 = vmatpush1.msra.mxu0 0.0
    %1101 = vmatprep.subr.mxu0 0.0
    %1102 = vmatpush1.msra.mxu0 0.0
    %1103 = vmatprep.subr.mxu0 0.0
    %1104 = vmatpush1.msra.mxu0 0.0
    %1105 = vmatprep.subr.mxu0 0.0
    %1106 = vmatpush1.msra.mxu0 0.0
    %1107 = vmatprep.subr.mxu0 0.0
    %1108 = vmatpush1.msra.mxu0 0.0
    %1109 = vmatprep.subr.mxu0 0.0
    %1110 = vmatpush1.msra.mxu0 0.0
    %1111 = vmatprep.subr.mxu0 0.0
    %1112 = vmatpush1.msra.mxu0 0.0
    %1113 = vmatprep.subr.mxu0 0.0
    %1114 = vmatpush1.msra.mxu0 0.0
    %1115 = vmatprep.subr.mxu0 0.0
    %1116 = vmatpush1.msra.mxu0 0.0
    %1117 = vmatprep.mubr.f32.mxu0 0.0
    %v1118 = vand.u32 %v1042, 4294901760
    %v1119 = vsub.f32 %v1042, %v1118
    %v1120 = vand.u32 %v1119, 4294901760
    %v1121 = vsub.f32 %v1119, %v1120
    %v1122 = vand.u32 %v1121, 4294901760
    %1123 = vmatmul.mubr.f32.gmra.mrb[0].mxu0 %v1122
    %v1124 = vpop.f32.mrb[0].mxu0
    %v1125 = vadd.f32 0.0, %v1124
    %v1126 = vpop.f32.mrb[0].mxu0
    %1127 = vdwg.mxu0
    %1128 = vmatprep.subr.mxu0 0.0
    %v1129 = vand.u32 %v1024, 4294901760
    %v1130 = vsub.f32 %v1024, %v1129
    %v1131 = vand.u32 %v1130, 4294901760
    %v1132 = vsub.f32 %v1130, %v1131
    %v1133 = vand.u32 %v1132, 4294901760
    %1134 = vmatpush1.msra.mxu0 %v1133
    %1135 = vmatprep.subr.mxu0 0.0
    %v1136 = vand.u32 %v1025, 4294901760
    %v1137 = vsub.f32 %v1025, %v1136
    %v1138 = vand.u32 %v1137, 4294901760
    %v1139 = vsub.f32 %v1137, %v1138
    %v1140 = vand.u32 %v1139, 4294901760
    %1141 = vmatpush1.msra.mxu0 %v1140
    %1142 = vmatprep.subr.mxu0 0.0
    %v1143 = vand.u32 %v1026, 4294901760
    %v1144 = vsub.f32 %v1026, %v1143
    %v1145 = vand.u32 %v1144, 4294901760
    %v1146 = vsub.f32 %v1144, %v1145
    %v1147 = vand.u32 %v1146, 4294901760
    %1148 = vmatpush1.msra.mxu0 %v1147
    %1149 = vmatprep.subr.mxu0 0.0
    %v1150 = vand.u32 %v1027, 4294901760
    %v1151 = vsub.f32 %v1027, %v1150
    %v1152 = vand.u32 %v1151, 4294901760
    %v1153 = vsub.f32 %v1151, %v1152
    %v1154 = vand.u32 %v1153, 4294901760
    %1155 = vmatpush1.msra.mxu0 %v1154
    %1156 = vmatprep.subr.mxu0 0.0
    %v1157 = vand.u32 %v1028, 4294901760
    %v1158 = vsub.f32 %v1028, %v1157
    %v1159 = vand.u32 %v1158, 4294901760
    %v1160 = vsub.f32 %v1158, %v1159
    %v1161 = vand.u32 %v1160, 4294901760
    %1162 = vmatpush1.msra.mxu0 %v1161
    %1163 = vmatprep.subr.mxu0 0.0
    %v1164 = vand.u32 %v1029, 4294901760
    %v1165 = vsub.f32 %v1029, %v1164
    %v1166 = vand.u32 %v1165, 4294901760
    %v1167 = vsub.f32 %v1165, %v1166
    %v1168 = vand.u32 %v1167, 4294901760
    %1169 = vmatpush1.msra.mxu0 %v1168
    %1170 = vmatprep.subr.mxu0 0.0
    %v1171 = vand.u32 %v1030, 4294901760
    %v1172 = vsub.f32 %v1030, %v1171
    %v1173 = vand.u32 %v1172, 4294901760
    %v1174 = vsub.f32 %v1172, %v1173
    %v1175 = vand.u32 %v1174, 4294901760
    %1176 = vmatpush1.msra.mxu0 %v1175
    %1177 = vmatprep.subr.mxu0 0.0
    %v1178 = vand.u32 %v1031, 4294901760
    %v1179 = vsub.f32 %v1031, %v1178
    %v1180 = vand.u32 %v1179, 4294901760
    %v1181 = vsub.f32 %v1179, %v1180
    %v1182 = vand.u32 %v1181, 4294901760
    %1183 = vmatpush1.msra.mxu0 %v1182
    %1184 = vmatprep.subr.mxu0 0.0
    %v1185 = vand.u32 %v1032, 4294901760
    %v1186 = vsub.f32 %v1032, %v1185
    %v1187 = vand.u32 %v1186, 4294901760
    %v1188 = vsub.f32 %v1186, %v1187
    %v1189 = vand.u32 %v1188, 4294901760
    %1190 = vmatpush1.msra.mxu0 %v1189
    %1191 = vmatprep.subr.mxu0 0.0
    %1192 = vmatpush1.msra.mxu0 0.0
    %1193 = vmatprep.subr.mxu0 0.0
    %1194 = vmatpush1.msra.mxu0 0.0
    %1195 = vmatprep.subr.mxu0 0.0
    %1196 = vmatpush1.msra.mxu0 0.0
    %1197 = vmatprep.subr.mxu0 0.0
    %1198 = vmatpush1.msra.mxu0 0.0
    %1199 = vmatprep.subr.mxu0 0.0
    %1200 = vmatpush1.msra.mxu0 0.0
    %1201 = vmatprep.subr.mxu0 0.0
    %1202 = vmatpush1.msra.mxu0 0.0
    %1203 = vmatprep.subr.mxu0 0.0
    %1204 = vmatpush1.msra.mxu0 0.0
    %1205 = vmatprep.subr.mxu0 0.0
    %1206 = vmatpush1.msra.mxu0 0.0
    %1207 = vmatprep.subr.mxu0 0.0
    %1208 = vmatpush1.msra.mxu0 0.0
    %1209 = vmatprep.subr.mxu0 0.0
    %1210 = vmatpush1.msra.mxu0 0.0
    %1211 = vmatprep.subr.mxu0 0.0
    %1212 = vmatpush1.msra.mxu0 0.0
    %1213 = vmatprep.subr.mxu0 0.0
    %1214 = vmatpush1.msra.mxu0 0.0
    %1215 = vmatprep.subr.mxu0 0.0
    %1216 = vmatpush1.msra.mxu0 0.0
    %1217 = vmatprep.subr.mxu0 0.0
    %1218 = vmatpush1.msra.mxu0 0.0
    %1219 = vmatprep.subr.mxu0 0.0
    %1220 = vmatpush1.msra.mxu0 0.0
    %1221 = vmatprep.subr.mxu0 0.0
    %1222 = vmatpush1.msra.mxu0 0.0
    %1223 = vmatprep.subr.mxu0 0.0
    %1224 = vmatpush1.msra.mxu0 0.0
    %1225 = vmatprep.subr.mxu0 0.0
    %1226 = vmatpush1.msra.mxu0 0.0
    %1227 = vmatprep.subr.mxu0 0.0
    %1228 = vmatpush1.msra.mxu0 0.0
    %1229 = vmatprep.subr.mxu0 0.0
    %1230 = vmatpush1.msra.mxu0 0.0
    %1231 = vmatprep.subr.mxu0 0.0
    %1232 = vmatpush1.msra.mxu0 0.0
    %1233 = vmatprep.subr.mxu0 0.0
    %1234 = vmatpush1.msra.mxu0 0.0
    %1235 = vmatprep.subr.mxu0 0.0
    %1236 = vmatpush1.msra.mxu0 0.0
    %1237 = vmatprep.mubr.f32.mxu0 0.0
    %v1238 = vand.u32 %v1042, 4294901760
    %1239 = vmatmul.mubr.f32.gmra.mrb[0].mxu0 %v1238
    %v1240 = vpop.f32.mrb[0].mxu0
    %v1241 = vadd.f32 %v1125, %v1240
    %v1242 = vpop.f32.mrb[0].mxu0
    %1243 = vdwg.mxu0
    %1244 = vmatprep.subr.mxu0 0.0
    %v1245 = vand.u32 %v1024, 4294901760
    %v1246 = vsub.f32 %v1024, %v1245
    %1247 = vmatpush1.msra.mxu0 %v1246
    %1248 = vmatprep.subr.mxu0 0.0
    %v1249 = vand.u32 %v1025, 4294901760
    %v1250 = vsub.f32 %v1025, %v1249
    %1251 = vmatpush1.msra.mxu0 %v1250
    %1252 = vmatprep.subr.mxu0 0.0
    %v1253 = vand.u32 %v1026, 4294901760
    %v1254 = vsub.f32 %v1026, %v1253
    %1255 = vmatpush1.msra.mxu0 %v1254
    %1256 = vmatprep.subr.mxu0 0.0
    %v1257 = vand.u32 %v1027, 4294901760
    %v1258 = vsub.f32 %v1027, %v1257
    %1259 = vmatpush1.msra.mxu0 %v1258
    %1260 = vmatprep.subr.mxu0 0.0
    %v1261 = vand.u32 %v1028, 4294901760
    %v1262 = vsub.f32 %v1028, %v1261
    %1263 = vmatpush1.msra.mxu0 %v1262
    %1264 = vmatprep.subr.mxu0 0.0
    %v1265 = vand.u32 %v1029, 4294901760
    %v1266 = vsub.f32 %v1029, %v1265
    %1267 = vmatpush1.msra.mxu0 %v1266
    %1268 = vmatprep.subr.mxu0 0.0
    %v1269 = vand.u32 %v1030, 4294901760
    %v1270 = vsub.f32 %v1030, %v1269
    %1271 = vmatpush1.msra.mxu0 %v1270
    %1272 = vmatprep.subr.mxu0 0.0
    %v1273 = vand.u32 %v1031, 4294901760
    %v1274 = vsub.f32 %v1031, %v1273
    %1275 = vmatpush1.msra.mxu0 %v1274
    %1276 = vmatprep.subr.mxu0 0.0
    %v1277 = vand.u32 %v1032, 4294901760
    %v1278 = vsub.f32 %v1032, %v1277
    %1279 = vmatpush1.msra.mxu0 %v1278
    %1280 = vmatprep.subr.mxu0 0.0
    %1281 = vmatpush1.msra.mxu0 0.0
    %1282 = vmatprep.subr.mxu0 0.0
    %1283 = vmatpush1.msra.mxu0 0.0
    %1284 = vmatprep.subr.mxu0 0.0
    %1285 = vmatpush1.msra.mxu0 0.0
    %1286 = vmatprep.subr.mxu0 0.0
    %1287 = vmatpush1.msra.mxu0 0.0
    %1288 = vmatprep.subr.mxu0 0.0
    %1289 = vmatpush1.msra.mxu0 0.0
    %1290 = vmatprep.subr.mxu0 0.0
    %1291 = vmatpush1.msra.mxu0 0.0
    %1292 = vmatprep.subr.mxu0 0.0
    %1293 = vmatpush1.msra.mxu0 0.0
    %1294 = vmatprep.subr.mxu0 0.0
    %1295 = vmatpush1.msra.mxu0 0.0
    %1296 = vmatprep.subr.mxu0 0.0
    %1297 = vmatpush1.msra.mxu0 0.0
    %1298 = vmatprep.subr.mxu0 0.0
    %1299 = vmatpush1.msra.mxu0 0.0
    %1300 = vmatprep.subr.mxu0 0.0
    %1301 = vmatpush1.msra.mxu0 0.0
    %1302 = vmatprep.subr.mxu0 0.0
    %1303 = vmatpush1.msra.mxu0 0.0
    %1304 = vmatprep.subr.mxu0 0.0
    %1305 = vmatpush1.msra.mxu0 0.0
    %1306 = vmatprep.subr.mxu0 0.0
    %1307 = vmatpush1.msra.mxu0 0.0
    %1308 = vmatprep.subr.mxu0 0.0
    %1309 = vmatpush1.msra.mxu0 0.0
    %1310 = vmatprep.subr.mxu0 0.0
    %1311 = vmatpush1.msra.mxu0 0.0
    %1312 = vmatprep.subr.mxu0 0.0
    %1313 = vmatpush1.msra.mxu0 0.0
    %1314 = vmatprep.subr.mxu0 0.0
    %1315 = vmatpush1.msra.mxu0 0.0
    %1316 = vmatprep.subr.mxu0 0.0
    %1317 = vmatpush1.msra.mxu0 0.0
    %1318 = vmatprep.subr.mxu0 0.0
    %1319 = vmatpush1.msra.mxu0 0.0
    %1320 = vmatprep.subr.mxu0 0.0
    %1321 = vmatpush1.msra.mxu0 0.0
    %1322 = vmatprep.subr.mxu0 0.0
    %1323 = vmatpush1.msra.mxu0 0.0
    %1324 = vmatprep.subr.mxu0 0.0
    %1325 = vmatpush1.msra.mxu0 0.0
    %1326 = vmatprep.mubr.f32.mxu0 0.0
    %v1327 = vand.u32 %v1042, 4294901760
    %v1328 = vsub.f32 %v1042, %v1327
    %1329 = vmatmul.mubr.f32.gmra.mrb[0].mxu0 %v1328
    %v1330 = vpop.f32.mrb[0].mxu0
    %v1331 = vadd.f32 %v1241, %v1330
    %v1332 = vpop.f32.mrb[0].mxu0
    %1333 = vdwg.mxu0
    %1334 = vmatprep.subr.mxu0 0.0
    %v1335 = vand.u32 %v1024, 4294901760
    %1336 = vmatpush1.msra.mxu0 %v1335
    %1337 = vmatprep.subr.mxu0 0.0
    %v1338 = vand.u32 %v1025, 4294901760
    %1339 = vmatpush1.msra.mxu0 %v1338
    %1340 = vmatprep.subr.mxu0 0.0
    %v1341 = vand.u32 %v1026, 4294901760
    %1342 = vmatpush1.msra.mxu0 %v1341
    %1343 = vmatprep.subr.mxu0 0.0
    %v1344 = vand.u32 %v1027, 4294901760
    %1345 = vmatpush1.msra.mxu0 %v1344
    %1346 = vmatprep.subr.mxu0 0.0
    %v1347 = vand.u32 %v1028, 4294901760
    %1348 = vmatpush1.msra.mxu0 %v1347
    %1349 = vmatprep.subr.mxu0 0.0
    %v1350 = vand.u32 %v1029, 4294901760
    %1351 = vmatpush1.msra.mxu0 %v1350
    %1352 = vmatprep.subr.mxu0 0.0
    %v1353 = vand.u32 %v1030, 4294901760
    %1354 = vmatpush1.msra.mxu0 %v1353
    %1355 = vmatprep.subr.mxu0 0.0
    %v1356 = vand.u32 %v1031, 4294901760
    %1357 = vmatpush1.msra.mxu0 %v1356
    %1358 = vmatprep.subr.mxu0 0.0
    %v1359 = vand.u32 %v1032, 4294901760
    %1360 = vmatpush1.msra.mxu0 %v1359
    %1361 = vmatprep.subr.mxu0 0.0
    %1362 = vmatpush1.msra.mxu0 0.0
    %1363 = vmatprep.subr.mxu0 0.0
    %1364 = vmatpush1.msra.mxu0 0.0
    %1365 = vmatprep.subr.mxu0 0.0
    %1366 = vmatpush1.msra.mxu0 0.0
    %1367 = vmatprep.subr.mxu0 0.0
    %1368 = vmatpush1.msra.mxu0 0.0
    %1369 = vmatprep.subr.mxu0 0.0
    %1370 = vmatpush1.msra.mxu0 0.0
    %1371 = vmatprep.subr.mxu0 0.0
    %1372 = vmatpush1.msra.mxu0 0.0
    %1373 = vmatprep.subr.mxu0 0.0
    %1374 = vmatpush1.msra.mxu0 0.0
    %1375 = vmatprep.subr.mxu0 0.0
    %1376 = vmatpush1.msra.mxu0 0.0
    %1377 = vmatprep.subr.mxu0 0.0
    %1378 = vmatpush1.msra.mxu0 0.0
    %1379 = vmatprep.subr.mxu0 0.0
    %1380 = vmatpush1.msra.mxu0 0.0
    %1381 = vmatprep.subr.mxu0 0.0
    %1382 = vmatpush1.msra.mxu0 0.0
    %1383 = vmatprep.subr.mxu0 0.0
    %1384 = vmatpush1.msra.mxu0 0.0
    %1385 = vmatprep.subr.mxu0 0.0
    %1386 = vmatpush1.msra.mxu0 0.0
    %1387 = vmatprep.subr.mxu0 0.0
    %1388 = vmatpush1.msra.mxu0 0.0
    %1389 = vmatprep.subr.mxu0 0.0
    %1390 = vmatpush1.msra.mxu0 0.0
    %1391 = vmatprep.subr.mxu0 0.0
    %1392 = vmatpush1.msra.mxu0 0.0
    %1393 = vmatprep.subr.mxu0 0.0
    %1394 = vmatpush1.msra.mxu0 0.0
    %1395 = vmatprep.subr.mxu0 0.0
    %1396 = vmatpush1.msra.mxu0 0.0
    %1397 = vmatprep.subr.mxu0 0.0
    %1398 = vmatpush1.msra.mxu0 0.0
    %1399 = vmatprep.subr.mxu0 0.0
    %1400 = vmatpush1.msra.mxu0 0.0
    %1401 = vmatprep.subr.mxu0 0.0
    %1402 = vmatpush1.msra.mxu0 0.0
    %1403 = vmatprep.subr.mxu0 0.0
    %1404 = vmatpush1.msra.mxu0 0.0
    %1405 = vmatprep.subr.mxu0 0.0
    %1406 = vmatpush1.msra.mxu0 0.0
    %1407 = vmatprep.mubr.f32.mxu0 0.0
    %v1408 = vand.u32 %v1042, 4294901760
    %v1409 = vsub.f32 %v1042, %v1408
    %v1410 = vand.u32 %v1409, 4294901760
    %1411 = vmatmul.mubr.f32.gmra.mrb[0].mxu0 %v1410
    %v1412 = vpop.f32.mrb[0].mxu0
    %v1413 = vadd.f32 %v1331, %v1412
    %v1414 = vpop.f32.mrb[0].mxu0
    %1415 = vdwg.mxu0
    %1416 = vmatprep.subr.mxu0 0.0
    %v1417 = vand.u32 %v1024, 4294901760
    %v1418 = vsub.f32 %v1024, %v1417
    %v1419 = vand.u32 %v1418, 4294901760
    %1420 = vmatpush1.msra.mxu0 %v1419
    %1421 = vmatprep.subr.mxu0 0.0
    %v1422 = vand.u32 %v1025, 4294901760
    %v1423 = vsub.f32 %v1025, %v1422
    %v1424 = vand.u32 %v1423, 4294901760
    %1425 = vmatpush1.msra.mxu0 %v1424
    %1426 = vmatprep.subr.mxu0 0.0
    %v1427 = vand.u32 %v1026, 4294901760
    %v1428 = vsub.f32 %v1026, %v1427
    %v1429 = vand.u32 %v1428, 4294901760
    %1430 = vmatpush1.msra.mxu0 %v1429
    %1431 = vmatprep.subr.mxu0 0.0
    %v1432 = vand.u32 %v1027, 4294901760
    %v1433 = vsub.f32 %v1027, %v1432
    %v1434 = vand.u32 %v1433, 4294901760
    %1435 = vmatpush1.msra.mxu0 %v1434
    %1436 = vmatprep.subr.mxu0 0.0
    %v1437 = vand.u32 %v1028, 4294901760
    %v1438 = vsub.f32 %v1028, %v1437
    %v1439 = vand.u32 %v1438, 4294901760
    %1440 = vmatpush1.msra.mxu0 %v1439
    %1441 = vmatprep.subr.mxu0 0.0
    %v1442 = vand.u32 %v1029, 4294901760
    %v1443 = vsub.f32 %v1029, %v1442
    %v1444 = vand.u32 %v1443, 4294901760
    %1445 = vmatpush1.msra.mxu0 %v1444
    %1446 = vmatprep.subr.mxu0 0.0
    %v1447 = vand.u32 %v1030, 4294901760
    %v1448 = vsub.f32 %v1030, %v1447
    %v1449 = vand.u32 %v1448, 4294901760
    %1450 = vmatpush1.msra.mxu0 %v1449
    %1451 = vmatprep.subr.mxu0 0.0
    %v1452 = vand.u32 %v1031, 4294901760
    %v1453 = vsub.f32 %v1031, %v1452
    %v1454 = vand.u32 %v1453, 4294901760
    %1455 = vmatpush1.msra.mxu0 %v1454
    %1456 = vmatprep.subr.mxu0 0.0
    %v1457 = vand.u32 %v1032, 4294901760
    %v1458 = vsub.f32 %v1032, %v1457
    %v1459 = vand.u32 %v1458, 4294901760
    %1460 = vmatpush1.msra.mxu0 %v1459
    %1461 = vmatprep.subr.mxu0 0.0
    %1462 = vmatpush1.msra.mxu0 0.0
    %1463 = vmatprep.subr.mxu0 0.0
    %1464 = vmatpush1.msra.mxu0 0.0
    %1465 = vmatprep.subr.mxu0 0.0
    %1466 = vmatpush1.msra.mxu0 0.0
    %1467 = vmatprep.subr.mxu0 0.0
    %1468 = vmatpush1.msra.mxu0 0.0
    %1469 = vmatprep.subr.mxu0 0.0
    %1470 = vmatpush1.msra.mxu0 0.0
    %1471 = vmatprep.subr.mxu0 0.0
    %1472 = vmatpush1.msra.mxu0 0.0
    %1473 = vmatprep.subr.mxu0 0.0
    %1474 = vmatpush1.msra.mxu0 0.0
    %1475 = vmatprep.subr.mxu0 0.0
    %1476 = vmatpush1.msra.mxu0 0.0
    %1477 = vmatprep.subr.mxu0 0.0
    %1478 = vmatpush1.msra.mxu0 0.0
    %1479 = vmatprep.subr.mxu0 0.0
    %1480 = vmatpush1.msra.mxu0 0.0
    %1481 = vmatprep.subr.mxu0 0.0
    %1482 = vmatpush1.msra.mxu0 0.0
    %1483 = vmatprep.subr.mxu0 0.0
    %1484 = vmatpush1.msra.mxu0 0.0
    %1485 = vmatprep.subr.mxu0 0.0
    %1486 = vmatpush1.msra.mxu0 0.0
    %1487 = vmatprep.subr.mxu0 0.0
    %1488 = vmatpush1.msra.mxu0 0.0
    %1489 = vmatprep.subr.mxu0 0.0
    %1490 = vmatpush1.msra.mxu0 0.0
    %1491 = vmatprep.subr.mxu0 0.0
    %1492 = vmatpush1.msra.mxu0 0.0
    %1493 = vmatprep.subr.mxu0 0.0
    %1494 = vmatpush1.msra.mxu0 0.0
    %1495 = vmatprep.subr.mxu0 0.0
    %1496 = vmatpush1.msra.mxu0 0.0
    %1497 = vmatprep.subr.mxu0 0.0
    %1498 = vmatpush1.msra.mxu0 0.0
    %1499 = vmatprep.subr.mxu0 0.0
    %1500 = vmatpush1.msra.mxu0 0.0
    %1501 = vmatprep.subr.mxu0 0.0
    %1502 = vmatpush1.msra.mxu0 0.0
    %1503 = vmatprep.subr.mxu0 0.0
    %1504 = vmatpush1.msra.mxu0 0.0
    %1505 = vmatprep.subr.mxu0 0.0
    %1506 = vmatpush1.msra.mxu0 0.0
    %1507 = vmatprep.mubr.f32.mxu0 0.0
    %v1508 = vand.u32 %v1042, 4294901760
    %1509 = vmatmul.mubr.f32.gmra.mrb[0].mxu0 %v1508
    %v1510 = vpop.f32.mrb[0].mxu0
    %v1511 = vadd.f32 %v1413, %v1510
    %v1512 = vpop.f32.mrb[0].mxu0
    %1513 = vdwg.mxu0
    %1514 = vmatprep.subr.mxu0 0.0
    %v1515 = vand.u32 %v1024, 4294901760
    %1516 = vmatpush1.msra.mxu0 %v1515
    %1517 = vmatprep.subr.mxu0 0.0
    %v1518 = vand.u32 %v1025, 4294901760
    %1519 = vmatpush1.msra.mxu0 %v1518
    %1520 = vmatprep.subr.mxu0 0.0
    %v1521 = vand.u32 %v1026, 4294901760
    %1522 = vmatpush1.msra.mxu0 %v1521
    %1523 = vmatprep.subr.mxu0 0.0
    %v1524 = vand.u32 %v1027, 4294901760
    %1525 = vmatpush1.msra.mxu0 %v1524
    %1526 = vmatprep.subr.mxu0 0.0
    %v1527 = vand.u32 %v1028, 4294901760
    %1528 = vmatpush1.msra.mxu0 %v1527
    %1529 = vmatprep.subr.mxu0 0.0
    %v1530 = vand.u32 %v1029, 4294901760
    %1531 = vmatpush1.msra.mxu0 %v1530
    %1532 = vmatprep.subr.mxu0 0.0
    %v1533 = vand.u32 %v1030, 4294901760
    %1534 = vmatpush1.msra.mxu0 %v1533
    %1535 = vmatprep.subr.mxu0 0.0
    %v1536 = vand.u32 %v1031, 4294901760
    %1537 = vmatpush1.msra.mxu0 %v1536
    %1538 = vmatprep.subr.mxu0 0.0
    %v1539 = vand.u32 %v1032, 4294901760
    %1540 = vmatpush1.msra.mxu0 %v1539
    %1541 = vmatprep.subr.mxu0 0.0
    %1542 = vmatpush1.msra.mxu0 0.0
    %1543 = vmatprep.subr.mxu0 0.0
    %1544 = vmatpush1.msra.mxu0 0.0
    %1545 = vmatprep.subr.mxu0 0.0
    %1546 = vmatpush1.msra.mxu0 0.0
    %1547 = vmatprep.subr.mxu0 0.0
    %1548 = vmatpush1.msra.mxu0 0.0
    %1549 = vmatprep.subr.mxu0 0.0
    %1550 = vmatpush1.msra.mxu0 0.0
    %1551 = vmatprep.subr.mxu0 0.0
    %1552 = vmatpush1.msra.mxu0 0.0
    %1553 = vmatprep.subr.mxu0 0.0
    %1554 = vmatpush1.msra.mxu0 0.0
    %1555 = vmatprep.subr.mxu0 0.0
    %1556 = vmatpush1.msra.mxu0 0.0
    %1557 = vmatprep.subr.mxu0 0.0
    %1558 = vmatpush1.msra.mxu0 0.0
    %1559 = vmatprep.subr.mxu0 0.0
    %1560 = vmatpush1.msra.mxu0 0.0
    %1561 = vmatprep.subr.mxu0 0.0
    %1562 = vmatpush1.msra.mxu0 0.0
    %1563 = vmatprep.subr.mxu0 0.0
    %1564 = vmatpush1.msra.mxu0 0.0
    %1565 = vmatprep.subr.mxu0 0.0
    %1566 = vmatpush1.msra.mxu0 0.0
    %1567 = vmatprep.subr.mxu0 0.0
    %1568 = vmatpush1.msra.mxu0 0.0
    %1569 = vmatprep.subr.mxu0 0.0
    %1570 = vmatpush1.msra.mxu0 0.0
    %1571 = vmatprep.subr.mxu0 0.0
    %1572 = vmatpush1.msra.mxu0 0.0
    %1573 = vmatprep.subr.mxu0 0.0
    %1574 = vmatpush1.msra.mxu0 0.0
    %1575 = vmatprep.subr.mxu0 0.0
    %1576 = vmatpush1.msra.mxu0 0.0
    %1577 = vmatprep.subr.mxu0 0.0
    %1578 = vmatpush1.msra.mxu0 0.0
    %1579 = vmatprep.subr.mxu0 0.0
    %1580 = vmatpush1.msra.mxu0 0.0
    %1581 = vmatprep.subr.mxu0 0.0
    %1582 = vmatpush1.msra.mxu0 0.0
    %1583 = vmatprep.subr.mxu0 0.0
    %1584 = vmatpush1.msra.mxu0 0.0
    %1585 = vmatprep.subr.mxu0 0.0
    %1586 = vmatpush1.msra.mxu0 0.0
    %1587 = vmatprep.mubr.f32.mxu0 0.0
    %v1588 = vand.u32 %v1042, 4294901760
    %1589 = vmatmul.mubr.f32.gmra.mrb[0].mxu0 %v1588
    %v1590 = vpop.f32.mrb[0].mxu0
    %v1591 = vadd.f32 %v1511, %v1590
    %v1592 = vpop.f32.mrb[0].mxu0
    %1593 = vdwg.mxu0
    %v1594 = vand.u32 2147483647, %v1591
    %v1595 = vld [vmem:[%s5] sm:$0xff]
    %v1596 = vld [vmem:[%s5 + $0x8] sm:$0xff]
    %v1597 = vld [vmem:[%s5 + $0x10] sm:$0xff]
    %v1598 = vld [vmem:[%s5 + $0x18] sm:$0xff]
    %v1599 = vld [vmem:[%s5 + $0x20] sm:$0xff]
    %v1600 = vld [vmem:[%s5 + $0x28] sm:$0xff]
    %vm1601 = vcmask 392192
    %v1603 = vsel %vm1601, %v1594, 0
    %1605 = vmatprep.subr.mxu0 0.0
    %v1606 = vand.u32 %v1595, 4294901760
    %1607 = vmatpush1.msra.mxu0 %v1606
    %1608 = vmatprep.subr.mxu0 0.0
    %v1609 = vand.u32 %v1596, 4294901760
    %1610 = vmatpush1.msra.mxu0 %v1609
    %1611 = vmatprep.subr.mxu0 0.0
    %v1612 = vand.u32 %v1597, 4294901760
    %1613 = vmatpush1.msra.mxu0 %v1612
    %1614 = vmatprep.subr.mxu0 0.0
    %v1615 = vand.u32 %v1598, 4294901760
    %1616 = vmatpush1.msra.mxu0 %v1615
    %1617 = vmatprep.subr.mxu0 0.0
    %v1618 = vand.u32 %v1599, 4294901760
    %1619 = vmatpush1.msra.mxu0 %v1618
    %1620 = vmatprep.subr.mxu0 0.0
    %v1621 = vand.u32 %v1600, 4294901760
    %1622 = vmatpush1.msra.mxu0 %v1621
    %1623 = vmatprep.subr.mxu0 0.0
    %1624 = vmatpush1.msra.mxu0 0.0
    %1625 = vmatprep.subr.mxu0 0.0
    %1626 = vmatpush1.msra.mxu0 0.0
    %1627 = vmatprep.subr.mxu0 0.0
    %1628 = vmatpush1.msra.mxu0 0.0
    %1629 = vmatprep.subr.mxu0 0.0
    %1630 = vmatpush1.msra.mxu0 0.0
    %1631 = vmatprep.subr.mxu0 0.0
    %1632 = vmatpush1.msra.mxu0 0.0
    %1633 = vmatprep.subr.mxu0 0.0
    %1634 = vmatpush1.msra.mxu0 0.0
    %1635 = vmatprep.subr.mxu0 0.0
    %1636 = vmatpush1.msra.mxu0 0.0
    %1637 = vmatprep.subr.mxu0 0.0
    %1638 = vmatpush1.msra.mxu0 0.0
    %1639 = vmatprep.subr.mxu0 0.0
    %1640 = vmatpush1.msra.mxu0 0.0
    %1641 = vmatprep.subr.mxu0 0.0
    %1642 = vmatpush1.msra.mxu0 0.0
    %1643 = vmatprep.subr.mxu0 0.0
    %1644 = vmatpush1.msra.mxu0 0.0
    %1645 = vmatprep.subr.mxu0 0.0
    %1646 = vmatpush1.msra.mxu0 0.0
    %1647 = vmatprep.subr.mxu0 0.0
    %1648 = vmatpush1.msra.mxu0 0.0
    %1649 = vmatprep.subr.mxu0 0.0
    %1650 = vmatpush1.msra.mxu0 0.0
    %1651 = vmatprep.subr.mxu0 0.0
    %1652 = vmatpush1.msra.mxu0 0.0
    %1653 = vmatprep.subr.mxu0 0.0
    %1654 = vmatpush1.msra.mxu0 0.0
    %1655 = vmatprep.subr.mxu0 0.0
    %1656 = vmatpush1.msra.mxu0 0.0
    %1657 = vmatprep.subr.mxu0 0.0
    %1658 = vmatpush1.msra.mxu0 0.0
    %1659 = vmatprep.subr.mxu0 0.0
    %1660 = vmatpush1.msra.mxu0 0.0
    %1661 = vmatprep.subr.mxu0 0.0
    %1662 = vmatpush1.msra.mxu0 0.0
    %1663 = vmatprep.subr.mxu0 0.0
    %1664 = vmatpush1.msra.mxu0 0.0
    %1665 = vmatprep.subr.mxu0 0.0
    %1666 = vmatpush1.msra.mxu0 0.0
    %1667 = vmatprep.subr.mxu0 0.0
    %1668 = vmatpush1.msra.mxu0 0.0
    %1669 = vmatprep.subr.mxu0 0.0
    %1670 = vmatpush1.msra.mxu0 0.0
    %1671 = vmatprep.subr.mxu0 0.0
    %1672 = vmatpush1.msra.mxu0 0.0
    %1673 = vmatprep.subr.mxu0 0.0
    %1674 = vmatpush1.msra.mxu0 0.0
    %1675 = vmatprep.mubr.f32.mxu0 0.0
    %v1676 = vand.u32 %v1603, 4294901760
    %v1677 = vsub.f32 %v1603, %v1676
    %v1678 = vand.u32 %v1677, 4294901760
    %v1679 = vsub.f32 %v1677, %v1678
    %v1680 = vand.u32 %v1679, 4294901760
    %1681 = vmatmul.mubr.f32.gmra.mrb[0].mxu0 %v1680
    %v1682 = vpop.f32.mrb[0].mxu0
    %v1683 = vadd.f32 0.0, %v1682
    %v1684 = vpop.f32.mrb[0].mxu0
    %1685 = vdwg.mxu0
    %1686 = vmatprep.subr.mxu0 0.0
    %v1687 = vand.u32 %v1595, 4294901760
    %v1688 = vsub.f32 %v1595, %v1687
    %v1689 = vand.u32 %v1688, 4294901760
    %v1690 = vsub.f32 %v1688, %v1689
    %v1691 = vand.u32 %v1690, 4294901760
    %1692 = vmatpush1.msra.mxu0 %v1691
    %1693 = vmatprep.subr.mxu0 0.0
    %v1694 = vand.u32 %v1596, 4294901760
    %v1695 = vsub.f32 %v1596, %v1694
    %v1696 = vand.u32 %v1695, 4294901760
    %v1697 = vsub.f32 %v1695, %v1696
    %v1698 = vand.u32 %v1697, 4294901760
    %1699 = vmatpush1.msra.mxu0 %v1698
    %1700 = vmatprep.subr.mxu0 0.0
    %v1701 = vand.u32 %v1597, 4294901760
    %v1702 = vsub.f32 %v1597, %v1701
    %v1703 = vand.u32 %v1702, 4294901760
    %v1704 = vsub.f32 %v1702, %v1703
    %v1705 = vand.u32 %v1704, 4294901760
    %1706 = vmatpush1.msra.mxu0 %v1705
    %1707 = vmatprep.subr.mxu0 0.0
    %v1708 = vand.u32 %v1598, 4294901760
    %v1709 = vsub.f32 %v1598, %v1708
    %v1710 = vand.u32 %v1709, 4294901760
    %v1711 = vsub.f32 %v1709, %v1710
    %v1712 = vand.u32 %v1711, 4294901760
    %1713 = vmatpush1.msra.mxu0 %v1712
    %1714 = vmatprep.subr.mxu0 0.0
    %v1715 = vand.u32 %v1599, 4294901760
    %v1716 = vsub.f32 %v1599, %v1715
    %v1717 = vand.u32 %v1716, 4294901760
    %v1718 = vsub.f32 %v1716, %v1717
    %v1719 = vand.u32 %v1718, 4294901760
    %1720 = vmatpush1.msra.mxu0 %v1719
    %1721 = vmatprep.subr.mxu0 0.0
    %v1722 = vand.u32 %v1600, 4294901760
    %v1723 = vsub.f32 %v1600, %v1722
    %v1724 = vand.u32 %v1723, 4294901760
    %v1725 = vsub.f32 %v1723, %v1724
    %v1726 = vand.u32 %v1725, 4294901760
    %1727 = vmatpush1.msra.mxu0 %v1726
    %1728 = vmatprep.subr.mxu0 0.0
    %1729 = vmatpush1.msra.mxu0 0.0
    %1730 = vmatprep.subr.mxu0 0.0
    %1731 = vmatpush1.msra.mxu0 0.0
    %1732 = vmatprep.subr.mxu0 0.0
    %1733 = vmatpush1.msra.mxu0 0.0
    %1734 = vmatprep.subr.mxu0 0.0
    %1735 = vmatpush1.msra.mxu0 0.0
    %1736 = vmatprep.subr.mxu0 0.0
    %1737 = vmatpush1.msra.mxu0 0.0
    %1738 = vmatprep.subr.mxu0 0.0
    %1739 = vmatpush1.msra.mxu0 0.0
    %1740 = vmatprep.subr.mxu0 0.0
    %1741 = vmatpush1.msra.mxu0 0.0
    %1742 = vmatprep.subr.mxu0 0.0
    %1743 = vmatpush1.msra.mxu0 0.0
    %1744 = vmatprep.subr.mxu0 0.0
    %1745 = vmatpush1.msra.mxu0 0.0
    %1746 = vmatprep.subr.mxu0 0.0
    %1747 = vmatpush1.msra.mxu0 0.0
    %1748 = vmatprep.subr.mxu0 0.0
    %1749 = vmatpush1.msra.mxu0 0.0
    %1750 = vmatprep.subr.mxu0 0.0
    %1751 = vmatpush1.msra.mxu0 0.0
    %1752 = vmatprep.subr.mxu0 0.0
    %1753 = vmatpush1.msra.mxu0 0.0
    %1754 = vmatprep.subr.mxu0 0.0
    %1755 = vmatpush1.msra.mxu0 0.0
    %1756 = vmatprep.subr.mxu0 0.0
    %1757 = vmatpush1.msra.mxu0 0.0
    %1758 = vmatprep.subr.mxu0 0.0
    %1759 = vmatpush1.msra.mxu0 0.0
    %1760 = vmatprep.subr.mxu0 0.0
    %1761 = vmatpush1.msra.mxu0 0.0
    %1762 = vmatprep.subr.mxu0 0.0
    %1763 = vmatpush1.msra.mxu0 0.0
    %1764 = vmatprep.subr.mxu0 0.0
    %1765 = vmatpush1.msra.mxu0 0.0
    %1766 = vmatprep.subr.mxu0 0.0
    %1767 = vmatpush1.msra.mxu0 0.0
    %1768 = vmatprep.subr.mxu0 0.0
    %1769 = vmatpush1.msra.mxu0 0.0
    %1770 = vmatprep.subr.mxu0 0.0
    %1771 = vmatpush1.msra.mxu0 0.0
    %1772 = vmatprep.subr.mxu0 0.0
    %1773 = vmatpush1.msra.mxu0 0.0
    %1774 = vmatprep.subr.mxu0 0.0
    %1775 = vmatpush1.msra.mxu0 0.0
    %1776 = vmatprep.subr.mxu0 0.0
    %1777 = vmatpush1.msra.mxu0 0.0
    %1778 = vmatprep.subr.mxu0 0.0
    %1779 = vmatpush1.msra.mxu0 0.0
    %1780 = vmatprep.mubr.f32.mxu0 0.0
    %v1781 = vand.u32 %v1603, 4294901760
    %1782 = vmatmul.mubr.f32.gmra.mrb[0].mxu0 %v1781
    %v1783 = vpop.f32.mrb[0].mxu0
    %v1784 = vadd.f32 %v1683, %v1783
    %v1785 = vpop.f32.mrb[0].mxu0
    %1786 = vdwg.mxu0
    %1787 = vmatprep.subr.mxu0 0.0
    %v1788 = vand.u32 %v1595, 4294901760
    %v1789 = vsub.f32 %v1595, %v1788
    %1790 = vmatpush1.msra.mxu0 %v1789
    %1791 = vmatprep.subr.mxu0 0.0
    %v1792 = vand.u32 %v1596, 4294901760
    %v1793 = vsub.f32 %v1596, %v1792
    %1794 = vmatpush1.msra.mxu0 %v1793
    %1795 = vmatprep.subr.mxu0 0.0
    %v1796 = vand.u32 %v1597, 4294901760
    %v1797 = vsub.f32 %v1597, %v1796
    %1798 = vmatpush1.msra.mxu0 %v1797
    %1799 = vmatprep.subr.mxu0 0.0
    %v1800 = vand.u32 %v1598, 4294901760
    %v1801 = vsub.f32 %v1598, %v1800
    %1802 = vmatpush1.msra.mxu0 %v1801
    %1803 = vmatprep.subr.mxu0 0.0
    %v1804 = vand.u32 %v1599, 4294901760
    %v1805 = vsub.f32 %v1599, %v1804
    %1806 = vmatpush1.msra.mxu0 %v1805
    %1807 = vmatprep.subr.mxu0 0.0
    %v1808 = vand.u32 %v1600, 4294901760
    %v1809 = vsub.f32 %v1600, %v1808
    %1810 = vmatpush1.msra.mxu0 %v1809
    %1811 = vmatprep.subr.mxu0 0.0
    %1812 = vmatpush1.msra.mxu0 0.0
    %1813 = vmatprep.subr.mxu0 0.0
    %1814 = vmatpush1.msra.mxu0 0.0
    %1815 = vmatprep.subr.mxu0 0.0
    %1816 = vmatpush1.msra.mxu0 0.0
    %1817 = vmatprep.subr.mxu0 0.0
    %1818 = vmatpush1.msra.mxu0 0.0
    %1819 = vmatprep.subr.mxu0 0.0
    %1820 = vmatpush1.msra.mxu0 0.0
    %1821 = vmatprep.subr.mxu0 0.0
    %1822 = vmatpush1.msra.mxu0 0.0
    %1823 = vmatprep.subr.mxu0 0.0
    %1824 = vmatpush1.msra.mxu0 0.0
    %1825 = vmatprep.subr.mxu0 0.0
    %1826 = vmatpush1.msra.mxu0 0.0
    %1827 = vmatprep.subr.mxu0 0.0
    %1828 = vmatpush1.msra.mxu0 0.0
    %1829 = vmatprep.subr.mxu0 0.0
    %1830 = vmatpush1.msra.mxu0 0.0
    %1831 = vmatprep.subr.mxu0 0.0
    %1832 = vmatpush1.msra.mxu0 0.0
    %1833 = vmatprep.subr.mxu0 0.0
    %1834 = vmatpush1.msra.mxu0 0.0
    %1835 = vmatprep.subr.mxu0 0.0
    %1836 = vmatpush1.msra.mxu0 0.0
    %1837 = vmatprep.subr.mxu0 0.0
    %1838 = vmatpush1.msra.mxu0 0.0
    %1839 = vmatprep.subr.mxu0 0.0
    %1840 = vmatpush1.msra.mxu0 0.0
    %1841 = vmatprep.subr.mxu0 0.0
    %1842 = vmatpush1.msra.mxu0 0.0
    %1843 = vmatprep.subr.mxu0 0.0
    %1844 = vmatpush1.msra.mxu0 0.0
    %1845 = vmatprep.subr.mxu0 0.0
    %1846 = vmatpush1.msra.mxu0 0.0
    %1847 = vmatprep.subr.mxu0 0.0
    %1848 = vmatpush1.msra.mxu0 0.0
    %1849 = vmatprep.subr.mxu0 0.0
    %1850 = vmatpush1.msra.mxu0 0.0
    %1851 = vmatprep.subr.mxu0 0.0
    %1852 = vmatpush1.msra.mxu0 0.0
    %1853 = vmatprep.subr.mxu0 0.0
    %1854 = vmatpush1.msra.mxu0 0.0
    %1855 = vmatprep.subr.mxu0 0.0
    %1856 = vmatpush1.msra.mxu0 0.0
    %1857 = vmatprep.subr.mxu0 0.0
    %1858 = vmatpush1.msra.mxu0 0.0
    %1859 = vmatprep.subr.mxu0 0.0
    %1860 = vmatpush1.msra.mxu0 0.0
    %1861 = vmatprep.subr.mxu0 0.0
    %1862 = vmatpush1.msra.mxu0 0.0
    %1863 = vmatprep.mubr.f32.mxu0 0.0
    %v1864 = vand.u32 %v1603, 4294901760
    %v1865 = vsub.f32 %v1603, %v1864
    %1866 = vmatmul.mubr.f32.gmra.mrb[0].mxu0 %v1865
    %v1867 = vpop.f32.mrb[0].mxu0
    %v1868 = vadd.f32 %v1784, %v1867
    %v1869 = vpop.f32.mrb[0].mxu0
    %1870 = vdwg.mxu0
    %1871 = vmatprep.subr.mxu0 0.0
    %v1872 = vand.u32 %v1595, 4294901760
    %1873 = vmatpush1.msra.mxu0 %v1872
    %1874 = vmatprep.subr.mxu0 0.0
    %v1875 = vand.u32 %v1596, 4294901760
    %1876 = vmatpush1.msra.mxu0 %v1875
    %1877 = vmatprep.subr.mxu0 0.0
    %v1878 = vand.u32 %v1597, 4294901760
    %1879 = vmatpush1.msra.mxu0 %v1878
    %1880 = vmatprep.subr.mxu0 0.0
    %v1881 = vand.u32 %v1598, 4294901760
    %1882 = vmatpush1.msra.mxu0 %v1881
    %1883 = vmatprep.subr.mxu0 0.0
    %v1884 = vand.u32 %v1599, 4294901760
    %1885 = vmatpush1.msra.mxu0 %v1884
    %1886 = vmatprep.subr.mxu0 0.0
    %v1887 = vand.u32 %v1600, 4294901760
    %1888 = vmatpush1.msra.mxu0 %v1887
    %1889 = vmatprep.subr.mxu0 0.0
    %1890 = vmatpush1.msra.mxu0 0.0
    %1891 = vmatprep.subr.mxu0 0.0
    %1892 = vmatpush1.msra.mxu0 0.0
    %1893 = vmatprep.subr.mxu0 0.0
    %1894 = vmatpush1.msra.mxu0 0.0
    %1895 = vmatprep.subr.mxu0 0.0
    %1896 = vmatpush1.msra.mxu0 0.0
    %1897 = vmatprep.subr.mxu0 0.0
    %1898 = vmatpush1.msra.mxu0 0.0
    %1899 = vmatprep.subr.mxu0 0.0
    %1900 = vmatpush1.msra.mxu0 0.0
    %1901 = vmatprep.subr.mxu0 0.0
    %1902 = vmatpush1.msra.mxu0 0.0
    %1903 = vmatprep.subr.mxu0 0.0
    %1904 = vmatpush1.msra.mxu0 0.0
    %1905 = vmatprep.subr.mxu0 0.0
    %1906 = vmatpush1.msra.mxu0 0.0
    %1907 = vmatprep.subr.mxu0 0.0
    %1908 = vmatpush1.msra.mxu0 0.0
    %1909 = vmatprep.subr.mxu0 0.0
    %1910 = vmatpush1.msra.mxu0 0.0
    %1911 = vmatprep.subr.mxu0 0.0
    %1912 = vmatpush1.msra.mxu0 0.0
    %1913 = vmatprep.subr.mxu0 0.0
    %1914 = vmatpush1.msra.mxu0 0.0
    %1915 = vmatprep.subr.mxu0 0.0
    %1916 = vmatpush1.msra.mxu0 0.0
    %1917 = vmatprep.subr.mxu0 0.0
    %1918 = vmatpush1.msra.mxu0 0.0
    %1919 = vmatprep.subr.mxu0 0.0
    %1920 = vmatpush1.msra.mxu0 0.0
    %1921 = vmatprep.subr.mxu0 0.0
    %1922 = vmatpush1.msra.mxu0 0.0
    %1923 = vmatprep.subr.mxu0 0.0
    %1924 = vmatpush1.msra.mxu0 0.0
    %1925 = vmatprep.subr.mxu0 0.0
    %1926 = vmatpush1.msra.mxu0 0.0
    %1927 = vmatprep.subr.mxu0 0.0
    %1928 = vmatpush1.msra.mxu0 0.0
    %1929 = vmatprep.subr.mxu0 0.0
    %1930 = vmatpush1.msra.mxu0 0.0
    %1931 = vmatprep.subr.mxu0 0.0
    %1932 = vmatpush1.msra.mxu0 0.0
    %1933 = vmatprep.subr.mxu0 0.0
    %1934 = vmatpush1.msra.mxu0 0.0
    %1935 = vmatprep.subr.mxu0 0.0
    %1936 = vmatpush1.msra.mxu0 0.0
    %1937 = vmatprep.subr.mxu0 0.0
    %1938 = vmatpush1.msra.mxu0 0.0
    %1939 = vmatprep.subr.mxu0 0.0
    %1940 = vmatpush1.msra.mxu0 0.0
    %1941 = vmatprep.mubr.f32.mxu0 0.0
    %v1942 = vand.u32 %v1603, 4294901760
    %v1943 = vsub.f32 %v1603, %v1942
    %v1944 = vand.u32 %v1943, 4294901760
    %1945 = vmatmul.mubr.f32.gmra.mrb[0].mxu0 %v1944
    %v1946 = vpop.f32.mrb[0].mxu0
    %v1947 = vadd.f32 %v1868, %v1946
    %v1948 = vpop.f32.mrb[0].mxu0
    %1949 = vdwg.mxu0
    %1950 = vmatprep.subr.mxu0 0.0
    %v1951 = vand.u32 %v1595, 4294901760
    %v1952 = vsub.f32 %v1595, %v1951
    %v1953 = vand.u32 %v1952, 4294901760
    %1954 = vmatpush1.msra.mxu0 %v1953
    %1955 = vmatprep.subr.mxu0 0.0
    %v1956 = vand.u32 %v1596, 4294901760
    %v1957 = vsub.f32 %v1596, %v1956
    %v1958 = vand.u32 %v1957, 4294901760
    %1959 = vmatpush1.msra.mxu0 %v1958
    %1960 = vmatprep.subr.mxu0 0.0
    %v1961 = vand.u32 %v1597, 4294901760
    %v1962 = vsub.f32 %v1597, %v1961
    %v1963 = vand.u32 %v1962, 4294901760
    %1964 = vmatpush1.msra.mxu0 %v1963
    %1965 = vmatprep.subr.mxu0 0.0
    %v1966 = vand.u32 %v1598, 4294901760
    %v1967 = vsub.f32 %v1598, %v1966
    %v1968 = vand.u32 %v1967, 4294901760
    %1969 = vmatpush1.msra.mxu0 %v1968
    %1970 = vmatprep.subr.mxu0 0.0
    %v1971 = vand.u32 %v1599, 4294901760
    %v1972 = vsub.f32 %v1599, %v1971
    %v1973 = vand.u32 %v1972, 4294901760
    %1974 = vmatpush1.msra.mxu0 %v1973
    %1975 = vmatprep.subr.mxu0 0.0
    %v1976 = vand.u32 %v1600, 4294901760
    %v1977 = vsub.f32 %v1600, %v1976
    %v1978 = vand.u32 %v1977, 4294901760
    %1979 = vmatpush1.msra.mxu0 %v1978
    %1980 = vmatprep.subr.mxu0 0.0
    %1981 = vmatpush1.msra.mxu0 0.0
    %1982 = vmatprep.subr.mxu0 0.0
    %1983 = vmatpush1.msra.mxu0 0.0
    %1984 = vmatprep.subr.mxu0 0.0
    %1985 = vmatpush1.msra.mxu0 0.0
    %1986 = vmatprep.subr.mxu0 0.0
    %1987 = vmatpush1.msra.mxu0 0.0
    %1988 = vmatprep.subr.mxu0 0.0
    %1989 = vmatpush1.msra.mxu0 0.0
    %1990 = vmatprep.subr.mxu0 0.0
    %1991 = vmatpush1.msra.mxu0 0.0
    %1992 = vmatprep.subr.mxu0 0.0
    %1993 = vmatpush1.msra.mxu0 0.0
    %1994 = vmatprep.subr.mxu0 0.0
    %1995 = vmatpush1.msra.mxu0 0.0
    %1996 = vmatprep.subr.mxu0 0.0
    %1997 = vmatpush1.msra.mxu0 0.0
    %1998 = vmatprep.subr.mxu0 0.0
    %1999 = vmatpush1.msra.mxu0 0.0
    %2000 = vmatprep.subr.mxu0 0.0
    %2001 = vmatpush1.msra.mxu0 0.0
    %2002 = vmatprep.subr.mxu0 0.0
    %2003 = vmatpush1.msra.mxu0 0.0
    %2004 = vmatprep.subr.mxu0 0.0
    %2005 = vmatpush1.msra.mxu0 0.0
    %2006 = vmatprep.subr.mxu0 0.0
    %2007 = vmatpush1.msra.mxu0 0.0
    %2008 = vmatprep.subr.mxu0 0.0
    %2009 = vmatpush1.msra.mxu0 0.0
    %2010 = vmatprep.subr.mxu0 0.0
    %2011 = vmatpush1.msra.mxu0 0.0
    %2012 = vmatprep.subr.mxu0 0.0
    %2013 = vmatpush1.msra.mxu0 0.0
    %2014 = vmatprep.subr.mxu0 0.0
    %2015 = vmatpush1.msra.mxu0 0.0
    %2016 = vmatprep.subr.mxu0 0.0
    %2017 = vmatpush1.msra.mxu0 0.0
    %2018 = vmatprep.subr.mxu0 0.0
    %2019 = vmatpush1.msra.mxu0 0.0
    %2020 = vmatprep.subr.mxu0 0.0
    %2021 = vmatpush1.msra.mxu0 0.0
    %2022 = vmatprep.subr.mxu0 0.0
    %2023 = vmatpush1.msra.mxu0 0.0
    %2024 = vmatprep.subr.mxu0 0.0
    %2025 = vmatpush1.msra.mxu0 0.0
    %2026 = vmatprep.subr.mxu0 0.0
    %2027 = vmatpush1.msra.mxu0 0.0
    %2028 = vmatprep.subr.mxu0 0.0
    %2029 = vmatpush1.msra.mxu0 0.0
    %2030 = vmatprep.subr.mxu0 0.0
    %2031 = vmatpush1.msra.mxu0 0.0
    %2032 = vmatprep.mubr.f32.mxu0 0.0
    %v2033 = vand.u32 %v1603, 4294901760
    %2034 = vmatmul.mubr.f32.gmra.mrb[0].mxu0 %v2033
    %v2035 = vpop.f32.mrb[0].mxu0
    %v2036 = vadd.f32 %v1947, %v2035
    %v2037 = vpop.f32.mrb[0].mxu0
    %2038 = vdwg.mxu0
    %2039 = vmatprep.subr.mxu0 0.0
    %v2040 = vand.u32 %v1595, 4294901760
    %2041 = vmatpush1.msra.mxu0 %v2040
    %2042 = vmatprep.subr.mxu0 0.0
    %v2043 = vand.u32 %v1596, 4294901760
    %2044 = vmatpush1.msra.mxu0 %v2043
    %2045 = vmatprep.subr.mxu0 0.0
    %v2046 = vand.u32 %v1597, 4294901760
    %2047 = vmatpush1.msra.mxu0 %v2046
    %2048 = vmatprep.subr.mxu0 0.0
    %v2049 = vand.u32 %v1598, 4294901760
    %2050 = vmatpush1.msra.mxu0 %v2049
    %2051 = vmatprep.subr.mxu0 0.0
    %v2052 = vand.u32 %v1599, 4294901760
    %2053 = vmatpush1.msra.mxu0 %v2052
    %2054 = vmatprep.subr.mxu0 0.0
    %v2055 = vand.u32 %v1600, 4294901760
    %2056 = vmatpush1.msra.mxu0 %v2055
    %2057 = vmatprep.subr.mxu0 0.0
    %2058 = vmatpush1.msra.mxu0 0.0
    %2059 = vmatprep.subr.mxu0 0.0
    %2060 = vmatpush1.msra.mxu0 0.0
    %2061 = vmatprep.subr.mxu0 0.0
    %2062 = vmatpush1.msra.mxu0 0.0
    %2063 = vmatprep.subr.mxu0 0.0
    %2064 = vmatpush1.msra.mxu0 0.0
    %2065 = vmatprep.subr.mxu0 0.0
    %2066 = vmatpush1.msra.mxu0 0.0
    %2067 = vmatprep.subr.mxu0 0.0
    %2068 = vmatpush1.msra.mxu0 0.0
    %2069 = vmatprep.subr.mxu0 0.0
    %2070 = vmatpush1.msra.mxu0 0.0
    %2071 = vmatprep.subr.mxu0 0.0
    %2072 = vmatpush1.msra.mxu0 0.0
    %2073 = vmatprep.subr.mxu0 0.0
    %2074 = vmatpush1.msra.mxu0 0.0
    %2075 = vmatprep.subr.mxu0 0.0
    %2076 = vmatpush1.msra.mxu0 0.0
    %2077 = vmatprep.subr.mxu0 0.0
    %2078 = vmatpush1.msra.mxu0 0.0
    %2079 = vmatprep.subr.mxu0 0.0
    %2080 = vmatpush1.msra.mxu0 0.0
    %2081 = vmatprep.subr.mxu0 0.0
    %2082 = vmatpush1.msra.mxu0 0.0
    %2083 = vmatprep.subr.mxu0 0.0
    %2084 = vmatpush1.msra.mxu0 0.0
    %2085 = vmatprep.subr.mxu0 0.0
    %2086 = vmatpush1.msra.mxu0 0.0
    %2087 = vmatprep.subr.mxu0 0.0
    %2088 = vmatpush1.msra.mxu0 0.0
    %2089 = vmatprep.subr.mxu0 0.0
    %2090 = vmatpush1.msra.mxu0 0.0
    %2091 = vmatprep.subr.mxu0 0.0
    %2092 = vmatpush1.msra.mxu0 0.0
    %2093 = vmatprep.subr.mxu0 0.0
    %2094 = vmatpush1.msra.mxu0 0.0
    %2095 = vmatprep.subr.mxu0 0.0
    %2096 = vmatpush1.msra.mxu0 0.0
    %2097 = vmatprep.subr.mxu0 0.0
    %2098 = vmatpush1.msra.mxu0 0.0
    %2099 = vmatprep.subr.mxu0 0.0
    %2100 = vmatpush1.msra.mxu0 0.0
    %2101 = vmatprep.subr.mxu0 0.0
    %2102 = vmatpush1.msra.mxu0 0.0
    %2103 = vmatprep.subr.mxu0 0.0
    %2104 = vmatpush1.msra.mxu0 0.0
    %2105 = vmatprep.subr.mxu0 0.0
    %2106 = vmatpush1.msra.mxu0 0.0
    %2107 = vmatprep.subr.mxu0 0.0
    %2108 = vmatpush1.msra.mxu0 0.0
    %2109 = vmatprep.mubr.f32.mxu0 0.0
    %v2110 = vand.u32 %v1603, 4294901760
    %2111 = vmatmul.mubr.f32.gmra.mrb[0].mxu0 %v2110
    %v2112 = vpop.f32.mrb[0].mxu0
    %v2113 = vadd.f32 %v2036, %v2112
    %v2114 = vpop.f32.mrb[0].mxu0
    %2115 = vdwg.mxu0
    %v2117 = vsel %vm1041, %v1004, 0
    %2119 = vmatprep.subr.mxu0 0.0
    %v2120 = vand.u32 %v1005, 4294901760
    %2121 = vmatpush1.msra.mxu0 %v2120
    %2122 = vmatprep.subr.mxu0 0.0
    %v2123 = vand.u32 %v1006, 4294901760
    %2124 = vmatpush1.msra.mxu0 %v2123
    %2125 = vmatprep.subr.mxu0 0.0
    %v2126 = vand.u32 %v1007, 4294901760
    %2127 = vmatpush1.msra.mxu0 %v2126
    %2128 = vmatprep.subr.mxu0 0.0
    %v2129 = vand.u32 %v1008, 4294901760
    %2130 = vmatpush1.msra.mxu0 %v2129
    %2131 = vmatprep.subr.mxu0 0.0
    %v2132 = vand.u32 %v1009, 4294901760
    %2133 = vmatpush1.msra.mxu0 %v2132
    %2134 = vmatprep.subr.mxu0 0.0
    %v2135 = vand.u32 %v1010, 4294901760
    %2136 = vmatpush1.msra.mxu0 %v2135
    %2137 = vmatprep.subr.mxu0 0.0
    %v2138 = vand.u32 %v1011, 4294901760
    %2139 = vmatpush1.msra.mxu0 %v2138
    %2140 = vmatprep.subr.mxu0 0.0
    %v2141 = vand.u32 %v1012, 4294901760
    %2142 = vmatpush1.msra.mxu0 %v2141
    %2143 = vmatprep.subr.mxu0 0.0
    %v2144 = vand.u32 %v1013, 4294901760
    %2145 = vmatpush1.msra.mxu0 %v2144
    %2146 = vmatprep.subr.mxu0 0.0
    %2147 = vmatpush1.msra.mxu0 0.0
    %2148 = vmatprep.subr.mxu0 0.0
    %2149 = vmatpush1.msra.mxu0 0.0
    %2150 = vmatprep.subr.mxu0 0.0
    %2151 = vmatpush1.msra.mxu0 0.0
    %2152 = vmatprep.subr.mxu0 0.0
    %2153 = vmatpush1.msra.mxu0 0.0
    %2154 = vmatprep.subr.mxu0 0.0
    %2155 = vmatpush1.msra.mxu0 0.0
    %2156 = vmatprep.subr.mxu0 0.0
    %2157 = vmatpush1.msra.mxu0 0.0
    %2158 = vmatprep.subr.mxu0 0.0
    %2159 = vmatpush1.msra.mxu0 0.0
    %2160 = vmatprep.subr.mxu0 0.0
    %2161 = vmatpush1.msra.mxu0 0.0
    %2162 = vmatprep.subr.mxu0 0.0
    %2163 = vmatpush1.msra.mxu0 0.0
    %2164 = vmatprep.subr.mxu0 0.0
    %2165 = vmatpush1.msra.mxu0 0.0
    %2166 = vmatprep.subr.mxu0 0.0
    %2167 = vmatpush1.msra.mxu0 0.0
    %2168 = vmatprep.subr.mxu0 0.0
    %2169 = vmatpush1.msra.mxu0 0.0
    %2170 = vmatprep.subr.mxu0 0.0
    %2171 = vmatpush1.msra.mxu0 0.0
    %2172 = vmatprep.subr.mxu0 0.0
    %2173 = vmatpush1.msra.mxu0 0.0
    %2174 = vmatprep.subr.mxu0 0.0
    %2175 = vmatpush1.msra.mxu0 0.0
    %2176 = vmatprep.subr.mxu0 0.0
    %2177 = vmatpush1.msra.mxu0 0.0
    %2178 = vmatprep.subr.mxu0 0.0
    %2179 = vmatpush1.msra.mxu0 0.0
    %2180 = vmatprep.subr.mxu0 0.0
    %2181 = vmatpush1.msra.mxu0 0.0
    %2182 = vmatprep.subr.mxu0 0.0
    %2183 = vmatpush1.msra.mxu0 0.0
    %2184 = vmatprep.subr.mxu0 0.0
    %2185 = vmatpush1.msra.mxu0 0.0
    %2186 = vmatprep.subr.mxu0 0.0
    %2187 = vmatpush1.msra.mxu0 0.0
    %2188 = vmatprep.subr.mxu0 0.0
    %2189 = vmatpush1.msra.mxu0 0.0
    %2190 = vmatprep.subr.mxu0 0.0
    %2191 = vmatpush1.msra.mxu0 0.0
    %2192 = vmatprep.mubr.f32.mxu0 0.0
    %v2193 = vand.u32 %v2117, 4294901760
    %v2194 = vsub.f32 %v2117, %v2193
    %v2195 = vand.u32 %v2194, 4294901760
    %v2196 = vsub.f32 %v2194, %v2195
    %v2197 = vand.u32 %v2196, 4294901760
    %2198 = vmatmul.mubr.f32.gmra.mrb[0].mxu0 %v2197
    %v2199 = vpop.f32.mrb[0].mxu0
    %v2200 = vadd.f32 %v2113, %v2199
    %v2201 = vpop.f32.mrb[0].mxu0
    %2202 = vdwg.mxu0
    %2203 = vmatprep.subr.mxu0 0.0
    %v2204 = vand.u32 %v1005, 4294901760
    %v2205 = vsub.f32 %v1005, %v2204
    %v2206 = vand.u32 %v2205, 4294901760
    %v2207 = vsub.f32 %v2205, %v2206
    %v2208 = vand.u32 %v2207, 4294901760
    %2209 = vmatpush1.msra.mxu0 %v2208
    %2210 = vmatprep.subr.mxu0 0.0
    %v2211 = vand.u32 %v1006, 4294901760
    %v2212 = vsub.f32 %v1006, %v2211
    %v2213 = vand.u32 %v2212, 4294901760
    %v2214 = vsub.f32 %v2212, %v2213
    %v2215 = vand.u32 %v2214, 4294901760
    %2216 = vmatpush1.msra.mxu0 %v2215
    %2217 = vmatprep.subr.mxu0 0.0
    %v2218 = vand.u32 %v1007, 4294901760
    %v2219 = vsub.f32 %v1007, %v2218
    %v2220 = vand.u32 %v2219, 4294901760
    %v2221 = vsub.f32 %v2219, %v2220
    %v2222 = vand.u32 %v2221, 4294901760
    %2223 = vmatpush1.msra.mxu0 %v2222
    %2224 = vmatprep.subr.mxu0 0.0
    %v2225 = vand.u32 %v1008, 4294901760
    %v2226 = vsub.f32 %v1008, %v2225
    %v2227 = vand.u32 %v2226, 4294901760
    %v2228 = vsub.f32 %v2226, %v2227
    %v2229 = vand.u32 %v2228, 4294901760
    %2230 = vmatpush1.msra.mxu0 %v2229
    %2231 = vmatprep.subr.mxu0 0.0
    %v2232 = vand.u32 %v1009, 4294901760
    %v2233 = vsub.f32 %v1009, %v2232
    %v2234 = vand.u32 %v2233, 4294901760
    %v2235 = vsub.f32 %v2233, %v2234
    %v2236 = vand.u32 %v2235, 4294901760
    %2237 = vmatpush1.msra.mxu0 %v2236
    %2238 = vmatprep.subr.mxu0 0.0
    %v2239 = vand.u32 %v1010, 4294901760
    %v2240 = vsub.f32 %v1010, %v2239
    %v2241 = vand.u32 %v2240, 4294901760
    %v2242 = vsub.f32 %v2240, %v2241
    %v2243 = vand.u32 %v2242, 4294901760
    %2244 = vmatpush1.msra.mxu0 %v2243
    %2245 = vmatprep.subr.mxu0 0.0
    %v2246 = vand.u32 %v1011, 4294901760
    %v2247 = vsub.f32 %v1011, %v2246
    %v2248 = vand.u32 %v2247, 4294901760
    %v2249 = vsub.f32 %v2247, %v2248
    %v2250 = vand.u32 %v2249, 4294901760
    %2251 = vmatpush1.msra.mxu0 %v2250
    %2252 = vmatprep.subr.mxu0 0.0
    %v2253 = vand.u32 %v1012, 4294901760
    %v2254 = vsub.f32 %v1012, %v2253
    %v2255 = vand.u32 %v2254, 4294901760
    %v2256 = vsub.f32 %v2254, %v2255
    %v2257 = vand.u32 %v2256, 4294901760
    %2258 = vmatpush1.msra.mxu0 %v2257
    %2259 = vmatprep.subr.mxu0 0.0
    %v2260 = vand.u32 %v1013, 4294901760
    %v2261 = vsub.f32 %v1013, %v2260
    %v2262 = vand.u32 %v2261, 4294901760
    %v2263 = vsub.f32 %v2261, %v2262
    %v2264 = vand.u32 %v2263, 4294901760
    %2265 = vmatpush1.msra.mxu0 %v2264
    %2266 = vmatprep.subr.mxu0 0.0
    %2267 = vmatpush1.msra.mxu0 0.0
    %2268 = vmatprep.subr.mxu0 0.0
    %2269 = vmatpush1.msra.mxu0 0.0
    %2270 = vmatprep.subr.mxu0 0.0
    %2271 = vmatpush1.msra.mxu0 0.0
    %2272 = vmatprep.subr.mxu0 0.0
    %2273 = vmatpush1.msra.mxu0 0.0
    %2274 = vmatprep.subr.mxu0 0.0
    %2275 = vmatpush1.msra.mxu0 0.0
    %2276 = vmatprep.subr.mxu0 0.0
    %2277 = vmatpush1.msra.mxu0 0.0
    %2278 = vmatprep.subr.mxu0 0.0
    %2279 = vmatpush1.msra.mxu0 0.0
    %2280 = vmatprep.subr.mxu0 0.0
    %2281 = vmatpush1.msra.mxu0 0.0
    %2282 = vmatprep.subr.mxu0 0.0
    %2283 = vmatpush1.msra.mxu0 0.0
    %2284 = vmatprep.subr.mxu0 0.0
    %2285 = vmatpush1.msra.mxu0 0.0
    %2286 = vmatprep.subr.mxu0 0.0
    %2287 = vmatpush1.msra.mxu0 0.0
    %2288 = vmatprep.subr.mxu0 0.0
    %2289 = vmatpush1.msra.mxu0 0.0
    %2290 = vmatprep.subr.mxu0 0.0
    %2291 = vmatpush1.msra.mxu0 0.0
    %2292 = vmatprep.subr.mxu0 0.0
    %2293 = vmatpush1.msra.mxu0 0.0
    %2294 = vmatprep.subr.mxu0 0.0
    %2295 = vmatpush1.msra.mxu0 0.0
    %2296 = vmatprep.subr.mxu0 0.0
    %2297 = vmatpush1.msra.mxu0 0.0
    %2298 = vmatprep.subr.mxu0 0.0
    %2299 = vmatpush1.msra.mxu0 0.0
    %2300 = vmatprep.subr.mxu0 0.0
    %2301 = vmatpush1.msra.mxu0 0.0
    %2302 = vmatprep.subr.mxu0 0.0
    %2303 = vmatpush1.msra.mxu0 0.0
    %2304 = vmatprep.subr.mxu0 0.0
    %2305 = vmatpush1.msra.mxu0 0.0
    %2306 = vmatprep.subr.mxu0 0.0
    %2307 = vmatpush1.msra.mxu0 0.0
    %2308 = vmatprep.subr.mxu0 0.0
    %2309 = vmatpush1.msra.mxu0 0.0
    %2310 = vmatprep.subr.mxu0 0.0
    %2311 = vmatpush1.msra.mxu0 0.0
    %2312 = vmatprep.mubr.f32.mxu0 0.0
    %v2313 = vand.u32 %v2117, 4294901760
    %2314 = vmatmul.mubr.f32.gmra.mrb[0].mxu0 %v2313
    %v2315 = vpop.f32.mrb[0].mxu0
    %v2316 = vadd.f32 %v2200, %v2315
    %v2317 = vpop.f32.mrb[0].mxu0
    %2318 = vdwg.mxu0
    %2319 = vmatprep.subr.mxu0 0.0
    %v2320 = vand.u32 %v1005, 4294901760
    %v2321 = vsub.f32 %v1005, %v2320
    %2322 = vmatpush1.msra.mxu0 %v2321
    %2323 = vmatprep.subr.mxu0 0.0
    %v2324 = vand.u32 %v1006, 4294901760
    %v2325 = vsub.f32 %v1006, %v2324
    %2326 = vmatpush1.msra.mxu0 %v2325
    %2327 = vmatprep.subr.mxu0 0.0
    %v2328 = vand.u32 %v1007, 4294901760
    %v2329 = vsub.f32 %v1007, %v2328
    %2330 = vmatpush1.msra.mxu0 %v2329
    %2331 = vmatprep.subr.mxu0 0.0
    %v2332 = vand.u32 %v1008, 4294901760
    %v2333 = vsub.f32 %v1008, %v2332
    %2334 = vmatpush1.msra.mxu0 %v2333
    %2335 = vmatprep.subr.mxu0 0.0
    %v2336 = vand.u32 %v1009, 4294901760
    %v2337 = vsub.f32 %v1009, %v2336
    %2338 = vmatpush1.msra.mxu0 %v2337
    %2339 = vmatprep.subr.mxu0 0.0
    %v2340 = vand.u32 %v1010, 4294901760
    %v2341 = vsub.f32 %v1010, %v2340
    %2342 = vmatpush1.msra.mxu0 %v2341
    %2343 = vmatprep.subr.mxu0 0.0
    %v2344 = vand.u32 %v1011, 4294901760
    %v2345 = vsub.f32 %v1011, %v2344
    %2346 = vmatpush1.msra.mxu0 %v2345
    %2347 = vmatprep.subr.mxu0 0.0
    %v2348 = vand.u32 %v1012, 4294901760
    %v2349 = vsub.f32 %v1012, %v2348
    %2350 = vmatpush1.msra.mxu0 %v2349
    %2351 = vmatprep.subr.mxu0 0.0
    %v2352 = vand.u32 %v1013, 4294901760
    %v2353 = vsub.f32 %v1013, %v2352
    %2354 = vmatpush1.msra.mxu0 %v2353
    %2355 = vmatprep.subr.mxu0 0.0
    %2356 = vmatpush1.msra.mxu0 0.0
    %2357 = vmatprep.subr.mxu0 0.0
    %2358 = vmatpush1.msra.mxu0 0.0
    %2359 = vmatprep.subr.mxu0 0.0
    %2360 = vmatpush1.msra.mxu0 0.0
    %2361 = vmatprep.subr.mxu0 0.0
    %2362 = vmatpush1.msra.mxu0 0.0
    %2363 = vmatprep.subr.mxu0 0.0
    %2364 = vmatpush1.msra.mxu0 0.0
    %2365 = vmatprep.subr.mxu0 0.0
    %2366 = vmatpush1.msra.mxu0 0.0
    %2367 = vmatprep.subr.mxu0 0.0
    %2368 = vmatpush1.msra.mxu0 0.0
    %2369 = vmatprep.subr.mxu0 0.0
    %2370 = vmatpush1.msra.mxu0 0.0
    %2371 = vmatprep.subr.mxu0 0.0
    %2372 = vmatpush1.msra.mxu0 0.0
    %2373 = vmatprep.subr.mxu0 0.0
    %2374 = vmatpush1.msra.mxu0 0.0
    %2375 = vmatprep.subr.mxu0 0.0
    %2376 = vmatpush1.msra.mxu0 0.0
    %2377 = vmatprep.subr.mxu0 0.0
    %2378 = vmatpush1.msra.mxu0 0.0
    %2379 = vmatprep.subr.mxu0 0.0
    %2380 = vmatpush1.msra.mxu0 0.0
    %2381 = vmatprep.subr.mxu0 0.0
    %2382 = vmatpush1.msra.mxu0 0.0
    %2383 = vmatprep.subr.mxu0 0.0
    %2384 = vmatpush1.msra.mxu0 0.0
    %2385 = vmatprep.subr.mxu0 0.0
    %2386 = vmatpush1.msra.mxu0 0.0
    %2387 = vmatprep.subr.mxu0 0.0
    %2388 = vmatpush1.msra.mxu0 0.0
    %2389 = vmatprep.subr.mxu0 0.0
    %2390 = vmatpush1.msra.mxu0 0.0
    %2391 = vmatprep.subr.mxu0 0.0
    %2392 = vmatpush1.msra.mxu0 0.0
    %2393 = vmatprep.subr.mxu0 0.0
    %2394 = vmatpush1.msra.mxu0 0.0
    %2395 = vmatprep.subr.mxu0 0.0
    %2396 = vmatpush1.msra.mxu0 0.0
    %2397 = vmatprep.subr.mxu0 0.0
    %2398 = vmatpush1.msra.mxu0 0.0
    %2399 = vmatprep.subr.mxu0 0.0
    %2400 = vmatpush1.msra.mxu0 0.0
    %2401 = vmatprep.mubr.f32.mxu0 0.0
    %v2402 = vand.u32 %v2117, 4294901760
    %v2403 = vsub.f32 %v2117, %v2402
    %2404 = vmatmul.mubr.f32.gmra.mrb[0].mxu0 %v2403
    %v2405 = vpop.f32.mrb[0].mxu0
    %v2406 = vadd.f32 %v2316, %v2405
    %v2407 = vpop.f32.mrb[0].mxu0
    %2408 = vdwg.mxu0
    %2409 = vmatprep.subr.mxu0 0.0
    %v2410 = vand.u32 %v1005, 4294901760
    %2411 = vmatpush1.msra.mxu0 %v2410
    %2412 = vmatprep.subr.mxu0 0.0
    %v2413 = vand.u32 %v1006, 4294901760
    %2414 = vmatpush1.msra.mxu0 %v2413
    %2415 = vmatprep.subr.mxu0 0.0
    %v2416 = vand.u32 %v1007, 4294901760
    %2417 = vmatpush1.msra.mxu0 %v2416
    %2418 = vmatprep.subr.mxu0 0.0
    %v2419 = vand.u32 %v1008, 4294901760
    %2420 = vmatpush1.msra.mxu0 %v2419
    %2421 = vmatprep.subr.mxu0 0.0
    %v2422 = vand.u32 %v1009, 4294901760
    %2423 = vmatpush1.msra.mxu0 %v2422
    %2424 = vmatprep.subr.mxu0 0.0
    %v2425 = vand.u32 %v1010, 4294901760
    %2426 = vmatpush1.msra.mxu0 %v2425
    %2427 = vmatprep.subr.mxu0 0.0
    %v2428 = vand.u32 %v1011, 4294901760
    %2429 = vmatpush1.msra.mxu0 %v2428
    %2430 = vmatprep.subr.mxu0 0.0
    %v2431 = vand.u32 %v1012, 4294901760
    %2432 = vmatpush1.msra.mxu0 %v2431
    %2433 = vmatprep.subr.mxu0 0.0
    %v2434 = vand.u32 %v1013, 4294901760
    %2435 = vmatpush1.msra.mxu0 %v2434
    %2436 = vmatprep.subr.mxu0 0.0
    %2437 = vmatpush1.msra.mxu0 0.0
    %2438 = vmatprep.subr.mxu0 0.0
    %2439 = vmatpush1.msra.mxu0 0.0
    %2440 = vmatprep.subr.mxu0 0.0
    %2441 = vmatpush1.msra.mxu0 0.0
    %2442 = vmatprep.subr.mxu0 0.0
    %2443 = vmatpush1.msra.mxu0 0.0
    %2444 = vmatprep.subr.mxu0 0.0
    %2445 = vmatpush1.msra.mxu0 0.0
    %2446 = vmatprep.subr.mxu0 0.0
    %2447 = vmatpush1.msra.mxu0 0.0
    %2448 = vmatprep.subr.mxu0 0.0
    %2449 = vmatpush1.msra.mxu0 0.0
    %2450 = vmatprep.subr.mxu0 0.0
    %2451 = vmatpush1.msra.mxu0 0.0
    %2452 = vmatprep.subr.mxu0 0.0
    %2453 = vmatpush1.msra.mxu0 0.0
    %2454 = vmatprep.subr.mxu0 0.0
    %2455 = vmatpush1.msra.mxu0 0.0
    %2456 = vmatprep.subr.mxu0 0.0
    %2457 = vmatpush1.msra.mxu0 0.0
    %2458 = vmatprep.subr.mxu0 0.0
    %2459 = vmatpush1.msra.mxu0 0.0
    %2460 = vmatprep.subr.mxu0 0.0
    %2461 = vmatpush1.msra.mxu0 0.0
    %2462 = vmatprep.subr.mxu0 0.0
    %2463 = vmatpush1.msra.mxu0 0.0
    %2464 = vmatprep.subr.mxu0 0.0
    %2465 = vmatpush1.msra.mxu0 0.0
    %2466 = vmatprep.subr.mxu0 0.0
    %2467 = vmatpush1.msra.mxu0 0.0
    %2468 = vmatprep.subr.mxu0 0.0
    %2469 = vmatpush1.msra.mxu0 0.0
    %2470 = vmatprep.subr.mxu0 0.0
    %2471 = vmatpush1.msra.mxu0 0.0
    %2472 = vmatprep.subr.mxu0 0.0
    %2473 = vmatpush1.msra.mxu0 0.0
    %2474 = vmatprep.subr.mxu0 0.0
    %2475 = vmatpush1.msra.mxu0 0.0
    %2476 = vmatprep.subr.mxu0 0.0
    %2477 = vmatpush1.msra.mxu0 0.0
    %2478 = vmatprep.subr.mxu0 0.0
    %2479 = vmatpush1.msra.mxu0 0.0
    %2480 = vmatprep.subr.mxu0 0.0
    %2481 = vmatpush1.msra.mxu0 0.0
    %2482 = vmatprep.mubr.f32.mxu0 0.0
    %v2483 = vand.u32 %v2117, 4294901760
    %v2484 = vsub.f32 %v2117, %v2483
    %v2485 = vand.u32 %v2484, 4294901760
    %2486 = vmatmul.mubr.f32.gmra.mrb[0].mxu0 %v2485
    %v2487 = vpop.f32.mrb[0].mxu0
    %v2488 = vadd.f32 %v2406, %v2487
    %v2489 = vpop.f32.mrb[0].mxu0
    %2490 = vdwg.mxu0
    %2491 = vmatprep.subr.mxu0 0.0
    %v2492 = vand.u32 %v1005, 4294901760
    %v2493 = vsub.f32 %v1005, %v2492
    %v2494 = vand.u32 %v2493, 4294901760
    %2495 = vmatpush1.msra.mxu0 %v2494
    %2496 = vmatprep.subr.mxu0 0.0
    %v2497 = vand.u32 %v1006, 4294901760
    %v2498 = vsub.f32 %v1006, %v2497
    %v2499 = vand.u32 %v2498, 4294901760
    %2500 = vmatpush1.msra.mxu0 %v2499
    %2501 = vmatprep.subr.mxu0 0.0
    %v2502 = vand.u32 %v1007, 4294901760
    %v2503 = vsub.f32 %v1007, %v2502
    %v2504 = vand.u32 %v2503, 4294901760
    %2505 = vmatpush1.msra.mxu0 %v2504
    %2506 = vmatprep.subr.mxu0 0.0
    %v2507 = vand.u32 %v1008, 4294901760
    %v2508 = vsub.f32 %v1008, %v2507
    %v2509 = vand.u32 %v2508, 4294901760
    %2510 = vmatpush1.msra.mxu0 %v2509
    %2511 = vmatprep.subr.mxu0 0.0
    %v2512 = vand.u32 %v1009, 4294901760
    %v2513 = vsub.f32 %v1009, %v2512
    %v2514 = vand.u32 %v2513, 4294901760
    %2515 = vmatpush1.msra.mxu0 %v2514
    %2516 = vmatprep.subr.mxu0 0.0
    %v2517 = vand.u32 %v1010, 4294901760
    %v2518 = vsub.f32 %v1010, %v2517
    %v2519 = vand.u32 %v2518, 4294901760
    %2520 = vmatpush1.msra.mxu0 %v2519
    %2521 = vmatprep.subr.mxu0 0.0
    %v2522 = vand.u32 %v1011, 4294901760
    %v2523 = vsub.f32 %v1011, %v2522
    %v2524 = vand.u32 %v2523, 4294901760
    %2525 = vmatpush1.msra.mxu0 %v2524
    %2526 = vmatprep.subr.mxu0 0.0
    %v2527 = vand.u32 %v1012, 4294901760
    %v2528 = vsub.f32 %v1012, %v2527
    %v2529 = vand.u32 %v2528, 4294901760
    %2530 = vmatpush1.msra.mxu0 %v2529
    %2531 = vmatprep.subr.mxu0 0.0
    %v2532 = vand.u32 %v1013, 4294901760
    %v2533 = vsub.f32 %v1013, %v2532
    %v2534 = vand.u32 %v2533, 4294901760
    %2535 = vmatpush1.msra.mxu0 %v2534
    %2536 = vmatprep.subr.mxu0 0.0
    %2537 = vmatpush1.msra.mxu0 0.0
    %2538 = vmatprep.subr.mxu0 0.0
    %2539 = vmatpush1.msra.mxu0 0.0
    %2540 = vmatprep.subr.mxu0 0.0
    %2541 = vmatpush1.msra.mxu0 0.0
    %2542 = vmatprep.subr.mxu0 0.0
    %2543 = vmatpush1.msra.mxu0 0.0
    %2544 = vmatprep.subr.mxu0 0.0
    %2545 = vmatpush1.msra.mxu0 0.0
    %2546 = vmatprep.subr.mxu0 0.0
    %2547 = vmatpush1.msra.mxu0 0.0
    %2548 = vmatprep.subr.mxu0 0.0
    %2549 = vmatpush1.msra.mxu0 0.0
    %2550 = vmatprep.subr.mxu0 0.0
    %2551 = vmatpush1.msra.mxu0 0.0
    %2552 = vmatprep.subr.mxu0 0.0
    %2553 = vmatpush1.msra.mxu0 0.0
    %2554 = vmatprep.subr.mxu0 0.0
    %2555 = vmatpush1.msra.mxu0 0.0
    %2556 = vmatprep.subr.mxu0 0.0
    %2557 = vmatpush1.msra.mxu0 0.0
    %2558 = vmatprep.subr.mxu0 0.0
    %2559 = vmatpush1.msra.mxu0 0.0
    %2560 = vmatprep.subr.mxu0 0.0
    %2561 = vmatpush1.msra.mxu0 0.0
    %2562 = vmatprep.subr.mxu0 0.0
    %2563 = vmatpush1.msra.mxu0 0.0
    %2564 = vmatprep.subr.mxu0 0.0
    %2565 = vmatpush1.msra.mxu0 0.0
    %2566 = vmatprep.subr.mxu0 0.0
    %2567 = vmatpush1.msra.mxu0 0.0
    %2568 = vmatprep.subr.mxu0 0.0
    %2569 = vmatpush1.msra.mxu0 0.0
    %2570 = vmatprep.subr.mxu0 0.0
    %2571 = vmatpush1.msra.mxu0 0.0
    %2572 = vmatprep.subr.mxu0 0.0
    %2573 = vmatpush1.msra.mxu0 0.0
    %2574 = vmatprep.subr.mxu0 0.0
    %2575 = vmatpush1.msra.mxu0 0.0
    %2576 = vmatprep.subr.mxu0 0.0
    %2577 = vmatpush1.msra.mxu0 0.0
    %2578 = vmatprep.subr.mxu0 0.0
    %2579 = vmatpush1.msra.mxu0 0.0
    %2580 = vmatprep.subr.mxu0 0.0
    %2581 = vmatpush1.msra.mxu0 0.0
    %2582 = vmatprep.mubr.f32.mxu0 0.0
    %v2583 = vand.u32 %v2117, 4294901760
    %2584 = vmatmul.mubr.f32.gmra.mrb[0].mxu0 %v2583
    %v2585 = vpop.f32.mrb[0].mxu0
    %v2586 = vadd.f32 %v2488, %v2585
    %v2587 = vpop.f32.mrb[0].mxu0
    %2588 = vdwg.mxu0
    %2589 = vmatprep.subr.mxu0 0.0
    %v2590 = vand.u32 %v1005, 4294901760
    %2591 = vmatpush1.msra.mxu0 %v2590
    %2592 = vmatprep.subr.mxu0 0.0
    %v2593 = vand.u32 %v1006, 4294901760
    %2594 = vmatpush1.msra.mxu0 %v2593
    %2595 = vmatprep.subr.mxu0 0.0
    %v2596 = vand.u32 %v1007, 4294901760
    %2597 = vmatpush1.msra.mxu0 %v2596
    %2598 = vmatprep.subr.mxu0 0.0
    %v2599 = vand.u32 %v1008, 4294901760
    %2600 = vmatpush1.msra.mxu0 %v2599
    %2601 = vmatprep.subr.mxu0 0.0
    %v2602 = vand.u32 %v1009, 4294901760
    %2603 = vmatpush1.msra.mxu0 %v2602
    %2604 = vmatprep.subr.mxu0 0.0
    %v2605 = vand.u32 %v1010, 4294901760
    %2606 = vmatpush1.msra.mxu0 %v2605
    %2607 = vmatprep.subr.mxu0 0.0
    %v2608 = vand.u32 %v1011, 4294901760
    %2609 = vmatpush1.msra.mxu0 %v2608
    %2610 = vmatprep.subr.mxu0 0.0
    %v2611 = vand.u32 %v1012, 4294901760
    %2612 = vmatpush1.msra.mxu0 %v2611
    %2613 = vmatprep.subr.mxu0 0.0
    %v2614 = vand.u32 %v1013, 4294901760
    %2615 = vmatpush1.msra.mxu0 %v2614
    %2616 = vmatprep.subr.mxu0 0.0
    %2617 = vmatpush1.msra.mxu0 0.0
    %2618 = vmatprep.subr.mxu0 0.0
    %2619 = vmatpush1.msra.mxu0 0.0
    %2620 = vmatprep.subr.mxu0 0.0
    %2621 = vmatpush1.msra.mxu0 0.0
    %2622 = vmatprep.subr.mxu0 0.0
    %2623 = vmatpush1.msra.mxu0 0.0
    %2624 = vmatprep.subr.mxu0 0.0
    %2625 = vmatpush1.msra.mxu0 0.0
    %2626 = vmatprep.subr.mxu0 0.0
    %2627 = vmatpush1.msra.mxu0 0.0
    %2628 = vmatprep.subr.mxu0 0.0
    %2629 = vmatpush1.msra.mxu0 0.0
    %2630 = vmatprep.subr.mxu0 0.0
    %2631 = vmatpush1.msra.mxu0 0.0
    %2632 = vmatprep.subr.mxu0 0.0
    %2633 = vmatpush1.msra.mxu0 0.0
    %2634 = vmatprep.subr.mxu0 0.0
    %2635 = vmatpush1.msra.mxu0 0.0
    %2636 = vmatprep.subr.mxu0 0.0
    %2637 = vmatpush1.msra.mxu0 0.0
    %2638 = vmatprep.subr.mxu0 0.0
    %2639 = vmatpush1.msra.mxu0 0.0
    %2640 = vmatprep.subr.mxu0 0.0
    %2641 = vmatpush1.msra.mxu0 0.0
    %2642 = vmatprep.subr.mxu0 0.0
    %2643 = vmatpush1.msra.mxu0 0.0
    %2644 = vmatprep.subr.mxu0 0.0
    %2645 = vmatpush1.msra.mxu0 0.0
    %2646 = vmatprep.subr.mxu0 0.0
    %2647 = vmatpush1.msra.mxu0 0.0
    %2648 = vmatprep.subr.mxu0 0.0
    %2649 = vmatpush1.msra.mxu0 0.0
    %2650 = vmatprep.subr.mxu0 0.0
    %2651 = vmatpush1.msra.mxu0 0.0
    %2652 = vmatprep.subr.mxu0 0.0
    %2653 = vmatpush1.msra.mxu0 0.0
    %2654 = vmatprep.subr.mxu0 0.0
    %2655 = vmatpush1.msra.mxu0 0.0
    %2656 = vmatprep.subr.mxu0 0.0
    %2657 = vmatpush1.msra.mxu0 0.0
    %2658 = vmatprep.subr.mxu0 0.0
    %2659 = vmatpush1.msra.mxu0 0.0
    %2660 = vmatprep.subr.mxu0 0.0
    %2661 = vmatpush1.msra.mxu0 0.0
    %2662 = vmatprep.mubr.f32.mxu0 0.0
    %v2663 = vand.u32 %v2117, 4294901760
    %2664 = vmatmul.mubr.f32.gmra.mrb[0].mxu0 %v2663
    %v2665 = vpop.f32.mrb[0].mxu0
    %v2666 = vadd.f32 %v2586, %v2665
    %v2667 = vpop.f32.mrb[0].mxu0
    %2668 = vdwg.mxu0
    %v2669 = vmul.f32 %v1591, 256.0
    %v2670 = vround.ne.pseudo %v2669
    %v2671 = vmax.f32 %v2670, -2047.0
    %v2672 = vmin.f32 %v2671, 2047.0
    %v2673 = vmul.f32 %v2672, 0.00390625
    %v2674 = vld [vmem:[#allocation6] sm:$0xff]
    %v2675 = vld [vmem:[#allocation6 + $0x8] sm:$0xff]
    %v2676 = vld [vmem:[#allocation6 + $0x10] sm:$0xff]
    %v2677 = vld [vmem:[#allocation6 + $0x18] sm:$0xff]
    %v2678 = vld [vmem:[#allocation6 + $0x20] sm:$0xff]
    %v2679 = vld [vmem:[#allocation6 + $0x28] sm:$0xff]
    %2681 = vrot.lane.b32.xlu0 %v2673, 80
    %v2682 = vpop.permute.xlu0 %2681
    %v2683 = vsel %vm1601, %v2682, 0
    %2685 = vmatprep.subr.mxu0 0.0
    %v2686 = vand.u32 %v2674, 4294901760
    %2687 = vmatpush1.msra.mxu0 %v2686
    %2688 = vmatprep.subr.mxu0 0.0
    %v2689 = vand.u32 %v2675, 4294901760
    %2690 = vmatpush1.msra.mxu0 %v2689
    %2691 = vmatprep.subr.mxu0 0.0
    %v2692 = vand.u32 %v2676, 4294901760
    %2693 = vmatpush1.msra.mxu0 %v2692
    %2694 = vmatprep.subr.mxu0 0.0
    %v2695 = vand.u32 %v2677, 4294901760
    %2696 = vmatpush1.msra.mxu0 %v2695
    %2697 = vmatprep.subr.mxu0 0.0
    %v2698 = vand.u32 %v2678, 4294901760
    %2699 = vmatpush1.msra.mxu0 %v2698
    %2700 = vmatprep.subr.mxu0 0.0
    %v2701 = vand.u32 %v2679, 4294901760
    %2702 = vmatpush1.msra.mxu0 %v2701
    %2703 = vmatprep.subr.mxu0 0.0
    %2704 = vmatpush1.msra.mxu0 0.0
    %2705 = vmatprep.subr.mxu0 0.0
    %2706 = vmatpush1.msra.mxu0 0.0
    %2707 = vmatprep.subr.mxu0 0.0
    %2708 = vmatpush1.msra.mxu0 0.0
    %2709 = vmatprep.subr.mxu0 0.0
    %2710 = vmatpush1.msra.mxu0 0.0
    %2711 = vmatprep.subr.mxu0 0.0
    %2712 = vmatpush1.msra.mxu0 0.0
    %2713 = vmatprep.subr.mxu0 0.0
    %2714 = vmatpush1.msra.mxu0 0.0
    %2715 = vmatprep.subr.mxu0 0.0
    %2716 = vmatpush1.msra.mxu0 0.0
    %2717 = vmatprep.subr.mxu0 0.0
    %2718 = vmatpush1.msra.mxu0 0.0
    %2719 = vmatprep.subr.mxu0 0.0
    %2720 = vmatpush1.msra.mxu0 0.0
    %2721 = vmatprep.subr.mxu0 0.0
    %2722 = vmatpush1.msra.mxu0 0.0
    %2723 = vmatprep.subr.mxu0 0.0
    %2724 = vmatpush1.msra.mxu0 0.0
    %2725 = vmatprep.subr.mxu0 0.0
    %2726 = vmatpush1.msra.mxu0 0.0
    %2727 = vmatprep.subr.mxu0 0.0
    %2728 = vmatpush1.msra.mxu0 0.0
    %2729 = vmatprep.subr.mxu0 0.0
    %2730 = vmatpush1.msra.mxu0 0.0
    %2731 = vmatprep.subr.mxu0 0.0
    %2732 = vmatpush1.msra.mxu0 0.0
    %2733 = vmatprep.subr.mxu0 0.0
    %2734 = vmatpush1.msra.mxu0 0.0
    %2735 = vmatprep.subr.mxu0 0.0
    %2736 = vmatpush1.msra.mxu0 0.0
    %2737 = vmatprep.subr.mxu0 0.0
    %2738 = vmatpush1.msra.mxu0 0.0
    %2739 = vmatprep.subr.mxu0 0.0
    %2740 = vmatpush1.msra.mxu0 0.0
    %2741 = vmatprep.subr.mxu0 0.0
    %2742 = vmatpush1.msra.mxu0 0.0
    %2743 = vmatprep.subr.mxu0 0.0
    %2744 = vmatpush1.msra.mxu0 0.0
    %2745 = vmatprep.subr.mxu0 0.0
    %2746 = vmatpush1.msra.mxu0 0.0
    %2747 = vmatprep.subr.mxu0 0.0
    %2748 = vmatpush1.msra.mxu0 0.0
    %2749 = vmatprep.subr.mxu0 0.0
    %2750 = vmatpush1.msra.mxu0 0.0
    %2751 = vmatprep.subr.mxu0 0.0
    %2752 = vmatpush1.msra.mxu0 0.0
    %2753 = vmatprep.subr.mxu0 0.0
    %2754 = vmatpush1.msra.mxu0 0.0
    %2755 = vmatprep.mubr.f32.mxu0 0.0
    %v2756 = vand.u32 %v2683, 4294901760
    %v2757 = vsub.f32 %v2683, %v2756
    %v2758 = vand.u32 %v2757, 4294901760
    %v2759 = vsub.f32 %v2757, %v2758
    %v2760 = vand.u32 %v2759, 4294901760
    %2761 = vmatmul.mubr.f32.gmra.mrb[0].mxu0 %v2760
    %v2762 = vpop.f32.mrb[0].mxu0
    %v2763 = vadd.f32 0.0, %v2762
    %v2764 = vpop.f32.mrb[0].mxu0
    %2765 = vdwg.mxu0
    %2766 = vmatprep.subr.mxu0 0.0
    %v2767 = vand.u32 %v2674, 4294901760
    %v2768 = vsub.f32 %v2674, %v2767
    %v2769 = vand.u32 %v2768, 4294901760
    %v2770 = vsub.f32 %v2768, %v2769
    %v2771 = vand.u32 %v2770, 4294901760
    %2772 = vmatpush1.msra.mxu0 %v2771
    %2773 = vmatprep.subr.mxu0 0.0
    %v2774 = vand.u32 %v2675, 4294901760
    %v2775 = vsub.f32 %v2675, %v2774
    %v2776 = vand.u32 %v2775, 4294901760
    %v2777 = vsub.f32 %v2775, %v2776
    %v2778 = vand.u32 %v2777, 4294901760
    %2779 = vmatpush1.msra.mxu0 %v2778
    %2780 = vmatprep.subr.mxu0 0.0
    %v2781 = vand.u32 %v2676, 4294901760
    %v2782 = vsub.f32 %v2676, %v2781
    %v2783 = vand.u32 %v2782, 4294901760
    %v2784 = vsub.f32 %v2782, %v2783
    %v2785 = vand.u32 %v2784, 4294901760
    %2786 = vmatpush1.msra.mxu0 %v2785
    %2787 = vmatprep.subr.mxu0 0.0
    %v2788 = vand.u32 %v2677, 4294901760
    %v2789 = vsub.f32 %v2677, %v2788
    %v2790 = vand.u32 %v2789, 4294901760
    %v2791 = vsub.f32 %v2789, %v2790
    %v2792 = vand.u32 %v2791, 4294901760
    %2793 = vmatpush1.msra.mxu0 %v2792
    %2794 = vmatprep.subr.mxu0 0.0
    %v2795 = vand.u32 %v2678, 4294901760
    %v2796 = vsub.f32 %v2678, %v2795
    %v2797 = vand.u32 %v2796, 4294901760
    %v2798 = vsub.f32 %v2796, %v2797
    %v2799 = vand.u32 %v2798, 4294901760
    %2800 = vmatpush1.msra.mxu0 %v2799
    %2801 = vmatprep.subr.mxu0 0.0
    %v2802 = vand.u32 %v2679, 4294901760
    %v2803 = vsub.f32 %v2679, %v2802
    %v2804 = vand.u32 %v2803, 4294901760
    %v2805 = vsub.f32 %v2803, %v2804
    %v2806 = vand.u32 %v2805, 4294901760
    %2807 = vmatpush1.msra.mxu0 %v2806
    %2808 = vmatprep.subr.mxu0 0.0
    %2809 = vmatpush1.msra.mxu0 0.0
    %2810 = vmatprep.subr.mxu0 0.0
    %2811 = vmatpush1.msra.mxu0 0.0
    %2812 = vmatprep.subr.mxu0 0.0
    %2813 = vmatpush1.msra.mxu0 0.0
    %2814 = vmatprep.subr.mxu0 0.0
    %2815 = vmatpush1.msra.mxu0 0.0
    %2816 = vmatprep.subr.mxu0 0.0
    %2817 = vmatpush1.msra.mxu0 0.0
    %2818 = vmatprep.subr.mxu0 0.0
    %2819 = vmatpush1.msra.mxu0 0.0
    %2820 = vmatprep.subr.mxu0 0.0
    %2821 = vmatpush1.msra.mxu0 0.0
    %2822 = vmatprep.subr.mxu0 0.0
    %2823 = vmatpush1.msra.mxu0 0.0
    %2824 = vmatprep.subr.mxu0 0.0
    %2825 = vmatpush1.msra.mxu0 0.0
    %2826 = vmatprep.subr.mxu0 0.0
    %2827 = vmatpush1.msra.mxu0 0.0
    %2828 = vmatprep.subr.mxu0 0.0
    %2829 = vmatpush1.msra.mxu0 0.0
    %2830 = vmatprep.subr.mxu0 0.0
    %2831 = vmatpush1.msra.mxu0 0.0
    %2832 = vmatprep.subr.mxu0 0.0
    %2833 = vmatpush1.msra.mxu0 0.0
    %2834 = vmatprep.subr.mxu0 0.0
    %2835 = vmatpush1.msra.mxu0 0.0
    %2836 = vmatprep.subr.mxu0 0.0
    %2837 = vmatpush1.msra.mxu0 0.0
    %2838 = vmatprep.subr.mxu0 0.0
    %2839 = vmatpush1.msra.mxu0 0.0
    %2840 = vmatprep.subr.mxu0 0.0
    %2841 = vmatpush1.msra.mxu0 0.0
    %2842 = vmatprep.subr.mxu0 0.0
    %2843 = vmatpush1.msra.mxu0 0.0
    %2844 = vmatprep.subr.mxu0 0.0
    %2845 = vmatpush1.msra.mxu0 0.0
    %2846 = vmatprep.subr.mxu0 0.0
    %2847 = vmatpush1.msra.mxu0 0.0
    %2848 = vmatprep.subr.mxu0 0.0
    %2849 = vmatpush1.msra.mxu0 0.0
    %2850 = vmatprep.subr.mxu0 0.0
    %2851 = vmatpush1.msra.mxu0 0.0
    %2852 = vmatprep.subr.mxu0 0.0
    %2853 = vmatpush1.msra.mxu0 0.0
    %2854 = vmatprep.subr.mxu0 0.0
    %2855 = vmatpush1.msra.mxu0 0.0
    %2856 = vmatprep.subr.mxu0 0.0
    %2857 = vmatpush1.msra.mxu0 0.0
    %2858 = vmatprep.subr.mxu0 0.0
    %2859 = vmatpush1.msra.mxu0 0.0
    %2860 = vmatprep.mubr.f32.mxu0 0.0
    %v2861 = vand.u32 %v2683, 4294901760
    %2862 = vmatmul.mubr.f32.gmra.mrb[0].mxu0 %v2861
    %v2863 = vpop.f32.mrb[0].mxu0
    %v2864 = vadd.f32 %v2763, %v2863
    %v2865 = vpop.f32.mrb[0].mxu0
    %2866 = vdwg.mxu0
    %2867 = vmatprep.subr.mxu0 0.0
    %v2868 = vand.u32 %v2674, 4294901760
    %v2869 = vsub.f32 %v2674, %v2868
    %2870 = vmatpush1.msra.mxu0 %v2869
    %2871 = vmatprep.subr.mxu0 0.0
    %v2872 = vand.u32 %v2675, 4294901760
    %v2873 = vsub.f32 %v2675, %v2872
    %2874 = vmatpush1.msra.mxu0 %v2873
    %2875 = vmatprep.subr.mxu0 0.0
    %v2876 = vand.u32 %v2676, 4294901760
    %v2877 = vsub.f32 %v2676, %v2876
    %2878 = vmatpush1.msra.mxu0 %v2877
    %2879 = vmatprep.subr.mxu0 0.0
    %v2880 = vand.u32 %v2677, 4294901760
    %v2881 = vsub.f32 %v2677, %v2880
    %2882 = vmatpush1.msra.mxu0 %v2881
    %2883 = vmatprep.subr.mxu0 0.0
    %v2884 = vand.u32 %v2678, 4294901760
    %v2885 = vsub.f32 %v2678, %v2884
    %2886 = vmatpush1.msra.mxu0 %v2885
    %2887 = vmatprep.subr.mxu0 0.0
    %v2888 = vand.u32 %v2679, 4294901760
    %v2889 = vsub.f32 %v2679, %v2888
    %2890 = vmatpush1.msra.mxu0 %v2889
    %2891 = vmatprep.subr.mxu0 0.0
    %2892 = vmatpush1.msra.mxu0 0.0
    %2893 = vmatprep.subr.mxu0 0.0
    %2894 = vmatpush1.msra.mxu0 0.0
    %2895 = vmatprep.subr.mxu0 0.0
    %2896 = vmatpush1.msra.mxu0 0.0
    %2897 = vmatprep.subr.mxu0 0.0
    %2898 = vmatpush1.msra.mxu0 0.0
    %2899 = vmatprep.subr.mxu0 0.0
    %2900 = vmatpush1.msra.mxu0 0.0
    %2901 = vmatprep.subr.mxu0 0.0
    %2902 = vmatpush1.msra.mxu0 0.0
    %2903 = vmatprep.subr.mxu0 0.0
    %2904 = vmatpush1.msra.mxu0 0.0
    %2905 = vmatprep.subr.mxu0 0.0
    %2906 = vmatpush1.msra.mxu0 0.0
    %2907 = vmatprep.subr.mxu0 0.0
    %2908 = vmatpush1.msra.mxu0 0.0
    %2909 = vmatprep.subr.mxu0 0.0
    %2910 = vmatpush1.msra.mxu0 0.0
    %2911 = vmatprep.subr.mxu0 0.0
    %2912 = vmatpush1.msra.mxu0 0.0
    %2913 = vmatprep.subr.mxu0 0.0
    %2914 = vmatpush1.msra.mxu0 0.0
    %2915 = vmatprep.subr.mxu0 0.0
    %2916 = vmatpush1.msra.mxu0 0.0
    %2917 = vmatprep.subr.mxu0 0.0
    %2918 = vmatpush1.msra.mxu0 0.0
    %2919 = vmatprep.subr.mxu0 0.0
    %2920 = vmatpush1.msra.mxu0 0.0
    %2921 = vmatprep.subr.mxu0 0.0
    %2922 = vmatpush1.msra.mxu0 0.0
    %2923 = vmatprep.subr.mxu0 0.0
    %2924 = vmatpush1.msra.mxu0 0.0
    %2925 = vmatprep.subr.mxu0 0.0
    %2926 = vmatpush1.msra.mxu0 0.0
    %2927 = vmatprep.subr.mxu0 0.0
    %2928 = vmatpush1.msra.mxu0 0.0
    %2929 = vmatprep.subr.mxu0 0.0
    %2930 = vmatpush1.msra.mxu0 0.0
    %2931 = vmatprep.subr.mxu0 0.0
    %2932 = vmatpush1.msra.mxu0 0.0
    %2933 = vmatprep.subr.mxu0 0.0
    %2934 = vmatpush1.msra.mxu0 0.0
    %2935 = vmatprep.subr.mxu0 0.0
    %2936 = vmatpush1.msra.mxu0 0.0
    %2937 = vmatprep.subr.mxu0 0.0
    %2938 = vmatpush1.msra.mxu0 0.0
    %2939 = vmatprep.subr.mxu0 0.0
    %2940 = vmatpush1.msra.mxu0 0.0
    %2941 = vmatprep.subr.mxu0 0.0
    %2942 = vmatpush1.msra.mxu0 0.0
    %2943 = vmatprep.mubr.f32.mxu0 0.0
    %v2944 = vand.u32 %v2683, 4294901760
    %v2945 = vsub.f32 %v2683, %v2944
    %2946 = vmatmul.mubr.f32.gmra.mrb[0].mxu0 %v2945
    %v2947 = vpop.f32.mrb[0].mxu0
    %v2948 = vadd.f32 %v2864, %v2947
    %v2949 = vpop.f32.mrb[0].mxu0
    %2950 = vdwg.mxu0
    %2951 = vmatprep.subr.mxu0 0.0
    %v2952 = vand.u32 %v2674, 4294901760
    %2953 = vmatpush1.msra.mxu0 %v2952
    %2954 = vmatprep.subr.mxu0 0.0
    %v2955 = vand.u32 %v2675, 4294901760
    %2956 = vmatpush1.msra.mxu0 %v2955
    %2957 = vmatprep.subr.mxu0 0.0
    %v2958 = vand.u32 %v2676, 4294901760
    %2959 = vmatpush1.msra.mxu0 %v2958
    %2960 = vmatprep.subr.mxu0 0.0
    %v2961 = vand.u32 %v2677, 4294901760
    %2962 = vmatpush1.msra.mxu0 %v2961
    %2963 = vmatprep.subr.mxu0 0.0
    %v2964 = vand.u32 %v2678, 4294901760
    %2965 = vmatpush1.msra.mxu0 %v2964
    %2966 = vmatprep.subr.mxu0 0.0
    %v2967 = vand.u32 %v2679, 4294901760
    %2968 = vmatpush1.msra.mxu0 %v2967
    %2969 = vmatprep.subr.mxu0 0.0
    %2970 = vmatpush1.msra.mxu0 0.0
    %2971 = vmatprep.subr.mxu0 0.0
    %2972 = vmatpush1.msra.mxu0 0.0
    %2973 = vmatprep.subr.mxu0 0.0
    %2974 = vmatpush1.msra.mxu0 0.0
    %2975 = vmatprep.subr.mxu0 0.0
    %2976 = vmatpush1.msra.mxu0 0.0
    %2977 = vmatprep.subr.mxu0 0.0
    %2978 = vmatpush1.msra.mxu0 0.0
    %2979 = vmatprep.subr.mxu0 0.0
    %2980 = vmatpush1.msra.mxu0 0.0
    %2981 = vmatprep.subr.mxu0 0.0
    %2982 = vmatpush1.msra.mxu0 0.0
    %2983 = vmatprep.subr.mxu0 0.0
    %2984 = vmatpush1.msra.mxu0 0.0
    %2985 = vmatprep.subr.mxu0 0.0
    %2986 = vmatpush1.msra.mxu0 0.0
    %2987 = vmatprep.subr.mxu0 0.0
    %2988 = vmatpush1.msra.mxu0 0.0
    %2989 = vmatprep.subr.mxu0 0.0
    %2990 = vmatpush1.msra.mxu0 0.0
    %2991 = vmatprep.subr.mxu0 0.0
    %2992 = vmatpush1.msra.mxu0 0.0
    %2993 = vmatprep.subr.mxu0 0.0
    %2994 = vmatpush1.msra.mxu0 0.0
    %2995 = vmatprep.subr.mxu0 0.0
    %2996 = vmatpush1.msra.mxu0 0.0
    %2997 = vmatprep.subr.mxu0 0.0
    %2998 = vmatpush1.msra.mxu0 0.0
    %2999 = vmatprep.subr.mxu0 0.0
    %3000 = vmatpush1.msra.mxu0 0.0
    %3001 = vmatprep.subr.mxu0 0.0
    %3002 = vmatpush1.msra.mxu0 0.0
    %3003 = vmatprep.subr.mxu0 0.0
    %3004 = vmatpush1.msra.mxu0 0.0
    %3005 = vmatprep.subr.mxu0 0.0
    %3006 = vmatpush1.msra.mxu0 0.0
    %3007 = vmatprep.subr.mxu0 0.0
    %3008 = vmatpush1.msra.mxu0 0.0
    %3009 = vmatprep.subr.mxu0 0.0
    %3010 = vmatpush1.msra.mxu0 0.0
    %3011 = vmatprep.subr.mxu0 0.0
    %3012 = vmatpush1.msra.mxu0 0.0
    %3013 = vmatprep.subr.mxu0 0.0
    %3014 = vmatpush1.msra.mxu0 0.0
    %3015 = vmatprep.subr.mxu0 0.0
    %3016 = vmatpush1.msra.mxu0 0.0
    %3017 = vmatprep.subr.mxu0 0.0
    %3018 = vmatpush1.msra.mxu0 0.0
    %3019 = vmatprep.subr.mxu0 0.0
    %3020 = vmatpush1.msra.mxu0 0.0
    %3021 = vmatprep.mubr.f32.mxu0 0.0
    %v3022 = vand.u32 %v2683, 4294901760
    %v3023 = vsub.f32 %v2683, %v3022
    %v3024 = vand.u32 %v3023, 4294901760
    %3025 = vmatmul.mubr.f32.gmra.mrb[0].mxu0 %v3024
    %v3026 = vpop.f32.mrb[0].mxu0
    %v3027 = vadd.f32 %v2948, %v3026
    %v3028 = vpop.f32.mrb[0].mxu0
    %3029 = vdwg.mxu0
    %3030 = vmatprep.subr.mxu0 0.0
    %v3031 = vand.u32 %v2674, 4294901760
    %v3032 = vsub.f32 %v2674, %v3031
    %v3033 = vand.u32 %v3032, 4294901760
    %3034 = vmatpush1.msra.mxu0 %v3033
    %3035 = vmatprep.subr.mxu0 0.0
    %v3036 = vand.u32 %v2675, 4294901760
    %v3037 = vsub.f32 %v2675, %v3036
    %v3038 = vand.u32 %v3037, 4294901760
    %3039 = vmatpush1.msra.mxu0 %v3038
    %3040 = vmatprep.subr.mxu0 0.0
    %v3041 = vand.u32 %v2676, 4294901760
    %v3042 = vsub.f32 %v2676, %v3041
    %v3043 = vand.u32 %v3042, 4294901760
    %3044 = vmatpush1.msra.mxu0 %v3043
    %3045 = vmatprep.subr.mxu0 0.0
    %v3046 = vand.u32 %v2677, 4294901760
    %v3047 = vsub.f32 %v2677, %v3046
    %v3048 = vand.u32 %v3047, 4294901760
    %3049 = vmatpush1.msra.mxu0 %v3048
    %3050 = vmatprep.subr.mxu0 0.0
    %v3051 = vand.u32 %v2678, 4294901760
    %v3052 = vsub.f32 %v2678, %v3051
    %v3053 = vand.u32 %v3052, 4294901760
    %3054 = vmatpush1.msra.mxu0 %v3053
    %3055 = vmatprep.subr.mxu0 0.0
    %v3056 = vand.u32 %v2679, 4294901760
    %v3057 = vsub.f32 %v2679, %v3056
    %v3058 = vand.u32 %v3057, 4294901760
    %3059 = vmatpush1.msra.mxu0 %v3058
    %3060 = vmatprep.subr.mxu0 0.0
    %3061 = vmatpush1.msra.mxu0 0.0
    %3062 = vmatprep.subr.mxu0 0.0
    %3063 = vmatpush1.msra.mxu0 0.0
    %3064 = vmatprep.subr.mxu0 0.0
    %3065 = vmatpush1.msra.mxu0 0.0
    %3066 = vmatprep.subr.mxu0 0.0
    %3067 = vmatpush1.msra.mxu0 0.0
    %3068 = vmatprep.subr.mxu0 0.0
    %3069 = vmatpush1.msra.mxu0 0.0
    %3070 = vmatprep.subr.mxu0 0.0
    %3071 = vmatpush1.msra.mxu0 0.0
    %3072 = vmatprep.subr.mxu0 0.0
    %3073 = vmatpush1.msra.mxu0 0.0
    %3074 = vmatprep.subr.mxu0 0.0
    %3075 = vmatpush1.msra.mxu0 0.0
    %3076 = vmatprep.subr.mxu0 0.0
    %3077 = vmatpush1.msra.mxu0 0.0
    %3078 = vmatprep.subr.mxu0 0.0
    %3079 = vmatpush1.msra.mxu0 0.0
    %3080 = vmatprep.subr.mxu0 0.0
    %3081 = vmatpush1.msra.mxu0 0.0
    %3082 = vmatprep.subr.mxu0 0.0
    %3083 = vmatpush1.msra.mxu0 0.0
    %3084 = vmatprep.subr.mxu0 0.0
    %3085 = vmatpush1.msra.mxu0 0.0
    %3086 = vmatprep.subr.mxu0 0.0
    %3087 = vmatpush1.msra.mxu0 0.0
    %3088 = vmatprep.subr.mxu0 0.0
    %3089 = vmatpush1.msra.mxu0 0.0
    %3090 = vmatprep.subr.mxu0 0.0
    %3091 = vmatpush1.msra.mxu0 0.0
    %3092 = vmatprep.subr.mxu0 0.0
    %3093 = vmatpush1.msra.mxu0 0.0
    %3094 = vmatprep.subr.mxu0 0.0
    %3095 = vmatpush1.msra.mxu0 0.0
    %3096 = vmatprep.subr.mxu0 0.0
    %3097 = vmatpush1.msra.mxu0 0.0
    %3098 = vmatprep.subr.mxu0 0.0
    %3099 = vmatpush1.msra.mxu0 0.0
    %3100 = vmatprep.subr.mxu0 0.0
    %3101 = vmatpush1.msra.mxu0 0.0
    %3102 = vmatprep.subr.mxu0 0.0
    %3103 = vmatpush1.msra.mxu0 0.0
    %3104 = vmatprep.subr.mxu0 0.0
    %3105 = vmatpush1.msra.mxu0 0.0
    %3106 = vmatprep.subr.mxu0 0.0
    %3107 = vmatpush1.msra.mxu0 0.0
    %3108 = vmatprep.subr.mxu0 0.0
    %3109 = vmatpush1.msra.mxu0 0.0
    %3110 = vmatprep.subr.mxu0 0.0
    %3111 = vmatpush1.msra.mxu0 0.0
    %3112 = vmatprep.mubr.f32.mxu0 0.0
    %v3113 = vand.u32 %v2683, 4294901760
    %3114 = vmatmul.mubr.f32.gmra.mrb[0].mxu0 %v3113
    %v3115 = vpop.f32.mrb[0].mxu0
    %v3116 = vadd.f32 %v3027, %v3115
    %v3117 = vpop.f32.mrb[0].mxu0
    %3118 = vdwg.mxu0
    %3119 = vmatprep.subr.mxu0 0.0
    %v3120 = vand.u32 %v2674, 4294901760
    %3121 = vmatpush1.msra.mxu0 %v3120
    %3122 = vmatprep.subr.mxu0 0.0
    %v3123 = vand.u32 %v2675, 4294901760
    %3124 = vmatpush1.msra.mxu0 %v3123
    %3125 = vmatprep.subr.mxu0 0.0
    %v3126 = vand.u32 %v2676, 4294901760
    %3127 = vmatpush1.msra.mxu0 %v3126
    %3128 = vmatprep.subr.mxu0 0.0
    %v3129 = vand.u32 %v2677, 4294901760
    %3130 = vmatpush1.msra.mxu0 %v3129
    %3131 = vmatprep.subr.mxu0 0.0
    %v3132 = vand.u32 %v2678, 4294901760
    %3133 = vmatpush1.msra.mxu0 %v3132
    %3134 = vmatprep.subr.mxu0 0.0
    %v3135 = vand.u32 %v2679, 4294901760
    %3136 = vmatpush1.msra.mxu0 %v3135
    %3137 = vmatprep.subr.mxu0 0.0
    %3138 = vmatpush1.msra.mxu0 0.0
    %3139 = vmatprep.subr.mxu0 0.0
    %3140 = vmatpush1.msra.mxu0 0.0
    %3141 = vmatprep.subr.mxu0 0.0
    %3142 = vmatpush1.msra.mxu0 0.0
    %3143 = vmatprep.subr.mxu0 0.0
    %3144 = vmatpush1.msra.mxu0 0.0
    %3145 = vmatprep.subr.mxu0 0.0
    %3146 = vmatpush1.msra.mxu0 0.0
    %3147 = vmatprep.subr.mxu0 0.0
    %3148 = vmatpush1.msra.mxu0 0.0
    %3149 = vmatprep.subr.mxu0 0.0
    %3150 = vmatpush1.msra.mxu0 0.0
    %3151 = vmatprep.subr.mxu0 0.0
    %3152 = vmatpush1.msra.mxu0 0.0
    %3153 = vmatprep.subr.mxu0 0.0
    %3154 = vmatpush1.msra.mxu0 0.0
    %3155 = vmatprep.subr.mxu0 0.0
    %3156 = vmatpush1.msra.mxu0 0.0
    %3157 = vmatprep.subr.mxu0 0.0
    %3158 = vmatpush1.msra.mxu0 0.0
    %3159 = vmatprep.subr.mxu0 0.0
    %3160 = vmatpush1.msra.mxu0 0.0
    %3161 = vmatprep.subr.mxu0 0.0
    %3162 = vmatpush1.msra.mxu0 0.0
    %3163 = vmatprep.subr.mxu0 0.0
    %3164 = vmatpush1.msra.mxu0 0.0
    %3165 = vmatprep.subr.mxu0 0.0
    %3166 = vmatpush1.msra.mxu0 0.0
    %3167 = vmatprep.subr.mxu0 0.0
    %3168 = vmatpush1.msra.mxu0 0.0
    %3169 = vmatprep.subr.mxu0 0.0
    %3170 = vmatpush1.msra.mxu0 0.0
    %3171 = vmatprep.subr.mxu0 0.0
    %3172 = vmatpush1.msra.mxu0 0.0
    %3173 = vmatprep.subr.mxu0 0.0
    %3174 = vmatpush1.msra.mxu0 0.0
    %3175 = vmatprep.subr.mxu0 0.0
    %3176 = vmatpush1.msra.mxu0 0.0
    %3177 = vmatprep.subr.mxu0 0.0
    %3178 = vmatpush1.msra.mxu0 0.0
    %3179 = vmatprep.subr.mxu0 0.0
    %3180 = vmatpush1.msra.mxu0 0.0
    %3181 = vmatprep.subr.mxu0 0.0
    %3182 = vmatpush1.msra.mxu0 0.0
    %3183 = vmatprep.subr.mxu0 0.0
    %3184 = vmatpush1.msra.mxu0 0.0
    %3185 = vmatprep.subr.mxu0 0.0
    %3186 = vmatpush1.msra.mxu0 0.0
    %3187 = vmatprep.subr.mxu0 0.0
    %3188 = vmatpush1.msra.mxu0 0.0
    %3189 = vmatprep.mubr.f32.mxu0 0.0
    %v3190 = vand.u32 %v2683, 4294901760
    %3191 = vmatmul.mubr.f32.gmra.mrb[0].mxu0 %v3190
    %v3192 = vpop.f32.mrb[0].mxu0
    %v3193 = vadd.f32 %v3116, %v3192
    %v3194 = vpop.f32.mrb[0].mxu0
    %3195 = vdwg.mxu0
    %v3196 = vand.u32 2147483647, %v3193
    %v3197 = vld [vmem:[#allocation9] sm:$0xff]
    %v3198 = vld [vmem:[#allocation9 + $0x8] sm:$0xff]
    %v3199 = vld [vmem:[#allocation9 + $0x10] sm:$0xff]
    %v3200 = vld [vmem:[#allocation9 + $0x18] sm:$0xff]
    %vm3201 = vcmask 261120
    %v3203 = vsel %vm3201, %v3196, 0
    %3205 = vmatprep.subr.mxu0 0.0
    %v3206 = vand.u32 %v3197, 4294901760
    %3207 = vmatpush1.msra.mxu0 %v3206
    %3208 = vmatprep.subr.mxu0 0.0
    %v3209 = vand.u32 %v3198, 4294901760
    %3210 = vmatpush1.msra.mxu0 %v3209
    %3211 = vmatprep.subr.mxu0 0.0
    %v3212 = vand.u32 %v3199, 4294901760
    %3213 = vmatpush1.msra.mxu0 %v3212
    %3214 = vmatprep.subr.mxu0 0.0
    %v3215 = vand.u32 %v3200, 4294901760
    %3216 = vmatpush1.msra.mxu0 %v3215
    %3217 = vmatprep.subr.mxu0 0.0
    %3218 = vmatpush1.msra.mxu0 0.0
    %3219 = vmatprep.subr.mxu0 0.0
    %3220 = vmatpush1.msra.mxu0 0.0
    %3221 = vmatprep.subr.mxu0 0.0
    %3222 = vmatpush1.msra.mxu0 0.0
    %3223 = vmatprep.subr.mxu0 0.0
    %3224 = vmatpush1.msra.mxu0 0.0
    %3225 = vmatprep.subr.mxu0 0.0
    %3226 = vmatpush1.msra.mxu0 0.0
    %3227 = vmatprep.subr.mxu0 0.0
    %3228 = vmatpush1.msra.mxu0 0.0
    %3229 = vmatprep.subr.mxu0 0.0
    %3230 = vmatpush1.msra.mxu0 0.0
    %3231 = vmatprep.subr.mxu0 0.0
    %3232 = vmatpush1.msra.mxu0 0.0
    %3233 = vmatprep.subr.mxu0 0.0
    %3234 = vmatpush1.msra.mxu0 0.0
    %3235 = vmatprep.subr.mxu0 0.0
    %3236 = vmatpush1.msra.mxu0 0.0
    %3237 = vmatprep.subr.mxu0 0.0
    %3238 = vmatpush1.msra.mxu0 0.0
    %3239 = vmatprep.subr.mxu0 0.0
    %3240 = vmatpush1.msra.mxu0 0.0
    %3241 = vmatprep.subr.mxu0 0.0
    %3242 = vmatpush1.msra.mxu0 0.0
    %3243 = vmatprep.subr.mxu0 0.0
    %3244 = vmatpush1.msra.mxu0 0.0
    %3245 = vmatprep.subr.mxu0 0.0
    %3246 = vmatpush1.msra.mxu0 0.0
    %3247 = vmatprep.subr.mxu0 0.0
    %3248 = vmatpush1.msra.mxu0 0.0
    %3249 = vmatprep.subr.mxu0 0.0
    %3250 = vmatpush1.msra.mxu0 0.0
    %3251 = vmatprep.subr.mxu0 0.0
    %3252 = vmatpush1.msra.mxu0 0.0
    %3253 = vmatprep.subr.mxu0 0.0
    %3254 = vmatpush1.msra.mxu0 0.0
    %3255 = vmatprep.subr.mxu0 0.0
    %3256 = vmatpush1.msra.mxu0 0.0
    %3257 = vmatprep.subr.mxu0 0.0
    %3258 = vmatpush1.msra.mxu0 0.0
    %3259 = vmatprep.subr.mxu0 0.0
    %3260 = vmatpush1.msra.mxu0 0.0
    %3261 = vmatprep.subr.mxu0 0.0
    %3262 = vmatpush1.msra.mxu0 0.0
    %3263 = vmatprep.subr.mxu0 0.0
    %3264 = vmatpush1.msra.mxu0 0.0
    %3265 = vmatprep.subr.mxu0 0.0
    %3266 = vmatpush1.msra.mxu0 0.0
    %3267 = vmatprep.subr.mxu0 0.0
    %3268 = vmatpush1.msra.mxu0 0.0
    %3269 = vmatprep.subr.mxu0 0.0
    %3270 = vmatpush1.msra.mxu0 0.0
    %3271 = vmatprep.subr.mxu0 0.0
    %3272 = vmatpush1.msra.mxu0 0.0
    %3273 = vmatprep.mubr.f32.mxu0 0.0
    %v3274 = vand.u32 %v3203, 4294901760
    %v3275 = vsub.f32 %v3203, %v3274
    %v3276 = vand.u32 %v3275, 4294901760
    %v3277 = vsub.f32 %v3275, %v3276
    %v3278 = vand.u32 %v3277, 4294901760
    %3279 = vmatmul.mubr.f32.gmra.mrb[0].mxu0 %v3278
    %v3280 = vpop.f32.mrb[0].mxu0
    %v3281 = vadd.f32 0.0, %v3280
    %v3282 = vpop.f32.mrb[0].mxu0
    %3283 = vdwg.mxu0
    %3284 = vmatprep.subr.mxu0 0.0
    %v3285 = vand.u32 %v3197, 4294901760
    %v3286 = vsub.f32 %v3197, %v3285
    %v3287 = vand.u32 %v3286, 4294901760
    %v3288 = vsub.f32 %v3286, %v3287
    %v3289 = vand.u32 %v3288, 4294901760
    %3290 = vmatpush1.msra.mxu0 %v3289
    %3291 = vmatprep.subr.mxu0 0.0
    %v3292 = vand.u32 %v3198, 4294901760
    %v3293 = vsub.f32 %v3198, %v3292
    %v3294 = vand.u32 %v3293, 4294901760
    %v3295 = vsub.f32 %v3293, %v3294
    %v3296 = vand.u32 %v3295, 4294901760
    %3297 = vmatpush1.msra.mxu0 %v3296
    %3298 = vmatprep.subr.mxu0 0.0
    %v3299 = vand.u32 %v3199, 4294901760
    %v3300 = vsub.f32 %v3199, %v3299
    %v3301 = vand.u32 %v3300, 4294901760
    %v3302 = vsub.f32 %v3300, %v3301
    %v3303 = vand.u32 %v3302, 4294901760
    %3304 = vmatpush1.msra.mxu0 %v3303
    %3305 = vmatprep.subr.mxu0 0.0
    %v3306 = vand.u32 %v3200, 4294901760
    %v3307 = vsub.f32 %v3200, %v3306
    %v3308 = vand.u32 %v3307, 4294901760
    %v3309 = vsub.f32 %v3307, %v3308
    %v3310 = vand.u32 %v3309, 4294901760
    %3311 = vmatpush1.msra.mxu0 %v3310
    %3312 = vmatprep.subr.mxu0 0.0
    %3313 = vmatpush1.msra.mxu0 0.0
    %3314 = vmatprep.subr.mxu0 0.0
    %3315 = vmatpush1.msra.mxu0 0.0
    %3316 = vmatprep.subr.mxu0 0.0
    %3317 = vmatpush1.msra.mxu0 0.0
    %3318 = vmatprep.subr.mxu0 0.0
    %3319 = vmatpush1.msra.mxu0 0.0
    %3320 = vmatprep.subr.mxu0 0.0
    %3321 = vmatpush1.msra.mxu0 0.0
    %3322 = vmatprep.subr.mxu0 0.0
    %3323 = vmatpush1.msra.mxu0 0.0
    %3324 = vmatprep.subr.mxu0 0.0
    %3325 = vmatpush1.msra.mxu0 0.0
    %3326 = vmatprep.subr.mxu0 0.0
    %3327 = vmatpush1.msra.mxu0 0.0
    %3328 = vmatprep.subr.mxu0 0.0
    %3329 = vmatpush1.msra.mxu0 0.0
    %3330 = vmatprep.subr.mxu0 0.0
    %3331 = vmatpush1.msra.mxu0 0.0
    %3332 = vmatprep.subr.mxu0 0.0
    %3333 = vmatpush1.msra.mxu0 0.0
    %3334 = vmatprep.subr.mxu0 0.0
    %3335 = vmatpush1.msra.mxu0 0.0
    %3336 = vmatprep.subr.mxu0 0.0
    %3337 = vmatpush1.msra.mxu0 0.0
    %3338 = vmatprep.subr.mxu0 0.0
    %3339 = vmatpush1.msra.mxu0 0.0
    %3340 = vmatprep.subr.mxu0 0.0
    %3341 = vmatpush1.msra.mxu0 0.0
    %3342 = vmatprep.subr.mxu0 0.0
    %3343 = vmatpush1.msra.mxu0 0.0
    %3344 = vmatprep.subr.mxu0 0.0
    %3345 = vmatpush1.msra.mxu0 0.0
    %3346 = vmatprep.subr.mxu0 0.0
    %3347 = vmatpush1.msra.mxu0 0.0
    %3348 = vmatprep.subr.mxu0 0.0
    %3349 = vmatpush1.msra.mxu0 0.0
    %3350 = vmatprep.subr.mxu0 0.0
    %3351 = vmatpush1.msra.mxu0 0.0
    %3352 = vmatprep.subr.mxu0 0.0
    %3353 = vmatpush1.msra.mxu0 0.0
    %3354 = vmatprep.subr.mxu0 0.0
    %3355 = vmatpush1.msra.mxu0 0.0
    %3356 = vmatprep.subr.mxu0 0.0
    %3357 = vmatpush1.msra.mxu0 0.0
    %3358 = vmatprep.subr.mxu0 0.0
    %3359 = vmatpush1.msra.mxu0 0.0
    %3360 = vmatprep.subr.mxu0 0.0
    %3361 = vmatpush1.msra.mxu0 0.0
    %3362 = vmatprep.subr.mxu0 0.0
    %3363 = vmatpush1.msra.mxu0 0.0
    %3364 = vmatprep.subr.mxu0 0.0
    %3365 = vmatpush1.msra.mxu0 0.0
    %3366 = vmatprep.subr.mxu0 0.0
    %3367 = vmatpush1.msra.mxu0 0.0
    %3368 = vmatprep.mubr.f32.mxu0 0.0
    %v3369 = vand.u32 %v3203, 4294901760
    %3370 = vmatmul.mubr.f32.gmra.mrb[0].mxu0 %v3369
    %v3371 = vpop.f32.mrb[0].mxu0
    %v3372 = vadd.f32 %v3281, %v3371
    %v3373 = vpop.f32.mrb[0].mxu0
    %3374 = vdwg.mxu0
    %3375 = vmatprep.subr.mxu0 0.0
    %v3376 = vand.u32 %v3197, 4294901760
    %v3377 = vsub.f32 %v3197, %v3376
    %3378 = vmatpush1.msra.mxu0 %v3377
    %3379 = vmatprep.subr.mxu0 0.0
    %v3380 = vand.u32 %v3198, 4294901760
    %v3381 = vsub.f32 %v3198, %v3380
    %3382 = vmatpush1.msra.mxu0 %v3381
    %3383 = vmatprep.subr.mxu0 0.0
    %v3384 = vand.u32 %v3199, 4294901760
    %v3385 = vsub.f32 %v3199, %v3384
    %3386 = vmatpush1.msra.mxu0 %v3385
    %3387 = vmatprep.subr.mxu0 0.0
    %v3388 = vand.u32 %v3200, 4294901760
    %v3389 = vsub.f32 %v3200, %v3388
    %3390 = vmatpush1.msra.mxu0 %v3389
    %3391 = vmatprep.subr.mxu0 0.0
    %3392 = vmatpush1.msra.mxu0 0.0
    %3393 = vmatprep.subr.mxu0 0.0
    %3394 = vmatpush1.msra.mxu0 0.0
    %3395 = vmatprep.subr.mxu0 0.0
    %3396 = vmatpush1.msra.mxu0 0.0
    %3397 = vmatprep.subr.mxu0 0.0
    %3398 = vmatpush1.msra.mxu0 0.0
    %3399 = vmatprep.subr.mxu0 0.0
    %3400 = vmatpush1.msra.mxu0 0.0
    %3401 = vmatprep.subr.mxu0 0.0
    %3402 = vmatpush1.msra.mxu0 0.0
    %3403 = vmatprep.subr.mxu0 0.0
    %3404 = vmatpush1.msra.mxu0 0.0
    %3405 = vmatprep.subr.mxu0 0.0
    %3406 = vmatpush1.msra.mxu0 0.0
    %3407 = vmatprep.subr.mxu0 0.0
    %3408 = vmatpush1.msra.mxu0 0.0
    %3409 = vmatprep.subr.mxu0 0.0
    %3410 = vmatpush1.msra.mxu0 0.0
    %3411 = vmatprep.subr.mxu0 0.0
    %3412 = vmatpush1.msra.mxu0 0.0
    %3413 = vmatprep.subr.mxu0 0.0
    %3414 = vmatpush1.msra.mxu0 0.0
    %3415 = vmatprep.subr.mxu0 0.0
    %3416 = vmatpush1.msra.mxu0 0.0
    %3417 = vmatprep.subr.mxu0 0.0
    %3418 = vmatpush1.msra.mxu0 0.0
    %3419 = vmatprep.subr.mxu0 0.0
    %3420 = vmatpush1.msra.mxu0 0.0
    %3421 = vmatprep.subr.mxu0 0.0
    %3422 = vmatpush1.msra.mxu0 0.0
    %3423 = vmatprep.subr.mxu0 0.0
    %3424 = vmatpush1.msra.mxu0 0.0
    %3425 = vmatprep.subr.mxu0 0.0
    %3426 = vmatpush1.msra.mxu0 0.0
    %3427 = vmatprep.subr.mxu0 0.0
    %3428 = vmatpush1.msra.mxu0 0.0
    %3429 = vmatprep.subr.mxu0 0.0
    %3430 = vmatpush1.msra.mxu0 0.0
    %3431 = vmatprep.subr.mxu0 0.0
    %3432 = vmatpush1.msra.mxu0 0.0
    %3433 = vmatprep.subr.mxu0 0.0
    %3434 = vmatpush1.msra.mxu0 0.0
    %3435 = vmatprep.subr.mxu0 0.0
    %3436 = vmatpush1.msra.mxu0 0.0
    %3437 = vmatprep.subr.mxu0 0.0
    %3438 = vmatpush1.msra.mxu0 0.0
    %3439 = vmatprep.subr.mxu0 0.0
    %3440 = vmatpush1.msra.mxu0 0.0
    %3441 = vmatprep.subr.mxu0 0.0
    %3442 = vmatpush1.msra.mxu0 0.0
    %3443 = vmatprep.subr.mxu0 0.0
    %3444 = vmatpush1.msra.mxu0 0.0
    %3445 = vmatprep.subr.mxu0 0.0
    %3446 = vmatpush1.msra.mxu0 0.0
    %3447 = vmatprep.mubr.f32.mxu0 0.0
    %v3448 = vand.u32 %v3203, 4294901760
    %v3449 = vsub.f32 %v3203, %v3448
    %3450 = vmatmul.mubr.f32.gmra.mrb[0].mxu0 %v3449
    %v3451 = vpop.f32.mrb[0].mxu0
    %v3452 = vadd.f32 %v3372, %v3451
    %v3453 = vpop.f32.mrb[0].mxu0
    %3454 = vdwg.mxu0
    %3455 = vmatprep.subr.mxu0 0.0
    %v3456 = vand.u32 %v3197, 4294901760
    %3457 = vmatpush1.msra.mxu0 %v3456
    %3458 = vmatprep.subr.mxu0 0.0
    %v3459 = vand.u32 %v3198, 4294901760
    %3460 = vmatpush1.msra.mxu0 %v3459
    %3461 = vmatprep.subr.mxu0 0.0
    %v3462 = vand.u32 %v3199, 4294901760
    %3463 = vmatpush1.msra.mxu0 %v3462
    %3464 = vmatprep.subr.mxu0 0.0
    %v3465 = vand.u32 %v3200, 4294901760
    %3466 = vmatpush1.msra.mxu0 %v3465
    %3467 = vmatprep.subr.mxu0 0.0
    %3468 = vmatpush1.msra.mxu0 0.0
    %3469 = vmatprep.subr.mxu0 0.0
    %3470 = vmatpush1.msra.mxu0 0.0
    %3471 = vmatprep.subr.mxu0 0.0
    %3472 = vmatpush1.msra.mxu0 0.0
    %3473 = vmatprep.subr.mxu0 0.0
    %3474 = vmatpush1.msra.mxu0 0.0
    %3475 = vmatprep.subr.mxu0 0.0
    %3476 = vmatpush1.msra.mxu0 0.0
    %3477 = vmatprep.subr.mxu0 0.0
    %3478 = vmatpush1.msra.mxu0 0.0
    %3479 = vmatprep.subr.mxu0 0.0
    %3480 = vmatpush1.msra.mxu0 0.0
    %3481 = vmatprep.subr.mxu0 0.0
    %3482 = vmatpush1.msra.mxu0 0.0
    %3483 = vmatprep.subr.mxu0 0.0
    %3484 = vmatpush1.msra.mxu0 0.0
    %3485 = vmatprep.subr.mxu0 0.0
    %3486 = vmatpush1.msra.mxu0 0.0
    %3487 = vmatprep.subr.mxu0 0.0
    %3488 = vmatpush1.msra.mxu0 0.0
    %3489 = vmatprep.subr.mxu0 0.0
    %3490 = vmatpush1.msra.mxu0 0.0
    %3491 = vmatprep.subr.mxu0 0.0
    %3492 = vmatpush1.msra.mxu0 0.0
    %3493 = vmatprep.subr.mxu0 0.0
    %3494 = vmatpush1.msra.mxu0 0.0
    %3495 = vmatprep.subr.mxu0 0.0
    %3496 = vmatpush1.msra.mxu0 0.0
    %3497 = vmatprep.subr.mxu0 0.0
    %3498 = vmatpush1.msra.mxu0 0.0
    %3499 = vmatprep.subr.mxu0 0.0
    %3500 = vmatpush1.msra.mxu0 0.0
    %3501 = vmatprep.subr.mxu0 0.0
    %3502 = vmatpush1.msra.mxu0 0.0
    %3503 = vmatprep.subr.mxu0 0.0
    %3504 = vmatpush1.msra.mxu0 0.0
    %3505 = vmatprep.subr.mxu0 0.0
    %3506 = vmatpush1.msra.mxu0 0.0
    %3507 = vmatprep.subr.mxu0 0.0
    %3508 = vmatpush1.msra.mxu0 0.0
    %3509 = vmatprep.subr.mxu0 0.0
    %3510 = vmatpush1.msra.mxu0 0.0
    %3511 = vmatprep.subr.mxu0 0.0
    %3512 = vmatpush1.msra.mxu0 0.0
    %3513 = vmatprep.subr.mxu0 0.0
    %3514 = vmatpush1.msra.mxu0 0.0
    %3515 = vmatprep.subr.mxu0 0.0
    %3516 = vmatpush1.msra.mxu0 0.0
    %3517 = vmatprep.subr.mxu0 0.0
    %3518 = vmatpush1.msra.mxu0 0.0
    %3519 = vmatprep.subr.mxu0 0.0
    %3520 = vmatpush1.msra.mxu0 0.0
    %3521 = vmatprep.subr.mxu0 0.0
    %3522 = vmatpush1.msra.mxu0 0.0
    %3523 = vmatprep.mubr.f32.mxu0 0.0
    %v3524 = vand.u32 %v3203, 4294901760
    %v3525 = vsub.f32 %v3203, %v3524
    %v3526 = vand.u32 %v3525, 4294901760
    %3527 = vmatmul.mubr.f32.gmra.mrb[0].mxu0 %v3526
    %v3528 = vpop.f32.mrb[0].mxu0
    %v3529 = vadd.f32 %v3452, %v3528
    %v3530 = vpop.f32.mrb[0].mxu0
    %3531 = vdwg.mxu0
    %3532 = vmatprep.subr.mxu0 0.0
    %v3533 = vand.u32 %v3197, 4294901760
    %v3534 = vsub.f32 %v3197, %v3533
    %v3535 = vand.u32 %v3534, 4294901760
    %3536 = vmatpush1.msra.mxu0 %v3535
    %3537 = vmatprep.subr.mxu0 0.0
    %v3538 = vand.u32 %v3198, 4294901760
    %v3539 = vsub.f32 %v3198, %v3538
    %v3540 = vand.u32 %v3539, 4294901760
    %3541 = vmatpush1.msra.mxu0 %v3540
    %3542 = vmatprep.subr.mxu0 0.0
    %v3543 = vand.u32 %v3199, 4294901760
    %v3544 = vsub.f32 %v3199, %v3543
    %v3545 = vand.u32 %v3544, 4294901760
    %3546 = vmatpush1.msra.mxu0 %v3545
    %3547 = vmatprep.subr.mxu0 0.0
    %v3548 = vand.u32 %v3200, 4294901760
    %v3549 = vsub.f32 %v3200, %v3548
    %v3550 = vand.u32 %v3549, 4294901760
    %3551 = vmatpush1.msra.mxu0 %v3550
    %3552 = vmatprep.subr.mxu0 0.0
    %3553 = vmatpush1.msra.mxu0 0.0
    %3554 = vmatprep.subr.mxu0 0.0
    %3555 = vmatpush1.msra.mxu0 0.0
    %3556 = vmatprep.subr.mxu0 0.0
    %3557 = vmatpush1.msra.mxu0 0.0
    %3558 = vmatprep.subr.mxu0 0.0
    %3559 = vmatpush1.msra.mxu0 0.0
    %3560 = vmatprep.subr.mxu0 0.0
    %3561 = vmatpush1.msra.mxu0 0.0
    %3562 = vmatprep.subr.mxu0 0.0
    %3563 = vmatpush1.msra.mxu0 0.0
    %3564 = vmatprep.subr.mxu0 0.0
    %3565 = vmatpush1.msra.mxu0 0.0
    %3566 = vmatprep.subr.mxu0 0.0
    %3567 = vmatpush1.msra.mxu0 0.0
    %3568 = vmatprep.subr.mxu0 0.0
    %3569 = vmatpush1.msra.mxu0 0.0
    %3570 = vmatprep.subr.mxu0 0.0
    %3571 = vmatpush1.msra.mxu0 0.0
    %3572 = vmatprep.subr.mxu0 0.0
    %3573 = vmatpush1.msra.mxu0 0.0
    %3574 = vmatprep.subr.mxu0 0.0
    %3575 = vmatpush1.msra.mxu0 0.0
    %3576 = vmatprep.subr.mxu0 0.0
    %3577 = vmatpush1.msra.mxu0 0.0
    %3578 = vmatprep.subr.mxu0 0.0
    %3579 = vmatpush1.msra.mxu0 0.0
    %3580 = vmatprep.subr.mxu0 0.0
    %3581 = vmatpush1.msra.mxu0 0.0
    %3582 = vmatprep.subr.mxu0 0.0
    %3583 = vmatpush1.msra.mxu0 0.0
    %3584 = vmatprep.subr.mxu0 0.0
    %3585 = vmatpush1.msra.mxu0 0.0
    %3586 = vmatprep.subr.mxu0 0.0
    %3587 = vmatpush1.msra.mxu0 0.0
    %3588 = vmatprep.subr.mxu0 0.0
    %3589 = vmatpush1.msra.mxu0 0.0
    %3590 = vmatprep.subr.mxu0 0.0
    %3591 = vmatpush1.msra.mxu0 0.0
    %3592 = vmatprep.subr.mxu0 0.0
    %3593 = vmatpush1.msra.mxu0 0.0
    %3594 = vmatprep.subr.mxu0 0.0
    %3595 = vmatpush1.msra.mxu0 0.0
    %3596 = vmatprep.subr.mxu0 0.0
    %3597 = vmatpush1.msra.mxu0 0.0
    %3598 = vmatprep.subr.mxu0 0.0
    %3599 = vmatpush1.msra.mxu0 0.0
    %3600 = vmatprep.subr.mxu0 0.0
    %3601 = vmatpush1.msra.mxu0 0.0
    %3602 = vmatprep.subr.mxu0 0.0
    %3603 = vmatpush1.msra.mxu0 0.0
    %3604 = vmatprep.subr.mxu0 0.0
    %3605 = vmatpush1.msra.mxu0 0.0
    %3606 = vmatprep.subr.mxu0 0.0
    %3607 = vmatpush1.msra.mxu0 0.0
    %3608 = vmatprep.mubr.f32.mxu0 0.0
    %v3609 = vand.u32 %v3203, 4294901760
    %3610 = vmatmul.mubr.f32.gmra.mrb[0].mxu0 %v3609
    %v3611 = vpop.f32.mrb[0].mxu0
    %v3612 = vadd.f32 %v3529, %v3611
    %v3613 = vpop.f32.mrb[0].mxu0
    %3614 = vdwg.mxu0
    %3615 = vmatprep.subr.mxu0 0.0
    %v3616 = vand.u32 %v3197, 4294901760
    %3617 = vmatpush1.msra.mxu0 %v3616
    %3618 = vmatprep.subr.mxu0 0.0
    %v3619 = vand.u32 %v3198, 4294901760
    %3620 = vmatpush1.msra.mxu0 %v3619
    %3621 = vmatprep.subr.mxu0 0.0
    %v3622 = vand.u32 %v3199, 4294901760
    %3623 = vmatpush1.msra.mxu0 %v3622
    %3624 = vmatprep.subr.mxu0 0.0
    %v3625 = vand.u32 %v3200, 4294901760
    %3626 = vmatpush1.msra.mxu0 %v3625
    %3627 = vmatprep.subr.mxu0 0.0
    %3628 = vmatpush1.msra.mxu0 0.0
    %3629 = vmatprep.subr.mxu0 0.0
    %3630 = vmatpush1.msra.mxu0 0.0
    %3631 = vmatprep.subr.mxu0 0.0
    %3632 = vmatpush1.msra.mxu0 0.0
    %3633 = vmatprep.subr.mxu0 0.0
    %3634 = vmatpush1.msra.mxu0 0.0
    %3635 = vmatprep.subr.mxu0 0.0
    %3636 = vmatpush1.msra.mxu0 0.0
    %3637 = vmatprep.subr.mxu0 0.0
    %3638 = vmatpush1.msra.mxu0 0.0
    %3639 = vmatprep.subr.mxu0 0.0
    %3640 = vmatpush1.msra.mxu0 0.0
    %3641 = vmatprep.subr.mxu0 0.0
    %3642 = vmatpush1.msra.mxu0 0.0
    %3643 = vmatprep.subr.mxu0 0.0
    %3644 = vmatpush1.msra.mxu0 0.0
    %3645 = vmatprep.subr.mxu0 0.0
    %3646 = vmatpush1.msra.mxu0 0.0
    %3647 = vmatprep.subr.mxu0 0.0
    %3648 = vmatpush1.msra.mxu0 0.0
    %3649 = vmatprep.subr.mxu0 0.0
    %3650 = vmatpush1.msra.mxu0 0.0
    %3651 = vmatprep.subr.mxu0 0.0
    %3652 = vmatpush1.msra.mxu0 0.0
    %3653 = vmatprep.subr.mxu0 0.0
    %3654 = vmatpush1.msra.mxu0 0.0
    %3655 = vmatprep.subr.mxu0 0.0
    %3656 = vmatpush1.msra.mxu0 0.0
    %3657 = vmatprep.subr.mxu0 0.0
    %3658 = vmatpush1.msra.mxu0 0.0
    %3659 = vmatprep.subr.mxu0 0.0
    %3660 = vmatpush1.msra.mxu0 0.0
    %3661 = vmatprep.subr.mxu0 0.0
    %3662 = vmatpush1.msra.mxu0 0.0
    %3663 = vmatprep.subr.mxu0 0.0
    %3664 = vmatpush1.msra.mxu0 0.0
    %3665 = vmatprep.subr.mxu0 0.0
    %3666 = vmatpush1.msra.mxu0 0.0
    %3667 = vmatprep.subr.mxu0 0.0
    %3668 = vmatpush1.msra.mxu0 0.0
    %3669 = vmatprep.subr.mxu0 0.0
    %3670 = vmatpush1.msra.mxu0 0.0
    %3671 = vmatprep.subr.mxu0 0.0
    %3672 = vmatpush1.msra.mxu0 0.0
    %3673 = vmatprep.subr.mxu0 0.0
    %3674 = vmatpush1.msra.mxu0 0.0
    %3675 = vmatprep.subr.mxu0 0.0
    %3676 = vmatpush1.msra.mxu0 0.0
    %3677 = vmatprep.subr.mxu0 0.0
    %3678 = vmatpush1.msra.mxu0 0.0
    %3679 = vmatprep.subr.mxu0 0.0
    %3680 = vmatpush1.msra.mxu0 0.0
    %3681 = vmatprep.subr.mxu0 0.0
    %3682 = vmatpush1.msra.mxu0 0.0
    %3683 = vmatprep.mubr.f32.mxu0 0.0
    %v3684 = vand.u32 %v3203, 4294901760
    %3685 = vmatmul.mubr.f32.gmra.mrb[0].mxu0 %v3684
    %v3686 = vpop.f32.mrb[0].mxu0
    %v3687 = vadd.f32 %v3612, %v3686
    %v3688 = vpop.f32.mrb[0].mxu0
    %3689 = vdwg.mxu0
    %v3690 = vadd.f32 %v2666, %v3687
    %v3691 = vld [vmem:[#allocation10] sm:$0xff]
    %v3692 = vld [vmem:[#allocation10 + $0x8] sm:$0xff]
    %v3693 = vld [vmem:[#allocation10 + $0x10] sm:$0xff]
    %v3694 = vld [vmem:[#allocation10 + $0x18] sm:$0xff]
    %3695 = vrot.lane.b32.xlu0 %v3196, 96
    %v3696 = vpop.permute.xlu0 %3695
    %v3697 = vsel %vm3201, %v3696, 0
    %3699 = vmatprep.subr.mxu0 0.0
    %v3700 = vand.u32 %v3691, 4294901760
    %3701 = vmatpush1.msra.mxu0 %v3700
    %3702 = vmatprep.subr.mxu0 0.0
    %v3703 = vand.u32 %v3692, 4294901760
    %3704 = vmatpush1.msra.mxu0 %v3703
    %3705 = vmatprep.subr.mxu0 0.0
    %v3706 = vand.u32 %v3693, 4294901760
    %3707 = vmatpush1.msra.mxu0 %v3706
    %3708 = vmatprep.subr.mxu0 0.0
    %v3709 = vand.u32 %v3694, 4294901760
    %3710 = vmatpush1.msra.mxu0 %v3709
    %3711 = vmatprep.subr.mxu0 0.0
    %3712 = vmatpush1.msra.mxu0 0.0
    %3713 = vmatprep.subr.mxu0 0.0
    %3714 = vmatpush1.msra.mxu0 0.0
    %3715 = vmatprep.subr.mxu0 0.0
    %3716 = vmatpush1.msra.mxu0 0.0
    %3717 = vmatprep.subr.mxu0 0.0
    %3718 = vmatpush1.msra.mxu0 0.0
    %3719 = vmatprep.subr.mxu0 0.0
    %3720 = vmatpush1.msra.mxu0 0.0
    %3721 = vmatprep.subr.mxu0 0.0
    %3722 = vmatpush1.msra.mxu0 0.0
    %3723 = vmatprep.subr.mxu0 0.0
    %3724 = vmatpush1.msra.mxu0 0.0
    %3725 = vmatprep.subr.mxu0 0.0
    %3726 = vmatpush1.msra.mxu0 0.0
    %3727 = vmatprep.subr.mxu0 0.0
    %3728 = vmatpush1.msra.mxu0 0.0
    %3729 = vmatprep.subr.mxu0 0.0
    %3730 = vmatpush1.msra.mxu0 0.0
    %3731 = vmatprep.subr.mxu0 0.0
    %3732 = vmatpush1.msra.mxu0 0.0
    %3733 = vmatprep.subr.mxu0 0.0
    %3734 = vmatpush1.msra.mxu0 0.0
    %3735 = vmatprep.subr.mxu0 0.0
    %3736 = vmatpush1.msra.mxu0 0.0
    %3737 = vmatprep.subr.mxu0 0.0
    %3738 = vmatpush1.msra.mxu0 0.0
    %3739 = vmatprep.subr.mxu0 0.0
    %3740 = vmatpush1.msra.mxu0 0.0
    %3741 = vmatprep.subr.mxu0 0.0
    %3742 = vmatpush1.msra.mxu0 0.0
    %3743 = vmatprep.subr.mxu0 0.0
    %3744 = vmatpush1.msra.mxu0 0.0
    %3745 = vmatprep.subr.mxu0 0.0
    %3746 = vmatpush1.msra.mxu0 0.0
    %3747 = vmatprep.subr.mxu0 0.0
    %3748 = vmatpush1.msra.mxu0 0.0
    %3749 = vmatprep.subr.mxu0 0.0
    %3750 = vmatpush1.msra.mxu0 0.0
    %3751 = vmatprep.subr.mxu0 0.0
    %3752 = vmatpush1.msra.mxu0 0.0
    %3753 = vmatprep.subr.mxu0 0.0
    %3754 = vmatpush1.msra.mxu0 0.0
    %3755 = vmatprep.subr.mxu0 0.0
    %3756 = vmatpush1.msra.mxu0 0.0
    %3757 = vmatprep.subr.mxu0 0.0
    %3758 = vmatpush1.msra.mxu0 0.0
    %3759 = vmatprep.subr.mxu0 0.0
    %3760 = vmatpush1.msra.mxu0 0.0
    %3761 = vmatprep.subr.mxu0 0.0
    %3762 = vmatpush1.msra.mxu0 0.0
    %3763 = vmatprep.subr.mxu0 0.0
    %3764 = vmatpush1.msra.mxu0 0.0
    %3765 = vmatprep.subr.mxu0 0.0
    %3766 = vmatpush1.msra.mxu0 0.0
    %3767 = vmatprep.mubr.f32.mxu0 0.0
    %v3768 = vand.u32 %v3697, 4294901760
    %v3769 = vsub.f32 %v3697, %v3768
    %v3770 = vand.u32 %v3769, 4294901760
    %v3771 = vsub.f32 %v3769, %v3770
    %v3772 = vand.u32 %v3771, 4294901760
    %3773 = vmatmul.mubr.f32.gmra.mrb[0].mxu0 %v3772
    %v3774 = vpop.f32.mrb[0].mxu0
    %v3775 = vadd.f32 0.0, %v3774
    %v3776 = vpop.f32.mrb[0].mxu0
    %3777 = vdwg.mxu0
    %3778 = vmatprep.subr.mxu0 0.0
    %v3779 = vand.u32 %v3691, 4294901760
    %v3780 = vsub.f32 %v3691, %v3779
    %v3781 = vand.u32 %v3780, 4294901760
    %v3782 = vsub.f32 %v3780, %v3781
    %v3783 = vand.u32 %v3782, 4294901760
    %3784 = vmatpush1.msra.mxu0 %v3783
    %3785 = vmatprep.subr.mxu0 0.0
    %v3786 = vand.u32 %v3692, 4294901760
    %v3787 = vsub.f32 %v3692, %v3786
    %v3788 = vand.u32 %v3787, 4294901760
    %v3789 = vsub.f32 %v3787, %v3788
    %v3790 = vand.u32 %v3789, 4294901760
    %3791 = vmatpush1.msra.mxu0 %v3790
    %3792 = vmatprep.subr.mxu0 0.0
    %v3793 = vand.u32 %v3693, 4294901760
    %v3794 = vsub.f32 %v3693, %v3793
    %v3795 = vand.u32 %v3794, 4294901760
    %v3796 = vsub.f32 %v3794, %v3795
    %v3797 = vand.u32 %v3796, 4294901760
    %3798 = vmatpush1.msra.mxu0 %v3797
    %3799 = vmatprep.subr.mxu0 0.0
    %v3800 = vand.u32 %v3694, 4294901760
    %v3801 = vsub.f32 %v3694, %v3800
    %v3802 = vand.u32 %v3801, 4294901760
    %v3803 = vsub.f32 %v3801, %v3802
    %v3804 = vand.u32 %v3803, 4294901760
    %3805 = vmatpush1.msra.mxu0 %v3804
    %3806 = vmatprep.subr.mxu0 0.0
    %3807 = vmatpush1.msra.mxu0 0.0
    %3808 = vmatprep.subr.mxu0 0.0
    %3809 = vmatpush1.msra.mxu0 0.0
    %3810 = vmatprep.subr.mxu0 0.0
    %3811 = vmatpush1.msra.mxu0 0.0
    %3812 = vmatprep.subr.mxu0 0.0
    %3813 = vmatpush1.msra.mxu0 0.0
    %3814 = vmatprep.subr.mxu0 0.0
    %3815 = vmatpush1.msra.mxu0 0.0
    %3816 = vmatprep.subr.mxu0 0.0
    %3817 = vmatpush1.msra.mxu0 0.0
    %3818 = vmatprep.subr.mxu0 0.0
    %3819 = vmatpush1.msra.mxu0 0.0
    %3820 = vmatprep.subr.mxu0 0.0
    %3821 = vmatpush1.msra.mxu0 0.0
    %3822 = vmatprep.subr.mxu0 0.0
    %3823 = vmatpush1.msra.mxu0 0.0
    %3824 = vmatprep.subr.mxu0 0.0
    %3825 = vmatpush1.msra.mxu0 0.0
    %3826 = vmatprep.subr.mxu0 0.0
    %3827 = vmatpush1.msra.mxu0 0.0
    %3828 = vmatprep.subr.mxu0 0.0
    %3829 = vmatpush1.msra.mxu0 0.0
    %3830 = vmatprep.subr.mxu0 0.0
    %3831 = vmatpush1.msra.mxu0 0.0
    %3832 = vmatprep.subr.mxu0 0.0
    %3833 = vmatpush1.msra.mxu0 0.0
    %3834 = vmatprep.subr.mxu0 0.0
    %3835 = vmatpush1.msra.mxu0 0.0
    %3836 = vmatprep.subr.mxu0 0.0
    %3837 = vmatpush1.msra.mxu0 0.0
    %3838 = vmatprep.subr.mxu0 0.0
    %3839 = vmatpush1.msra.mxu0 0.0
    %3840 = vmatprep.subr.mxu0 0.0
    %3841 = vmatpush1.msra.mxu0 0.0
    %3842 = vmatprep.subr.mxu0 0.0
    %3843 = vmatpush1.msra.mxu0 0.0
    %3844 = vmatprep.subr.mxu0 0.0
    %3845 = vmatpush1.msra.mxu0 0.0
    %3846 = vmatprep.subr.mxu0 0.0
    %3847 = vmatpush1.msra.mxu0 0.0
    %3848 = vmatprep.subr.mxu0 0.0
    %3849 = vmatpush1.msra.mxu0 0.0
    %3850 = vmatprep.subr.mxu0 0.0
    %3851 = vmatpush1.msra.mxu0 0.0
    %3852 = vmatprep.subr.mxu0 0.0
    %3853 = vmatpush1.msra.mxu0 0.0
    %3854 = vmatprep.subr.mxu0 0.0
    %3855 = vmatpush1.msra.mxu0 0.0
    %3856 = vmatprep.subr.mxu0 0.0
    %3857 = vmatpush1.msra.mxu0 0.0
    %3858 = vmatprep.subr.mxu0 0.0
    %3859 = vmatpush1.msra.mxu0 0.0
    %3860 = vmatprep.subr.mxu0 0.0
    %3861 = vmatpush1.msra.mxu0 0.0
    %3862 = vmatprep.mubr.f32.mxu0 0.0
    %v3863 = vand.u32 %v3697, 4294901760
    %3864 = vmatmul.mubr.f32.gmra.mrb[0].mxu0 %v3863
    %v3865 = vpop.f32.mrb[0].mxu0
    %v3866 = vadd.f32 %v3775, %v3865
    %v3867 = vpop.f32.mrb[0].mxu0
    %3868 = vdwg.mxu0
    %3869 = vmatprep.subr.mxu0 0.0
    %v3870 = vand.u32 %v3691, 4294901760
    %v3871 = vsub.f32 %v3691, %v3870
    %3872 = vmatpush1.msra.mxu0 %v3871
    %3873 = vmatprep.subr.mxu0 0.0
    %v3874 = vand.u32 %v3692, 4294901760
    %v3875 = vsub.f32 %v3692, %v3874
    %3876 = vmatpush1.msra.mxu0 %v3875
    %3877 = vmatprep.subr.mxu0 0.0
    %v3878 = vand.u32 %v3693, 4294901760
    %v3879 = vsub.f32 %v3693, %v3878
    %3880 = vmatpush1.msra.mxu0 %v3879
    %3881 = vmatprep.subr.mxu0 0.0
    %v3882 = vand.u32 %v3694, 4294901760
    %v3883 = vsub.f32 %v3694, %v3882
    %3884 = vmatpush1.msra.mxu0 %v3883
    %3885 = vmatprep.subr.mxu0 0.0
    %3886 = vmatpush1.msra.mxu0 0.0
    %3887 = vmatprep.subr.mxu0 0.0
    %3888 = vmatpush1.msra.mxu0 0.0
    %3889 = vmatprep.subr.mxu0 0.0
    %3890 = vmatpush1.msra.mxu0 0.0
    %3891 = vmatprep.subr.mxu0 0.0
    %3892 = vmatpush1.msra.mxu0 0.0
    %3893 = vmatprep.subr.mxu0 0.0
    %3894 = vmatpush1.msra.mxu0 0.0
    %3895 = vmatprep.subr.mxu0 0.0
    %3896 = vmatpush1.msra.mxu0 0.0
    %3897 = vmatprep.subr.mxu0 0.0
    %3898 = vmatpush1.msra.mxu0 0.0
    %3899 = vmatprep.subr.mxu0 0.0
    %3900 = vmatpush1.msra.mxu0 0.0
    %3901 = vmatprep.subr.mxu0 0.0
    %3902 = vmatpush1.msra.mxu0 0.0
    %3903 = vmatprep.subr.mxu0 0.0
    %3904 = vmatpush1.msra.mxu0 0.0
    %3905 = vmatprep.subr.mxu0 0.0
    %3906 = vmatpush1.msra.mxu0 0.0
    %3907 = vmatprep.subr.mxu0 0.0
    %3908 = vmatpush1.msra.mxu0 0.0
    %3909 = vmatprep.subr.mxu0 0.0
    %3910 = vmatpush1.msra.mxu0 0.0
    %3911 = vmatprep.subr.mxu0 0.0
    %3912 = vmatpush1.msra.mxu0 0.0
    %3913 = vmatprep.subr.mxu0 0.0
    %3914 = vmatpush1.msra.mxu0 0.0
    %3915 = vmatprep.subr.mxu0 0.0
    %3916 = vmatpush1.msra.mxu0 0.0
    %3917 = vmatprep.subr.mxu0 0.0
    %3918 = vmatpush1.msra.mxu0 0.0
    %3919 = vmatprep.subr.mxu0 0.0
    %3920 = vmatpush1.msra.mxu0 0.0
    %3921 = vmatprep.subr.mxu0 0.0
    %3922 = vmatpush1.msra.mxu0 0.0
    %3923 = vmatprep.subr.mxu0 0.0
    %3924 = vmatpush1.msra.mxu0 0.0
    %3925 = vmatprep.subr.mxu0 0.0
    %3926 = vmatpush1.msra.mxu0 0.0
    %3927 = vmatprep.subr.mxu0 0.0
    %3928 = vmatpush1.msra.mxu0 0.0
    %3929 = vmatprep.subr.mxu0 0.0
    %3930 = vmatpush1.msra.mxu0 0.0
    %3931 = vmatprep.subr.mxu0 0.0
    %3932 = vmatpush1.msra.mxu0 0.0
    %3933 = vmatprep.subr.mxu0 0.0
    %3934 = vmatpush1.msra.mxu0 0.0
    %3935 = vmatprep.subr.mxu0 0.0
    %3936 = vmatpush1.msra.mxu0 0.0
    %3937 = vmatprep.subr.mxu0 0.0
    %3938 = vmatpush1.msra.mxu0 0.0
    %3939 = vmatprep.subr.mxu0 0.0
    %3940 = vmatpush1.msra.mxu0 0.0
    %3941 = vmatprep.mubr.f32.mxu0 0.0
    %v3942 = vand.u32 %v3697, 4294901760
    %v3943 = vsub.f32 %v3697, %v3942
    %3944 = vmatmul.mubr.f32.gmra.mrb[0].mxu0 %v3943
    %v3945 = vpop.f32.mrb[0].mxu0
    %v3946 = vadd.f32 %v3866, %v3945
    %v3947 = vpop.f32.mrb[0].mxu0
    %3948 = vdwg.mxu0
    %3949 = vmatprep.subr.mxu0 0.0
    %v3950 = vand.u32 %v3691, 4294901760
    %3951 = vmatpush1.msra.mxu0 %v3950
    %3952 = vmatprep.subr.mxu0 0.0
    %v3953 = vand.u32 %v3692, 4294901760
    %3954 = vmatpush1.msra.mxu0 %v3953
    %3955 = vmatprep.subr.mxu0 0.0
    %v3956 = vand.u32 %v3693, 4294901760
    %3957 = vmatpush1.msra.mxu0 %v3956
    %3958 = vmatprep.subr.mxu0 0.0
    %v3959 = vand.u32 %v3694, 4294901760
    %3960 = vmatpush1.msra.mxu0 %v3959
    %3961 = vmatprep.subr.mxu0 0.0
    %3962 = vmatpush1.msra.mxu0 0.0
    %3963 = vmatprep.subr.mxu0 0.0
    %3964 = vmatpush1.msra.mxu0 0.0
    %3965 = vmatprep.subr.mxu0 0.0
    %3966 = vmatpush1.msra.mxu0 0.0
    %3967 = vmatprep.subr.mxu0 0.0
    %3968 = vmatpush1.msra.mxu0 0.0
    %3969 = vmatprep.subr.mxu0 0.0
    %3970 = vmatpush1.msra.mxu0 0.0
    %3971 = vmatprep.subr.mxu0 0.0
    %3972 = vmatpush1.msra.mxu0 0.0
    %3973 = vmatprep.subr.mxu0 0.0
    %3974 = vmatpush1.msra.mxu0 0.0
    %3975 = vmatprep.subr.mxu0 0.0
    %3976 = vmatpush1.msra.mxu0 0.0
    %3977 = vmatprep.subr.mxu0 0.0
    %3978 = vmatpush1.msra.mxu0 0.0
    %3979 = vmatprep.subr.mxu0 0.0
    %3980 = vmatpush1.msra.mxu0 0.0
    %3981 = vmatprep.subr.mxu0 0.0
    %3982 = vmatpush1.msra.mxu0 0.0
    %3983 = vmatprep.subr.mxu0 0.0
    %3984 = vmatpush1.msra.mxu0 0.0
    %3985 = vmatprep.subr.mxu0 0.0
    %3986 = vmatpush1.msra.mxu0 0.0
    %3987 = vmatprep.subr.mxu0 0.0
    %3988 = vmatpush1.msra.mxu0 0.0
    %3989 = vmatprep.subr.mxu0 0.0
    %3990 = vmatpush1.msra.mxu0 0.0
    %3991 = vmatprep.subr.mxu0 0.0
    %3992 = vmatpush1.msra.mxu0 0.0
    %3993 = vmatprep.subr.mxu0 0.0
    %3994 = vmatpush1.msra.mxu0 0.0
    %3995 = vmatprep.subr.mxu0 0.0
    %3996 = vmatpush1.msra.mxu0 0.0
    %3997 = vmatprep.subr.mxu0 0.0
    %3998 = vmatpush1.msra.mxu0 0.0
    %3999 = vmatprep.subr.mxu0 0.0
    %4000 = vmatpush1.msra.mxu0 0.0
    %4001 = vmatprep.subr.mxu0 0.0
    %4002 = vmatpush1.msra.mxu0 0.0
    %4003 = vmatprep.subr.mxu0 0.0
    %4004 = vmatpush1.msra.mxu0 0.0
    %4005 = vmatprep.subr.mxu0 0.0
    %4006 = vmatpush1.msra.mxu0 0.0
    %4007 = vmatprep.subr.mxu0 0.0
    %4008 = vmatpush1.msra.mxu0 0.0
    %4009 = vmatprep.subr.mxu0 0.0
    %4010 = vmatpush1.msra.mxu0 0.0
    %4011 = vmatprep.subr.mxu0 0.0
    %4012 = vmatpush1.msra.mxu0 0.0
    %4013 = vmatprep.subr.mxu0 0.0
    %4014 = vmatpush1.msra.mxu0 0.0
    %4015 = vmatprep.subr.mxu0 0.0
    %4016 = vmatpush1.msra.mxu0 0.0
    %4017 = vmatprep.mubr.f32.mxu0 0.0
    %v4018 = vand.u32 %v3697, 4294901760
    %v4019 = vsub.f32 %v3697, %v4018
    %v4020 = vand.u32 %v4019, 4294901760
    %4021 = vmatmul.mubr.f32.gmra.mrb[0].mxu0 %v4020
    %v4022 = vpop.f32.mrb[0].mxu0
    %v4023 = vadd.f32 %v3946, %v4022
    %v4024 = vpop.f32.mrb[0].mxu0
    %4025 = vdwg.mxu0
    %4026 = vmatprep.subr.mxu0 0.0
    %v4027 = vand.u32 %v3691, 4294901760
    %v4028 = vsub.f32 %v3691, %v4027
    %v4029 = vand.u32 %v4028, 4294901760
    %4030 = vmatpush1.msra.mxu0 %v4029
    %4031 = vmatprep.subr.mxu0 0.0
    %v4032 = vand.u32 %v3692, 4294901760
    %v4033 = vsub.f32 %v3692, %v4032
    %v4034 = vand.u32 %v4033, 4294901760
    %4035 = vmatpush1.msra.mxu0 %v4034
    %4036 = vmatprep.subr.mxu0 0.0
    %v4037 = vand.u32 %v3693, 4294901760
    %v4038 = vsub.f32 %v3693, %v4037
    %v4039 = vand.u32 %v4038, 4294901760
    %4040 = vmatpush1.msra.mxu0 %v4039
    %4041 = vmatprep.subr.mxu0 0.0
    %v4042 = vand.u32 %v3694, 4294901760
    %v4043 = vsub.f32 %v3694, %v4042
    %v4044 = vand.u32 %v4043, 4294901760
    %4045 = vmatpush1.msra.mxu0 %v4044
    %4046 = vmatprep.subr.mxu0 0.0
    %4047 = vmatpush1.msra.mxu0 0.0
    %4048 = vmatprep.subr.mxu0 0.0
    %4049 = vmatpush1.msra.mxu0 0.0
    %4050 = vmatprep.subr.mxu0 0.0
    %4051 = vmatpush1.msra.mxu0 0.0
    %4052 = vmatprep.subr.mxu0 0.0
    %4053 = vmatpush1.msra.mxu0 0.0
    %4054 = vmatprep.subr.mxu0 0.0
    %4055 = vmatpush1.msra.mxu0 0.0
    %4056 = vmatprep.subr.mxu0 0.0
    %4057 = vmatpush1.msra.mxu0 0.0
    %4058 = vmatprep.subr.mxu0 0.0
    %4059 = vmatpush1.msra.mxu0 0.0
    %4060 = vmatprep.subr.mxu0 0.0
    %4061 = vmatpush1.msra.mxu0 0.0
    %4062 = vmatprep.subr.mxu0 0.0
    %4063 = vmatpush1.msra.mxu0 0.0
    %4064 = vmatprep.subr.mxu0 0.0
    %4065 = vmatpush1.msra.mxu0 0.0
    %4066 = vmatprep.subr.mxu0 0.0
    %4067 = vmatpush1.msra.mxu0 0.0
    %4068 = vmatprep.subr.mxu0 0.0
    %4069 = vmatpush1.msra.mxu0 0.0
    %4070 = vmatprep.subr.mxu0 0.0
    %4071 = vmatpush1.msra.mxu0 0.0
    %4072 = vmatprep.subr.mxu0 0.0
    %4073 = vmatpush1.msra.mxu0 0.0
    %4074 = vmatprep.subr.mxu0 0.0
    %4075 = vmatpush1.msra.mxu0 0.0
    %4076 = vmatprep.subr.mxu0 0.0
    %4077 = vmatpush1.msra.mxu0 0.0
    %4078 = vmatprep.subr.mxu0 0.0
    %4079 = vmatpush1.msra.mxu0 0.0
    %4080 = vmatprep.subr.mxu0 0.0
    %4081 = vmatpush1.msra.mxu0 0.0
    %4082 = vmatprep.subr.mxu0 0.0
    %4083 = vmatpush1.msra.mxu0 0.0
    %4084 = vmatprep.subr.mxu0 0.0
    %4085 = vmatpush1.msra.mxu0 0.0
    %4086 = vmatprep.subr.mxu0 0.0
    %4087 = vmatpush1.msra.mxu0 0.0
    %4088 = vmatprep.subr.mxu0 0.0
    %4089 = vmatpush1.msra.mxu0 0.0
    %4090 = vmatprep.subr.mxu0 0.0
    %4091 = vmatpush1.msra.mxu0 0.0
    %4092 = vmatprep.subr.mxu0 0.0
    %4093 = vmatpush1.msra.mxu0 0.0
    %4094 = vmatprep.subr.mxu0 0.0
    %4095 = vmatpush1.msra.mxu0 0.0
    %4096 = vmatprep.subr.mxu0 0.0
    %4097 = vmatpush1.msra.mxu0 0.0
    %4098 = vmatprep.subr.mxu0 0.0
    %4099 = vmatpush1.msra.mxu0 0.0
    %4100 = vmatprep.subr.mxu0 0.0
    %4101 = vmatpush1.msra.mxu0 0.0
    %4102 = vmatprep.mubr.f32.mxu0 0.0
    %v4103 = vand.u32 %v3697, 4294901760
    %4104 = vmatmul.mubr.f32.gmra.mrb[0].mxu0 %v4103
    %v4105 = vpop.f32.mrb[0].mxu0
    %v4106 = vadd.f32 %v4023, %v4105
    %v4107 = vpop.f32.mrb[0].mxu0
    %4108 = vdwg.mxu0
    %4109 = vmatprep.subr.mxu0 0.0
    %v4110 = vand.u32 %v3691, 4294901760
    %4111 = vmatpush1.msra.mxu0 %v4110
    %4112 = vmatprep.subr.mxu0 0.0
    %v4113 = vand.u32 %v3692, 4294901760
    %4114 = vmatpush1.msra.mxu0 %v4113
    %4115 = vmatprep.subr.mxu0 0.0
    %v4116 = vand.u32 %v3693, 4294901760
    %4117 = vmatpush1.msra.mxu0 %v4116
    %4118 = vmatprep.subr.mxu0 0.0
    %v4119 = vand.u32 %v3694, 4294901760
    %4120 = vmatpush1.msra.mxu0 %v4119
    %4121 = vmatprep.subr.mxu0 0.0
    %4122 = vmatpush1.msra.mxu0 0.0
    %4123 = vmatprep.subr.mxu0 0.0
    %4124 = vmatpush1.msra.mxu0 0.0
    %4125 = vmatprep.subr.mxu0 0.0
    %4126 = vmatpush1.msra.mxu0 0.0
    %4127 = vmatprep.subr.mxu0 0.0
    %4128 = vmatpush1.msra.mxu0 0.0
    %4129 = vmatprep.subr.mxu0 0.0
    %4130 = vmatpush1.msra.mxu0 0.0
    %4131 = vmatprep.subr.mxu0 0.0
    %4132 = vmatpush1.msra.mxu0 0.0
    %4133 = vmatprep.subr.mxu0 0.0
    %4134 = vmatpush1.msra.mxu0 0.0
    %4135 = vmatprep.subr.mxu0 0.0
    %4136 = vmatpush1.msra.mxu0 0.0
    %4137 = vmatprep.subr.mxu0 0.0
    %4138 = vmatpush1.msra.mxu0 0.0
    %4139 = vmatprep.subr.mxu0 0.0
    %4140 = vmatpush1.msra.mxu0 0.0
    %4141 = vmatprep.subr.mxu0 0.0
    %4142 = vmatpush1.msra.mxu0 0.0
    %4143 = vmatprep.subr.mxu0 0.0
    %4144 = vmatpush1.msra.mxu0 0.0
    %4145 = vmatprep.subr.mxu0 0.0
    %4146 = vmatpush1.msra.mxu0 0.0
    %4147 = vmatprep.subr.mxu0 0.0
    %4148 = vmatpush1.msra.mxu0 0.0
    %4149 = vmatprep.subr.mxu0 0.0
    %4150 = vmatpush1.msra.mxu0 0.0
    %4151 = vmatprep.subr.mxu0 0.0
    %4152 = vmatpush1.msra.mxu0 0.0
    %4153 = vmatprep.subr.mxu0 0.0
    %4154 = vmatpush1.msra.mxu0 0.0
    %4155 = vmatprep.subr.mxu0 0.0
    %4156 = vmatpush1.msra.mxu0 0.0
    %4157 = vmatprep.subr.mxu0 0.0
    %4158 = vmatpush1.msra.mxu0 0.0
    %4159 = vmatprep.subr.mxu0 0.0
    %4160 = vmatpush1.msra.mxu0 0.0
    %4161 = vmatprep.subr.mxu0 0.0
    %4162 = vmatpush1.msra.mxu0 0.0
    %4163 = vmatprep.subr.mxu0 0.0
    %4164 = vmatpush1.msra.mxu0 0.0
    %4165 = vmatprep.subr.mxu0 0.0
    %4166 = vmatpush1.msra.mxu0 0.0
    %4167 = vmatprep.subr.mxu0 0.0
    %4168 = vmatpush1.msra.mxu0 0.0
    %4169 = vmatprep.subr.mxu0 0.0
    %4170 = vmatpush1.msra.mxu0 0.0
    %4171 = vmatprep.subr.mxu0 0.0
    %4172 = vmatpush1.msra.mxu0 0.0
    %4173 = vmatprep.subr.mxu0 0.0
    %4174 = vmatpush1.msra.mxu0 0.0
    %4175 = vmatprep.subr.mxu0 0.0
    %4176 = vmatpush1.msra.mxu0 0.0
    %4177 = vmatprep.mubr.f32.mxu0 0.0
    %v4178 = vand.u32 %v3697, 4294901760
    %4179 = vmatmul.mubr.f32.gmra.mrb[0].mxu0 %v4178
    %v4180 = vpop.f32.mrb[0].mxu0
    %v4181 = vadd.f32 %v4106, %v4180
    %v4182 = vpop.f32.mrb[0].mxu0
    %4183 = vdwg.mxu0
    %v4184 = vadd.f32 %v3690, %v4181
    %v4185 = vround.ne.pseudo %v4184
    %v4186 = vmax.f32 %v4185, -2047.0
    %v4187 = vmin.f32 %v4186, 2047.0
    %v4188 = vmul.f32 %v4187, 0.00390625
    %4189 = vst [vmem:[%s8] sm:$0xff] %v4188
    // Predicated region
    $region58: #{forward.1} parent=1 // pred_check
      _
    $region59: #{forward.1} parent=1 // pred_check_branch
      %4191 = sbr.rel (0) target = $region61
    $region60: #{forward.1} parent=1 // pred_region
      _
    $region61: #{forward.1} parent=1 // pred_fallthru
      _
    // Predicated region
    $region62: #{forward.1} parent=1 // pred_check
      _
    $region63: #{forward.1} parent=1 // pred_check_branch
      %4193 = sbr.rel (0) target = $region65
    $region64: #{forward.1} parent=1 // pred_region
      _
    $region65: #{forward.1} parent=1 // pred_fallthru
      _
    %4194 = vsyncpa [#allocation3], 1
    %4195 = vsyncpa [#allocation5], 1
    %4196 = vsyncpa [#allocation8], 1
    %4197 = vsyncpa [#allocation11], 1

// kernel: forward.1
$region0: #{forward.1}
  #allocation0 [shape = 'u32[]', space=smem, size = 0x4, offset = 0x4, fixed_abs, tag = 'smem constant byte address 0x4 - core index']
  #allocation1 [shape = 'u32[144,128]{1,0:T(1,128)}', space=vmem, size = 0x12000, scoped, tag = 'internal scratch']
  %s0 = inlined_call_operand.vmem [shape: f32[8,128], index: 0, kind: input, shape index: {}]
  %s1 = inlined_call_operand.hbm [shape: f32[128,144], index: 1, kind: input, shape index: {}]
  %s2 = inlined_call_operand.hbm [shape: f32[72,96], index: 2, kind: input, shape index: {}]
  %s3 = inlined_call_operand.hbm [shape: f32[48,64], index: 3, kind: input, shape index: {}]
  %s4 = inlined_call_operand.hbm [shape: f32[72,128], index: 4, kind: input, shape index: {}]
  %s5 = inlined_call_operand.vmem [shape: f32[48,128], index: 5, kind: input, shape index: {}]
  %s6 = inlined_call_operand.hbm [shape: f32[32,128], index: 6, kind: input, shape index: {}]
  %s7 = inlined_call_operand.hbm [shape: f32[32,128], index: 7, kind: input, shape index: {}]
  %s8 = inlined_call_operand.vmem [shape: f32[8,128], index: 8, kind: output, shape index: {}]
  %s9 = sld [smem:[#allocation0]]
  $region66: #{forward.1} parent=0
    _
  %s11 = ssub.s32 1, %s9
  %s12 = scalar_select 0, %s11, %s9
  $region1: #{forward.1} parent=0
    #allocation2 [shape = 'u8[131072]{0}', space=vmem, size = 0x20000, scoped, tag = 'input window, operand 1, single buffered']
    #allocation3 [shape = 's32[1]{0}', space=sflag, size = 0x4, scoped, tag = 'scoped memory for forward.1']
    #allocation4 [shape = 'u8[36864]{0}', space=vmem, size = 0x9000, scoped, tag = 'input window, operand 2, single buffered']
    #allocation5 [shape = 's32[1]{0}', space=sflag, size = 0x4, scoped, tag = 'scoped memory for forward.1']
    #allocation6 [shape = 'u8[24576]{0}', space=vmem, size = 0x6000, scoped, tag = 'input window, operand 3, single buffered']
    #allocation7 [shape = 'u8[36864]{0}', space=vmem, size = 0x9000, scoped, tag = 'input window, operand 4, single buffered']
    #allocation8 [shape = 's32[1]{0}', space=sflag, size = 0x4, scoped, tag = 'scoped memory for forward.1']
    #allocation9 [shape = 'u8[16384]{0}', space=vmem, size = 0x4000, scoped, tag = 'input window, operand 6, single buffered']
    #allocation10 [shape = 'u8[16384]{0}', space=vmem, size = 0x4000, scoped, tag = 'input window, operand 7, single buffered']
    #allocation11 [shape = 's32[1]{0}', space=sflag, size = 0x4, scoped, tag = 'scoped memory for forward.1']
    %13 = vsyncpa [#allocation3], 0
    %14 = vsyncpa [#allocation5], 0
    %15 = vsyncpa [#allocation8], 0
    %16 = vsyncpa [#allocation11], 0
    // Predicated region
    $region2: #{forward.1} parent=1 // pred_check
      _
    $region3: #{forward.1} parent=1 // pred_check_branch
      %18 = sbr.rel (0) target = $region5
    $region4: #{forward.1} parent=1 // pred_region
      _
    $region5: #{forward.1} parent=1 // pred_fallthru
      _
    // Predicated region
    $region6: #{forward.1} parent=1 // pred_check
      _
    $region7: #{forward.1} parent=1 // pred_check_branch
      %20 = sbr.rel (0) target = $region9
    $region8: #{forward.1} parent=1 // pred_region
      %s22 = ssub.s32 4096, 4096
      %23 = vsyncadd [#allocation3], %s22
      %s24 = sshll.u32 [#allocation2], 4
      %s25 = int_to_ptr.vmem [resolvable:$true] %s24
      %30 = dma.hbm_to_vmem [thread:$0]  %s1, 4096, %s25, [#allocation3], 256, 256, 16
    $region9: #{forward.1} parent=1 // pred_fallthru
      _
    // Predicated region
    $region10: #{forward.1} parent=1 // pred_check
      _
    $region11: #{forward.1} parent=1 // pred_check_branch
      %32 = sbr.rel (0) target = $region13
    $region12: #{forward.1} parent=1 // pred_region
      %s34 = ssub.s32 1152, 1152
      %35 = vsyncadd [#allocation5], %s34
      %s36 = sshll.u32 [#allocation4], 4
      %s37 = int_to_ptr.vmem [resolvable:$true] %s36
      %42 = dma.hbm_to_vmem [thread:$0]  %s2, 1152, %s37, [#allocation5], 128, 128, 8
    $region13: #{forward.1} parent=1 // pred_fallthru
      _
    // Predicated region
    $region14: #{forward.1} parent=1 // pred_check
      _
    $region15: #{forward.1} parent=1 // pred_check_branch
      %44 = sbr.rel (0) target = $region17
    $region16: #{forward.1} parent=1 // pred_region
      %s46 = ssub.s32 768, 768
      %47 = vsyncadd [#allocation5], %s46
      %s48 = sshll.u32 [#allocation6], 4
      %s49 = int_to_ptr.vmem [resolvable:$true] %s48
      %54 = dma.hbm_to_vmem [thread:$0]  %s3, 768, %s49, [#allocation5], 128, 128, 8
    $region17: #{forward.1} parent=1 // pred_fallthru
      _
    // Predicated region
    $region18: #{forward.1} parent=1 // pred_check
      _
    $region19: #{forward.1} parent=1 // pred_check_branch
      %56 = sbr.rel (0) target = $region21
    $region20: #{forward.1} parent=1 // pred_region
      %s58 = ssub.s32 1152, 1152
      %59 = vsyncadd [#allocation8], %s58
      %s60 = sshll.u32 [#allocation7], 4
      %s61 = int_to_ptr.vmem [resolvable:$true] %s60
      %66 = dma.hbm_to_vmem [thread:$0]  %s4, 1152, %s61, [#allocation8], 128, 128, 8
    $region21: #{forward.1} parent=1 // pred_fallthru
      _
    // Predicated region
    $region22: #{forward.1} parent=1 // pred_check
      _
    $region23: #{forward.1} parent=1 // pred_check_branch
      %68 = sbr.rel (0) target = $region25
    $region24: #{forward.1} parent=1 // pred_region
      _
    $region25: #{forward.1} parent=1 // pred_fallthru
      _
    // Predicated region
    $region26: #{forward.1} parent=1 // pred_check
      _
    $region27: #{forward.1} parent=1 // pred_check_branch
      %70 = sbr.rel (0) target = $region29
    $region28: #{forward.1} parent=1 // pred_region
      %s72 = ssub.s32 512, 512
      %73 = vsyncadd [#allocation8], %s72
      %s74 = sshll.u32 [#allocation9], 4
      %s75 = int_to_ptr.vmem [resolvable:$true] %s74
      %80 = dma.hbm_to_vmem [thread:$0]  %s6, 512, %s75, [#allocation8], 128, 128, 8
    $region29: #{forward.1} parent=1 // pred_fallthru
      _
    // Predicated region
    $region30: #{forward.1} parent=1 // pred_check
      _
    $region31: #{forward.1} parent=1 // pred_check_branch
      %82 = sbr.rel (0) target = $region33
    $region32: #{forward.1} parent=1 // pred_region
      %s84 = ssub.s32 512, 512
      %85 = vsyncadd [#allocation11], %s84
      %s86 = sshll.u32 [#allocation10], 4
      %s87 = int_to_ptr.vmem [resolvable:$true] %s86
      %92 = dma.hbm_to_vmem [thread:$0]  %s7, 512, %s87, [#allocation11], 128, 128, 8
    $region33: #{forward.1} parent=1 // pred_fallthru
      _
    // Predicated region
    $region34: #{forward.1} parent=1 // pred_check
      _
    $region35: #{forward.1} parent=1 // pred_check_branch
      %94 = sbr.rel (0) target = $region37
    $region36: #{forward.1} parent=1 // pred_region
      %95 = dma.done [#allocation3], 4096
    $region37: #{forward.1} parent=1 // pred_fallthru
      _
    // Predicated region
    $region38: #{forward.1} parent=1 // pred_check
      _
    $region39: #{forward.1} parent=1 // pred_check_branch
      %97 = sbr.rel (0) target = $region41
    $region40: #{forward.1} parent=1 // pred_region
      %98 = dma.done [#allocation5], 1152
    $region41: #{forward.1} parent=1 // pred_fallthru
      _
    // Predicated region
    $region42: #{forward.1} parent=1 // pred_check
      _
    $region43: #{forward.1} parent=1 // pred_check_branch
      %100 = sbr.rel (0) target = $region45
    $region44: #{forward.1} parent=1 // pred_region
      %101 = dma.done [#allocation5], 768
    $region45: #{forward.1} parent=1 // pred_fallthru
      _
    // Predicated region
    $region46: #{forward.1} parent=1 // pred_check
      _
    $region47: #{forward.1} parent=1 // pred_check_branch
      %103 = sbr.rel (0) target = $region49
    $region48: #{forward.1} parent=1 // pred_region
      %104 = dma.done [#allocation8], 1152
    $region49: #{forward.1} parent=1 // pred_fallthru
      _
    // Predicated region
    $region50: #{forward.1} parent=1 // pred_check
      _
    $region51: #{forward.1} parent=1 // pred_check_branch
      %106 = sbr.rel (0) target = $region53
    $region52: #{forward.1} parent=1 // pred_region
      %107 = dma.done [#allocation8], 512
    $region53: #{forward.1} parent=1 // pred_fallthru
      _
    // Predicated region
    $region54: #{forward.1} parent=1 // pred_check
      _
    $region55: #{forward.1} parent=1 // pred_check_branch
      %109 = sbr.rel (0) target = $region57
    $region56: #{forward.1} parent=1 // pred_region
      %110 = dma.done [#allocation11], 512
    $region57: #{forward.1} parent=1 // pred_fallthru
      _
    %v111 = vld [vmem:[%s0] sm:$0xff]
    %v112 = vmul.f32 %v111, 256.0
    %v113 = vround.ne.pseudo %v112
    %v114 = vmax.f32 %v113, -2047.0
    %v115 = vmin.f32 %v114, 2047.0
    %v116 = vmul.f32 %v115, 0.00390625
    %v117 = vld [vmem:[#allocation2] sm:$0xff]
    %v118 = vld [vmem:[#allocation2 + $0x8] sm:$0xff]
    %v119 = vld [vmem:[#allocation2 + $0x10] sm:$0xff]
    %v120 = vld [vmem:[#allocation2 + $0x18] sm:$0xff]
    %v121 = vld [vmem:[#allocation2 + $0x20] sm:$0xff]
    %v122 = vld [vmem:[#allocation2 + $0x28] sm:$0xff]
    %v123 = vld [vmem:[#allocation2 + $0x30] sm:$0xff]
    %v124 = vld [vmem:[#allocation2 + $0x38] sm:$0xff]
    %v125 = vld [vmem:[#allocation2 + $0x40] sm:$0xff]
    %v126 = vld [vmem:[#allocation2 + $0x48] sm:$0xff]
    %v127 = vld [vmem:[#allocation2 + $0x50] sm:$0xff]
    %v128 = vld [vmem:[#allocation2 + $0x58] sm:$0xff]
    %v129 = vld [vmem:[#allocation2 + $0x60] sm:$0xff]
    %v130 = vld [vmem:[#allocation2 + $0x68] sm:$0xff]
    %v131 = vld [vmem:[#allocation2 + $0x70] sm:$0xff]
    %v132 = vld [vmem:[#allocation2 + $0x78] sm:$0xff]
    %v133 = vld [vmem:[#allocation2 + $0x80] sm:$0xff]
    %v134 = vld [vmem:[#allocation2 + $0x88] sm:$0xff]
    %v135 = vld [vmem:[#allocation2 + $0x90] sm:$0xff]
    %v136 = vld [vmem:[#allocation2 + $0x98] sm:$0xff]
    %v137 = vld [vmem:[#allocation2 + $0xa0] sm:$0xff]
    %v138 = vld [vmem:[#allocation2 + $0xa8] sm:$0xff]
    %v139 = vld [vmem:[#allocation2 + $0xb0] sm:$0xff]
    %v140 = vld [vmem:[#allocation2 + $0xb8] sm:$0xff]
    %v141 = vld [vmem:[#allocation2 + $0xc0] sm:$0xff]
    %v142 = vld [vmem:[#allocation2 + $0xc8] sm:$0xff]
    %v143 = vld [vmem:[#allocation2 + $0xd0] sm:$0xff]
    %v144 = vld [vmem:[#allocation2 + $0xd8] sm:$0xff]
    %v145 = vld [vmem:[#allocation2 + $0xe0] sm:$0xff]
    %v146 = vld [vmem:[#allocation2 + $0xe8] sm:$0xff]
    %v147 = vld [vmem:[#allocation2 + $0xf0] sm:$0xff]
    %v148 = vld [vmem:[#allocation2 + $0xf8] sm:$0xff]
    %v149 = vand.u32 %v118, 4294901760
    %150 = vmatprep.subr.mxu0 %v149
    %v151 = vand.u32 %v117, 4294901760
    %152 = vmatpush1.msra.mxu0 %v151
    %v153 = vand.u32 %v120, 4294901760
    %154 = vmatprep.subr.mxu0 %v153
    %v155 = vand.u32 %v119, 4294901760
    %156 = vmatpush1.msra.mxu0 %v155
    %v157 = vand.u32 %v122, 4294901760
    %158 = vmatprep.subr.mxu0 %v157
    %v159 = vand.u32 %v121, 4294901760
    %160 = vmatpush1.msra.mxu0 %v159
    %v161 = vand.u32 %v124, 4294901760
    %162 = vmatprep.subr.mxu0 %v161
    %v163 = vand.u32 %v123, 4294901760
    %164 = vmatpush1.msra.mxu0 %v163
    %v165 = vand.u32 %v126, 4294901760
    %166 = vmatprep.subr.mxu0 %v165
    %v167 = vand.u32 %v125, 4294901760
    %168 = vmatpush1.msra.mxu0 %v167
    %v169 = vand.u32 %v128, 4294901760
    %170 = vmatprep.subr.mxu0 %v169
    %v171 = vand.u32 %v127, 4294901760
    %172 = vmatpush1.msra.mxu0 %v171
    %v173 = vand.u32 %v130, 4294901760
    %174 = vmatprep.subr.mxu0 %v173
    %v175 = vand.u32 %v129, 4294901760
    %176 = vmatpush1.msra.mxu0 %v175
    %v177 = vand.u32 %v132, 4294901760
    %178 = vmatprep.subr.mxu0 %v177
    %v179 = vand.u32 %v131, 4294901760
    %180 = vmatpush1.msra.mxu0 %v179
    %v181 = vand.u32 %v134, 4294901760
    %182 = vmatprep.subr.mxu0 %v181
    %v183 = vand.u32 %v133, 4294901760
    %184 = vmatpush1.msra.mxu0 %v183
    %v185 = vand.u32 %v136, 4294901760
    %186 = vmatprep.subr.mxu0 %v185
    %v187 = vand.u32 %v135, 4294901760
    %188 = vmatpush1.msra.mxu0 %v187
    %v189 = vand.u32 %v138, 4294901760
    %190 = vmatprep.subr.mxu0 %v189
    %v191 = vand.u32 %v137, 4294901760
    %192 = vmatpush1.msra.mxu0 %v191
    %v193 = vand.u32 %v140, 4294901760
    %194 = vmatprep.subr.mxu0 %v193
    %v195 = vand.u32 %v139, 4294901760
    %196 = vmatpush1.msra.mxu0 %v195
    %v197 = vand.u32 %v142, 4294901760
    %198 = vmatprep.subr.mxu0 %v197
    %v199 = vand.u32 %v141, 4294901760
    %200 = vmatpush1.msra.mxu0 %v199
    %v201 = vand.u32 %v144, 4294901760
    %202 = vmatprep.subr.mxu0 %v201
    %v203 = vand.u32 %v143, 4294901760
    %204 = vmatpush1.msra.mxu0 %v203
    %v205 = vand.u32 %v146, 4294901760
    %206 = vmatprep.subr.mxu0 %v205
    %v207 = vand.u32 %v145, 4294901760
    %208 = vmatpush1.msra.mxu0 %v207
    %v209 = vand.u32 %v148, 4294901760
    %210 = vmatprep.subr.mxu0 %v209
    %v211 = vand.u32 %v147, 4294901760
    %212 = vmatpush1.msra.mxu0 %v211
    %213 = vmatprep.subr.mxu0 0.0
    %214 = vmatpush1.msra.mxu0 0.0
    %215 = vmatprep.subr.mxu0 0.0
    %216 = vmatpush1.msra.mxu0 0.0
    %217 = vmatprep.subr.mxu0 0.0
    %218 = vmatpush1.msra.mxu0 0.0
    %219 = vmatprep.subr.mxu0 0.0
    %220 = vmatpush1.msra.mxu0 0.0
    %221 = vmatprep.subr.mxu0 0.0
    %222 = vmatpush1.msra.mxu0 0.0
    %223 = vmatprep.subr.mxu0 0.0
    %224 = vmatpush1.msra.mxu0 0.0
    %225 = vmatprep.subr.mxu0 0.0
    %226 = vmatpush1.msra.mxu0 0.0
    %227 = vmatprep.subr.mxu0 0.0
    %228 = vmatpush1.msra.mxu0 0.0
    %229 = vmatprep.subr.mxu0 0.0
    %230 = vmatpush1.msra.mxu0 0.0
    %231 = vmatprep.subr.mxu0 0.0
    %232 = vmatpush1.msra.mxu0 0.0
    %233 = vmatprep.subr.mxu0 0.0
    %234 = vmatpush1.msra.mxu0 0.0
    %235 = vmatprep.subr.mxu0 0.0
    %236 = vmatpush1.msra.mxu0 0.0
    %237 = vmatprep.subr.mxu0 0.0
    %238 = vmatpush1.msra.mxu0 0.0
    %239 = vmatprep.subr.mxu0 0.0
    %240 = vmatpush1.msra.mxu0 0.0
    %241 = vmatprep.subr.mxu0 0.0
    %242 = vmatpush1.msra.mxu0 0.0
    %243 = vmatprep.subr.mxu0 0.0
    %244 = vmatpush1.msra.mxu0 0.0
    %245 = vmatprep.mubr.f32.mxu0 0.0
    %v246 = vand.u32 %v116, 4294901760
    %v247 = vsub.f32 %v116, %v246
    %v248 = vand.u32 %v247, 4294901760
    %v249 = vsub.f32 %v247, %v248
    %v250 = vand.u32 %v249, 4294901760
    %251 = vmatmul.mubr.f32.gmra.mrb[0].mxu0 %v250
    %v252 = vpop.f32.mrb[0].mxu0
    %v253 = vadd.f32 0.0, %v252
    %v254 = vpop.f32.mrb[0].mxu0
    %v255 = vadd.f32 0.0, %v254
    %256 = vdwg.mxu0
    %v257 = vand.u32 %v118, 4294901760
    %v258 = vsub.f32 %v118, %v257
    %v259 = vand.u32 %v258, 4294901760
    %v260 = vsub.f32 %v258, %v259
    %v261 = vand.u32 %v260, 4294901760
    %262 = vmatprep.subr.mxu0 %v261
    %v263 = vand.u32 %v117, 4294901760
    %v264 = vsub.f32 %v117, %v263
    %v265 = vand.u32 %v264, 4294901760
    %v266 = vsub.f32 %v264, %v265
    %v267 = vand.u32 %v266, 4294901760
    %268 = vmatpush1.msra.mxu0 %v267
    %v269 = vand.u32 %v120, 4294901760
    %v270 = vsub.f32 %v120, %v269
    %v271 = vand.u32 %v270, 4294901760
    %v272 = vsub.f32 %v270, %v271
    %v273 = vand.u32 %v272, 4294901760
    %274 = vmatprep.subr.mxu0 %v273
    %v275 = vand.u32 %v119, 4294901760
    %v276 = vsub.f32 %v119, %v275
    %v277 = vand.u32 %v276, 4294901760
    %v278 = vsub.f32 %v276, %v277
    %v279 = vand.u32 %v278, 4294901760
    %280 = vmatpush1.msra.mxu0 %v279
    %v281 = vand.u32 %v122, 4294901760
    %v282 = vsub.f32 %v122, %v281
    %v283 = vand.u32 %v282, 4294901760
    %v284 = vsub.f32 %v282, %v283
    %v285 = vand.u32 %v284, 4294901760
    %286 = vmatprep.subr.mxu0 %v285
    %v287 = vand.u32 %v121, 4294901760
    %v288 = vsub.f32 %v121, %v287
    %v289 = vand.u32 %v288, 4294901760
    %v290 = vsub.f32 %v288, %v289
    %v291 = vand.u32 %v290, 4294901760
    %292 = vmatpush1.msra.mxu0 %v291
    %v293 = vand.u32 %v124, 4294901760
    %v294 = vsub.f32 %v124, %v293
    %v295 = vand.u32 %v294, 4294901760
    %v296 = vsub.f32 %v294, %v295
    %v297 = vand.u32 %v296, 4294901760
    %298 = vmatprep.subr.mxu0 %v297
    %v299 = vand.u32 %v123, 4294901760
    %v300 = vsub.f32 %v123, %v299
    %v301 = vand.u32 %v300, 4294901760
    %v302 = vsub.f32 %v300, %v301
    %v303 = vand.u32 %v302, 4294901760
    %304 = vmatpush1.msra.mxu0 %v303
    %v305 = vand.u32 %v126, 4294901760
    %v306 = vsub.f32 %v126, %v305
    %v307 = vand.u32 %v306, 4294901760
    %v308 = vsub.f32 %v306, %v307
    %v309 = vand.u32 %v308, 4294901760
    %310 = vmatprep.subr.mxu0 %v309
    %v311 = vand.u32 %v125, 4294901760
    %v312 = vsub.f32 %v125, %v311
    %v313 = vand.u32 %v312, 4294901760
    %v314 = vsub.f32 %v312, %v313
    %v315 = vand.u32 %v314, 4294901760
    %316 = vmatpush1.msra.mxu0 %v315
    %v317 = vand.u32 %v128, 4294901760
    %v318 = vsub.f32 %v128, %v317
    %v319 = vand.u32 %v318, 4294901760
    %v320 = vsub.f32 %v318, %v319
    %v321 = vand.u32 %v320, 4294901760
    %322 = vmatprep.subr.mxu0 %v321
    %v323 = vand.u32 %v127, 4294901760
    %v324 = vsub.f32 %v127, %v323
    %v325 = vand.u32 %v324, 4294901760
    %v326 = vsub.f32 %v324, %v325
    %v327 = vand.u32 %v326, 4294901760
    %328 = vmatpush1.msra.mxu0 %v327
    %v329 = vand.u32 %v130, 4294901760
    %v330 = vsub.f32 %v130, %v329
    %v331 = vand.u32 %v330, 4294901760
    %v332 = vsub.f32 %v330, %v331
    %v333 = vand.u32 %v332, 4294901760
    %334 = vmatprep.subr.mxu0 %v333
    %v335 = vand.u32 %v129, 4294901760
    %v336 = vsub.f32 %v129, %v335
    %v337 = vand.u32 %v336, 4294901760
    %v338 = vsub.f32 %v336, %v337
    %v339 = vand.u32 %v338, 4294901760
    %340 = vmatpush1.msra.mxu0 %v339
    %v341 = vand.u32 %v132, 4294901760
    %v342 = vsub.f32 %v132, %v341
    %v343 = vand.u32 %v342, 4294901760
    %v344 = vsub.f32 %v342, %v343
    %v345 = vand.u32 %v344, 4294901760
    %346 = vmatprep.subr.mxu0 %v345
    %v347 = vand.u32 %v131, 4294901760
    %v348 = vsub.f32 %v131, %v347
    %v349 = vand.u32 %v348, 4294901760
    %v350 = vsub.f32 %v348, %v349
    %v351 = vand.u32 %v350, 4294901760
    %352 = vmatpush1.msra.mxu0 %v351
    %v353 = vand.u32 %v134, 4294901760
    %v354 = vsub.f32 %v134, %v353
    %v355 = vand.u32 %v354, 4294901760
    %v356 = vsub.f32 %v354, %v355
    %v357 = vand.u32 %v356, 4294901760
    %358 = vmatprep.subr.mxu0 %v357
    %v359 = vand.u32 %v133, 4294901760
    %v360 = vsub.f32 %v133, %v359
    %v361 = vand.u32 %v360, 4294901760
    %v362 = vsub.f32 %v360, %v361
    %v363 = vand.u32 %v362, 4294901760
    %364 = vmatpush1.msra.mxu0 %v363
    %v365 = vand.u32 %v136, 4294901760
    %v366 = vsub.f32 %v136, %v365
    %v367 = vand.u32 %v366, 4294901760
    %v368 = vsub.f32 %v366, %v367
    %v369 = vand.u32 %v368, 4294901760
    %370 = vmatprep.subr.mxu0 %v369
    %v371 = vand.u32 %v135, 4294901760
    %v372 = vsub.f32 %v135, %v371
    %v373 = vand.u32 %v372, 4294901760
    %v374 = vsub.f32 %v372, %v373
    %v375 = vand.u32 %v374, 4294901760
    %376 = vmatpush1.msra.mxu0 %v375
    %v377 = vand.u32 %v138, 4294901760
    %v378 = vsub.f32 %v138, %v377
    %v379 = vand.u32 %v378, 4294901760
    %v380 = vsub.f32 %v378, %v379
    %v381 = vand.u32 %v380, 4294901760
    %382 = vmatprep.subr.mxu0 %v381
    %v383 = vand.u32 %v137, 4294901760
    %v384 = vsub.f32 %v137, %v383
    %v385 = vand.u32 %v384, 4294901760
    %v386 = vsub.f32 %v384, %v385
    %v387 = vand.u32 %v386, 4294901760
    %388 = vmatpush1.msra.mxu0 %v387
    %v389 = vand.u32 %v140, 4294901760
    %v390 = vsub.f32 %v140, %v389
    %v391 = vand.u32 %v390, 4294901760
    %v392 = vsub.f32 %v390, %v391
    %v393 = vand.u32 %v392, 4294901760
    %394 = vmatprep.subr.mxu0 %v393
    %v395 = vand.u32 %v139, 4294901760
    %v396 = vsub.f32 %v139, %v395
    %v397 = vand.u32 %v396, 4294901760
    %v398 = vsub.f32 %v396, %v397
    %v399 = vand.u32 %v398, 4294901760
    %400 = vmatpush1.msra.mxu0 %v399
    %v401 = vand.u32 %v142, 4294901760
    %v402 = vsub.f32 %v142, %v401
    %v403 = vand.u32 %v402, 4294901760
    %v404 = vsub.f32 %v402, %v403
    %v405 = vand.u32 %v404, 4294901760
    %406 = vmatprep.subr.mxu0 %v405
    %v407 = vand.u32 %v141, 4294901760
    %v408 = vsub.f32 %v141, %v407
    %v409 = vand.u32 %v408, 4294901760
    %v410 = vsub.f32 %v408, %v409
    %v411 = vand.u32 %v410, 4294901760
    %412 = vmatpush1.msra.mxu0 %v411
    %v413 = vand.u32 %v144, 4294901760
    %v414 = vsub.f32 %v144, %v413
    %v415 = vand.u32 %v414, 4294901760
    %v416 = vsub.f32 %v414, %v415
    %v417 = vand.u32 %v416, 4294901760
    %418 = vmatprep.subr.mxu0 %v417
    %v419 = vand.u32 %v143, 4294901760
    %v420 = vsub.f32 %v143, %v419
    %v421 = vand.u32 %v420, 4294901760
    %v422 = vsub.f32 %v420, %v421
    %v423 = vand.u32 %v422, 4294901760
    %424 = vmatpush1.msra.mxu0 %v423
    %v425 = vand.u32 %v146, 4294901760
    %v426 = vsub.f32 %v146, %v425
    %v427 = vand.u32 %v426, 4294901760
    %v428 = vsub.f32 %v426, %v427
    %v429 = vand.u32 %v428, 4294901760
    %430 = vmatprep.subr.mxu0 %v429
    %v431 = vand.u32 %v145, 4294901760
    %v432 = vsub.f32 %v145, %v431
    %v433 = vand.u32 %v432, 4294901760
    %v434 = vsub.f32 %v432, %v433
    %v435 = vand.u32 %v434, 4294901760
    %436 = vmatpush1.msra.mxu0 %v435
    %v437 = vand.u32 %v148, 4294901760
    %v438 = vsub.f32 %v148, %v437
    %v439 = vand.u32 %v438, 4294901760
    %v440 = vsub.f32 %v438, %v439
    %v441 = vand.u32 %v440, 4294901760
    %442 = vmatprep.subr.mxu0 %v441
    %v443 = vand.u32 %v147, 4294901760
    %v444 = vsub.f32 %v147, %v443
    %v445 = vand.u32 %v444, 4294901760
    %v446 = vsub.f32 %v444, %v445
    %v447 = vand.u32 %v446, 4294901760
    %448 = vmatpush1.msra.mxu0 %v447
    %449 = vmatprep.subr.mxu0 0.0
    %450 = vmatpush1.msra.mxu0 0.0
    %451 = vmatprep.subr.mxu0 0.0
    %452 = vmatpush1.msra.mxu0 0.0
    %453 = vmatprep.subr.mxu0 0.0
    %454 = vmatpush1.msra.mxu0 0.0
    %455 = vmatprep.subr.mxu0 0.0
    %456 = vmatpush1.msra.mxu0 0.0
    %457 = vmatprep.subr.mxu0 0.0
    %458 = vmatpush1.msra.mxu0 0.0
    %459 = vmatprep.subr.mxu0 0.0
    %460 = vmatpush1.msra.mxu0 0.0
    %461 = vmatprep.subr.mxu0 0.0
    %462 = vmatpush1.msra.mxu0 0.0
    %463 = vmatprep.subr.mxu0 0.0
    %464 = vmatpush1.msra.mxu0 0.0
    %465 = vmatprep.subr.mxu0 0.0
    %466 = vmatpush1.msra.mxu0 0.0
    %467 = vmatprep.subr.mxu0 0.0
    %468 = vmatpush1.msra.mxu0 0.0
    %469 = vmatprep.subr.mxu0 0.0
    %470 = vmatpush1.msra.mxu0 0.0
    %471 = vmatprep.subr.mxu0 0.0
    %472 = vmatpush1.msra.mxu0 0.0
    %473 = vmatprep.subr.mxu0 0.0
    %474 = vmatpush1.msra.mxu0 0.0
    %475 = vmatprep.subr.mxu0 0.0
    %476 = vmatpush1.msra.mxu0 0.0
    %477 = vmatprep.subr.mxu0 0.0
    %478 = vmatpush1.msra.mxu0 0.0
    %479 = vmatprep.subr.mxu0 0.0
    %480 = vmatpush1.msra.mxu0 0.0
    %481 = vmatprep.mubr.f32.mxu0 0.0
    %v482 = vand.u32 %v116, 4294901760
    %483 = vmatmul.mubr.f32.gmra.mrb[0].mxu0 %v482
    %v484 = vpop.f32.mrb[0].mxu0
    %v485 = vadd.f32 %v253, %v484
    %v486 = vpop.f32.mrb[0].mxu0
    %v487 = vadd.f32 %v255, %v486
    %488 = vdwg.mxu0
    %v489 = vand.u32 %v118, 4294901760
    %v490 = vsub.f32 %v118, %v489
    %491 = vmatprep.subr.mxu0 %v490
    %v492 = vand.u32 %v117, 4294901760
    %v493 = vsub.f32 %v117, %v492
    %494 = vmatpush1.msra.mxu0 %v493
    %v495 = vand.u32 %v120, 4294901760
    %v496 = vsub.f32 %v120, %v495
    %497 = vmatprep.subr.mxu0 %v496
    %v498 = vand.u32 %v119, 4294901760
    %v499 = vsub.f32 %v119, %v498
    %500 = vmatpush1.msra.mxu0 %v499
    %v501 = vand.u32 %v122, 4294901760
    %v502 = vsub.f32 %v122, %v501
    %503 = vmatprep.subr.mxu0 %v502
    %v504 = vand.u32 %v121, 4294901760
    %v505 = vsub.f32 %v121, %v504
    %506 = vmatpush1.msra.mxu0 %v505
    %v507 = vand.u32 %v124, 4294901760
    %v508 = vsub.f32 %v124, %v507
    %509 = vmatprep.subr.mxu0 %v508
    %v510 = vand.u32 %v123, 4294901760
    %v511 = vsub.f32 %v123, %v510
    %512 = vmatpush1.msra.mxu0 %v511
    %v513 = vand.u32 %v126, 4294901760
    %v514 = vsub.f32 %v126, %v513
    %515 = vmatprep.subr.mxu0 %v514
    %v516 = vand.u32 %v125, 4294901760
    %v517 = vsub.f32 %v125, %v516
    %518 = vmatpush1.msra.mxu0 %v517
    %v519 = vand.u32 %v128, 4294901760
    %v520 = vsub.f32 %v128, %v519
    %521 = vmatprep.subr.mxu0 %v520
    %v522 = vand.u32 %v127, 4294901760
    %v523 = vsub.f32 %v127, %v522
    %524 = vmatpush1.msra.mxu0 %v523
    %v525 = vand.u32 %v130, 4294901760
    %v526 = vsub.f32 %v130, %v525
    %527 = vmatprep.subr.mxu0 %v526
    %v528 = vand.u32 %v129, 4294901760
    %v529 = vsub.f32 %v129, %v528
    %530 = vmatpush1.msra.mxu0 %v529
    %v531 = vand.u32 %v132, 4294901760
    %v532 = vsub.f32 %v132, %v531
    %533 = vmatprep.subr.mxu0 %v532
    %v534 = vand.u32 %v131, 4294901760
    %v535 = vsub.f32 %v131, %v534
    %536 = vmatpush1.msra.mxu0 %v535
    %v537 = vand.u32 %v134, 4294901760
    %v538 = vsub.f32 %v134, %v537
    %539 = vmatprep.subr.mxu0 %v538
    %v540 = vand.u32 %v133, 4294901760
    %v541 = vsub.f32 %v133, %v540
    %542 = vmatpush1.msra.mxu0 %v541
    %v543 = vand.u32 %v136, 4294901760
    %v544 = vsub.f32 %v136, %v543
    %545 = vmatprep.subr.mxu0 %v544
    %v546 = vand.u32 %v135, 4294901760
    %v547 = vsub.f32 %v135, %v546
    %548 = vmatpush1.msra.mxu0 %v547
    %v549 = vand.u32 %v138, 4294901760
    %v550 = vsub.f32 %v138, %v549
    %551 = vmatprep.subr.mxu0 %v550
    %v552 = vand.u32 %v137, 4294901760
    %v553 = vsub.f32 %v137, %v552
    %554 = vmatpush1.msra.mxu0 %v553
    %v555 = vand.u32 %v140, 4294901760
    %v556 = vsub.f32 %v140, %v555
    %557 = vmatprep.subr.mxu0 %v556
    %v558 = vand.u32 %v139, 4294901760
    %v559 = vsub.f32 %v139, %v558
    %560 = vmatpush1.msra.mxu0 %v559
    %v561 = vand.u32 %v142, 4294901760
    %v562 = vsub.f32 %v142, %v561
    %563 = vmatprep.subr.mxu0 %v562
    %v564 = vand.u32 %v141, 4294901760
    %v565 = vsub.f32 %v141, %v564
    %566 = vmatpush1.msra.mxu0 %v565
    %v567 = vand.u32 %v144, 4294901760
    %v568 = vsub.f32 %v144, %v567
    %569 = vmatprep.subr.mxu0 %v568
    %v570 = vand.u32 %v143, 4294901760
    %v571 = vsub.f32 %v143, %v570
    %572 = vmatpush1.msra.mxu0 %v571
    %v573 = vand.u32 %v146, 4294901760
    %v574 = vsub.f32 %v146, %v573
    %575 = vmatprep.subr.mxu0 %v574
    %v576 = vand.u32 %v145, 4294901760
    %v577 = vsub.f32 %v145, %v576
    %578 = vmatpush1.msra.mxu0 %v577
    %v579 = vand.u32 %v148, 4294901760
    %v580 = vsub.f32 %v148, %v579
    %581 = vmatprep.subr.mxu0 %v580
    %v582 = vand.u32 %v147, 4294901760
    %v583 = vsub.f32 %v147, %v582
    %584 = vmatpush1.msra.mxu0 %v583
    %585 = vmatprep.subr.mxu0 0.0
    %586 = vmatpush1.msra.mxu0 0.0
    %587 = vmatprep.subr.mxu0 0.0
    %588 = vmatpush1.msra.mxu0 0.0
    %589 = vmatprep.subr.mxu0 0.0
    %590 = vmatpush1.msra.mxu0 0.0
    %591 = vmatprep.subr.mxu0 0.0
    %592 = vmatpush1.msra.mxu0 0.0
    %593 = vmatprep.subr.mxu0 0.0
    %594 = vmatpush1.msra.mxu0 0.0
    %595 = vmatprep.subr.mxu0 0.0
    %596 = vmatpush1.msra.mxu0 0.0
    %597 = vmatprep.subr.mxu0 0.0
    %598 = vmatpush1.msra.mxu0 0.0
    %599 = vmatprep.subr.mxu0 0.0
    %600 = vmatpush1.msra.mxu0 0.0
    %601 = vmatprep.subr.mxu0 0.0
    %602 = vmatpush1.msra.mxu0 0.0
    %603 = vmatprep.subr.mxu0 0.0
    %604 = vmatpush1.msra.mxu0 0.0
    %605 = vmatprep.subr.mxu0 0.0
    %606 = vmatpush1.msra.mxu0 0.0
    %607 = vmatprep.subr.mxu0 0.0
    %608 = vmatpush1.msra.mxu0 0.0
    %609 = vmatprep.subr.mxu0 0.0
    %610 = vmatpush1.msra.mxu0 0.0
    %611 = vmatprep.subr.mxu0 0.0
    %612 = vmatpush1.msra.mxu0 0.0
    %613 = vmatprep.subr.mxu0 0.0
    %614 = vmatpush1.msra.mxu0 0.0
    %615 = vmatprep.subr.mxu0 0.0
    %616 = vmatpush1.msra.mxu0 0.0
    %617 = vmatprep.mubr.f32.mxu0 0.0
    %v618 = vand.u32 %v116, 4294901760
    %v619 = vsub.f32 %v116, %v618
    %620 = vmatmul.mubr.f32.gmra.mrb[0].mxu0 %v619
    %v621 = vpop.f32.mrb[0].mxu0
    %v622 = vadd.f32 %v485, %v621
    %v623 = vpop.f32.mrb[0].mxu0
    %v624 = vadd.f32 %v487, %v623
    %625 = vdwg.mxu0
    %v626 = vand.u32 %v118, 4294901760
    %627 = vmatprep.subr.mxu0 %v626
    %v628 = vand.u32 %v117, 4294901760
    %629 = vmatpush1.msra.mxu0 %v628
    %v630 = vand.u32 %v120, 4294901760
    %631 = vmatprep.subr.mxu0 %v630
    %v632 = vand.u32 %v119, 4294901760
    %633 = vmatpush1.msra.mxu0 %v632
    %v634 = vand.u32 %v122, 4294901760
    %635 = vmatprep.subr.mxu0 %v634
    %v636 = vand.u32 %v121, 4294901760
    %637 = vmatpush1.msra.mxu0 %v636
    %v638 = vand.u32 %v124, 4294901760
    %639 = vmatprep.subr.mxu0 %v638
    %v640 = vand.u32 %v123, 4294901760
    %641 = vmatpush1.msra.mxu0 %v640
    %v642 = vand.u32 %v126, 4294901760
    %643 = vmatprep.subr.mxu0 %v642
    %v644 = vand.u32 %v125, 4294901760
    %645 = vmatpush1.msra.mxu0 %v644
    %v646 = vand.u32 %v128, 4294901760
    %647 = vmatprep.subr.mxu0 %v646
    %v648 = vand.u32 %v127, 4294901760
    %649 = vmatpush1.msra.mxu0 %v648
    %v650 = vand.u32 %v130, 4294901760
    %651 = vmatprep.subr.mxu0 %v650
    %v652 = vand.u32 %v129, 4294901760
    %653 = vmatpush1.msra.mxu0 %v652
    %v654 = vand.u32 %v132, 4294901760
    %655 = vmatprep.subr.mxu0 %v654
    %v656 = vand.u32 %v131, 4294901760
    %657 = vmatpush1.msra.mxu0 %v656
    %v658 = vand.u32 %v134, 4294901760
    %659 = vmatprep.subr.mxu0 %v658
    %v660 = vand.u32 %v133, 4294901760
    %661 = vmatpush1.msra.mxu0 %v660
    %v662 = vand.u32 %v136, 4294901760
    %663 = vmatprep.subr.mxu0 %v662
    %v664 = vand.u32 %v135, 4294901760
    %665 = vmatpush1.msra.mxu0 %v664
    %v666 = vand.u32 %v138, 4294901760
    %667 = vmatprep.subr.mxu0 %v666
    %v668 = vand.u32 %v137, 4294901760
    %669 = vmatpush1.msra.mxu0 %v668
    %v670 = vand.u32 %v140, 4294901760
    %671 = vmatprep.subr.mxu0 %v670
    %v672 = vand.u32 %v139, 4294901760
    %673 = vmatpush1.msra.mxu0 %v672
    %v674 = vand.u32 %v142, 4294901760
    %675 = vmatprep.subr.mxu0 %v674
    %v676 = vand.u32 %v141, 4294901760
    %677 = vmatpush1.msra.mxu0 %v676
    %v678 = vand.u32 %v144, 4294901760
    %679 = vmatprep.subr.mxu0 %v678
    %v680 = vand.u32 %v143, 4294901760
    %681 = vmatpush1.msra.mxu0 %v680
    %v682 = vand.u32 %v146, 4294901760
    %683 = vmatprep.subr.mxu0 %v682
    %v684 = vand.u32 %v145, 4294901760
    %685 = vmatpush1.msra.mxu0 %v684
    %v686 = vand.u32 %v148, 4294901760
    %687 = vmatprep.subr.mxu0 %v686
    %v688 = vand.u32 %v147, 4294901760
    %689 = vmatpush1.msra.mxu0 %v688
    %690 = vmatprep.subr.mxu0 0.0
    %691 = vmatpush1.msra.mxu0 0.0
    %692 = vmatprep.subr.mxu0 0.0
    %693 = vmatpush1.msra.mxu0 0.0
    %694 = vmatprep.subr.mxu0 0.0
    %695 = vmatpush1.msra.mxu0 0.0
    %696 = vmatprep.subr.mxu0 0.0
    %697 = vmatpush1.msra.mxu0 0.0
    %698 = vmatprep.subr.mxu0 0.0
    %699 = vmatpush1.msra.mxu0 0.0
    %700 = vmatprep.subr.mxu0 0.0
    %701 = vmatpush1.msra.mxu0 0.0
    %702 = vmatprep.subr.mxu0 0.0
    %703 = vmatpush1.msra.mxu0 0.0
    %704 = vmatprep.subr.mxu0 0.0
    %705 = vmatpush1.msra.mxu0 0.0
    %706 = vmatprep.subr.mxu0 0.0
    %707 = vmatpush1.msra.mxu0 0.0
    %708 = vmatprep.subr.mxu0 0.0
    %709 = vmatpush1.msra.mxu0 0.0
    %710 = vmatprep.subr.mxu0 0.0
    %711 = vmatpush1.msra.mxu0 0.0
    %712 = vmatprep.subr.mxu0 0.0
    %713 = vmatpush1.msra.mxu0 0.0
    %714 = vmatprep.subr.mxu0 0.0
    %715 = vmatpush1.msra.mxu0 0.0
    %716 = vmatprep.subr.mxu0 0.0
    %717 = vmatpush1.msra.mxu0 0.0
    %718 = vmatprep.subr.mxu0 0.0
    %719 = vmatpush1.msra.mxu0 0.0
    %720 = vmatprep.subr.mxu0 0.0
    %721 = vmatpush1.msra.mxu0 0.0
    %722 = vmatprep.mubr.f32.mxu0 0.0
    %v723 = vand.u32 %v116, 4294901760
    %v724 = vsub.f32 %v116, %v723
    %v725 = vand.u32 %v724, 4294901760
    %726 = vmatmul.mubr.f32.gmra.mrb[0].mxu0 %v725
    %v727 = vpop.f32.mrb[0].mxu0
    %v728 = vadd.f32 %v622, %v727
    %v729 = vpop.f32.mrb[0].mxu0
    %v730 = vadd.f32 %v624, %v729
    %731 = vdwg.mxu0
    %v732 = vand.u32 %v118, 4294901760
    %v733 = vsub.f32 %v118, %v732
    %v734 = vand.u32 %v733, 4294901760
    %735 = vmatprep.subr.mxu0 %v734
    %v736 = vand.u32 %v117, 4294901760
    %v737 = vsub.f32 %v117, %v736
    %v738 = vand.u32 %v737, 4294901760
    %739 = vmatpush1.msra.mxu0 %v738
    %v740 = vand.u32 %v120, 4294901760
    %v741 = vsub.f32 %v120, %v740
    %v742 = vand.u32 %v741, 4294901760
    %743 = vmatprep.subr.mxu0 %v742
    %v744 = vand.u32 %v119, 4294901760
    %v745 = vsub.f32 %v119, %v744
    %v746 = vand.u32 %v745, 4294901760
    %747 = vmatpush1.msra.mxu0 %v746
    %v748 = vand.u32 %v122, 4294901760
    %v749 = vsub.f32 %v122, %v748
    %v750 = vand.u32 %v749, 4294901760
    %751 = vmatprep.subr.mxu0 %v750
    %v752 = vand.u32 %v121, 4294901760
    %v753 = vsub.f32 %v121, %v752
    %v754 = vand.u32 %v753, 4294901760
    %755 = vmatpush1.msra.mxu0 %v754
    %v756 = vand.u32 %v124, 4294901760
    %v757 = vsub.f32 %v124, %v756
    %v758 = vand.u32 %v757, 4294901760
    %759 = vmatprep.subr.mxu0 %v758
    %v760 = vand.u32 %v123, 4294901760
    %v761 = vsub.f32 %v123, %v760
    %v762 = vand.u32 %v761, 4294901760
    %763 = vmatpush1.msra.mxu0 %v762
    %v764 = vand.u32 %v126, 4294901760
    %v765 = vsub.f32 %v126, %v764
    %v766 = vand.u32 %v765, 4294901760
    %767 = vmatprep.subr.mxu0 %v766
    %v768 = vand.u32 %v125, 4294901760
    %v769 = vsub.f32 %v125, %v768
    %v770 = vand.u32 %v769, 4294901760
    %771 = vmatpush1.msra.mxu0 %v770
    %v772 = vand.u32 %v128, 4294901760
    %v773 = vsub.f32 %v128, %v772
    %v774 = vand.u32 %v773, 4294901760
    %775 = vmatprep.subr.mxu0 %v774
    %v776 = vand.u32 %v127, 4294901760
    %v777 = vsub.f32 %v127, %v776
    %v778 = vand.u32 %v777, 4294901760
    %779 = vmatpush1.msra.mxu0 %v778
    %v780 = vand.u32 %v130, 4294901760
    %v781 = vsub.f32 %v130, %v780
    %v782 = vand.u32 %v781, 4294901760
    %783 = vmatprep.subr.mxu0 %v782
    %v784 = vand.u32 %v129, 4294901760
    %v785 = vsub.f32 %v129, %v784
    %v786 = vand.u32 %v785, 4294901760
    %787 = vmatpush1.msra.mxu0 %v786
    %v788 = vand.u32 %v132, 4294901760
    %v789 = vsub.f32 %v132, %v788
    %v790 = vand.u32 %v789, 4294901760
    %791 = vmatprep.subr.mxu0 %v790
    %v792 = vand.u32 %v131, 4294901760
    %v793 = vsub.f32 %v131, %v792
    %v794 = vand.u32 %v793, 4294901760
    %795 = vmatpush1.msra.mxu0 %v794
    %v796 = vand.u32 %v134, 4294901760
    %v797 = vsub.f32 %v134, %v796
    %v798 = vand.u32 %v797, 4294901760
    %799 = vmatprep.subr.mxu0 %v798
    %v800 = vand.u32 %v133, 4294901760
    %v801 = vsub.f32 %v133, %v800
    %v802 = vand.u32 %v801, 4294901760
    %803 = vmatpush1.msra.mxu0 %v802
    %v804 = vand.u32 %v136, 4294901760
    %v805 = vsub.f32 %v136, %v804
    %v806 = vand.u32 %v805, 4294901760
    %807 = vmatprep.subr.mxu0 %v806
    %v808 = vand.u32 %v135, 4294901760
    %v809 = vsub.f32 %v135, %v808
    %v810 = vand.u32 %v809, 4294901760
    %811 = vmatpush1.msra.mxu0 %v810
    %v812 = vand.u32 %v138, 4294901760
    %v813 = vsub.f32 %v138, %v812
    %v814 = vand.u32 %v813, 4294901760
    %815 = vmatprep.subr.mxu0 %v814
    %v816 = vand.u32 %v137, 4294901760
    %v817 = vsub.f32 %v137, %v816
    %v818 = vand.u32 %v817, 4294901760
    %819 = vmatpush1.msra.mxu0 %v818
    %v820 = vand.u32 %v140, 4294901760
    %v821 = vsub.f32 %v140, %v820
    %v822 = vand.u32 %v821, 4294901760
    %823 = vmatprep.subr.mxu0 %v822
    %v824 = vand.u32 %v139, 4294901760
    %v825 = vsub.f32 %v139, %v824
    %v826 = vand.u32 %v825, 4294901760
    %827 = vmatpush1.msra.mxu0 %v826
    %v828 = vand.u32 %v142, 4294901760
    %v829 = vsub.f32 %v142, %v828
    %v830 = vand.u32 %v829, 4294901760
    %831 = vmatprep.subr.mxu0 %v830
    %v832 = vand.u32 %v141, 4294901760
    %v833 = vsub.f32 %v141, %v832
    %v834 = vand.u32 %v833, 4294901760
    %835 = vmatpush1.msra.mxu0 %v834
    %v836 = vand.u32 %v144, 4294901760
    %v837 = vsub.f32 %v144, %v836
    %v838 = vand.u32 %v837, 4294901760
    %839 = vmatprep.subr.mxu0 %v838
    %v840 = vand.u32 %v143, 4294901760
    %v841 = vsub.f32 %v143, %v840
    %v842 = vand.u32 %v841, 4294901760
    %843 = vmatpush1.msra.mxu0 %v842
    %v844 = vand.u32 %v146, 4294901760
    %v845 = vsub.f32 %v146, %v844
    %v846 = vand.u32 %v845, 4294901760
    %847 = vmatprep.subr.mxu0 %v846
    %v848 = vand.u32 %v145, 4294901760
    %v849 = vsub.f32 %v145, %v848
    %v850 = vand.u32 %v849, 4294901760
    %851 = vmatpush1.msra.mxu0 %v850
    %v852 = vand.u32 %v148, 4294901760
    %v853 = vsub.f32 %v148, %v852
    %v854 = vand.u32 %v853, 4294901760
    %855 = vmatprep.subr.mxu0 %v854
    %v856 = vand.u32 %v147, 4294901760
    %v857 = vsub.f32 %v147, %v856
    %v858 = vand.u32 %v857, 4294901760
    %859 = vmatpush1.msra.mxu0 %v858
    %860 = vmatprep.subr.mxu0 0.0
    %861 = vmatpush1.msra.mxu0 0.0
    %862 = vmatprep.subr.mxu0 0.0
    %863 = vmatpush1.msra.mxu0 0.0
    %864 = vmatprep.subr.mxu0 0.0
    %865 = vmatpush1.msra.mxu0 0.0
    %866 = vmatprep.subr.mxu0 0.0
    %867 = vmatpush1.msra.mxu0 0.0
    %868 = vmatprep.subr.mxu0 0.0
    %869 = vmatpush1.msra.mxu0 0.0
    %870 = vmatprep.subr.mxu0 0.0
    %871 = vmatpush1.msra.mxu0 0.0
    %872 = vmatprep.subr.mxu0 0.0
    %873 = vmatpush1.msra.mxu0 0.0
    %874 = vmatprep.subr.mxu0 0.0
    %875 = vmatpush1.msra.mxu0 0.0
    %876 = vmatprep.subr.mxu0 0.0
    %877 = vmatpush1.msra.mxu0 0.0
    %878 = vmatprep.subr.mxu0 0.0
    %879 = vmatpush1.msra.mxu0 0.0
    %880 = vmatprep.subr.mxu0 0.0
    %881 = vmatpush1.msra.mxu0 0.0
    %882 = vmatprep.subr.mxu0 0.0
    %883 = vmatpush1.msra.mxu0 0.0
    %884 = vmatprep.subr.mxu0 0.0
    %885 = vmatpush1.msra.mxu0 0.0
    %886 = vmatprep.subr.mxu0 0.0
    %887 = vmatpush1.msra.mxu0 0.0
    %888 = vmatprep.subr.mxu0 0.0
    %889 = vmatpush1.msra.mxu0 0.0
    %890 = vmatprep.subr.mxu0 0.0
    %891 = vmatpush1.msra.mxu0 0.0
    %892 = vmatprep.mubr.f32.mxu0 0.0
    %v893 = vand.u32 %v116, 4294901760
    %894 = vmatmul.mubr.f32.gmra.mrb[0].mxu0 %v893
    %v895 = vpop.f32.mrb[0].mxu0
    %v896 = vadd.f32 %v728, %v895
    %v897 = vpop.f32.mrb[0].mxu0
    %v898 = vadd.f32 %v730, %v897
    %899 = vdwg.mxu0
    %v900 = vand.u32 %v118, 4294901760
    %901 = vmatprep.subr.mxu0 %v900
    %v902 = vand.u32 %v117, 4294901760
    %903 = vmatpush1.msra.mxu0 %v902
    %v904 = vand.u32 %v120, 4294901760
    %905 = vmatprep.subr.mxu0 %v904
    %v906 = vand.u32 %v119, 4294901760
    %907 = vmatpush1.msra.mxu0 %v906
    %v908 = vand.u32 %v122, 4294901760
    %909 = vmatprep.subr.mxu0 %v908
    %v910 = vand.u32 %v121, 4294901760
    %911 = vmatpush1.msra.mxu0 %v910
    %v912 = vand.u32 %v124, 4294901760
    %913 = vmatprep.subr.mxu0 %v912
    %v914 = vand.u32 %v123, 4294901760
    %915 = vmatpush1.msra.mxu0 %v914
    %v916 = vand.u32 %v126, 4294901760
    %917 = vmatprep.subr.mxu0 %v916
    %v918 = vand.u32 %v125, 4294901760
    %919 = vmatpush1.msra.mxu0 %v918
    %v920 = vand.u32 %v128, 4294901760
    %921 = vmatprep.subr.mxu0 %v920
    %v922 = vand.u32 %v127, 4294901760
    %923 = vmatpush1.msra.mxu0 %v922
    %v924 = vand.u32 %v130, 4294901760
    %925 = vmatprep.subr.mxu0 %v924
    %v926 = vand.u32 %v129, 4294901760
    %927 = vmatpush1.msra.mxu0 %v926
    %v928 = vand.u32 %v132, 4294901760
    %929 = vmatprep.subr.mxu0 %v928
    %v930 = vand.u32 %v131, 4294901760
    %931 = vmatpush1.msra.mxu0 %v930
    %v932 = vand.u32 %v134, 4294901760
    %933 = vmatprep.subr.mxu0 %v932
    %v934 = vand.u32 %v133, 4294901760
    %935 = vmatpush1.msra.mxu0 %v934
    %v936 = vand.u32 %v136, 4294901760
    %937 = vmatprep.subr.mxu0 %v936
    %v938 = vand.u32 %v135, 4294901760
    %939 = vmatpush1.msra.mxu0 %v938
    %v940 = vand.u32 %v138, 4294901760
    %941 = vmatprep.subr.mxu0 %v940
    %v942 = vand.u32 %v137, 4294901760
    %943 = vmatpush1.msra.mxu0 %v942
    %v944 = vand.u32 %v140, 4294901760
    %945 = vmatprep.subr.mxu0 %v944
    %v946 = vand.u32 %v139, 4294901760
    %947 = vmatpush1.msra.mxu0 %v946
    %v948 = vand.u32 %v142, 4294901760
    %949 = vmatprep.subr.mxu0 %v948
    %v950 = vand.u32 %v141, 4294901760
    %951 = vmatpush1.msra.mxu0 %v950
    %v952 = vand.u32 %v144, 4294901760
    %953 = vmatprep.subr.mxu0 %v952
    %v954 = vand.u32 %v143, 4294901760
    %955 = vmatpush1.msra.mxu0 %v954
    %v956 = vand.u32 %v146, 4294901760
    %957 = vmatprep.subr.mxu0 %v956
    %v958 = vand.u32 %v145, 4294901760
    %959 = vmatpush1.msra.mxu0 %v958
    %v960 = vand.u32 %v148, 4294901760
    %961 = vmatprep.subr.mxu0 %v960
    %v962 = vand.u32 %v147, 4294901760
    %963 = vmatpush1.msra.mxu0 %v962
    %964 = vmatprep.subr.mxu0 0.0
    %965 = vmatpush1.msra.mxu0 0.0
    %966 = vmatprep.subr.mxu0 0.0
    %967 = vmatpush1.msra.mxu0 0.0
    %968 = vmatprep.subr.mxu0 0.0
    %969 = vmatpush1.msra.mxu0 0.0
    %970 = vmatprep.subr.mxu0 0.0
    %971 = vmatpush1.msra.mxu0 0.0
    %972 = vmatprep.subr.mxu0 0.0
    %973 = vmatpush1.msra.mxu0 0.0
    %974 = vmatprep.subr.mxu0 0.0
    %975 = vmatpush1.msra.mxu0 0.0
    %976 = vmatprep.subr.mxu0 0.0
    %977 = vmatpush1.msra.mxu0 0.0
    %978 = vmatprep.subr.mxu0 0.0
    %979 = vmatpush1.msra.mxu0 0.0
    %980 = vmatprep.subr.mxu0 0.0
    %981 = vmatpush1.msra.mxu0 0.0
    %982 = vmatprep.subr.mxu0 0.0
    %983 = vmatpush1.msra.mxu0 0.0
    %984 = vmatprep.subr.mxu0 0.0
    %985 = vmatpush1.msra.mxu0 0.0
    %986 = vmatprep.subr.mxu0 0.0
    %987 = vmatpush1.msra.mxu0 0.0
    %988 = vmatprep.subr.mxu0 0.0
    %989 = vmatpush1.msra.mxu0 0.0
    %990 = vmatprep.subr.mxu0 0.0
    %991 = vmatpush1.msra.mxu0 0.0
    %992 = vmatprep.subr.mxu0 0.0
    %993 = vmatpush1.msra.mxu0 0.0
    %994 = vmatprep.subr.mxu0 0.0
    %995 = vmatpush1.msra.mxu0 0.0
    %996 = vmatprep.mubr.f32.mxu0 0.0
    %v997 = vand.u32 %v116, 4294901760
    %998 = vmatmul.mubr.f32.gmra.mrb[0].mxu0 %v997
    %v999 = vpop.f32.mrb[0].mxu0
    %v1000 = vadd.f32 %v896, %v999
    %v1001 = vpop.f32.mrb[0].mxu0
    %v1002 = vadd.f32 %v898, %v1001
    %1003 = vdwg.mxu0
    %v1004 = vand.u32 2147483647, %v1000
    %v1005 = vld [vmem:[#allocation7] sm:$0xff]
    %v1006 = vld [vmem:[#allocation7 + $0x8] sm:$0xff]
    %v1007 = vld [vmem:[#allocation7 + $0x10] sm:$0xff]
    %v1008 = vld [vmem:[#allocation7 + $0x18] sm:$0xff]
    %v1009 = vld [vmem:[#allocation7 + $0x20] sm:$0xff]
    %v1010 = vld [vmem:[#allocation7 + $0x28] sm:$0xff]
    %v1011 = vld [vmem:[#allocation7 + $0x30] sm:$0xff]
    %v1012 = vld [vmem:[#allocation7 + $0x38] sm:$0xff]
    %v1013 = vld [vmem:[#allocation7 + $0x40] sm:$0xff]
    %v1014 = vmul.f32 %v1000, 256.0
    %v1015 = vmul.f32 %v1002, 256.0
    %v1016 = vround.ne.pseudo %v1014
    %v1017 = vround.ne.pseudo %v1015
    %v1018 = vmax.f32 %v1016, -2047.0
    %v1019 = vmax.f32 %v1017, -2047.0
    %v1020 = vmin.f32 %v1018, 2047.0
    %v1021 = vmin.f32 %v1019, 2047.0
    %v1022 = vmul.f32 %v1020, 0.00390625
    %v1023 = vmul.f32 %v1021, 0.00390625
    %v1024 = vld [vmem:[#allocation4] sm:$0xff]
    %v1025 = vld [vmem:[#allocation4 + $0x8] sm:$0xff]
    %v1026 = vld [vmem:[#allocation4 + $0x10] sm:$0xff]
    %v1027 = vld [vmem:[#allocation4 + $0x18] sm:$0xff]
    %v1028 = vld [vmem:[#allocation4 + $0x20] sm:$0xff]
    %v1029 = vld [vmem:[#allocation4 + $0x28] sm:$0xff]
    %v1030 = vld [vmem:[#allocation4 + $0x30] sm:$0xff]
    %v1031 = vld [vmem:[#allocation4 + $0x38] sm:$0xff]
    %v1032 = vld [vmem:[#allocation4 + $0x40] sm:$0xff]
    %1035 = vrot.lane.b32.xlu0 %v1022, 56
    %v1036 = vpop.permute.xlu0 %1035
    %1037 = vrot.lane.b32.xlu0 %v1023, 56
    %v1038 = vpop.permute.xlu0 %1037
    %vm1039 = vcmask 457728
    %v1040 = vsel %vm1039, %v1036, %v1038
    %vm1041 = vcmask 588800
    %v1042 = vsel %vm1041, %v1040, 0
    %1044 = vmatprep.subr.mxu0 0.0
    %v1045 = vand.u32 %v1024, 4294901760
    %1046 = vmatpush1.msra.mxu0 %v1045
    %1047 = vmatprep.subr.mxu0 0.0
    %v1048 = vand.u32 %v1025, 4294901760
    %1049 = vmatpush1.msra.mxu0 %v1048
    %1050 = vmatprep.subr.mxu0 0.0
    %v1051 = vand.u32 %v1026, 4294901760
    %1052 = vmatpush1.msra.mxu0 %v1051
    %1053 = vmatprep.subr.mxu0 0.0
    %v1054 = vand.u32 %v1027, 4294901760
    %1055 = vmatpush1.msra.mxu0 %v1054
    %1056 = vmatprep.subr.mxu0 0.0
    %v1057 = vand.u32 %v1028, 4294901760
    %1058 = vmatpush1.msra.mxu0 %v1057
    %1059 = vmatprep.subr.mxu0 0.0
    %v1060 = vand.u32 %v1029, 4294901760
    %1061 = vmatpush1.msra.mxu0 %v1060
    %1062 = vmatprep.subr.mxu0 0.0
    %v1063 = vand.u32 %v1030, 4294901760
    %1064 = vmatpush1.msra.mxu0 %v1063
    %1065 = vmatprep.subr.mxu0 0.0
    %v1066 = vand.u32 %v1031, 4294901760
    %1067 = vmatpush1.msra.mxu0 %v1066
    %1068 = vmatprep.subr.mxu0 0.0
    %v1069 = vand.u32 %v1032, 4294901760
    %1070 = vmatpush1.msra.mxu0 %v1069
    %1071 = vmatprep.subr.mxu0 0.0
    %1072 = vmatpush1.msra.mxu0 0.0
    %1073 = vmatprep.subr.mxu0 0.0
    %1074 = vmatpush1.msra.mxu0 0.0
    %1075 = vmatprep.subr.mxu0 0.0
    %1076 = vmatpush1.msra.mxu0 0.0
    %1077 = vmatprep.subr.mxu0 0.0
    %1078 = vmatpush1.msra.mxu0 0.0
    %1079 = vmatprep.subr.mxu0 0.0
    %1080 = vmatpush1.msra.mxu0 0.0
    %1081 = vmatprep.subr.mxu0 0.0
    %1082 = vmatpush1.msra.mxu0 0.0
    %1083 = vmatprep.subr.mxu0 0.0
    %1084 = vmatpush1.msra.mxu0 0.0
    %1085 = vmatprep.subr.mxu0 0.0
    %1086 = vmatpush1.msra.mxu0 0.0
    %1087 = vmatprep.subr.mxu0 0.0
    %1088 = vmatpush1.msra.mxu0 0.0
    %1089 = vmatprep.subr.mxu0 0.0
    %1090 = vmatpush1.msra.mxu0 0.0
    %1091 = vmatprep.subr.mxu0 0.0
    %1092 = vmatpush1.msra.mxu0 0.0
    %1093 = vmatprep.subr.mxu0 0.0
    %1094 = vmatpush1.msra.mxu0 0.0
    %1095 = vmatprep.subr.mxu0 0.0
    %1096 = vmatpush1.msra.mxu0 0.0
    %1097 = vmatprep.subr.mxu0 0.0
    %1098 = vmatpush1.msra.mxu0 0.0
    %1099 = vmatprep.subr.mxu0 0.0
    %1100 = vmatpush1.msra.mxu0 0.0
    %1101 = vmatprep.subr.mxu0 0.0
    %1102 = vmatpush1.msra.mxu0 0.0
    %1103 = vmatprep.subr.mxu0 0.0
    %1104 = vmatpush1.msra.mxu0 0.0
    %1105 = vmatprep.subr.mxu0 0.0
    %1106 = vmatpush1.msra.mxu0 0.0
    %1107 = vmatprep.subr.mxu0 0.0
    %1108 = vmatpush1.msra.mxu0 0.0
    %1109 = vmatprep.subr.mxu0 0.0
    %1110 = vmatpush1.msra.mxu0 0.0
    %1111 = vmatprep.subr.mxu0 0.0
    %1112 = vmatpush1.msra.mxu0 0.0
    %1113 = vmatprep.subr.mxu0 0.0
    %1114 = vmatpush1.msra.mxu0 0.0
    %1115 = vmatprep.subr.mxu0 0.0
    %1116 = vmatpush1.msra.mxu0 0.0
    %1117 = vmatprep.mubr.f32.mxu0 0.0
    %v1118 = vand.u32 %v1042, 4294901760
    %v1119 = vsub.f32 %v1042, %v1118
    %v1120 = vand.u32 %v1119, 4294901760
    %v1121 = vsub.f32 %v1119, %v1120
    %v1122 = vand.u32 %v1121, 4294901760
    %1123 = vmatmul.mubr.f32.gmra.mrb[0].mxu0 %v1122
    %v1124 = vpop.f32.mrb[0].mxu0
    %v1125 = vadd.f32 0.0, %v1124
    %v1126 = vpop.f32.mrb[0].mxu0
    %1127 = vdwg.mxu0
    %1128 = vmatprep.subr.mxu0 0.0
    %v1129 = vand.u32 %v1024, 4294901760
    %v1130 = vsub.f32 %v1024, %v1129
    %v1131 = vand.u32 %v1130, 4294901760
    %v1132 = vsub.f32 %v1130, %v1131
    %v1133 = vand.u32 %v1132, 4294901760
    %1134 = vmatpush1.msra.mxu0 %v1133
    %1135 = vmatprep.subr.mxu0 0.0
    %v1136 = vand.u32 %v1025, 4294901760
    %v1137 = vsub.f32 %v1025, %v1136
    %v1138 = vand.u32 %v1137, 4294901760
    %v1139 = vsub.f32 %v1137, %v1138
    %v1140 = vand.u32 %v1139, 4294901760
    %1141 = vmatpush1.msra.mxu0 %v1140
    %1142 = vmatprep.subr.mxu0 0.0
    %v1143 = vand.u32 %v1026, 4294901760
    %v1144 = vsub.f32 %v1026, %v1143
    %v1145 = vand.u32 %v1144, 4294901760
    %v1146 = vsub.f32 %v1144, %v1145
    %v1147 = vand.u32 %v1146, 4294901760
    %1148 = vmatpush1.msra.mxu0 %v1147
    %1149 = vmatprep.subr.mxu0 0.0
    %v1150 = vand.u32 %v1027, 4294901760
    %v1151 = vsub.f32 %v1027, %v1150
    %v1152 = vand.u32 %v1151, 4294901760
    %v1153 = vsub.f32 %v1151, %v1152
    %v1154 = vand.u32 %v1153, 4294901760
    %1155 = vmatpush1.msra.mxu0 %v1154
    %1156 = vmatprep.subr.mxu0 0.0
    %v1157 = vand.u32 %v1028, 4294901760
    %v1158 = vsub.f32 %v1028, %v1157
    %v1159 = vand.u32 %v1158, 4294901760
    %v1160 = vsub.f32 %v1158, %v1159
    %v1161 = vand.u32 %v1160, 4294901760
    %1162 = vmatpush1.msra.mxu0 %v1161
    %1163 = vmatprep.subr.mxu0 0.0
    %v1164 = vand.u32 %v1029, 4294901760
    %v1165 = vsub.f32 %v1029, %v1164
    %v1166 = vand.u32 %v1165, 4294901760
    %v1167 = vsub.f32 %v1165, %v1166
    %v1168 = vand.u32 %v1167, 4294901760
    %1169 = vmatpush1.msra.mxu0 %v1168
    %1170 = vmatprep.subr.mxu0 0.0
    %v1171 = vand.u32 %v1030, 4294901760
    %v1172 = vsub.f32 %v1030, %v1171
    %v1173 = vand.u32 %v1172, 4294901760
    %v1174 = vsub.f32 %v1172, %v1173
    %v1175 = vand.u32 %v1174, 4294901760
    %1176 = vmatpush1.msra.mxu0 %v1175
    %1177 = vmatprep.subr.mxu0 0.0
    %v1178 = vand.u32 %v1031, 4294901760
    %v1179 = vsub.f32 %v1031, %v1178
    %v1180 = vand.u32 %v1179, 4294901760
    %v1181 = vsub.f32 %v1179, %v1180
    %v1182 = vand.u32 %v1181, 4294901760
    %1183 = vmatpush1.msra.mxu0 %v1182
    %1184 = vmatprep.subr.mxu0 0.0
    %v1185 = vand.u32 %v1032, 4294901760
    %v1186 = vsub.f32 %v1032, %v1185
    %v1187 = vand.u32 %v1186, 4294901760
    %v1188 = vsub.f32 %v1186, %v1187
    %v1189 = vand.u32 %v1188, 4294901760
    %1190 = vmatpush1.msra.mxu0 %v1189
    %1191 = vmatprep.subr.mxu0 0.0
    %1192 = vmatpush1.msra.mxu0 0.0
    %1193 = vmatprep.subr.mxu0 0.0
    %1194 = vmatpush1.msra.mxu0 0.0
    %1195 = vmatprep.subr.mxu0 0.0
    %1196 = vmatpush1.msra.mxu0 0.0
    %1197 = vmatprep.subr.mxu0 0.0
    %1198 = vmatpush1.msra.mxu0 0.0
    %1199 = vmatprep.subr.mxu0 0.0
    %1200 = vmatpush1.msra.mxu0 0.0
    %1201 = vmatprep.subr.mxu0 0.0
    %1202 = vmatpush1.msra.mxu0 0.0
    %1203 = vmatprep.subr.mxu0 0.0
    %1204 = vmatpush1.msra.mxu0 0.0
    %1205 = vmatprep.subr.mxu0 0.0
    %1206 = vmatpush1.msra.mxu0 0.0
    %1207 = vmatprep.subr.mxu0 0.0
    %1208 = vmatpush1.msra.mxu0 0.0
    %1209 = vmatprep.subr.mxu0 0.0
    %1210 = vmatpush1.msra.mxu0 0.0
    %1211 = vmatprep.subr.mxu0 0.0
    %1212 = vmatpush1.msra.mxu0 0.0
    %1213 = vmatprep.subr.mxu0 0.0
    %1214 = vmatpush1.msra.mxu0 0.0
    %1215 = vmatprep.subr.mxu0 0.0
    %1216 = vmatpush1.msra.mxu0 0.0
    %1217 = vmatprep.subr.mxu0 0.0
    %1218 = vmatpush1.msra.mxu0 0.0
    %1219 = vmatprep.subr.mxu0 0.0
    %1220 = vmatpush1.msra.mxu0 0.0
    %1221 = vmatprep.subr.mxu0 0.0
    %1222 = vmatpush1.msra.mxu0 0.0
    %1223 = vmatprep.subr.mxu0 0.0
    %1224 = vmatpush1.msra.mxu0 0.0
    %1225 = vmatprep.subr.mxu0 0.0
    %1226 = vmatpush1.msra.mxu0 0.0
    %1227 = vmatprep.subr.mxu0 0.0
    %1228 = vmatpush1.msra.mxu0 0.0
    %1229 = vmatprep.subr.mxu0 0.0
    %1230 = vmatpush1.msra.mxu0 0.0
    %1231 = vmatprep.subr.mxu0 0.0
    %1232 = vmatpush1.msra.mxu0 0.0
    %1233 = vmatprep.subr.mxu0 0.0
    %1234 = vmatpush1.msra.mxu0 0.0
    %1235 = vmatprep.subr.mxu0 0.0
    %1236 = vmatpush1.msra.mxu0 0.0
    %1237 = vmatprep.mubr.f32.mxu0 0.0
    %v1238 = vand.u32 %v1042, 4294901760
    %1239 = vmatmul.mubr.f32.gmra.mrb[0].mxu0 %v1238
    %v1240 = vpop.f32.mrb[0].mxu0
    %v1241 = vadd.f32 %v1125, %v1240
    %v1242 = vpop.f32.mrb[0].mxu0
    %1243 = vdwg.mxu0
    %1244 = vmatprep.subr.mxu0 0.0
    %v1245 = vand.u32 %v1024, 4294901760
    %v1246 = vsub.f32 %v1024, %v1245
    %1247 = vmatpush1.msra.mxu0 %v1246
    %1248 = vmatprep.subr.mxu0 0.0
    %v1249 = vand.u32 %v1025, 4294901760
    %v1250 = vsub.f32 %v1025, %v1249
    %1251 = vmatpush1.msra.mxu0 %v1250
    %1252 = vmatprep.subr.mxu0 0.0
    %v1253 = vand.u32 %v1026, 4294901760
    %v1254 = vsub.f32 %v1026, %v1253
    %1255 = vmatpush1.msra.mxu0 %v1254
    %1256 = vmatprep.subr.mxu0 0.0
    %v1257 = vand.u32 %v1027, 4294901760
    %v1258 = vsub.f32 %v1027, %v1257
    %1259 = vmatpush1.msra.mxu0 %v1258
    %1260 = vmatprep.subr.mxu0 0.0
    %v1261 = vand.u32 %v1028, 4294901760
    %v1262 = vsub.f32 %v1028, %v1261
    %1263 = vmatpush1.msra.mxu0 %v1262
    %1264 = vmatprep.subr.mxu0 0.0
    %v1265 = vand.u32 %v1029, 4294901760
    %v1266 = vsub.f32 %v1029, %v1265
    %1267 = vmatpush1.msra.mxu0 %v1266
    %1268 = vmatprep.subr.mxu0 0.0
    %v1269 = vand.u32 %v1030, 4294901760
    %v1270 = vsub.f32 %v1030, %v1269
    %1271 = vmatpush1.msra.mxu0 %v1270
    %1272 = vmatprep.subr.mxu0 0.0
    %v1273 = vand.u32 %v1031, 4294901760
    %v1274 = vsub.f32 %v1031, %v1273
    %1275 = vmatpush1.msra.mxu0 %v1274
    %1276 = vmatprep.subr.mxu0 0.0
    %v1277 = vand.u32 %v1032, 4294901760
    %v1278 = vsub.f32 %v1032, %v1277
    %1279 = vmatpush1.msra.mxu0 %v1278
    %1280 = vmatprep.subr.mxu0 0.0
    %1281 = vmatpush1.msra.mxu0 0.0
    %1282 = vmatprep.subr.mxu0 0.0
    %1283 = vmatpush1.msra.mxu0 0.0
    %1284 = vmatprep.subr.mxu0 0.0
    %1285 = vmatpush1.msra.mxu0 0.0
    %1286 = vmatprep.subr.mxu0 0.0
    %1287 = vmatpush1.msra.mxu0 0.0
    %1288 = vmatprep.subr.mxu0 0.0
    %1289 = vmatpush1.msra.mxu0 0.0
    %1290 = vmatprep.subr.mxu0 0.0
    %1291 = vmatpush1.msra.mxu0 0.0
    %1292 = vmatprep.subr.mxu0 0.0
    %1293 = vmatpush1.msra.mxu0 0.0
    %1294 = vmatprep.subr.mxu0 0.0
    %1295 = vmatpush1.msra.mxu0 0.0
    %1296 = vmatprep.subr.mxu0 0.0
    %1297 = vmatpush1.msra.mxu0 0.0
    %1298 = vmatprep.subr.mxu0 0.0
    %1299 = vmatpush1.msra.mxu0 0.0
    %1300 = vmatprep.subr.mxu0 0.0
    %1301 = vmatpush1.msra.mxu0 0.0
    %1302 = vmatprep.subr.mxu0 0.0
    %1303 = vmatpush1.msra.mxu0 0.0
    %1304 = vmatprep.subr.mxu0 0.0
    %1305 = vmatpush1.msra.mxu0 0.0
    %1306 = vmatprep.subr.mxu0 0.0
    %1307 = vmatpush1.msra.mxu0 0.0
    %1308 = vmatprep.subr.mxu0 0.0
    %1309 = vmatpush1.msra.mxu0 0.0
    %1310 = vmatprep.subr.mxu0 0.0
    %1311 = vmatpush1.msra.mxu0 0.0
    %1312 = vmatprep.subr.mxu0 0.0
    %1313 = vmatpush1.msra.mxu0 0.0
    %1314 = vmatprep.subr.mxu0 0.0
    %1315 = vmatpush1.msra.mxu0 0.0
    %1316 = vmatprep.subr.mxu0 0.0
    %1317 = vmatpush1.msra.mxu0 0.0
    %1318 = vmatprep.subr.mxu0 0.0
    %1319 = vmatpush1.msra.mxu0 0.0
    %1320 = vmatprep.subr.mxu0 0.0
    %1321 = vmatpush1.msra.mxu0 0.0
    %1322 = vmatprep.subr.mxu0 0.0
    %1323 = vmatpush1.msra.mxu0 0.0
    %1324 = vmatprep.subr.mxu0 0.0
    %1325 = vmatpush1.msra.mxu0 0.0
    %1326 = vmatprep.mubr.f32.mxu0 0.0
    %v1327 = vand.u32 %v1042, 4294901760
    %v1328 = vsub.f32 %v1042, %v1327
    %1329 = vmatmul.mubr.f32.gmra.mrb[0].mxu0 %v1328
    %v1330 = vpop.f32.mrb[0].mxu0
    %v1331 = vadd.f32 %v1241, %v1330
    %v1332 = vpop.f32.mrb[0].mxu0
    %1333 = vdwg.mxu0
    %1334 = vmatprep.subr.mxu0 0.0
    %v1335 = vand.u32 %v1024, 4294901760
    %1336 = vmatpush1.msra.mxu0 %v1335
    %1337 = vmatprep.subr.mxu0 0.0
    %v1338 = vand.u32 %v1025, 4294901760
    %1339 = vmatpush1.msra.mxu0 %v1338
    %1340 = vmatprep.subr.mxu0 0.0
    %v1341 = vand.u32 %v1026, 4294901760
    %1342 = vmatpush1.msra.mxu0 %v1341
    %1343 = vmatprep.subr.mxu0 0.0
    %v1344 = vand.u32 %v1027, 4294901760
    %1345 = vmatpush1.msra.mxu0 %v1344
    %1346 = vmatprep.subr.mxu0 0.0
    %v1347 = vand.u32 %v1028, 4294901760
    %1348 = vmatpush1.msra.mxu0 %v1347
    %1349 = vmatprep.subr.mxu0 0.0
    %v1350 = vand.u32 %v1029, 4294901760
    %1351 = vmatpush1.msra.mxu0 %v1350
    %1352 = vmatprep.subr.mxu0 0.0
    %v1353 = vand.u32 %v1030, 4294901760
    %1354 = vmatpush1.msra.mxu0 %v1353
    %1355 = vmatprep.subr.mxu0 0.0
    %v1356 = vand.u32 %v1031, 4294901760
    %1357 = vmatpush1.msra.mxu0 %v1356
    %1358 = vmatprep.subr.mxu0 0.0
    %v1359 = vand.u32 %v1032, 4294901760
    %1360 = vmatpush1.msra.mxu0 %v1359
    %1361 = vmatprep.subr.mxu0 0.0
    %1362 = vmatpush1.msra.mxu0 0.0
    %1363 = vmatprep.subr.mxu0 0.0
    %1364 = vmatpush1.msra.mxu0 0.0
    %1365 = vmatprep.subr.mxu0 0.0
    %1366 = vmatpush1.msra.mxu0 0.0
    %1367 = vmatprep.subr.mxu0 0.0
    %1368 = vmatpush1.msra.mxu0 0.0
    %1369 = vmatprep.subr.mxu0 0.0
    %1370 = vmatpush1.msra.mxu0 0.0
    %1371 = vmatprep.subr.mxu0 0.0
    %1372 = vmatpush1.msra.mxu0 0.0
    %1373 = vmatprep.subr.mxu0 0.0
    %1374 = vmatpush1.msra.mxu0 0.0
    %1375 = vmatprep.subr.mxu0 0.0
    %1376 = vmatpush1.msra.mxu0 0.0
    %1377 = vmatprep.subr.mxu0 0.0
    %1378 = vmatpush1.msra.mxu0 0.0
    %1379 = vmatprep.subr.mxu0 0.0
    %1380 = vmatpush1.msra.mxu0 0.0
    %1381 = vmatprep.subr.mxu0 0.0
    %1382 = vmatpush1.msra.mxu0 0.0
    %1383 = vmatprep.subr.mxu0 0.0
    %1384 = vmatpush1.msra.mxu0 0.0
    %1385 = vmatprep.subr.mxu0 0.0
    %1386 = vmatpush1.msra.mxu0 0.0
    %1387 = vmatprep.subr.mxu0 0.0
    %1388 = vmatpush1.msra.mxu0 0.0
    %1389 = vmatprep.subr.mxu0 0.0
    %1390 = vmatpush1.msra.mxu0 0.0
    %1391 = vmatprep.subr.mxu0 0.0
    %1392 = vmatpush1.msra.mxu0 0.0
    %1393 = vmatprep.subr.mxu0 0.0
    %1394 = vmatpush1.msra.mxu0 0.0
    %1395 = vmatprep.subr.mxu0 0.0
    %1396 = vmatpush1.msra.mxu0 0.0
    %1397 = vmatprep.subr.mxu0 0.0
    %1398 = vmatpush1.msra.mxu0 0.0
    %1399 = vmatprep.subr.mxu0 0.0
    %1400 = vmatpush1.msra.mxu0 0.0
    %1401 = vmatprep.subr.mxu0 0.0
    %1402 = vmatpush1.msra.mxu0 0.0
    %1403 = vmatprep.subr.mxu0 0.0
    %1404 = vmatpush1.msra.mxu0 0.0
    %1405 = vmatprep.subr.mxu0 0.0
    %1406 = vmatpush1.msra.mxu0 0.0
    %1407 = vmatprep.mubr.f32.mxu0 0.0
    %v1408 = vand.u32 %v1042, 4294901760
    %v1409 = vsub.f32 %v1042, %v1408
    %v1410 = vand.u32 %v1409, 4294901760
    %1411 = vmatmul.mubr.f32.gmra.mrb[0].mxu0 %v1410
    %v1412 = vpop.f32.mrb[0].mxu0
    %v1413 = vadd.f32 %v1331, %v1412
    %v1414 = vpop.f32.mrb[0].mxu0
    %1415 = vdwg.mxu0
    %1416 = vmatprep.subr.mxu0 0.0
    %v1417 = vand.u32 %v1024, 4294901760
    %v1418 = vsub.f32 %v1024, %v1417
    %v1419 = vand.u32 %v1418, 4294901760
    %1420 = vmatpush1.msra.mxu0 %v1419
    %1421 = vmatprep.subr.mxu0 0.0
    %v1422 = vand.u32 %v1025, 4294901760
    %v1423 = vsub.f32 %v1025, %v1422
    %v1424 = vand.u32 %v1423, 4294901760
    %1425 = vmatpush1.msra.mxu0 %v1424
    %1426 = vmatprep.subr.mxu0 0.0
    %v1427 = vand.u32 %v1026, 4294901760
    %v1428 = vsub.f32 %v1026, %v1427
    %v1429 = vand.u32 %v1428, 4294901760
    %1430 = vmatpush1.msra.mxu0 %v1429
    %1431 = vmatprep.subr.mxu0 0.0
    %v1432 = vand.u32 %v1027, 4294901760
    %v1433 = vsub.f32 %v1027, %v1432
    %v1434 = vand.u32 %v1433, 4294901760
    %1435 = vmatpush1.msra.mxu0 %v1434
    %1436 = vmatprep.subr.mxu0 0.0
    %v1437 = vand.u32 %v1028, 4294901760
    %v1438 = vsub.f32 %v1028, %v1437
    %v1439 = vand.u32 %v1438, 4294901760
    %1440 = vmatpush1.msra.mxu0 %v1439
    %1441 = vmatprep.subr.mxu0 0.0
    %v1442 = vand.u32 %v1029, 4294901760
    %v1443 = vsub.f32 %v1029, %v1442
    %v1444 = vand.u32 %v1443, 4294901760
    %1445 = vmatpush1.msra.mxu0 %v1444
    %1446 = vmatprep.subr.mxu0 0.0
    %v1447 = vand.u32 %v1030, 4294901760
    %v1448 = vsub.f32 %v1030, %v1447
    %v1449 = vand.u32 %v1448, 4294901760
    %1450 = vmatpush1.msra.mxu0 %v1449
    %1451 = vmatprep.subr.mxu0 0.0
    %v1452 = vand.u32 %v1031, 4294901760
    %v1453 = vsub.f32 %v1031, %v1452
    %v1454 = vand.u32 %v1453, 4294901760
    %1455 = vmatpush1.msra.mxu0 %v1454
    %1456 = vmatprep.subr.mxu0 0.0
    %v1457 = vand.u32 %v1032, 4294901760
    %v1458 = vsub.f32 %v1032, %v1457
    %v1459 = vand.u32 %v1458, 4294901760
    %1460 = vmatpush1.msra.mxu0 %v1459
    %1461 = vmatprep.subr.mxu0 0.0
    %1462 = vmatpush1.msra.mxu0 0.0
    %1463 = vmatprep.subr.mxu0 0.0
    %1464 = vmatpush1.msra.mxu0 0.0
    %1465 = vmatprep.subr.mxu0 0.0
    %1466 = vmatpush1.msra.mxu0 0.0
    %1467 = vmatprep.subr.mxu0 0.0
    %1468 = vmatpush1.msra.mxu0 0.0
    %1469 = vmatprep.subr.mxu0 0.0
    %1470 = vmatpush1.msra.mxu0 0.0
    %1471 = vmatprep.subr.mxu0 0.0
    %1472 = vmatpush1.msra.mxu0 0.0
    %1473 = vmatprep.subr.mxu0 0.0
    %1474 = vmatpush1.msra.mxu0 0.0
    %1475 = vmatprep.subr.mxu0 0.0
    %1476 = vmatpush1.msra.mxu0 0.0
    %1477 = vmatprep.subr.mxu0 0.0
    %1478 = vmatpush1.msra.mxu0 0.0
    %1479 = vmatprep.subr.mxu0 0.0
    %1480 = vmatpush1.msra.mxu0 0.0
    %1481 = vmatprep.subr.mxu0 0.0
    %1482 = vmatpush1.msra.mxu0 0.0
    %1483 = vmatprep.subr.mxu0 0.0
    %1484 = vmatpush1.msra.mxu0 0.0
    %1485 = vmatprep.subr.mxu0 0.0
    %1486 = vmatpush1.msra.mxu0 0.0
    %1487 = vmatprep.subr.mxu0 0.0
    %1488 = vmatpush1.msra.mxu0 0.0
    %1489 = vmatprep.subr.mxu0 0.0
    %1490 = vmatpush1.msra.mxu0 0.0
    %1491 = vmatprep.subr.mxu0 0.0
    %1492 = vmatpush1.msra.mxu0 0.0
    %1493 = vmatprep.subr.mxu0 0.0
    %1494 = vmatpush1.msra.mxu0 0.0
    %1495 = vmatprep.subr.mxu0 0.0
    %1496 = vmatpush1.msra.mxu0 0.0
    %1497 = vmatprep.subr.mxu0 0.0
    %1498 = vmatpush1.msra.mxu0 0.0
    %1499 = vmatprep.subr.mxu0 0.0
    %1500 = vmatpush1.msra.mxu0 0.0
    %1501 = vmatprep.subr.mxu0 0.0
    %1502 = vmatpush1.msra.mxu0 0.0
    %1503 = vmatprep.subr.mxu0 0.0
    %1504 = vmatpush1.msra.mxu0 0.0
    %1505 = vmatprep.subr.mxu0 0.0
    %1506 = vmatpush1.msra.mxu0 0.0
    %1507 = vmatprep.mubr.f32.mxu0 0.0
    %v1508 = vand.u32 %v1042, 4294901760
    %1509 = vmatmul.mubr.f32.gmra.mrb[0].mxu0 %v1508
    %v1510 = vpop.f32.mrb[0].mxu0
    %v1511 = vadd.f32 %v1413, %v1510
    %v1512 = vpop.f32.mrb[0].mxu0
    %1513 = vdwg.mxu0
    %1514 = vmatprep.subr.mxu0 0.0
    %v1515 = vand.u32 %v1024, 4294901760
    %1516 = vmatpush1.msra.mxu0 %v1515
    %1517 = vmatprep.subr.mxu0 0.0
    %v1518 = vand.u32 %v1025, 4294901760
    %1519 = vmatpush1.msra.mxu0 %v1518
    %1520 = vmatprep.subr.mxu0 0.0
    %v1521 = vand.u32 %v1026, 4294901760
    %1522 = vmatpush1.msra.mxu0 %v1521
    %1523 = vmatprep.subr.mxu0 0.0
    %v1524 = vand.u32 %v1027, 4294901760
    %1525 = vmatpush1.msra.mxu0 %v1524
    %1526 = vmatprep.subr.mxu0 0.0
    %v1527 = vand.u32 %v1028, 4294901760
    %1528 = vmatpush1.msra.mxu0 %v1527
    %1529 = vmatprep.subr.mxu0 0.0
    %v1530 = vand.u32 %v1029, 4294901760
    %1531 = vmatpush1.msra.mxu0 %v1530
    %1532 = vmatprep.subr.mxu0 0.0
    %v1533 = vand.u32 %v1030, 4294901760
    %1534 = vmatpush1.msra.mxu0 %v1533
    %1535 = vmatprep.subr.mxu0 0.0
    %v1536 = vand.u32 %v1031, 4294901760
    %1537 = vmatpush1.msra.mxu0 %v1536
    %1538 = vmatprep.subr.mxu0 0.0
    %v1539 = vand.u32 %v1032, 4294901760
    %1540 = vmatpush1.msra.mxu0 %v1539
    %1541 = vmatprep.subr.mxu0 0.0
    %1542 = vmatpush1.msra.mxu0 0.0
    %1543 = vmatprep.subr.mxu0 0.0
    %1544 = vmatpush1.msra.mxu0 0.0
    %1545 = vmatprep.subr.mxu0 0.0
    %1546 = vmatpush1.msra.mxu0 0.0
    %1547 = vmatprep.subr.mxu0 0.0
    %1548 = vmatpush1.msra.mxu0 0.0
    %1549 = vmatprep.subr.mxu0 0.0
    %1550 = vmatpush1.msra.mxu0 0.0
    %1551 = vmatprep.subr.mxu0 0.0
    %1552 = vmatpush1.msra.mxu0 0.0
    %1553 = vmatprep.subr.mxu0 0.0
    %1554 = vmatpush1.msra.mxu0 0.0
    %1555 = vmatprep.subr.mxu0 0.0
    %1556 = vmatpush1.msra.mxu0 0.0
    %1557 = vmatprep.subr.mxu0 0.0
    %1558 = vmatpush1.msra.mxu0 0.0
    %1559 = vmatprep.subr.mxu0 0.0
    %1560 = vmatpush1.msra.mxu0 0.0
    %1561 = vmatprep.subr.mxu0 0.0
    %1562 = vmatpush1.msra.mxu0 0.0
    %1563 = vmatprep.subr.mxu0 0.0
    %1564 = vmatpush1.msra.mxu0 0.0
    %1565 = vmatprep.subr.mxu0 0.0
    %1566 = vmatpush1.msra.mxu0 0.0
    %1567 = vmatprep.subr.mxu0 0.0
    %1568 = vmatpush1.msra.mxu0 0.0
    %1569 = vmatprep.subr.mxu0 0.0
    %1570 = vmatpush1.msra.mxu0 0.0
    %1571 = vmatprep.subr.mxu0 0.0
    %1572 = vmatpush1.msra.mxu0 0.0
    %1573 = vmatprep.subr.mxu0 0.0
    %1574 = vmatpush1.msra.mxu0 0.0
    %1575 = vmatprep.subr.mxu0 0.0
    %1576 = vmatpush1.msra.mxu0 0.0
    %1577 = vmatprep.subr.mxu0 0.0
    %1578 = vmatpush1.msra.mxu0 0.0
    %1579 = vmatprep.subr.mxu0 0.0
    %1580 = vmatpush1.msra.mxu0 0.0
    %1581 = vmatprep.subr.mxu0 0.0
    %1582 = vmatpush1.msra.mxu0 0.0
    %1583 = vmatprep.subr.mxu0 0.0
    %1584 = vmatpush1.msra.mxu0 0.0
    %1585 = vmatprep.subr.mxu0 0.0
    %1586 = vmatpush1.msra.mxu0 0.0
    %1587 = vmatprep.mubr.f32.mxu0 0.0
    %v1588 = vand.u32 %v1042, 4294901760
    %1589 = vmatmul.mubr.f32.gmra.mrb[0].mxu0 %v1588
    %v1590 = vpop.f32.mrb[0].mxu0
    %v1591 = vadd.f32 %v1511, %v1590
    %v1592 = vpop.f32.mrb[0].mxu0
    %1593 = vdwg.mxu0
    %v1594 = vand.u32 2147483647, %v1591
    %v1595 = vld [vmem:[%s5] sm:$0xff]
    %v1596 = vld [vmem:[%s5 + $0x8] sm:$0xff]
    %v1597 = vld [vmem:[%s5 + $0x10] sm:$0xff]
    %v1598 = vld [vmem:[%s5 + $0x18] sm:$0xff]
    %v1599 = vld [vmem:[%s5 + $0x20] sm:$0xff]
    %v1600 = vld [vmem:[%s5 + $0x28] sm:$0xff]
    %vm1601 = vcmask 392192
    %v1603 = vsel %vm1601, %v1594, 0
    %1605 = vmatprep.subr.mxu0 0.0
    %v1606 = vand.u32 %v1595, 4294901760
    %1607 = vmatpush1.msra.mxu0 %v1606
    %1608 = vmatprep.subr.mxu0 0.0
    %v1609 = vand.u32 %v1596, 4294901760
    %1610 = vmatpush1.msra.mxu0 %v1609
    %1611 = vmatprep.subr.mxu0 0.0
    %v1612 = vand.u32 %v1597, 4294901760
    %1613 = vmatpush1.msra.mxu0 %v1612
    %1614 = vmatprep.subr.mxu0 0.0
    %v1615 = vand.u32 %v1598, 4294901760
    %1616 = vmatpush1.msra.mxu0 %v1615
    %1617 = vmatprep.subr.mxu0 0.0
    %v1618 = vand.u32 %v1599, 4294901760
    %1619 = vmatpush1.msra.mxu0 %v1618
    %1620 = vmatprep.subr.mxu0 0.0
    %v1621 = vand.u32 %v1600, 4294901760
    %1622 = vmatpush1.msra.mxu0 %v1621
    %1623 = vmatprep.subr.mxu0 0.0
    %1624 = vmatpush1.msra.mxu0 0.0
    %1625 = vmatprep.subr.mxu0 0.0
    %1626 = vmatpush1.msra.mxu0 0.0
    %1627 = vmatprep.subr.mxu0 0.0
    %1628 = vmatpush1.msra.mxu0 0.0
    %1629 = vmatprep.subr.mxu0 0.0
    %1630 = vmatpush1.msra.mxu0 0.0
    %1631 = vmatprep.subr.mxu0 0.0
    %1632 = vmatpush1.msra.mxu0 0.0
    %1633 = vmatprep.subr.mxu0 0.0
    %1634 = vmatpush1.msra.mxu0 0.0
    %1635 = vmatprep.subr.mxu0 0.0
    %1636 = vmatpush1.msra.mxu0 0.0
    %1637 = vmatprep.subr.mxu0 0.0
    %1638 = vmatpush1.msra.mxu0 0.0
    %1639 = vmatprep.subr.mxu0 0.0
    %1640 = vmatpush1.msra.mxu0 0.0
    %1641 = vmatprep.subr.mxu0 0.0
    %1642 = vmatpush1.msra.mxu0 0.0
    %1643 = vmatprep.subr.mxu0 0.0
    %1644 = vmatpush1.msra.mxu0 0.0
    %1645 = vmatprep.subr.mxu0 0.0
    %1646 = vmatpush1.msra.mxu0 0.0
    %1647 = vmatprep.subr.mxu0 0.0
    %1648 = vmatpush1.msra.mxu0 0.0
    %1649 = vmatprep.subr.mxu0 0.0
    %1650 = vmatpush1.msra.mxu0 0.0
    %1651 = vmatprep.subr.mxu0 0.0
    %1652 = vmatpush1.msra.mxu0 0.0
    %1653 = vmatprep.subr.mxu0 0.0
    %1654 = vmatpush1.msra.mxu0 0.0
    %1655 = vmatprep.subr.mxu0 0.0
    %1656 = vmatpush1.msra.mxu0 0.0
    %1657 = vmatprep.subr.mxu0 0.0
    %1658 = vmatpush1.msra.mxu0 0.0
    %1659 = vmatprep.subr.mxu0 0.0
    %1660 = vmatpush1.msra.mxu0 0.0
    %1661 = vmatprep.subr.mxu0 0.0
    %1662 = vmatpush1.msra.mxu0 0.0
    %1663 = vmatprep.subr.mxu0 0.0
    %1664 = vmatpush1.msra.mxu0 0.0
    %1665 = vmatprep.subr.mxu0 0.0
    %1666 = vmatpush1.msra.mxu0 0.0
    %1667 = vmatprep.subr.mxu0 0.0
    %1668 = vmatpush1.msra.mxu0 0.0
    %1669 = vmatprep.subr.mxu0 0.0
    %1670 = vmatpush1.msra.mxu0 0.0
    %1671 = vmatprep.subr.mxu0 0.0
    %1672 = vmatpush1.msra.mxu0 0.0
    %1673 = vmatprep.subr.mxu0 0.0
    %1674 = vmatpush1.msra.mxu0 0.0
    %1675 = vmatprep.mubr.f32.mxu0 0.0
    %v1676 = vand.u32 %v1603, 4294901760
    %v1677 = vsub.f32 %v1603, %v1676
    %v1678 = vand.u32 %v1677, 4294901760
    %v1679 = vsub.f32 %v1677, %v1678
    %v1680 = vand.u32 %v1679, 4294901760
    %1681 = vmatmul.mubr.f32.gmra.mrb[0].mxu0 %v1680
    %v1682 = vpop.f32.mrb[0].mxu0
    %v1683 = vadd.f32 0.0, %v1682
    %v1684 = vpop.f32.mrb[0].mxu0
    %1685 = vdwg.mxu0
    %1686 = vmatprep.subr.mxu0 0.0
    %v1687 = vand.u32 %v1595, 4294901760
    %v1688 = vsub.f32 %v1595, %v1687
    %v1689 = vand.u32 %v1688, 4294901760
    %v1690 = vsub.f32 %v1688, %v1689
    %v1691 = vand.u32 %v1690, 4294901760
    %1692 = vmatpush1.msra.mxu0 %v1691
    %1693 = vmatprep.subr.mxu0 0.0
    %v1694 = vand.u32 %v1596, 4294901760
    %v1695 = vsub.f32 %v1596, %v1694
    %v1696 = vand.u32 %v1695, 4294901760
    %v1697 = vsub.f32 %v1695, %v1696
    %v1698 = vand.u32 %v1697, 4294901760
    %1699 = vmatpush1.msra.mxu0 %v1698
    %1700 = vmatprep.subr.mxu0 0.0
    %v1701 = vand.u32 %v1597, 4294901760
    %v1702 = vsub.f32 %v1597, %v1701
    %v1703 = vand.u32 %v1702, 4294901760
    %v1704 = vsub.f32 %v1702, %v1703
    %v1705 = vand.u32 %v1704, 4294901760
    %1706 = vmatpush1.msra.mxu0 %v1705
    %1707 = vmatprep.subr.mxu0 0.0
    %v1708 = vand.u32 %v1598, 4294901760
    %v1709 = vsub.f32 %v1598, %v1708
    %v1710 = vand.u32 %v1709, 4294901760
    %v1711 = vsub.f32 %v1709, %v1710
    %v1712 = vand.u32 %v1711, 4294901760
    %1713 = vmatpush1.msra.mxu0 %v1712
    %1714 = vmatprep.subr.mxu0 0.0
    %v1715 = vand.u32 %v1599, 4294901760
    %v1716 = vsub.f32 %v1599, %v1715
    %v1717 = vand.u32 %v1716, 4294901760
    %v1718 = vsub.f32 %v1716, %v1717
    %v1719 = vand.u32 %v1718, 4294901760
    %1720 = vmatpush1.msra.mxu0 %v1719
    %1721 = vmatprep.subr.mxu0 0.0
    %v1722 = vand.u32 %v1600, 4294901760
    %v1723 = vsub.f32 %v1600, %v1722
    %v1724 = vand.u32 %v1723, 4294901760
    %v1725 = vsub.f32 %v1723, %v1724
    %v1726 = vand.u32 %v1725, 4294901760
    %1727 = vmatpush1.msra.mxu0 %v1726
    %1728 = vmatprep.subr.mxu0 0.0
    %1729 = vmatpush1.msra.mxu0 0.0
    %1730 = vmatprep.subr.mxu0 0.0
    %1731 = vmatpush1.msra.mxu0 0.0
    %1732 = vmatprep.subr.mxu0 0.0
    %1733 = vmatpush1.msra.mxu0 0.0
    %1734 = vmatprep.subr.mxu0 0.0
    %1735 = vmatpush1.msra.mxu0 0.0
    %1736 = vmatprep.subr.mxu0 0.0
    %1737 = vmatpush1.msra.mxu0 0.0
    %1738 = vmatprep.subr.mxu0 0.0
    %1739 = vmatpush1.msra.mxu0 0.0
    %1740 = vmatprep.subr.mxu0 0.0
    %1741 = vmatpush1.msra.mxu0 0.0
    %1742 = vmatprep.subr.mxu0 0.0
    %1743 = vmatpush1.msra.mxu0 0.0
    %1744 = vmatprep.subr.mxu0 0.0
    %1745 = vmatpush1.msra.mxu0 0.0
    %1746 = vmatprep.subr.mxu0 0.0
    %1747 = vmatpush1.msra.mxu0 0.0
    %1748 = vmatprep.subr.mxu0 0.0
    %1749 = vmatpush1.msra.mxu0 0.0
    %1750 = vmatprep.subr.mxu0 0.0
    %1751 = vmatpush1.msra.mxu0 0.0
    %1752 = vmatprep.subr.mxu0 0.0
    %1753 = vmatpush1.msra.mxu0 0.0
    %1754 = vmatprep.subr.mxu0 0.0
    %1755 = vmatpush1.msra.mxu0 0.0
    %1756 = vmatprep.subr.mxu0 0.0
    %1757 = vmatpush1.msra.mxu0 0.0
    %1758 = vmatprep.subr.mxu0 0.0
    %1759 = vmatpush1.msra.mxu0 0.0
    %1760 = vmatprep.subr.mxu0 0.0
    %1761 = vmatpush1.msra.mxu0 0.0
    %1762 = vmatprep.subr.mxu0 0.0
    %1763 = vmatpush1.msra.mxu0 0.0
    %1764 = vmatprep.subr.mxu0 0.0
    %1765 = vmatpush1.msra.mxu0 0.0
    %1766 = vmatprep.subr.mxu0 0.0
    %1767 = vmatpush1.msra.mxu0 0.0
    %1768 = vmatprep.subr.mxu0 0.0
    %1769 = vmatpush1.msra.mxu0 0.0
    %1770 = vmatprep.subr.mxu0 0.0
    %1771 = vmatpush1.msra.mxu0 0.0
    %1772 = vmatprep.subr.mxu0 0.0
    %1773 = vmatpush1.msra.mxu0 0.0
    %1774 = vmatprep.subr.mxu0 0.0
    %1775 = vmatpush1.msra.mxu0 0.0
    %1776 = vmatprep.subr.mxu0 0.0
    %1777 = vmatpush1.msra.mxu0 0.0
    %1778 = vmatprep.subr.mxu0 0.0
    %1779 = vmatpush1.msra.mxu0 0.0
    %1780 = vmatprep.mubr.f32.mxu0 0.0
    %v1781 = vand.u32 %v1603, 4294901760
    %1782 = vmatmul.mubr.f32.gmra.mrb[0].mxu0 %v1781
    %v1783 = vpop.f32.mrb[0].mxu0
    %v1784 = vadd.f32 %v1683, %v1783
    %v1785 = vpop.f32.mrb[0].mxu0
    %1786 = vdwg.mxu0
    %1787 = vmatprep.subr.mxu0 0.0
    %v1788 = vand.u32 %v1595, 4294901760
    %v1789 = vsub.f32 %v1595, %v1788
    %1790 = vmatpush1.msra.mxu0 %v1789
    %1791 = vmatprep.subr.mxu0 0.0
    %v1792 = vand.u32 %v1596, 4294901760
    %v1793 = vsub.f32 %v1596, %v1792
    %1794 = vmatpush1.msra.mxu0 %v1793
    %1795 = vmatprep.subr.mxu0 0.0
    %v1796 = vand.u32 %v1597, 4294901760
    %v1797 = vsub.f32 %v1597, %v1796
    %1798 = vmatpush1.msra.mxu0 %v1797
    %1799 = vmatprep.subr.mxu0 0.0
    %v1800 = vand.u32 %v1598, 4294901760
    %v1801 = vsub.f32 %v1598, %v1800
    %1802 = vmatpush1.msra.mxu0 %v1801
    %1803 = vmatprep.subr.mxu0 0.0
    %v1804 = vand.u32 %v1599, 4294901760
    %v1805 = vsub.f32 %v1599, %v1804
    %1806 = vmatpush1.msra.mxu0 %v1805
    %1807 = vmatprep.subr.mxu0 0.0
    %v1808 = vand.u32 %v1600, 4294901760
    %v1809 = vsub.f32 %v1600, %v1808
    %1810 = vmatpush1.msra.mxu0 %v1809
    %1811 = vmatprep.subr.mxu0 0.0
    %1812 = vmatpush1.msra.mxu0 0.0
    %1813 = vmatprep.subr.mxu0 0.0
    %1814 = vmatpush1.msra.mxu0 0.0
    %1815 = vmatprep.subr.mxu0 0.0
    %1816 = vmatpush1.msra.mxu0 0.0
    %1817 = vmatprep.subr.mxu0 0.0
    %1818 = vmatpush1.msra.mxu0 0.0
    %1819 = vmatprep.subr.mxu0 0.0
    %1820 = vmatpush1.msra.mxu0 0.0
    %1821 = vmatprep.subr.mxu0 0.0
    %1822 = vmatpush1.msra.mxu0 0.0
    %1823 = vmatprep.subr.mxu0 0.0
    %1824 = vmatpush1.msra.mxu0 0.0
    %1825 = vmatprep.subr.mxu0 0.0
    %1826 = vmatpush1.msra.mxu0 0.0
    %1827 = vmatprep.subr.mxu0 0.0
    %1828 = vmatpush1.msra.mxu0 0.0
    %1829 = vmatprep.subr.mxu0 0.0
    %1830 = vmatpush1.msra.mxu0 0.0
    %1831 = vmatprep.subr.mxu0 0.0
    %1832 = vmatpush1.msra.mxu0 0.0
    %1833 = vmatprep.subr.mxu0 0.0
    %1834 = vmatpush1.msra.mxu0 0.0
    %1835 = vmatprep.subr.mxu0 0.0
    %1836 = vmatpush1.msra.mxu0 0.0
    %1837 = vmatprep.subr.mxu0 0.0
    %1838 = vmatpush1.msra.mxu0 0.0
    %1839 = vmatprep.subr.mxu0 0.0
    %1840 = vmatpush1.msra.mxu0 0.0
    %1841 = vmatprep.subr.mxu0 0.0
    %1842 = vmatpush1.msra.mxu0 0.0
    %1843 = vmatprep.subr.mxu0 0.0
    %1844 = vmatpush1.msra.mxu0 0.0
    %1845 = vmatprep.subr.mxu0 0.0
    %1846 = vmatpush1.msra.mxu0 0.0
    %1847 = vmatprep.subr.mxu0 0.0
    %1848 = vmatpush1.msra.mxu0 0.0
    %1849 = vmatprep.subr.mxu0 0.0
    %1850 = vmatpush1.msra.mxu0 0.0
    %1851 = vmatprep.subr.mxu0 0.0
    %1852 = vmatpush1.msra.mxu0 0.0
    %1853 = vmatprep.subr.mxu0 0.0
    %1854 = vmatpush1.msra.mxu0 0.0
    %1855 = vmatprep.subr.mxu0 0.0
    %1856 = vmatpush1.msra.mxu0 0.0
    %1857 = vmatprep.subr.mxu0 0.0
    %1858 = vmatpush1.msra.mxu0 0.0
    %1859 = vmatprep.subr.mxu0 0.0
    %1860 = vmatpush1.msra.mxu0 0.0
    %1861 = vmatprep.subr.mxu0 0.0
    %1862 = vmatpush1.msra.mxu0 0.0
    %1863 = vmatprep.mubr.f32.mxu0 0.0
    %v1864 = vand.u32 %v1603, 4294901760
    %v1865 = vsub.f32 %v1603, %v1864
    %1866 = vmatmul.mubr.f32.gmra.mrb[0].mxu0 %v1865
    %v1867 = vpop.f32.mrb[0].mxu0
    %v1868 = vadd.f32 %v1784, %v1867
    %v1869 = vpop.f32.mrb[0].mxu0
    %1870 = vdwg.mxu0
    %1871 = vmatprep.subr.mxu0 0.0
    %v1872 = vand.u32 %v1595, 4294901760
    %1873 = vmatpush1.msra.mxu0 %v1872
    %1874 = vmatprep.subr.mxu0 0.0
    %v1875 = vand.u32 %v1596, 4294901760
    %1876 = vmatpush1.msra.mxu0 %v1875
    %1877 = vmatprep.subr.mxu0 0.0
    %v1878 = vand.u32 %v1597, 4294901760
    %1879 = vmatpush1.msra.mxu0 %v1878
    %1880 = vmatprep.subr.mxu0 0.0
    %v1881 = vand.u32 %v1598, 4294901760
    %1882 = vmatpush1.msra.mxu0 %v1881
    %1883 = vmatprep.subr.mxu0 0.0
    %v1884 = vand.u32 %v1599, 4294901760
    %1885 = vmatpush1.msra.mxu0 %v1884
    %1886 = vmatprep.subr.mxu0 0.0
    %v1887 = vand.u32 %v1600, 4294901760
    %1888 = vmatpush1.msra.mxu0 %v1887
    %1889 = vmatprep.subr.mxu0 0.0
    %1890 = vmatpush1.msra.mxu0 0.0
    %1891 = vmatprep.subr.mxu0 0.0
    %1892 = vmatpush1.msra.mxu0 0.0
    %1893 = vmatprep.subr.mxu0 0.0
    %1894 = vmatpush1.msra.mxu0 0.0
    %1895 = vmatprep.subr.mxu0 0.0
    %1896 = vmatpush1.msra.mxu0 0.0
    %1897 = vmatprep.subr.mxu0 0.0
    %1898 = vmatpush1.msra.mxu0 0.0
    %1899 = vmatprep.subr.mxu0 0.0
    %1900 = vmatpush1.msra.mxu0 0.0
    %1901 = vmatprep.subr.mxu0 0.0
    %1902 = vmatpush1.msra.mxu0 0.0
    %1903 = vmatprep.subr.mxu0 0.0
    %1904 = vmatpush1.msra.mxu0 0.0
    %1905 = vmatprep.subr.mxu0 0.0
    %1906 = vmatpush1.msra.mxu0 0.0
    %1907 = vmatprep.subr.mxu0 0.0
    %1908 = vmatpush1.msra.mxu0 0.0
    %1909 = vmatprep.subr.mxu0 0.0
    %1910 = vmatpush1.msra.mxu0 0.0
    %1911 = vmatprep.subr.mxu0 0.0
    %1912 = vmatpush1.msra.mxu0 0.0
    %1913 = vmatprep.subr.mxu0 0.0
    %1914 = vmatpush1.msra.mxu0 0.0
    %1915 = vmatprep.subr.mxu0 0.0
    %1916 = vmatpush1.msra.mxu0 0.0
    %1917 = vmatprep.subr.mxu0 0.0
    %1918 = vmatpush1.msra.mxu0 0.0
    %1919 = vmatprep.subr.mxu0 0.0
    %1920 = vmatpush1.msra.mxu0 0.0
    %1921 = vmatprep.subr.mxu0 0.0
    %1922 = vmatpush1.msra.mxu0 0.0
    %1923 = vmatprep.subr.mxu0 0.0
    %1924 = vmatpush1.msra.mxu0 0.0
    %1925 = vmatprep.subr.mxu0 0.0
    %1926 = vmatpush1.msra.mxu0 0.0
    %1927 = vmatprep.subr.mxu0 0.0
    %1928 = vmatpush1.msra.mxu0 0.0
    %1929 = vmatprep.subr.mxu0 0.0
    %1930 = vmatpush1.msra.mxu0 0.0
    %1931 = vmatprep.subr.mxu0 0.0
    %1932 = vmatpush1.msra.mxu0 0.0
    %1933 = vmatprep.subr.mxu0 0.0
    %1934 = vmatpush1.msra.mxu0 0.0
    %1935 = vmatprep.subr.mxu0 0.0
    %1936 = vmatpush1.msra.mxu0 0.0
    %1937 = vmatprep.subr.mxu0 0.0
    %1938 = vmatpush1.msra.mxu0 0.0
    %1939 = vmatprep.subr.mxu0 0.0
    %1940 = vmatpush1.msra.mxu0 0.0
    %1941 = vmatprep.mubr.f32.mxu0 0.0
    %v1942 = vand.u32 %v1603, 4294901760
    %v1943 = vsub.f32 %v1603, %v1942
    %v1944 = vand.u32 %v1943, 4294901760
    %1945 = vmatmul.mubr.f32.gmra.mrb[0].mxu0 %v1944
    %v1946 = vpop.f32.mrb[0].mxu0
    %v1947 = vadd.f32 %v1868, %v1946
    %v1948 = vpop.f32.mrb[0].mxu0
    %1949 = vdwg.mxu0
    %1950 = vmatprep.subr.mxu0 0.0
    %v1951 = vand.u32 %v1595, 4294901760
    %v1952 = vsub.f32 %v1595, %v1951
    %v1953 = vand.u32 %v1952, 4294901760
    %1954 = vmatpush1.msra.mxu0 %v1953
    %1955 = vmatprep.subr.mxu0 0.0
    %v1956 = vand.u32 %v1596, 4294901760
    %v1957 = vsub.f32 %v1596, %v1956
    %v1958 = vand.u32 %v1957, 4294901760
    %1959 = vmatpush1.msra.mxu0 %v1958
    %1960 = vmatprep.subr.mxu0 0.0
    %v1961 = vand.u32 %v1597, 4294901760
    %v1962 = vsub.f32 %v1597, %v1961
    %v1963 = vand.u32 %v1962, 4294901760
    %1964 = vmatpush1.msra.mxu0 %v1963
    %1965 = vmatprep.subr.mxu0 0.0
    %v1966 = vand.u32 %v1598, 4294901760
    %v1967 = vsub.f32 %v1598, %v1966
    %v1968 = vand.u32 %v1967, 4294901760
    %1969 = vmatpush1.msra.mxu0 %v1968
    %1970 = vmatprep.subr.mxu0 0.0
    %v1971 = vand.u32 %v1599, 4294901760
    %v1972 = vsub.f32 %v1599, %v1971
    %v1973 = vand.u32 %v1972, 4294901760
    %1974 = vmatpush1.msra.mxu0 %v1973
    %1975 = vmatprep.subr.mxu0 0.0
    %v1976 = vand.u32 %v1600, 4294901760
    %v1977 = vsub.f32 %v1600, %v1976
    %v1978 = vand.u32 %v1977, 4294901760
    %1979 = vmatpush1.msra.mxu0 %v1978
    %1980 = vmatprep.subr.mxu0 0.0
    %1981 = vmatpush1.msra.mxu0 0.0
    %1982 = vmatprep.subr.mxu0 0.0
    %1983 = vmatpush1.msra.mxu0 0.0
    %1984 = vmatprep.subr.mxu0 0.0
    %1985 = vmatpush1.msra.mxu0 0.0
    %1986 = vmatprep.subr.mxu0 0.0
    %1987 = vmatpush1.msra.mxu0 0.0
    %1988 = vmatprep.subr.mxu0 0.0
    %1989 = vmatpush1.msra.mxu0 0.0
    %1990 = vmatprep.subr.mxu0 0.0
    %1991 = vmatpush1.msra.mxu0 0.0
    %1992 = vmatprep.subr.mxu0 0.0
    %1993 = vmatpush1.msra.mxu0 0.0
    %1994 = vmatprep.subr.mxu0 0.0
    %1995 = vmatpush1.msra.mxu0 0.0
    %1996 = vmatprep.subr.mxu0 0.0
    %1997 = vmatpush1.msra.mxu0 0.0
    %1998 = vmatprep.subr.mxu0 0.0
    %1999 = vmatpush1.msra.mxu0 0.0
    %2000 = vmatprep.subr.mxu0 0.0
    %2001 = vmatpush1.msra.mxu0 0.0
    %2002 = vmatprep.subr.mxu0 0.0
    %2003 = vmatpush1.msra.mxu0 0.0
    %2004 = vmatprep.subr.mxu0 0.0
    %2005 = vmatpush1.msra.mxu0 0.0
    %2006 = vmatprep.subr.mxu0 0.0
    %2007 = vmatpush1.msra.mxu0 0.0
    %2008 = vmatprep.subr.mxu0 0.0
    %2009 = vmatpush1.msra.mxu0 0.0
    %2010 = vmatprep.subr.mxu0 0.0
    %2011 = vmatpush1.msra.mxu0 0.0
    %2012 = vmatprep.subr.mxu0 0.0
    %2013 = vmatpush1.msra.mxu0 0.0
    %2014 = vmatprep.subr.mxu0 0.0
    %2015 = vmatpush1.msra.mxu0 0.0
    %2016 = vmatprep.subr.mxu0 0.0
    %2017 = vmatpush1.msra.mxu0 0.0
    %2018 = vmatprep.subr.mxu0 0.0
    %2019 = vmatpush1.msra.mxu0 0.0
    %2020 = vmatprep.subr.mxu0 0.0
    %2021 = vmatpush1.msra.mxu0 0.0
    %2022 = vmatprep.subr.mxu0 0.0
    %2023 = vmatpush1.msra.mxu0 0.0
    %2024 = vmatprep.subr.mxu0 0.0
    %2025 = vmatpush1.msra.mxu0 0.0
    %2026 = vmatprep.subr.mxu0 0.0
    %2027 = vmatpush1.msra.mxu0 0.0
    %2028 = vmatprep.subr.mxu0 0.0
    %2029 = vmatpush1.msra.mxu0 0.0
    %2030 = vmatprep.subr.mxu0 0.0
    %2031 = vmatpush1.msra.mxu0 0.0
    %2032 = vmatprep.mubr.f32.mxu0 0.0
    %v2033 = vand.u32 %v1603, 4294901760
    %2034 = vmatmul.mubr.f32.gmra.mrb[0].mxu0 %v2033
    %v2035 = vpop.f32.mrb[0].mxu0
    %v2036 = vadd.f32 %v1947, %v2035
    %v2037 = vpop.f32.mrb[0].mxu0
    %2038 = vdwg.mxu0
    %2039 = vmatprep.subr.mxu0 0.0
    %v2040 = vand.u32 %v1595, 4294901760
    %2041 = vmatpush1.msra.mxu0 %v2040
    %2042 = vmatprep.subr.mxu0 0.0
    %v2043 = vand.u32 %v1596, 4294901760
    %2044 = vmatpush1.msra.mxu0 %v2043
    %2045 = vmatprep.subr.mxu0 0.0
    %v2046 = vand.u32 %v1597, 4294901760
    %2047 = vmatpush1.msra.mxu0 %v2046
    %2048 = vmatprep.subr.mxu0 0.0
    %v2049 = vand.u32 %v1598, 4294901760
    %2050 = vmatpush1.msra.mxu0 %v2049
    %2051 = vmatprep.subr.mxu0 0.0
    %v2052 = vand.u32 %v1599, 4294901760
    %2053 = vmatpush1.msra.mxu0 %v2052
    %2054 = vmatprep.subr.mxu0 0.0
    %v2055 = vand.u32 %v1600, 4294901760
    %2056 = vmatpush1.msra.mxu0 %v2055
    %2057 = vmatprep.subr.mxu0 0.0
    %2058 = vmatpush1.msra.mxu0 0.0
    %2059 = vmatprep.subr.mxu0 0.0
    %2060 = vmatpush1.msra.mxu0 0.0
    %2061 = vmatprep.subr.mxu0 0.0
    %2062 = vmatpush1.msra.mxu0 0.0
    %2063 = vmatprep.subr.mxu0 0.0
    %2064 = vmatpush1.msra.mxu0 0.0
    %2065 = vmatprep.subr.mxu0 0.0
    %2066 = vmatpush1.msra.mxu0 0.0
    %2067 = vmatprep.subr.mxu0 0.0
    %2068 = vmatpush1.msra.mxu0 0.0
    %2069 = vmatprep.subr.mxu0 0.0
    %2070 = vmatpush1.msra.mxu0 0.0
    %2071 = vmatprep.subr.mxu0 0.0
    %2072 = vmatpush1.msra.mxu0 0.0
    %2073 = vmatprep.subr.mxu0 0.0
    %2074 = vmatpush1.msra.mxu0 0.0
    %2075 = vmatprep.subr.mxu0 0.0
    %2076 = vmatpush1.msra.mxu0 0.0
    %2077 = vmatprep.subr.mxu0 0.0
    %2078 = vmatpush1.msra.mxu0 0.0
    %2079 = vmatprep.subr.mxu0 0.0
    %2080 = vmatpush1.msra.mxu0 0.0
    %2081 = vmatprep.subr.mxu0 0.0
    %2082 = vmatpush1.msra.mxu0 0.0
    %2083 = vmatprep.subr.mxu0 0.0
    %2084 = vmatpush1.msra.mxu0 0.0
    %2085 = vmatprep.subr.mxu0 0.0
    %2086 = vmatpush1.msra.mxu0 0.0
    %2087 = vmatprep.subr.mxu0 0.0
    %2088 = vmatpush1.msra.mxu0 0.0
    %2089 = vmatprep.subr.mxu0 0.0
    %2090 = vmatpush1.msra.mxu0 0.0
    %2091 = vmatprep.subr.mxu0 0.0
    %2092 = vmatpush1.msra.mxu0 0.0
    %2093 = vmatprep.subr.mxu0 0.0
    %2094 = vmatpush1.msra.mxu0 0.0
    %2095 = vmatprep.subr.mxu0 0.0
    %2096 = vmatpush1.msra.mxu0 0.0
    %2097 = vmatprep.subr.mxu0 0.0
    %2098 = vmatpush1.msra.mxu0 0.0
    %2099 = vmatprep.subr.mxu0 0.0
    %2100 = vmatpush1.msra.mxu0 0.0
    %2101 = vmatprep.subr.mxu0 0.0
    %2102 = vmatpush1.msra.mxu0 0.0
    %2103 = vmatprep.subr.mxu0 0.0
    %2104 = vmatpush1.msra.mxu0 0.0
    %2105 = vmatprep.subr.mxu0 0.0
    %2106 = vmatpush1.msra.mxu0 0.0
    %2107 = vmatprep.subr.mxu0 0.0
    %2108 = vmatpush1.msra.mxu0 0.0
    %2109 = vmatprep.mubr.f32.mxu0 0.0
    %v2110 = vand.u32 %v1603, 4294901760
    %2111 = vmatmul.mubr.f32.gmra.mrb[0].mxu0 %v2110
    %v2112 = vpop.f32.mrb[0].mxu0
    %v2113 = vadd.f32 %v2036, %v2112
    %v2114 = vpop.f32.mrb[0].mxu0
    %2115 = vdwg.mxu0
    %v2117 = vsel %vm1041, %v1004, 0
    %2119 = vmatprep.subr.mxu0 0.0
    %v2120 = vand.u32 %v1005, 4294901760
    %2121 = vmatpush1.msra.mxu0 %v2120
    %2122 = vmatprep.subr.mxu0 0.0
    %v2123 = vand.u32 %v1006, 4294901760
    %2124 = vmatpush1.msra.mxu0 %v2123
    %2125 = vmatprep.subr.mxu0 0.0
    %v2126 = vand.u32 %v1007, 4294901760
    %2127 = vmatpush1.msra.mxu0 %v2126
    %2128 = vmatprep.subr.mxu0 0.0
    %v2129 = vand.u32 %v1008, 4294901760
    %2130 = vmatpush1.msra.mxu0 %v2129
    %2131 = vmatprep.subr.mxu0 0.0
    %v2132 = vand.u32 %v1009, 4294901760
    %2133 = vmatpush1.msra.mxu0 %v2132
    %2134 = vmatprep.subr.mxu0 0.0
    %v2135 = vand.u32 %v1010, 4294901760
    %2136 = vmatpush1.msra.mxu0 %v2135
    %2137 = vmatprep.subr.mxu0 0.0
    %v2138 = vand.u32 %v1011, 4294901760
    %2139 = vmatpush1.msra.mxu0 %v2138
    %2140 = vmatprep.subr.mxu0 0.0
    %v2141 = vand.u32 %v1012, 4294901760
    %2142 = vmatpush1.msra.mxu0 %v2141
    %2143 = vmatprep.subr.mxu0 0.0
    %v2144 = vand.u32 %v1013, 4294901760
    %2145 = vmatpush1.msra.mxu0 %v2144
    %2146 = vmatprep.subr.mxu0 0.0
    %2147 = vmatpush1.msra.mxu0 0.0
    %2148 = vmatprep.subr.mxu0 0.0
    %2149 = vmatpush1.msra.mxu0 0.0
    %2150 = vmatprep.subr.mxu0 0.0
    %2151 = vmatpush1.msra.mxu0 0.0
    %2152 = vmatprep.subr.mxu0 0.0
    %2153 = vmatpush1.msra.mxu0 0.0
    %2154 = vmatprep.subr.mxu0 0.0
    %2155 = vmatpush1.msra.mxu0 0.0
    %2156 = vmatprep.subr.mxu0 0.0
    %2157 = vmatpush1.msra.mxu0 0.0
    %2158 = vmatprep.subr.mxu0 0.0
    %2159 = vmatpush1.msra.mxu0 0.0
    %2160 = vmatprep.subr.mxu0 0.0
    %2161 = vmatpush1.msra.mxu0 0.0
    %2162 = vmatprep.subr.mxu0 0.0
    %2163 = vmatpush1.msra.mxu0 0.0
    %2164 = vmatprep.subr.mxu0 0.0
    %2165 = vmatpush1.msra.mxu0 0.0
    %2166 = vmatprep.subr.mxu0 0.0
    %2167 = vmatpush1.msra.mxu0 0.0
    %2168 = vmatprep.subr.mxu0 0.0
    %2169 = vmatpush1.msra.mxu0 0.0
    %2170 = vmatprep.subr.mxu0 0.0
    %2171 = vmatpush1.msra.mxu0 0.0
    %2172 = vmatprep.subr.mxu0 0.0
    %2173 = vmatpush1.msra.mxu0 0.0
    %2174 = vmatprep.subr.mxu0 0.0
    %2175 = vmatpush1.msra.mxu0 0.0
    %2176 = vmatprep.subr.mxu0 0.0
    %2177 = vmatpush1.msra.mxu0 0.0
    %2178 = vmatprep.subr.mxu0 0.0
    %2179 = vmatpush1.msra.mxu0 0.0
    %2180 = vmatprep.subr.mxu0 0.0
    %2181 = vmatpush1.msra.mxu0 0.0
    %2182 = vmatprep.subr.mxu0 0.0
    %2183 = vmatpush1.msra.mxu0 0.0
    %2184 = vmatprep.subr.mxu0 0.0
    %2185 = vmatpush1.msra.mxu0 0.0
    %2186 = vmatprep.subr.mxu0 0.0
    %2187 = vmatpush1.msra.mxu0 0.0
    %2188 = vmatprep.subr.mxu0 0.0
    %2189 = vmatpush1.msra.mxu0 0.0
    %2190 = vmatprep.subr.mxu0 0.0
    %2191 = vmatpush1.msra.mxu0 0.0
    %2192 = vmatprep.mubr.f32.mxu0 0.0
    %v2193 = vand.u32 %v2117, 4294901760
    %v2194 = vsub.f32 %v2117, %v2193
    %v2195 = vand.u32 %v2194, 4294901760
    %v2196 = vsub.f32 %v2194, %v2195
    %v2197 = vand.u32 %v2196, 4294901760
    %2198 = vmatmul.mubr.f32.gmra.mrb[0].mxu0 %v2197
    %v2199 = vpop.f32.mrb[0].mxu0
    %v2200 = vadd.f32 %v2113, %v2199
    %v2201 = vpop.f32.mrb[0].mxu0
    %2202 = vdwg.mxu0
    %2203 = vmatprep.subr.mxu0 0.0
    %v2204 = vand.u32 %v1005, 4294901760
    %v2205 = vsub.f32 %v1005, %v2204
    %v2206 = vand.u32 %v2205, 4294901760
    %v2207 = vsub.f32 %v2205, %v2206
    %v2208 = vand.u32 %v2207, 4294901760
    %2209 = vmatpush1.msra.mxu0 %v2208
    %2210 = vmatprep.subr.mxu0 0.0
    %v2211 = vand.u32 %v1006, 4294901760
    %v2212 = vsub.f32 %v1006, %v2211
    %v2213 = vand.u32 %v2212, 4294901760
    %v2214 = vsub.f32 %v2212, %v2213
    %v2215 = vand.u32 %v2214, 4294901760
    %2216 = vmatpush1.msra.mxu0 %v2215
    %2217 = vmatprep.subr.mxu0 0.0
    %v2218 = vand.u32 %v1007, 4294901760
    %v2219 = vsub.f32 %v1007, %v2218
    %v2220 = vand.u32 %v2219, 4294901760
    %v2221 = vsub.f32 %v2219, %v2220
    %v2222 = vand.u32 %v2221, 4294901760
    %2223 = vmatpush1.msra.mxu0 %v2222
    %2224 = vmatprep.subr.mxu0 0.0
    %v2225 = vand.u32 %v1008, 4294901760
    %v2226 = vsub.f32 %v1008, %v2225
    %v2227 = vand.u32 %v2226, 4294901760
    %v2228 = vsub.f32 %v2226, %v2227
    %v2229 = vand.u32 %v2228, 4294901760
    %2230 = vmatpush1.msra.mxu0 %v2229
    %2231 = vmatprep.subr.mxu0 0.0
    %v2232 = vand.u32 %v1009, 4294901760
    %v2233 = vsub.f32 %v1009, %v2232
    %v2234 = vand.u32 %v2233, 4294901760
    %v2235 = vsub.f32 %v2233, %v2234
    %v2236 = vand.u32 %v2235, 4294901760
    %2237 = vmatpush1.msra.mxu0 %v2236
    %2238 = vmatprep.subr.mxu0 0.0
    %v2239 = vand.u32 %v1010, 4294901760
    %v2240 = vsub.f32 %v1010, %v2239
    %v2241 = vand.u32 %v2240, 4294901760
    %v2242 = vsub.f32 %v2240, %v2241
    %v2243 = vand.u32 %v2242, 4294901760
    %2244 = vmatpush1.msra.mxu0 %v2243
    %2245 = vmatprep.subr.mxu0 0.0
    %v2246 = vand.u32 %v1011, 4294901760
    %v2247 = vsub.f32 %v1011, %v2246
    %v2248 = vand.u32 %v2247, 4294901760
    %v2249 = vsub.f32 %v2247, %v2248
    %v2250 = vand.u32 %v2249, 4294901760
    %2251 = vmatpush1.msra.mxu0 %v2250
    %2252 = vmatprep.subr.mxu0 0.0
    %v2253 = vand.u32 %v1012, 4294901760
    %v2254 = vsub.f32 %v1012, %v2253
    %v2255 = vand.u32 %v2254, 4294901760
    %v2256 = vsub.f32 %v2254, %v2255
    %v2257 = vand.u32 %v2256, 4294901760
    %2258 = vmatpush1.msra.mxu0 %v2257
    %2259 = vmatprep.subr.mxu0 0.0
    %v2260 = vand.u32 %v1013, 4294901760
    %v2261 = vsub.f32 %v1013, %v2260
    %v2262 = vand.u32 %v2261, 4294901760
    %v2263 = vsub.f32 %v2261, %v2262
    %v2264 = vand.u32 %v2263, 4294901760
    %2265 = vmatpush1.msra.mxu0 %v2264
    %2266 = vmatprep.subr.mxu0 0.0
    %2267 = vmatpush1.msra.mxu0 0.0
    %2268 = vmatprep.subr.mxu0 0.0
    %2269 = vmatpush1.msra.mxu0 0.0
    %2270 = vmatprep.subr.mxu0 0.0
    %2271 = vmatpush1.msra.mxu0 0.0
    %2272 = vmatprep.subr.mxu0 0.0
    %2273 = vmatpush1.msra.mxu0 0.0
    %2274 = vmatprep.subr.mxu0 0.0
    %2275 = vmatpush1.msra.mxu0 0.0
    %2276 = vmatprep.subr.mxu0 0.0
    %2277 = vmatpush1.msra.mxu0 0.0
    %2278 = vmatprep.subr.mxu0 0.0
    %2279 = vmatpush1.msra.mxu0 0.0
    %2280 = vmatprep.subr.mxu0 0.0
    %2281 = vmatpush1.msra.mxu0 0.0
    %2282 = vmatprep.subr.mxu0 0.0
    %2283 = vmatpush1.msra.mxu0 0.0
    %2284 = vmatprep.subr.mxu0 0.0
    %2285 = vmatpush1.msra.mxu0 0.0
    %2286 = vmatprep.subr.mxu0 0.0
    %2287 = vmatpush1.msra.mxu0 0.0
    %2288 = vmatprep.subr.mxu0 0.0
    %2289 = vmatpush1.msra.mxu0 0.0
    %2290 = vmatprep.subr.mxu0 0.0
    %2291 = vmatpush1.msra.mxu0 0.0
    %2292 = vmatprep.subr.mxu0 0.0
    %2293 = vmatpush1.msra.mxu0 0.0
    %2294 = vmatprep.subr.mxu0 0.0
    %2295 = vmatpush1.msra.mxu0 0.0
    %2296 = vmatprep.subr.mxu0 0.0
    %2297 = vmatpush1.msra.mxu0 0.0
    %2298 = vmatprep.subr.mxu0 0.0
    %2299 = vmatpush1.msra.mxu0 0.0
    %2300 = vmatprep.subr.mxu0 0.0
    %2301 = vmatpush1.msra.mxu0 0.0
    %2302 = vmatprep.subr.mxu0 0.0
    %2303 = vmatpush1.msra.mxu0 0.0
    %2304 = vmatprep.subr.mxu0 0.0
    %2305 = vmatpush1.msra.mxu0 0.0
    %2306 = vmatprep.subr.mxu0 0.0
    %2307 = vmatpush1.msra.mxu0 0.0
    %2308 = vmatprep.subr.mxu0 0.0
    %2309 = vmatpush1.msra.mxu0 0.0
    %2310 = vmatprep.subr.mxu0 0.0
    %2311 = vmatpush1.msra.mxu0 0.0
    %2312 = vmatprep.mubr.f32.mxu0 0.0
    %v2313 = vand.u32 %v2117, 4294901760
    %2314 = vmatmul.mubr.f32.gmra.mrb[0].mxu0 %v2313
    %v2315 = vpop.f32.mrb[0].mxu0
    %v2316 = vadd.f32 %v2200, %v2315
    %v2317 = vpop.f32.mrb[0].mxu0
    %2318 = vdwg.mxu0
    %2319 = vmatprep.subr.mxu0 0.0
    %v2320 = vand.u32 %v1005, 4294901760
    %v2321 = vsub.f32 %v1005, %v2320
    %2322 = vmatpush1.msra.mxu0 %v2321
    %2323 = vmatprep.subr.mxu0 0.0
    %v2324 = vand.u32 %v1006, 4294901760
    %v2325 = vsub.f32 %v1006, %v2324
    %2326 = vmatpush1.msra.mxu0 %v2325
    %2327 = vmatprep.subr.mxu0 0.0
    %v2328 = vand.u32 %v1007, 4294901760
    %v2329 = vsub.f32 %v1007, %v2328
    %2330 = vmatpush1.msra.mxu0 %v2329
    %2331 = vmatprep.subr.mxu0 0.0
    %v2332 = vand.u32 %v1008, 4294901760
    %v2333 = vsub.f32 %v1008, %v2332
    %2334 = vmatpush1.msra.mxu0 %v2333
    %2335 = vmatprep.subr.mxu0 0.0
    %v2336 = vand.u32 %v1009, 4294901760
    %v2337 = vsub.f32 %v1009, %v2336
    %2338 = vmatpush1.msra.mxu0 %v2337
    %2339 = vmatprep.subr.mxu0 0.0
    %v2340 = vand.u32 %v1010, 4294901760
    %v2341 = vsub.f32 %v1010, %v2340
    %2342 = vmatpush1.msra.mxu0 %v2341
    %2343 = vmatprep.subr.mxu0 0.0
    %v2344 = vand.u32 %v1011, 4294901760
    %v2345 = vsub.f32 %v1011, %v2344
    %2346 = vmatpush1.msra.mxu0 %v2345
    %2347 = vmatprep.subr.mxu0 0.0
    %v2348 = vand.u32 %v1012, 4294901760
    %v2349 = vsub.f32 %v1012, %v2348
    %2350 = vmatpush1.msra.mxu0 %v2349
    %2351 = vmatprep.subr.mxu0 0.0
    %v2352 = vand.u32 %v1013, 4294901760
    %v2353 = vsub.f32 %v1013, %v2352
    %2354 = vmatpush1.msra.mxu0 %v2353
    %2355 = vmatprep.subr.mxu0 0.0
    %2356 = vmatpush1.msra.mxu0 0.0
    %2357 = vmatprep.subr.mxu0 0.0
    %2358 = vmatpush1.msra.mxu0 0.0
    %2359 = vmatprep.subr.mxu0 0.0
    %2360 = vmatpush1.msra.mxu0 0.0
    %2361 = vmatprep.subr.mxu0 0.0
    %2362 = vmatpush1.msra.mxu0 0.0
    %2363 = vmatprep.subr.mxu0 0.0
    %2364 = vmatpush1.msra.mxu0 0.0
    %2365 = vmatprep.subr.mxu0 0.0
    %2366 = vmatpush1.msra.mxu0 0.0
    %2367 = vmatprep.subr.mxu0 0.0
    %2368 = vmatpush1.msra.mxu0 0.0
    %2369 = vmatprep.subr.mxu0 0.0
    %2370 = vmatpush1.msra.mxu0 0.0
    %2371 = vmatprep.subr.mxu0 0.0
    %2372 = vmatpush1.msra.mxu0 0.0
    %2373 = vmatprep.subr.mxu0 0.0
    %2374 = vmatpush1.msra.mxu0 0.0
    %2375 = vmatprep.subr.mxu0 0.0
    %2376 = vmatpush1.msra.mxu0 0.0
    %2377 = vmatprep.subr.mxu0 0.0
    %2378 = vmatpush1.msra.mxu0 0.0
    %2379 = vmatprep.subr.mxu0 0.0
    %2380 = vmatpush1.msra.mxu0 0.0
    %2381 = vmatprep.subr.mxu0 0.0
    %2382 = vmatpush1.msra.mxu0 0.0
    %2383 = vmatprep.subr.mxu0 0.0
    %2384 = vmatpush1.msra.mxu0 0.0
    %2385 = vmatprep.subr.mxu0 0.0
    %2386 = vmatpush1.msra.mxu0 0.0
    %2387 = vmatprep.subr.mxu0 0.0
    %2388 = vmatpush1.msra.mxu0 0.0
    %2389 = vmatprep.subr.mxu0 0.0
    %2390 = vmatpush1.msra.mxu0 0.0
    %2391 = vmatprep.subr.mxu0 0.0
    %2392 = vmatpush1.msra.mxu0 0.0
    %2393 = vmatprep.subr.mxu0 0.0
    %2394 = vmatpush1.msra.mxu0 0.0
    %2395 = vmatprep.subr.mxu0 0.0
    %2396 = vmatpush1.msra.mxu0 0.0
    %2397 = vmatprep.subr.mxu0 0.0
    %2398 = vmatpush1.msra.mxu0 0.0
    %2399 = vmatprep.subr.mxu0 0.0
    %2400 = vmatpush1.msra.mxu0 0.0
    %2401 = vmatprep.mubr.f32.mxu0 0.0
    %v2402 = vand.u32 %v2117, 4294901760
    %v2403 = vsub.f32 %v2117, %v2402
    %2404 = vmatmul.mubr.f32.gmra.mrb[0].mxu0 %v2403
    %v2405 = vpop.f32.mrb[0].mxu0
    %v2406 = vadd.f32 %v2316, %v2405
    %v2407 = vpop.f32.mrb[0].mxu0
    %2408 = vdwg.mxu0
    %2409 = vmatprep.subr.mxu0 0.0
    %v2410 = vand.u32 %v1005, 4294901760
    %2411 = vmatpush1.msra.mxu0 %v2410
    %2412 = vmatprep.subr.mxu0 0.0
    %v2413 = vand.u32 %v1006, 4294901760
    %2414 = vmatpush1.msra.mxu0 %v2413
    %2415 = vmatprep.subr.mxu0 0.0
    %v2416 = vand.u32 %v1007, 4294901760
    %2417 = vmatpush1.msra.mxu0 %v2416
    %2418 = vmatprep.subr.mxu0 0.0
    %v2419 = vand.u32 %v1008, 4294901760
    %2420 = vmatpush1.msra.mxu0 %v2419
    %2421 = vmatprep.subr.mxu0 0.0
    %v2422 = vand.u32 %v1009, 4294901760
    %2423 = vmatpush1.msra.mxu0 %v2422
    %2424 = vmatprep.subr.mxu0 0.0
    %v2425 = vand.u32 %v1010, 4294901760
    %2426 = vmatpush1.msra.mxu0 %v2425
    %2427 = vmatprep.subr.mxu0 0.0
    %v2428 = vand.u32 %v1011, 4294901760
    %2429 = vmatpush1.msra.mxu0 %v2428
    %2430 = vmatprep.subr.mxu0 0.0
    %v2431 = vand.u32 %v1012, 4294901760
    %2432 = vmatpush1.msra.mxu0 %v2431
    %2433 = vmatprep.subr.mxu0 0.0
    %v2434 = vand.u32 %v1013, 4294901760
    %2435 = vmatpush1.msra.mxu0 %v2434
    %2436 = vmatprep.subr.mxu0 0.0
    %2437 = vmatpush1.msra.mxu0 0.0
    %2438 = vmatprep.subr.mxu0 0.0
    %2439 = vmatpush1.msra.mxu0 0.0
    %2440 = vmatprep.subr.mxu0 0.0
    %2441 = vmatpush1.msra.mxu0 0.0
    %2442 = vmatprep.subr.mxu0 0.0
    %2443 = vmatpush1.msra.mxu0 0.0
    %2444 = vmatprep.subr.mxu0 0.0
    %2445 = vmatpush1.msra.mxu0 0.0
    %2446 = vmatprep.subr.mxu0 0.0
    %2447 = vmatpush1.msra.mxu0 0.0
    %2448 = vmatprep.subr.mxu0 0.0
    %2449 = vmatpush1.msra.mxu0 0.0
    %2450 = vmatprep.subr.mxu0 0.0
    %2451 = vmatpush1.msra.mxu0 0.0
    %2452 = vmatprep.subr.mxu0 0.0
    %2453 = vmatpush1.msra.mxu0 0.0
    %2454 = vmatprep.subr.mxu0 0.0
    %2455 = vmatpush1.msra.mxu0 0.0
    %2456 = vmatprep.subr.mxu0 0.0
    %2457 = vmatpush1.msra.mxu0 0.0
    %2458 = vmatprep.subr.mxu0 0.0
    %2459 = vmatpush1.msra.mxu0 0.0
    %2460 = vmatprep.subr.mxu0 0.0
    %2461 = vmatpush1.msra.mxu0 0.0
    %2462 = vmatprep.subr.mxu0 0.0
    %2463 = vmatpush1.msra.mxu0 0.0
    %2464 = vmatprep.subr.mxu0 0.0
    %2465 = vmatpush1.msra.mxu0 0.0
    %2466 = vmatprep.subr.mxu0 0.0
    %2467 = vmatpush1.msra.mxu0 0.0
    %2468 = vmatprep.subr.mxu0 0.0
    %2469 = vmatpush1.msra.mxu0 0.0
    %2470 = vmatprep.subr.mxu0 0.0
    %2471 = vmatpush1.msra.mxu0 0.0
    %2472 = vmatprep.subr.mxu0 0.0
    %2473 = vmatpush1.msra.mxu0 0.0
    %2474 = vmatprep.subr.mxu0 0.0
    %2475 = vmatpush1.msra.mxu0 0.0
    %2476 = vmatprep.subr.mxu0 0.0
    %2477 = vmatpush1.msra.mxu0 0.0
    %2478 = vmatprep.subr.mxu0 0.0
    %2479 = vmatpush1.msra.mxu0 0.0
    %2480 = vmatprep.subr.mxu0 0.0
    %2481 = vmatpush1.msra.mxu0 0.0
    %2482 = vmatprep.mubr.f32.mxu0 0.0
    %v2483 = vand.u32 %v2117, 4294901760
    %v2484 = vsub.f32 %v2117, %v2483
    %v2485 = vand.u32 %v2484, 4294901760
    %2486 = vmatmul.mubr.f32.gmra.mrb[0].mxu0 %v2485
    %v2487 = vpop.f32.mrb[0].mxu0
    %v2488 = vadd.f32 %v2406, %v2487
    %v2489 = vpop.f32.mrb[0].mxu0
    %2490 = vdwg.mxu0
    %2491 = vmatprep.subr.mxu0 0.0
    %v2492 = vand.u32 %v1005, 4294901760
    %v2493 = vsub.f32 %v1005, %v2492
    %v2494 = vand.u32 %v2493, 4294901760
    %2495 = vmatpush1.msra.mxu0 %v2494
    %2496 = vmatprep.subr.mxu0 0.0
    %v2497 = vand.u32 %v1006, 4294901760
    %v2498 = vsub.f32 %v1006, %v2497
    %v2499 = vand.u32 %v2498, 4294901760
    %2500 = vmatpush1.msra.mxu0 %v2499
    %2501 = vmatprep.subr.mxu0 0.0
    %v2502 = vand.u32 %v1007, 4294901760
    %v2503 = vsub.f32 %v1007, %v2502
    %v2504 = vand.u32 %v2503, 4294901760
    %2505 = vmatpush1.msra.mxu0 %v2504
    %2506 = vmatprep.subr.mxu0 0.0
    %v2507 = vand.u32 %v1008, 4294901760
    %v2508 = vsub.f32 %v1008, %v2507
    %v2509 = vand.u32 %v2508, 4294901760
    %2510 = vmatpush1.msra.mxu0 %v2509
    %2511 = vmatprep.subr.mxu0 0.0
    %v2512 = vand.u32 %v1009, 4294901760
    %v2513 = vsub.f32 %v1009, %v2512
    %v2514 = vand.u32 %v2513, 4294901760
    %2515 = vmatpush1.msra.mxu0 %v2514
    %2516 = vmatprep.subr.mxu0 0.0
    %v2517 = vand.u32 %v1010, 4294901760
    %v2518 = vsub.f32 %v1010, %v2517
    %v2519 = vand.u32 %v2518, 4294901760
    %2520 = vmatpush1.msra.mxu0 %v2519
    %2521 = vmatprep.subr.mxu0 0.0
    %v2522 = vand.u32 %v1011, 4294901760
    %v2523 = vsub.f32 %v1011, %v2522
    %v2524 = vand.u32 %v2523, 4294901760
    %2525 = vmatpush1.msra.mxu0 %v2524
    %2526 = vmatprep.subr.mxu0 0.0
    %v2527 = vand.u32 %v1012, 4294901760
    %v2528 = vsub.f32 %v1012, %v2527
    %v2529 = vand.u32 %v2528, 4294901760
    %2530 = vmatpush1.msra.mxu0 %v2529
    %2531 = vmatprep.subr.mxu0 0.0
    %v2532 = vand.u32 %v1013, 4294901760
    %v2533 = vsub.f32 %v1013, %v2532
    %v2534 = vand.u32 %v2533, 4294901760
    %2535 = vmatpush1.msra.mxu0 %v2534
    %2536 = vmatprep.subr.mxu0 0.0
    %2537 = vmatpush1.msra.mxu0 0.0
    %2538 = vmatprep.subr.mxu0 0.0
    %2539 = vmatpush1.msra.mxu0 0.0
    %2540 = vmatprep.subr.mxu0 0.0
    %2541 = vmatpush1.msra.mxu0 0.0
    %2542 = vmatprep.subr.mxu0 0.0
    %2543 = vmatpush1.msra.mxu0 0.0
    %2544 = vmatprep.subr.mxu0 0.0
    %2545 = vmatpush1.msra.mxu0 0.0
    %2546 = vmatprep.subr.mxu0 0.0
    %2547 = vmatpush1.msra.mxu0 0.0
    %2548 = vmatprep.subr.mxu0 0.0
    %2549 = vmatpush1.msra.mxu0 0.0
    %2550 = vmatprep.subr.mxu0 0.0
    %2551 = vmatpush1.msra.mxu0 0.0
    %2552 = vmatprep.subr.mxu0 0.0
    %2553 = vmatpush1.msra.mxu0 0.0
    %2554 = vmatprep.subr.mxu0 0.0
    %2555 = vmatpush1.msra.mxu0 0.0
    %2556 = vmatprep.subr.mxu0 0.0
    %2557 = vmatpush1.msra.mxu0 0.0
    %2558 = vmatprep.subr.mxu0 0.0
    %2559 = vmatpush1.msra.mxu0 0.0
    %2560 = vmatprep.subr.mxu0 0.0
    %2561 = vmatpush1.msra.mxu0 0.0
    %2562 = vmatprep.subr.mxu0 0.0
    %2563 = vmatpush1.msra.mxu0 0.0
    %2564 = vmatprep.subr.mxu0 0.0
    %2565 = vmatpush1.msra.mxu0 0.0
    %2566 = vmatprep.subr.mxu0 0.0
    %2567 = vmatpush1.msra.mxu0 0.0
    %2568 = vmatprep.subr.mxu0 0.0
    %2569 = vmatpush1.msra.mxu0 0.0
    %2570 = vmatprep.subr.mxu0 0.0
    %2571 = vmatpush1.msra.mxu0 0.0
    %2572 = vmatprep.subr.mxu0 0.0
    %2573 = vmatpush1.msra.mxu0 0.0
    %2574 = vmatprep.subr.mxu0 0.0
    %2575 = vmatpush1.msra.mxu0 0.0
    %2576 = vmatprep.subr.mxu0 0.0
    %2577 = vmatpush1.msra.mxu0 0.0
    %2578 = vmatprep.subr.mxu0 0.0
    %2579 = vmatpush1.msra.mxu0 0.0
    %2580 = vmatprep.subr.mxu0 0.0
    %2581 = vmatpush1.msra.mxu0 0.0
    %2582 = vmatprep.mubr.f32.mxu0 0.0
    %v2583 = vand.u32 %v2117, 4294901760
    %2584 = vmatmul.mubr.f32.gmra.mrb[0].mxu0 %v2583
    %v2585 = vpop.f32.mrb[0].mxu0
    %v2586 = vadd.f32 %v2488, %v2585
    %v2587 = vpop.f32.mrb[0].mxu0
    %2588 = vdwg.mxu0
    %2589 = vmatprep.subr.mxu0 0.0
    %v2590 = vand.u32 %v1005, 4294901760
    %2591 = vmatpush1.msra.mxu0 %v2590
    %2592 = vmatprep.subr.mxu0 0.0
    %v2593 = vand.u32 %v1006, 4294901760
    %2594 = vmatpush1.msra.mxu0 %v2593
    %2595 = vmatprep.subr.mxu0 0.0
    %v2596 = vand.u32 %v1007, 4294901760
    %2597 = vmatpush1.msra.mxu0 %v2596
    %2598 = vmatprep.subr.mxu0 0.0
    %v2599 = vand.u32 %v1008, 4294901760
    %2600 = vmatpush1.msra.mxu0 %v2599
    %2601 = vmatprep.subr.mxu0 0.0
    %v2602 = vand.u32 %v1009, 4294901760
    %2603 = vmatpush1.msra.mxu0 %v2602
    %2604 = vmatprep.subr.mxu0 0.0
    %v2605 = vand.u32 %v1010, 4294901760
    %2606 = vmatpush1.msra.mxu0 %v2605
    %2607 = vmatprep.subr.mxu0 0.0
    %v2608 = vand.u32 %v1011, 4294901760
    %2609 = vmatpush1.msra.mxu0 %v2608
    %2610 = vmatprep.subr.mxu0 0.0
    %v2611 = vand.u32 %v1012, 4294901760
    %2612 = vmatpush1.msra.mxu0 %v2611
    %2613 = vmatprep.subr.mxu0 0.0
    %v2614 = vand.u32 %v1013, 4294901760
    %2615 = vmatpush1.msra.mxu0 %v2614
    %2616 = vmatprep.subr.mxu0 0.0
    %2617 = vmatpush1.msra.mxu0 0.0
    %2618 = vmatprep.subr.mxu0 0.0
    %2619 = vmatpush1.msra.mxu0 0.0
    %2620 = vmatprep.subr.mxu0 0.0
    %2621 = vmatpush1.msra.mxu0 0.0
    %2622 = vmatprep.subr.mxu0 0.0
    %2623 = vmatpush1.msra.mxu0 0.0
    %2624 = vmatprep.subr.mxu0 0.0
    %2625 = vmatpush1.msra.mxu0 0.0
    %2626 = vmatprep.subr.mxu0 0.0
    %2627 = vmatpush1.msra.mxu0 0.0
    %2628 = vmatprep.subr.mxu0 0.0
    %2629 = vmatpush1.msra.mxu0 0.0
    %2630 = vmatprep.subr.mxu0 0.0
    %2631 = vmatpush1.msra.mxu0 0.0
    %2632 = vmatprep.subr.mxu0 0.0
    %2633 = vmatpush1.msra.mxu0 0.0
    %2634 = vmatprep.subr.mxu0 0.0
    %2635 = vmatpush1.msra.mxu0 0.0
    %2636 = vmatprep.subr.mxu0 0.0
    %2637 = vmatpush1.msra.mxu0 0.0
    %2638 = vmatprep.subr.mxu0 0.0
    %2639 = vmatpush1.msra.mxu0 0.0
    %2640 = vmatprep.subr.mxu0 0.0
    %2641 = vmatpush1.msra.mxu0 0.0
    %2642 = vmatprep.subr.mxu0 0.0
    %2643 = vmatpush1.msra.mxu0 0.0
    %2644 = vmatprep.subr.mxu0 0.0
    %2645 = vmatpush1.msra.mxu0 0.0
    %2646 = vmatprep.subr.mxu0 0.0
    %2647 = vmatpush1.msra.mxu0 0.0
    %2648 = vmatprep.subr.mxu0 0.0
    %2649 = vmatpush1.msra.mxu0 0.0
    %2650 = vmatprep.subr.mxu0 0.0
    %2651 = vmatpush1.msra.mxu0 0.0
    %2652 = vmatprep.subr.mxu0 0.0
    %2653 = vmatpush1.msra.mxu0 0.0
    %2654 = vmatprep.subr.mxu0 0.0
    %2655 = vmatpush1.msra.mxu0 0.0
    %2656 = vmatprep.subr.mxu0 0.0
    %2657 = vmatpush1.msra.mxu0 0.0
    %2658 = vmatprep.subr.mxu0 0.0
    %2659 = vmatpush1.msra.mxu0 0.0
    %2660 = vmatprep.subr.mxu0 0.0
    %2661 = vmatpush1.msra.mxu0 0.0
    %2662 = vmatprep.mubr.f32.mxu0 0.0
    %v2663 = vand.u32 %v2117, 4294901760
    %2664 = vmatmul.mubr.f32.gmra.mrb[0].mxu0 %v2663
    %v2665 = vpop.f32.mrb[0].mxu0
    %v2666 = vadd.f32 %v2586, %v2665
    %v2667 = vpop.f32.mrb[0].mxu0
    %2668 = vdwg.mxu0
    %v2669 = vmul.f32 %v1591, 256.0
    %v2670 = vround.ne.pseudo %v2669
    %v2671 = vmax.f32 %v2670, -2047.0
    %v2672 = vmin.f32 %v2671, 2047.0
    %v2673 = vmul.f32 %v2672, 0.00390625
    %v2674 = vld [vmem:[#allocation6] sm:$0xff]
    %v2675 = vld [vmem:[#allocation6 + $0x8] sm:$0xff]
    %v2676 = vld [vmem:[#allocation6 + $0x10] sm:$0xff]
    %v2677 = vld [vmem:[#allocation6 + $0x18] sm:$0xff]
    %v2678 = vld [vmem:[#allocation6 + $0x20] sm:$0xff]
    %v2679 = vld [vmem:[#allocation6 + $0x28] sm:$0xff]
    %2681 = vrot.lane.b32.xlu0 %v2673, 80
    %v2682 = vpop.permute.xlu0 %2681
    %v2683 = vsel %vm1601, %v2682, 0
    %2685 = vmatprep.subr.mxu0 0.0
    %v2686 = vand.u32 %v2674, 4294901760
    %2687 = vmatpush1.msra.mxu0 %v2686
    %2688 = vmatprep.subr.mxu0 0.0
    %v2689 = vand.u32 %v2675, 4294901760
    %2690 = vmatpush1.msra.mxu0 %v2689
    %2691 = vmatprep.subr.mxu0 0.0
    %v2692 = vand.u32 %v2676, 4294901760
    %2693 = vmatpush1.msra.mxu0 %v2692
    %2694 = vmatprep.subr.mxu0 0.0
    %v2695 = vand.u32 %v2677, 4294901760
    %2696 = vmatpush1.msra.mxu0 %v2695
    %2697 = vmatprep.subr.mxu0 0.0
    %v2698 = vand.u32 %v2678, 4294901760
    %2699 = vmatpush1.msra.mxu0 %v2698
    %2700 = vmatprep.subr.mxu0 0.0
    %v2701 = vand.u32 %v2679, 4294901760
    %2702 = vmatpush1.msra.mxu0 %v2701
    %2703 = vmatprep.subr.mxu0 0.0
    %2704 = vmatpush1.msra.mxu0 0.0
    %2705 = vmatprep.subr.mxu0 0.0
    %2706 = vmatpush1.msra.mxu0 0.0
    %2707 = vmatprep.subr.mxu0 0.0
    %2708 = vmatpush1.msra.mxu0 0.0
    %2709 = vmatprep.subr.mxu0 0.0
    %2710 = vmatpush1.msra.mxu0 0.0
    %2711 = vmatprep.subr.mxu0 0.0
    %2712 = vmatpush1.msra.mxu0 0.0
    %2713 = vmatprep.subr.mxu0 0.0
    %2714 = vmatpush1.msra.mxu0 0.0
    %2715 = vmatprep.subr.mxu0 0.0
    %2716 = vmatpush1.msra.mxu0 0.0
    %2717 = vmatprep.subr.mxu0 0.0
    %2718 = vmatpush1.msra.mxu0 0.0
    %2719 = vmatprep.subr.mxu0 0.0
    %2720 = vmatpush1.msra.mxu0 0.0
    %2721 = vmatprep.subr.mxu0 0.0
    %2722 = vmatpush1.msra.mxu0 0.0
    %2723 = vmatprep.subr.mxu0 0.0
    %2724 = vmatpush1.msra.mxu0 0.0
    %2725 = vmatprep.subr.mxu0 0.0
    %2726 = vmatpush1.msra.mxu0 0.0
    %2727 = vmatprep.subr.mxu0 0.0
    %2728 = vmatpush1.msra.mxu0 0.0
    %2729 = vmatprep.subr.mxu0 0.0
    %2730 = vmatpush1.msra.mxu0 0.0
    %2731 = vmatprep.subr.mxu0 0.0
    %2732 = vmatpush1.msra.mxu0 0.0
    %2733 = vmatprep.subr.mxu0 0.0
    %2734 = vmatpush1.msra.mxu0 0.0
    %2735 = vmatprep.subr.mxu0 0.0
    %2736 = vmatpush1.msra.mxu0 0.0
    %2737 = vmatprep.subr.mxu0 0.0
    %2738 = vmatpush1.msra.mxu0 0.0
    %2739 = vmatprep.subr.mxu0 0.0
    %2740 = vmatpush1.msra.mxu0 0.0
    %2741 = vmatprep.subr.mxu0 0.0
    %2742 = vmatpush1.msra.mxu0 0.0
    %2743 = vmatprep.subr.mxu0 0.0
    %2744 = vmatpush1.msra.mxu0 0.0
    %2745 = vmatprep.subr.mxu0 0.0
    %2746 = vmatpush1.msra.mxu0 0.0
    %2747 = vmatprep.subr.mxu0 0.0
    %2748 = vmatpush1.msra.mxu0 0.0
    %2749 = vmatprep.subr.mxu0 0.0
    %2750 = vmatpush1.msra.mxu0 0.0
    %2751 = vmatprep.subr.mxu0 0.0
    %2752 = vmatpush1.msra.mxu0 0.0
    %2753 = vmatprep.subr.mxu0 0.0
    %2754 = vmatpush1.msra.mxu0 0.0
    %2755 = vmatprep.mubr.f32.mxu0 0.0
    %v2756 = vand.u32 %v2683, 4294901760
    %v2757 = vsub.f32 %v2683, %v2756
    %v2758 = vand.u32 %v2757, 4294901760
    %v2759 = vsub.f32 %v2757, %v2758
    %v2760 = vand.u32 %v2759, 4294901760
    %2761 = vmatmul.mubr.f32.gmra.mrb[0].mxu0 %v2760
    %v2762 = vpop.f32.mrb[0].mxu0
    %v2763 = vadd.f32 0.0, %v2762
    %v2764 = vpop.f32.mrb[0].mxu0
    %2765 = vdwg.mxu0
    %2766 = vmatprep.subr.mxu0 0.0
    %v2767 = vand.u32 %v2674, 4294901760
    %v2768 = vsub.f32 %v2674, %v2767
    %v2769 = vand.u32 %v2768, 4294901760
    %v2770 = vsub.f32 %v2768, %v2769
    %v2771 = vand.u32 %v2770, 4294901760
    %2772 = vmatpush1.msra.mxu0 %v2771
    %2773 = vmatprep.subr.mxu0 0.0
    %v2774 = vand.u32 %v2675, 4294901760
    %v2775 = vsub.f32 %v2675, %v2774
    %v2776 = vand.u32 %v2775, 4294901760
    %v2777 = vsub.f32 %v2775, %v2776
    %v2778 = vand.u32 %v2777, 4294901760
    %2779 = vmatpush1.msra.mxu0 %v2778
    %2780 = vmatprep.subr.mxu0 0.0
    %v2781 = vand.u32 %v2676, 4294901760
    %v2782 = vsub.f32 %v2676, %v2781
    %v2783 = vand.u32 %v2782, 4294901760
    %v2784 = vsub.f32 %v2782, %v2783
    %v2785 = vand.u32 %v2784, 4294901760
    %2786 = vmatpush1.msra.mxu0 %v2785
    %2787 = vmatprep.subr.mxu0 0.0
    %v2788 = vand.u32 %v2677, 4294901760
    %v2789 = vsub.f32 %v2677, %v2788
    %v2790 = vand.u32 %v2789, 4294901760
    %v2791 = vsub.f32 %v2789, %v2790
    %v2792 = vand.u32 %v2791, 4294901760
    %2793 = vmatpush1.msra.mxu0 %v2792
    %2794 = vmatprep.subr.mxu0 0.0
    %v2795 = vand.u32 %v2678, 4294901760
    %v2796 = vsub.f32 %v2678, %v2795
    %v2797 = vand.u32 %v2796, 4294901760
    %v2798 = vsub.f32 %v2796, %v2797
    %v2799 = vand.u32 %v2798, 4294901760
    %2800 = vmatpush1.msra.mxu0 %v2799
    %2801 = vmatprep.subr.mxu0 0.0
    %v2802 = vand.u32 %v2679, 4294901760
    %v2803 = vsub.f32 %v2679, %v2802
    %v2804 = vand.u32 %v2803, 4294901760
    %v2805 = vsub.f32 %v2803, %v2804
    %v2806 = vand.u32 %v2805, 4294901760
    %2807 = vmatpush1.msra.mxu0 %v2806
    %2808 = vmatprep.subr.mxu0 0.0
    %2809 = vmatpush1.msra.mxu0 0.0
    %2810 = vmatprep.subr.mxu0 0.0
    %2811 = vmatpush1.msra.mxu0 0.0
    %2812 = vmatprep.subr.mxu0 0.0
    %2813 = vmatpush1.msra.mxu0 0.0
    %2814 = vmatprep.subr.mxu0 0.0
    %2815 = vmatpush1.msra.mxu0 0.0
    %2816 = vmatprep.subr.mxu0 0.0
    %2817 = vmatpush1.msra.mxu0 0.0
    %2818 = vmatprep.subr.mxu0 0.0
    %2819 = vmatpush1.msra.mxu0 0.0
    %2820 = vmatprep.subr.mxu0 0.0
    %2821 = vmatpush1.msra.mxu0 0.0
    %2822 = vmatprep.subr.mxu0 0.0
    %2823 = vmatpush1.msra.mxu0 0.0
    %2824 = vmatprep.subr.mxu0 0.0
    %2825 = vmatpush1.msra.mxu0 0.0
    %2826 = vmatprep.subr.mxu0 0.0
    %2827 = vmatpush1.msra.mxu0 0.0
    %2828 = vmatprep.subr.mxu0 0.0
    %2829 = vmatpush1.msra.mxu0 0.0
    %2830 = vmatprep.subr.mxu0 0.0
    %2831 = vmatpush1.msra.mxu0 0.0
    %2832 = vmatprep.subr.mxu0 0.0
    %2833 = vmatpush1.msra.mxu0 0.0
    %2834 = vmatprep.subr.mxu0 0.0
    %2835 = vmatpush1.msra.mxu0 0.0
    %2836 = vmatprep.subr.mxu0 0.0
    %2837 = vmatpush1.msra.mxu0 0.0
    %2838 = vmatprep.subr.mxu0 0.0
    %2839 = vmatpush1.msra.mxu0 0.0
    %2840 = vmatprep.subr.mxu0 0.0
    %2841 = vmatpush1.msra.mxu0 0.0
    %2842 = vmatprep.subr.mxu0 0.0
    %2843 = vmatpush1.msra.mxu0 0.0
    %2844 = vmatprep.subr.mxu0 0.0
    %2845 = vmatpush1.msra.mxu0 0.0
    %2846 = vmatprep.subr.mxu0 0.0
    %2847 = vmatpush1.msra.mxu0 0.0
    %2848 = vmatprep.subr.mxu0 0.0
    %2849 = vmatpush1.msra.mxu0 0.0
    %2850 = vmatprep.subr.mxu0 0.0
    %2851 = vmatpush1.msra.mxu0 0.0
    %2852 = vmatprep.subr.mxu0 0.0
    %2853 = vmatpush1.msra.mxu0 0.0
    %2854 = vmatprep.subr.mxu0 0.0
    %2855 = vmatpush1.msra.mxu0 0.0
    %2856 = vmatprep.subr.mxu0 0.0
    %2857 = vmatpush1.msra.mxu0 0.0
    %2858 = vmatprep.subr.mxu0 0.0
    %2859 = vmatpush1.msra.mxu0 0.0
    %2860 = vmatprep.mubr.f32.mxu0 0.0
    %v2861 = vand.u32 %v2683, 4294901760
    %2862 = vmatmul.mubr.f32.gmra.mrb[0].mxu0 %v2861
    %v2863 = vpop.f32.mrb[0].mxu0
    %v2864 = vadd.f32 %v2763, %v2863
    %v2865 = vpop.f32.mrb[0].mxu0
    %2866 = vdwg.mxu0
    %2867 = vmatprep.subr.mxu0 0.0
    %v2868 = vand.u32 %v2674, 4294901760
    %v2869 = vsub.f32 %v2674, %v2868
    %2870 = vmatpush1.msra.mxu0 %v2869
    %2871 = vmatprep.subr.mxu0 0.0
    %v2872 = vand.u32 %v2675, 4294901760
    %v2873 = vsub.f32 %v2675, %v2872
    %2874 = vmatpush1.msra.mxu0 %v2873
    %2875 = vmatprep.subr.mxu0 0.0
    %v2876 = vand.u32 %v2676, 4294901760
    %v2877 = vsub.f32 %v2676, %v2876
    %2878 = vmatpush1.msra.mxu0 %v2877
    %2879 = vmatprep.subr.mxu0 0.0
    %v2880 = vand.u32 %v2677, 4294901760
    %v2881 = vsub.f32 %v2677, %v2880
    %2882 = vmatpush1.msra.mxu0 %v2881
    %2883 = vmatprep.subr.mxu0 0.0
    %v2884 = vand.u32 %v2678, 4294901760
    %v2885 = vsub.f32 %v2678, %v2884
    %2886 = vmatpush1.msra.mxu0 %v2885
    %2887 = vmatprep.subr.mxu0 0.0
    %v2888 = vand.u32 %v2679, 4294901760
    %v2889 = vsub.f32 %v2679, %v2888
    %2890 = vmatpush1.msra.mxu0 %v2889
    %2891 = vmatprep.subr.mxu0 0.0
    %2892 = vmatpush1.msra.mxu0 0.0
    %2893 = vmatprep.subr.mxu0 0.0
    %2894 = vmatpush1.msra.mxu0 0.0
    %2895 = vmatprep.subr.mxu0 0.0
    %2896 = vmatpush1.msra.mxu0 0.0
    %2897 = vmatprep.subr.mxu0 0.0
    %2898 = vmatpush1.msra.mxu0 0.0
    %2899 = vmatprep.subr.mxu0 0.0
    %2900 = vmatpush1.msra.mxu0 0.0
    %2901 = vmatprep.subr.mxu0 0.0
    %2902 = vmatpush1.msra.mxu0 0.0
    %2903 = vmatprep.subr.mxu0 0.0
    %2904 = vmatpush1.msra.mxu0 0.0
    %2905 = vmatprep.subr.mxu0 0.0
    %2906 = vmatpush1.msra.mxu0 0.0
    %2907 = vmatprep.subr.mxu0 0.0
    %2908 = vmatpush1.msra.mxu0 0.0
    %2909 = vmatprep.subr.mxu0 0.0
    %2910 = vmatpush1.msra.mxu0 0.0
    %2911 = vmatprep.subr.mxu0 0.0
    %2912 = vmatpush1.msra.mxu0 0.0
    %2913 = vmatprep.subr.mxu0 0.0
    %2914 = vmatpush1.msra.mxu0 0.0
    %2915 = vmatprep.subr.mxu0 0.0
    %2916 = vmatpush1.msra.mxu0 0.0
    %2917 = vmatprep.subr.mxu0 0.0
    %2918 = vmatpush1.msra.mxu0 0.0
    %2919 = vmatprep.subr.mxu0 0.0
    %2920 = vmatpush1.msra.mxu0 0.0
    %2921 = vmatprep.subr.mxu0 0.0
    %2922 = vmatpush1.msra.mxu0 0.0
    %2923 = vmatprep.subr.mxu0 0.0
    %2924 = vmatpush1.msra.mxu0 0.0
    %2925 = vmatprep.subr.mxu0 0.0
    %2926 = vmatpush1.msra.mxu0 0.0
    %2927 = vmatprep.subr.mxu0 0.0
    %2928 = vmatpush1.msra.mxu0 0.0
    %2929 = vmatprep.subr.mxu0 0.0
    %2930 = vmatpush1.msra.mxu0 0.0
    %2931 = vmatprep.subr.mxu0 0.0
    %2932 = vmatpush1.msra.mxu0 0.0
    %2933 = vmatprep.subr.mxu0 0.0
    %2934 = vmatpush1.msra.mxu0 0.0
    %2935 = vmatprep.subr.mxu0 0.0
    %2936 = vmatpush1.msra.mxu0 0.0
    %2937 = vmatprep.subr.mxu0 0.0
    %2938 = vmatpush1.msra.mxu0 0.0
    %2939 = vmatprep.subr.mxu0 0.0
    %2940 = vmatpush1.msra.mxu0 0.0
    %2941 = vmatprep.subr.mxu0 0.0
    %2942 = vmatpush1.msra.mxu0 0.0
    %2943 = vmatprep.mubr.f32.mxu0 0.0
    %v2944 = vand.u32 %v2683, 4294901760
    %v2945 = vsub.f32 %v2683, %v2944
    %2946 = vmatmul.mubr.f32.gmra.mrb[0].mxu0 %v2945
    %v2947 = vpop.f32.mrb[0].mxu0
    %v2948 = vadd.f32 %v2864, %v2947
    %v2949 = vpop.f32.mrb[0].mxu0
    %2950 = vdwg.mxu0
    %2951 = vmatprep.subr.mxu0 0.0
    %v2952 = vand.u32 %v2674, 4294901760
    %2953 = vmatpush1.msra.mxu0 %v2952
    %2954 = vmatprep.subr.mxu0 0.0
    %v2955 = vand.u32 %v2675, 4294901760
    %2956 = vmatpush1.msra.mxu0 %v2955
    %2957 = vmatprep.subr.mxu0 0.0
    %v2958 = vand.u32 %v2676, 4294901760
    %2959 = vmatpush1.msra.mxu0 %v2958
    %2960 = vmatprep.subr.mxu0 0.0
    %v2961 = vand.u32 %v2677, 4294901760
    %2962 = vmatpush1.msra.mxu0 %v2961
    %2963 = vmatprep.subr.mxu0 0.0
    %v2964 = vand.u32 %v2678, 4294901760
    %2965 = vmatpush1.msra.mxu0 %v2964
    %2966 = vmatprep.subr.mxu0 0.0
    %v2967 = vand.u32 %v2679, 4294901760
    %2968 = vmatpush1.msra.mxu0 %v2967
    %2969 = vmatprep.subr.mxu0 0.0
    %2970 = vmatpush1.msra.mxu0 0.0
    %2971 = vmatprep.subr.mxu0 0.0
    %2972 = vmatpush1.msra.mxu0 0.0
    %2973 = vmatprep.subr.mxu0 0.0
    %2974 = vmatpush1.msra.mxu0 0.0
    %2975 = vmatprep.subr.mxu0 0.0
    %2976 = vmatpush1.msra.mxu0 0.0
    %2977 = vmatprep.subr.mxu0 0.0
    %2978 = vmatpush1.msra.mxu0 0.0
    %2979 = vmatprep.subr.mxu0 0.0
    %2980 = vmatpush1.msra.mxu0 0.0
    %2981 = vmatprep.subr.mxu0 0.0
    %2982 = vmatpush1.msra.mxu0 0.0
    %2983 = vmatprep.subr.mxu0 0.0
    %2984 = vmatpush1.msra.mxu0 0.0
    %2985 = vmatprep.subr.mxu0 0.0
    %2986 = vmatpush1.msra.mxu0 0.0
    %2987 = vmatprep.subr.mxu0 0.0
    %2988 = vmatpush1.msra.mxu0 0.0
    %2989 = vmatprep.subr.mxu0 0.0
    %2990 = vmatpush1.msra.mxu0 0.0
    %2991 = vmatprep.subr.mxu0 0.0
    %2992 = vmatpush1.msra.mxu0 0.0
    %2993 = vmatprep.subr.mxu0 0.0
    %2994 = vmatpush1.msra.mxu0 0.0
    %2995 = vmatprep.subr.mxu0 0.0
    %2996 = vmatpush1.msra.mxu0 0.0
    %2997 = vmatprep.subr.mxu0 0.0
    %2998 = vmatpush1.msra.mxu0 0.0
    %2999 = vmatprep.subr.mxu0 0.0
    %3000 = vmatpush1.msra.mxu0 0.0
    %3001 = vmatprep.subr.mxu0 0.0
    %3002 = vmatpush1.msra.mxu0 0.0
    %3003 = vmatprep.subr.mxu0 0.0
    %3004 = vmatpush1.msra.mxu0 0.0
    %3005 = vmatprep.subr.mxu0 0.0
    %3006 = vmatpush1.msra.mxu0 0.0
    %3007 = vmatprep.subr.mxu0 0.0
    %3008 = vmatpush1.msra.mxu0 0.0
    %3009 = vmatprep.subr.mxu0 0.0
    %3010 = vmatpush1.msra.mxu0 0.0
    %3011 = vmatprep.subr.mxu0 0.0
    %3012 = vmatpush1.msra.mxu0 0.0
    %3013 = vmatprep.subr.mxu0 0.0
    %3014 = vmatpush1.msra.mxu0 0.0
    %3015 = vmatprep.subr.mxu0 0.0
    %3016 = vmatpush1.msra.mxu0 0.0
    %3017 = vmatprep.subr.mxu0 0.0
    %3018 = vmatpush1.msra.mxu0 0.0
    %3019 = vmatprep.subr.mxu0 0.0
    %3020 = vmatpush1.msra.mxu0 0.0
    %3021 = vmatprep.mubr.f32.mxu0 0.0
    %v3022 = vand.u32 %v2683, 4294901760
    %v3023 = vsub.f32 %v2683, %v3022
    %v3024 = vand.u32 %v3023, 4294901760
    %3025 = vmatmul.mubr.f32.gmra.mrb[0].mxu0 %v3024
    %v3026 = vpop.f32.mrb[0].mxu0
    %v3027 = vadd.f32 %v2948, %v3026
    %v3028 = vpop.f32.mrb[0].mxu0
    %3029 = vdwg.mxu0
    %3030 = vmatprep.subr.mxu0 0.0
    %v3031 = vand.u32 %v2674, 4294901760
    %v3032 = vsub.f32 %v2674, %v3031
    %v3033 = vand.u32 %v3032, 4294901760
    %3034 = vmatpush1.msra.mxu0 %v3033
    %3035 = vmatprep.subr.mxu0 0.0
    %v3036 = vand.u32 %v2675, 4294901760
    %v3037 = vsub.f32 %v2675, %v3036
    %v3038 = vand.u32 %v3037, 4294901760
    %3039 = vmatpush1.msra.mxu0 %v3038
    %3040 = vmatprep.subr.mxu0 0.0
    %v3041 = vand.u32 %v2676, 4294901760
    %v3042 = vsub.f32 %v2676, %v3041
    %v3043 = vand.u32 %v3042, 4294901760
    %3044 = vmatpush1.msra.mxu0 %v3043
    %3045 = vmatprep.subr.mxu0 0.0
    %v3046 = vand.u32 %v2677, 4294901760
    %v3047 = vsub.f32 %v2677, %v3046
    %v3048 = vand.u32 %v3047, 4294901760
    %3049 = vmatpush1.msra.mxu0 %v3048
    %3050 = vmatprep.subr.mxu0 0.0
    %v3051 = vand.u32 %v2678, 4294901760
    %v3052 = vsub.f32 %v2678, %v3051
    %v3053 = vand.u32 %v3052, 4294901760
    %3054 = vmatpush1.msra.mxu0 %v3053
    %3055 = vmatprep.subr.mxu0 0.0
    %v3056 = vand.u32 %v2679, 4294901760
    %v3057 = vsub.f32 %v2679, %v3056
    %v3058 = vand.u32 %v3057, 4294901760
    %3059 = vmatpush1.msra.mxu0 %v3058
    %3060 = vmatprep.subr.mxu0 0.0
    %3061 = vmatpush1.msra.mxu0 0.0
    %3062 = vmatprep.subr.mxu0 0.0
    %3063 = vmatpush1.msra.mxu0 0.0
    %3064 = vmatprep.subr.mxu0 0.0
    %3065 = vmatpush1.msra.mxu0 0.0
    %3066 = vmatprep.subr.mxu0 0.0
    %3067 = vmatpush1.msra.mxu0 0.0
    %3068 = vmatprep.subr.mxu0 0.0
    %3069 = vmatpush1.msra.mxu0 0.0
    %3070 = vmatprep.subr.mxu0 0.0
    %3071 = vmatpush1.msra.mxu0 0.0
    %3072 = vmatprep.subr.mxu0 0.0
    %3073 = vmatpush1.msra.mxu0 0.0
    %3074 = vmatprep.subr.mxu0 0.0
    %3075 = vmatpush1.msra.mxu0 0.0
    %3076 = vmatprep.subr.mxu0 0.0
    %3077 = vmatpush1.msra.mxu0 0.0
    %3078 = vmatprep.subr.mxu0 0.0
    %3079 = vmatpush1.msra.mxu0 0.0
    %3080 = vmatprep.subr.mxu0 0.0
    %3081 = vmatpush1.msra.mxu0 0.0
    %3082 = vmatprep.subr.mxu0 0.0
    %3083 = vmatpush1.msra.mxu0 0.0
    %3084 = vmatprep.subr.mxu0 0.0
    %3085 = vmatpush1.msra.mxu0 0.0
    %3086 = vmatprep.subr.mxu0 0.0
    %3087 = vmatpush1.msra.mxu0 0.0
    %3088 = vmatprep.subr.mxu0 0.0
    %3089 = vmatpush1.msra.mxu0 0.0
    %3090 = vmatprep.subr.mxu0 0.0
    %3091 = vmatpush1.msra.mxu0 0.0
    %3092 = vmatprep.subr.mxu0 0.0
    %3093 = vmatpush1.msra.mxu0 0.0
    %3094 = vmatprep.subr.mxu0 0.0
    %3095 = vmatpush1.msra.mxu0 0.0
    %3096 = vmatprep.subr.mxu0 0.0
    %3097 = vmatpush1.msra.mxu0 0.0
    %3098 = vmatprep.subr.mxu0 0.0
    %3099 = vmatpush1.msra.mxu0 0.0
    %3100 = vmatprep.subr.mxu0 0.0
    %3101 = vmatpush1.msra.mxu0 0.0
    %3102 = vmatprep.subr.mxu0 0.0
    %3103 = vmatpush1.msra.mxu0 0.0
    %3104 = vmatprep.subr.mxu0 0.0
    %3105 = vmatpush1.msra.mxu0 0.0
    %3106 = vmatprep.subr.mxu0 0.0
    %3107 = vmatpush1.msra.mxu0 0.0
    %3108 = vmatprep.subr.mxu0 0.0
    %3109 = vmatpush1.msra.mxu0 0.0
    %3110 = vmatprep.subr.mxu0 0.0
    %3111 = vmatpush1.msra.mxu0 0.0
    %3112 = vmatprep.mubr.f32.mxu0 0.0
    %v3113 = vand.u32 %v2683, 4294901760
    %3114 = vmatmul.mubr.f32.gmra.mrb[0].mxu0 %v3113
    %v3115 = vpop.f32.mrb[0].mxu0
    %v3116 = vadd.f32 %v3027, %v3115
    %v3117 = vpop.f32.mrb[0].mxu0
    %3118 = vdwg.mxu0
    %3119 = vmatprep.subr.mxu0 0.0
    %v3120 = vand.u32 %v2674, 4294901760
    %3121 = vmatpush1.msra.mxu0 %v3120
    %3122 = vmatprep.subr.mxu0 0.0
    %v3123 = vand.u32 %v2675, 4294901760
    %3124 = vmatpush1.msra.mxu0 %v3123
    %3125 = vmatprep.subr.mxu0 0.0
    %v3126 = vand.u32 %v2676, 4294901760
    %3127 = vmatpush1.msra.mxu0 %v3126
    %3128 = vmatprep.subr.mxu0 0.0
    %v3129 = vand.u32 %v2677, 4294901760
    %3130 = vmatpush1.msra.mxu0 %v3129
    %3131 = vmatprep.subr.mxu0 0.0
    %v3132 = vand.u32 %v2678, 4294901760
    %3133 = vmatpush1.msra.mxu0 %v3132
    %3134 = vmatprep.subr.mxu0 0.0
    %v3135 = vand.u32 %v2679, 4294901760
    %3136 = vmatpush1.msra.mxu0 %v3135
    %3137 = vmatprep.subr.mxu0 0.0
    %3138 = vmatpush1.msra.mxu0 0.0
    %3139 = vmatprep.subr.mxu0 0.0
    %3140 = vmatpush1.msra.mxu0 0.0
    %3141 = vmatprep.subr.mxu0 0.0
    %3142 = vmatpush1.msra.mxu0 0.0
    %3143 = vmatprep.subr.mxu0 0.0
    %3144 = vmatpush1.msra.mxu0 0.0
    %3145 = vmatprep.subr.mxu0 0.0
    %3146 = vmatpush1.msra.mxu0 0.0
    %3147 = vmatprep.subr.mxu0 0.0
    %3148 = vmatpush1.msra.mxu0 0.0
    %3149 = vmatprep.subr.mxu0 0.0
    %3150 = vmatpush1.msra.mxu0 0.0
    %3151 = vmatprep.subr.mxu0 0.0
    %3152 = vmatpush1.msra.mxu0 0.0
    %3153 = vmatprep.subr.mxu0 0.0
    %3154 = vmatpush1.msra.mxu0 0.0
    %3155 = vmatprep.subr.mxu0 0.0
    %3156 = vmatpush1.msra.mxu0 0.0
    %3157 = vmatprep.subr.mxu0 0.0
    %3158 = vmatpush1.msra.mxu0 0.0
    %3159 = vmatprep.subr.mxu0 0.0
    %3160 = vmatpush1.msra.mxu0 0.0
    %3161 = vmatprep.subr.mxu0 0.0
    %3162 = vmatpush1.msra.mxu0 0.0
    %3163 = vmatprep.subr.mxu0 0.0
    %3164 = vmatpush1.msra.mxu0 0.0
    %3165 = vmatprep.subr.mxu0 0.0
    %3166 = vmatpush1.msra.mxu0 0.0
    %3167 = vmatprep.subr.mxu0 0.0
    %3168 = vmatpush1.msra.mxu0 0.0
    %3169 = vmatprep.subr.mxu0 0.0
    %3170 = vmatpush1.msra.mxu0 0.0
    %3171 = vmatprep.subr.mxu0 0.0
    %3172 = vmatpush1.msra.mxu0 0.0
    %3173 = vmatprep.subr.mxu0 0.0
    %3174 = vmatpush1.msra.mxu0 0.0
    %3175 = vmatprep.subr.mxu0 0.0
    %3176 = vmatpush1.msra.mxu0 0.0
    %3177 = vmatprep.subr.mxu0 0.0
    %3178 = vmatpush1.msra.mxu0 0.0
    %3179 = vmatprep.subr.mxu0 0.0
    %3180 = vmatpush1.msra.mxu0 0.0
    %3181 = vmatprep.subr.mxu0 0.0
    %3182 = vmatpush1.msra.mxu0 0.0
    %3183 = vmatprep.subr.mxu0 0.0
    %3184 = vmatpush1.msra.mxu0 0.0
    %3185 = vmatprep.subr.mxu0 0.0
    %3186 = vmatpush1.msra.mxu0 0.0
    %3187 = vmatprep.subr.mxu0 0.0
    %3188 = vmatpush1.msra.mxu0 0.0
    %3189 = vmatprep.mubr.f32.mxu0 0.0
    %v3190 = vand.u32 %v2683, 4294901760
    %3191 = vmatmul.mubr.f32.gmra.mrb[0].mxu0 %v3190
    %v3192 = vpop.f32.mrb[0].mxu0
    %v3193 = vadd.f32 %v3116, %v3192
    %v3194 = vpop.f32.mrb[0].mxu0
    %3195 = vdwg.mxu0
    %v3196 = vand.u32 2147483647, %v3193
    %v3197 = vld [vmem:[#allocation9] sm:$0xff]
    %v3198 = vld [vmem:[#allocation9 + $0x8] sm:$0xff]
    %v3199 = vld [vmem:[#allocation9 + $0x10] sm:$0xff]
    %v3200 = vld [vmem:[#allocation9 + $0x18] sm:$0xff]
    %vm3201 = vcmask 261120
    %v3203 = vsel %vm3201, %v3196, 0
    %3205 = vmatprep.subr.mxu0 0.0
    %v3206 = vand.u32 %v3197, 4294901760
    %3207 = vmatpush1.msra.mxu0 %v3206
    %3208 = vmatprep.subr.mxu0 0.0
    %v3209 = vand.u32 %v3198, 4294901760
    %3210 = vmatpush1.msra.mxu0 %v3209
    %3211 = vmatprep.subr.mxu0 0.0
    %v3212 = vand.u32 %v3199, 4294901760
    %3213 = vmatpush1.msra.mxu0 %v3212
    %3214 = vmatprep.subr.mxu0 0.0
    %v3215 = vand.u32 %v3200, 4294901760
    %3216 = vmatpush1.msra.mxu0 %v3215
    %3217 = vmatprep.subr.mxu0 0.0
    %3218 = vmatpush1.msra.mxu0 0.0
    %3219 = vmatprep.subr.mxu0 0.0
    %3220 = vmatpush1.msra.mxu0 0.0
    %3221 = vmatprep.subr.mxu0 0.0
    %3222 = vmatpush1.msra.mxu0 0.0
    %3223 = vmatprep.subr.mxu0 0.0
    %3224 = vmatpush1.msra.mxu0 0.0
    %3225 = vmatprep.subr.mxu0 0.0
    %3226 = vmatpush1.msra.mxu0 0.0
    %3227 = vmatprep.subr.mxu0 0.0
    %3228 = vmatpush1.msra.mxu0 0.0
    %3229 = vmatprep.subr.mxu0 0.0
    %3230 = vmatpush1.msra.mxu0 0.0
    %3231 = vmatprep.subr.mxu0 0.0
    %3232 = vmatpush1.msra.mxu0 0.0
    %3233 = vmatprep.subr.mxu0 0.0
    %3234 = vmatpush1.msra.mxu0 0.0
    %3235 = vmatprep.subr.mxu0 0.0
    %3236 = vmatpush1.msra.mxu0 0.0
    %3237 = vmatprep.subr.mxu0 0.0
    %3238 = vmatpush1.msra.mxu0 0.0
    %3239 = vmatprep.subr.mxu0 0.0
    %3240 = vmatpush1.msra.mxu0 0.0
    %3241 = vmatprep.subr.mxu0 0.0
    %3242 = vmatpush1.msra.mxu0 0.0
    %3243 = vmatprep.subr.mxu0 0.0
    %3244 = vmatpush1.msra.mxu0 0.0
    %3245 = vmatprep.subr.mxu0 0.0
    %3246 = vmatpush1.msra.mxu0 0.0
    %3247 = vmatprep.subr.mxu0 0.0
    %3248 = vmatpush1.msra.mxu0 0.0
    %3249 = vmatprep.subr.mxu0 0.0
    %3250 = vmatpush1.msra.mxu0 0.0
    %3251 = vmatprep.subr.mxu0 0.0
    %3252 = vmatpush1.msra.mxu0 0.0
    %3253 = vmatprep.subr.mxu0 0.0
    %3254 = vmatpush1.msra.mxu0 0.0
    %3255 = vmatprep.subr.mxu0 0.0
    %3256 = vmatpush1.msra.mxu0 0.0
    %3257 = vmatprep.subr.mxu0 0.0
    %3258 = vmatpush1.msra.mxu0 0.0
    %3259 = vmatprep.subr.mxu0 0.0
    %3260 = vmatpush1.msra.mxu0 0.0
    %3261 = vmatprep.subr.mxu0 0.0
    %3262 = vmatpush1.msra.mxu0 0.0
    %3263 = vmatprep.subr.mxu0 0.0
    %3264 = vmatpush1.msra.mxu0 0.0
    %3265 = vmatprep.subr.mxu0 0.0
    %3266 = vmatpush1.msra.mxu0 0.0
    %3267 = vmatprep.subr.mxu0 0.0
    %3268 = vmatpush1.msra.mxu0 0.0
    %3269 = vmatprep.subr.mxu0 0.0
    %3270 = vmatpush1.msra.mxu0 0.0
    %3271 = vmatprep.subr.mxu0 0.0
    %3272 = vmatpush1.msra.mxu0 0.0
    %3273 = vmatprep.mubr.f32.mxu0 0.0
    %v3274 = vand.u32 %v3203, 4294901760
    %v3275 = vsub.f32 %v3203, %v3274
    %v3276 = vand.u32 %v3275, 4294901760
    %v3277 = vsub.f32 %v3275, %v3276
    %v3278 = vand.u32 %v3277, 4294901760
    %3279 = vmatmul.mubr.f32.gmra.mrb[0].mxu0 %v3278
    %v3280 = vpop.f32.mrb[0].mxu0
    %v3281 = vadd.f32 0.0, %v3280
    %v3282 = vpop.f32.mrb[0].mxu0
    %3283 = vdwg.mxu0
    %3284 = vmatprep.subr.mxu0 0.0
    %v3285 = vand.u32 %v3197, 4294901760
    %v3286 = vsub.f32 %v3197, %v3285
    %v3287 = vand.u32 %v3286, 4294901760
    %v3288 = vsub.f32 %v3286, %v3287
    %v3289 = vand.u32 %v3288, 4294901760
    %3290 = vmatpush1.msra.mxu0 %v3289
    %3291 = vmatprep.subr.mxu0 0.0
    %v3292 = vand.u32 %v3198, 4294901760
    %v3293 = vsub.f32 %v3198, %v3292
    %v3294 = vand.u32 %v3293, 4294901760
    %v3295 = vsub.f32 %v3293, %v3294
    %v3296 = vand.u32 %v3295, 4294901760
    %3297 = vmatpush1.msra.mxu0 %v3296
    %3298 = vmatprep.subr.mxu0 0.0
    %v3299 = vand.u32 %v3199, 4294901760
    %v3300 = vsub.f32 %v3199, %v3299
    %v3301 = vand.u32 %v3300, 4294901760
    %v3302 = vsub.f32 %v3300, %v3301
    %v3303 = vand.u32 %v3302, 4294901760
    %3304 = vmatpush1.msra.mxu0 %v3303
    %3305 = vmatprep.subr.mxu0 0.0
    %v3306 = vand.u32 %v3200, 4294901760
    %v3307 = vsub.f32 %v3200, %v3306
    %v3308 = vand.u32 %v3307, 4294901760
    %v3309 = vsub.f32 %v3307, %v3308
    %v3310 = vand.u32 %v3309, 4294901760
    %3311 = vmatpush1.msra.mxu0 %v3310
    %3312 = vmatprep.subr.mxu0 0.0
    %3313 = vmatpush1.msra.mxu0 0.0
    %3314 = vmatprep.subr.mxu0 0.0
    %3315 = vmatpush1.msra.mxu0 0.0
    %3316 = vmatprep.subr.mxu0 0.0
    %3317 = vmatpush1.msra.mxu0 0.0
    %3318 = vmatprep.subr.mxu0 0.0
    %3319 = vmatpush1.msra.mxu0 0.0
    %3320 = vmatprep.subr.mxu0 0.0
    %3321 = vmatpush1.msra.mxu0 0.0
    %3322 = vmatprep.subr.mxu0 0.0
    %3323 = vmatpush1.msra.mxu0 0.0
    %3324 = vmatprep.subr.mxu0 0.0
    %3325 = vmatpush1.msra.mxu0 0.0
    %3326 = vmatprep.subr.mxu0 0.0
    %3327 = vmatpush1.msra.mxu0 0.0
    %3328 = vmatprep.subr.mxu0 0.0
    %3329 = vmatpush1.msra.mxu0 0.0
    %3330 = vmatprep.subr.mxu0 0.0
    %3331 = vmatpush1.msra.mxu0 0.0
    %3332 = vmatprep.subr.mxu0 0.0
    %3333 = vmatpush1.msra.mxu0 0.0
    %3334 = vmatprep.subr.mxu0 0.0
    %3335 = vmatpush1.msra.mxu0 0.0
    %3336 = vmatprep.subr.mxu0 0.0
    %3337 = vmatpush1.msra.mxu0 0.0
    %3338 = vmatprep.subr.mxu0 0.0
    %3339 = vmatpush1.msra.mxu0 0.0
    %3340 = vmatprep.subr.mxu0 0.0
    %3341 = vmatpush1.msra.mxu0 0.0
    %3342 = vmatprep.subr.mxu0 0.0
    %3343 = vmatpush1.msra.mxu0 0.0
    %3344 = vmatprep.subr.mxu0 0.0
    %3345 = vmatpush1.msra.mxu0 0.0
    %3346 = vmatprep.subr.mxu0 0.0
    %3347 = vmatpush1.msra.mxu0 0.0
    %3348 = vmatprep.subr.mxu0 0.0
    %3349 = vmatpush1.msra.mxu0 0.0
    %3350 = vmatprep.subr.mxu0 0.0
    %3351 = vmatpush1.msra.mxu0 0.0
    %3352 = vmatprep.subr.mxu0 0.0
    %3353 = vmatpush1.msra.mxu0 0.0
    %3354 = vmatprep.subr.mxu0 0.0
    %3355 = vmatpush1.msra.mxu0 0.0
    %3356 = vmatprep.subr.mxu0 0.0
    %3357 = vmatpush1.msra.mxu0 0.0
    %3358 = vmatprep.subr.mxu0 0.0
    %3359 = vmatpush1.msra.mxu0 0.0
    %3360 = vmatprep.subr.mxu0 0.0
    %3361 = vmatpush1.msra.mxu0 0.0
    %3362 = vmatprep.subr.mxu0 0.0
    %3363 = vmatpush1.msra.mxu0 0.0
    %3364 = vmatprep.subr.mxu0 0.0
    %3365 = vmatpush1.msra.mxu0 0.0
    %3366 = vmatprep.subr.mxu0 0.0
    %3367 = vmatpush1.msra.mxu0 0.0
    %3368 = vmatprep.mubr.f32.mxu0 0.0
    %v3369 = vand.u32 %v3203, 4294901760
    %3370 = vmatmul.mubr.f32.gmra.mrb[0].mxu0 %v3369
    %v3371 = vpop.f32.mrb[0].mxu0
    %v3372 = vadd.f32 %v3281, %v3371
    %v3373 = vpop.f32.mrb[0].mxu0
    %3374 = vdwg.mxu0
    %3375 = vmatprep.subr.mxu0 0.0
    %v3376 = vand.u32 %v3197, 4294901760
    %v3377 = vsub.f32 %v3197, %v3376
    %3378 = vmatpush1.msra.mxu0 %v3377
    %3379 = vmatprep.subr.mxu0 0.0
    %v3380 = vand.u32 %v3198, 4294901760
    %v3381 = vsub.f32 %v3198, %v3380
    %3382 = vmatpush1.msra.mxu0 %v3381
    %3383 = vmatprep.subr.mxu0 0.0
    %v3384 = vand.u32 %v3199, 4294901760
    %v3385 = vsub.f32 %v3199, %v3384
    %3386 = vmatpush1.msra.mxu0 %v3385
    %3387 = vmatprep.subr.mxu0 0.0
    %v3388 = vand.u32 %v3200, 4294901760
    %v3389 = vsub.f32 %v3200, %v3388
    %3390 = vmatpush1.msra.mxu0 %v3389
    %3391 = vmatprep.subr.mxu0 0.0
    %3392 = vmatpush1.msra.mxu0 0.0
    %3393 = vmatprep.subr.mxu0 0.0
    %3394 = vmatpush1.msra.mxu0 0.0
    %3395 = vmatprep.subr.mxu0 0.0
    %3396 = vmatpush1.msra.mxu0 0.0
    %3397 = vmatprep.subr.mxu0 0.0
    %3398 = vmatpush1.msra.mxu0 0.0
    %3399 = vmatprep.subr.mxu0 0.0
    %3400 = vmatpush1.msra.mxu0 0.0
    %3401 = vmatprep.subr.mxu0 0.0
    %3402 = vmatpush1.msra.mxu0 0.0
    %3403 = vmatprep.subr.mxu0 0.0
    %3404 = vmatpush1.msra.mxu0 0.0
    %3405 = vmatprep.subr.mxu0 0.0
    %3406 = vmatpush1.msra.mxu0 0.0
    %3407 = vmatprep.subr.mxu0 0.0
    %3408 = vmatpush1.msra.mxu0 0.0
    %3409 = vmatprep.subr.mxu0 0.0
    %3410 = vmatpush1.msra.mxu0 0.0
    %3411 = vmatprep.subr.mxu0 0.0
    %3412 = vmatpush1.msra.mxu0 0.0
    %3413 = vmatprep.subr.mxu0 0.0
    %3414 = vmatpush1.msra.mxu0 0.0
    %3415 = vmatprep.subr.mxu0 0.0
    %3416 = vmatpush1.msra.mxu0 0.0
    %3417 = vmatprep.subr.mxu0 0.0
    %3418 = vmatpush1.msra.mxu0 0.0
    %3419 = vmatprep.subr.mxu0 0.0
    %3420 = vmatpush1.msra.mxu0 0.0
    %3421 = vmatprep.subr.mxu0 0.0
    %3422 = vmatpush1.msra.mxu0 0.0
    %3423 = vmatprep.subr.mxu0 0.0
    %3424 = vmatpush1.msra.mxu0 0.0
    %3425 = vmatprep.subr.mxu0 0.0
    %3426 = vmatpush1.msra.mxu0 0.0
    %3427 = vmatprep.subr.mxu0 0.0
    %3428 = vmatpush1.msra.mxu0 0.0
    %3429 = vmatprep.subr.mxu0 0.0
    %3430 = vmatpush1.msra.mxu0 0.0
    %3431 = vmatprep.subr.mxu0 0.0
    %3432 = vmatpush1.msra.mxu0 0.0
    %3433 = vmatprep.subr.mxu0 0.0
    %3434 = vmatpush1.msra.mxu0 0.0
    %3435 = vmatprep.subr.mxu0 0.0
    %3436 = vmatpush1.msra.mxu0 0.0
    %3437 = vmatprep.subr.mxu0 0.0
    %3438 = vmatpush1.msra.mxu0 0.0
    %3439 = vmatprep.subr.mxu0 0.0
    %3440 = vmatpush1.msra.mxu0 0.0
    %3441 = vmatprep.subr.mxu0 0.0
    %3442 = vmatpush1.msra.mxu0 0.0
    %3443 = vmatprep.subr.mxu0 0.0
    %3444 = vmatpush1.msra.mxu0 0.0
    %3445 = vmatprep.subr.mxu0 0.0
    %3446 = vmatpush1.msra.mxu0 0.0
    %3447 = vmatprep.mubr.f32.mxu0 0.0
    %v3448 = vand.u32 %v3203, 4294901760
    %v3449 = vsub.f32 %v3203, %v3448
    %3450 = vmatmul.mubr.f32.gmra.mrb[0].mxu0 %v3449
    %v3451 = vpop.f32.mrb[0].mxu0
    %v3452 = vadd.f32 %v3372, %v3451
    %v3453 = vpop.f32.mrb[0].mxu0
    %3454 = vdwg.mxu0
    %3455 = vmatprep.subr.mxu0 0.0
    %v3456 = vand.u32 %v3197, 4294901760
    %3457 = vmatpush1.msra.mxu0 %v3456
    %3458 = vmatprep.subr.mxu0 0.0
    %v3459 = vand.u32 %v3198, 4294901760
    %3460 = vmatpush1.msra.mxu0 %v3459
    %3461 = vmatprep.subr.mxu0 0.0
    %v3462 = vand.u32 %v3199, 4294901760
    %3463 = vmatpush1.msra.mxu0 %v3462
    %3464 = vmatprep.subr.mxu0 0.0
    %v3465 = vand.u32 %v3200, 4294901760
    %3466 = vmatpush1.msra.mxu0 %v3465
    %3467 = vmatprep.subr.mxu0 0.0
    %3468 = vmatpush1.msra.mxu0 0.0
    %3469 = vmatprep.subr.mxu0 0.0
    %3470 = vmatpush1.msra.mxu0 0.0
    %3471 = vmatprep.subr.mxu0 0.0
    %3472 = vmatpush1.msra.mxu0 0.0
    %3473 = vmatprep.subr.mxu0 0.0
    %3474 = vmatpush1.msra.mxu0 0.0
    %3475 = vmatprep.subr.mxu0 0.0
    %3476 = vmatpush1.msra.mxu0 0.0
    %3477 = vmatprep.subr.mxu0 0.0
    %3478 = vmatpush1.msra.mxu0 0.0
    %3479 = vmatprep.subr.mxu0 0.0
    %3480 = vmatpush1.msra.mxu0 0.0
    %3481 = vmatprep.subr.mxu0 0.0
    %3482 = vmatpush1.msra.mxu0 0.0
    %3483 = vmatprep.subr.mxu0 0.0
    %3484 = vmatpush1.msra.mxu0 0.0
    %3485 = vmatprep.subr.mxu0 0.0
    %3486 = vmatpush1.msra.mxu0 0.0
    %3487 = vmatprep.subr.mxu0 0.0
    %3488 = vmatpush1.msra.mxu0 0.0
    %3489 = vmatprep.subr.mxu0 0.0
    %3490 = vmatpush1.msra.mxu0 0.0
    %3491 = vmatprep.subr.mxu0 0.0
    %3492 = vmatpush1.msra.mxu0 0.0
    %3493 = vmatprep.subr.mxu0 0.0
    %3494 = vmatpush1.msra.mxu0 0.0
    %3495 = vmatprep.subr.mxu0 0.0
    %3496 = vmatpush1.msra.mxu0 0.0
    %3497 = vmatprep.subr.mxu0 0.0
    %3498 = vmatpush1.msra.mxu0 0.0
    %3499 = vmatprep.subr.mxu0 0.0
    %3500 = vmatpush1.msra.mxu0 0.0
    %3501 = vmatprep.subr.mxu0 0.0
    %3502 = vmatpush1.msra.mxu0 0.0
    %3503 = vmatprep.subr.mxu0 0.0
    %3504 = vmatpush1.msra.mxu0 0.0
    %3505 = vmatprep.subr.mxu0 0.0
    %3506 = vmatpush1.msra.mxu0 0.0
    %3507 = vmatprep.subr.mxu0 0.0
    %3508 = vmatpush1.msra.mxu0 0.0
    %3509 = vmatprep.subr.mxu0 0.0
    %3510 = vmatpush1.msra.mxu0 0.0
    %3511 = vmatprep.subr.mxu0 0.0
    %3512 = vmatpush1.msra.mxu0 0.0
    %3513 = vmatprep.subr.mxu0 0.0
    %3514 = vmatpush1.msra.mxu0 0.0
    %3515 = vmatprep.subr.mxu0 0.0
    %3516 = vmatpush1.msra.mxu0 0.0
    %3517 = vmatprep.subr.mxu0 0.0
    %3518 = vmatpush1.msra.mxu0 0.0
    %3519 = vmatprep.subr.mxu0 0.0
    %3520 = vmatpush1.msra.mxu0 0.0
    %3521 = vmatprep.subr.mxu0 0.0
    %3522 = vmatpush1.msra.mxu0 0.0
    %3523 = vmatprep.mubr.f32.mxu0 0.0
    %v3524 = vand.u32 %v3203, 4294901760
    %v3525 = vsub.f32 %v3203, %v3524
    %v3526 = vand.u32 %v3525, 4294901760
    %3527 = vmatmul.mubr.f32.gmra.mrb[0].mxu0 %v3526
    %v3528 = vpop.f32.mrb[0].mxu0
    %v3529 = vadd.f32 %v3452, %v3528
    %v3530 = vpop.f32.mrb[0].mxu0
    %3531 = vdwg.mxu0
    %3532 = vmatprep.subr.mxu0 0.0
    %v3533 = vand.u32 %v3197, 4294901760
    %v3534 = vsub.f32 %v3197, %v3533
    %v3535 = vand.u32 %v3534, 4294901760
    %3536 = vmatpush1.msra.mxu0 %v3535
    %3537 = vmatprep.subr.mxu0 0.0
    %v3538 = vand.u32 %v3198, 4294901760
    %v3539 = vsub.f32 %v3198, %v3538
    %v3540 = vand.u32 %v3539, 4294901760
    %3541 = vmatpush1.msra.mxu0 %v3540
    %3542 = vmatprep.subr.mxu0 0.0
    %v3543 = vand.u32 %v3199, 4294901760
    %v3544 = vsub.f32 %v3199, %v3543
    %v3545 = vand.u32 %v3544, 4294901760
    %3546 = vmatpush1.msra.mxu0 %v3545
    %3547 = vmatprep.subr.mxu0 0.0
    %v3548 = vand.u32 %v3200, 4294901760
    %v3549 = vsub.f32 %v3200, %v3548
    %v3550 = vand.u32 %v3549, 4294901760
    %3551 = vmatpush1.msra.mxu0 %v3550
    %3552 = vmatprep.subr.mxu0 0.0
    %3553 = vmatpush1.msra.mxu0 0.0
    %3554 = vmatprep.subr.mxu0 0.0
    %3555 = vmatpush1.msra.mxu0 0.0
    %3556 = vmatprep.subr.mxu0 0.0
    %3557 = vmatpush1.msra.mxu0 0.0
    %3558 = vmatprep.subr.mxu0 0.0
    %3559 = vmatpush1.msra.mxu0 0.0
    %3560 = vmatprep.subr.mxu0 0.0
    %3561 = vmatpush1.msra.mxu0 0.0
    %3562 = vmatprep.subr.mxu0 0.0
    %3563 = vmatpush1.msra.mxu0 0.0
    %3564 = vmatprep.subr.mxu0 0.0
    %3565 = vmatpush1.msra.mxu0 0.0
    %3566 = vmatprep.subr.mxu0 0.0
    %3567 = vmatpush1.msra.mxu0 0.0
    %3568 = vmatprep.subr.mxu0 0.0
    %3569 = vmatpush1.msra.mxu0 0.0
    %3570 = vmatprep.subr.mxu0 0.0
    %3571 = vmatpush1.msra.mxu0 0.0
    %3572 = vmatprep.subr.mxu0 0.0
    %3573 = vmatpush1.msra.mxu0 0.0
    %3574 = vmatprep.subr.mxu0 0.0
    %3575 = vmatpush1.msra.mxu0 0.0
    %3576 = vmatprep.subr.mxu0 0.0
    %3577 = vmatpush1.msra.mxu0 0.0
    %3578 = vmatprep.subr.mxu0 0.0
    %3579 = vmatpush1.msra.mxu0 0.0
    %3580 = vmatprep.subr.mxu0 0.0
    %3581 = vmatpush1.msra.mxu0 0.0
    %3582 = vmatprep.subr.mxu0 0.0
    %3583 = vmatpush1.msra.mxu0 0.0
    %3584 = vmatprep.subr.mxu0 0.0
    %3585 = vmatpush1.msra.mxu0 0.0
    %3586 = vmatprep.subr.mxu0 0.0
    %3587 = vmatpush1.msra.mxu0 0.0
    %3588 = vmatprep.subr.mxu0 0.0
    %3589 = vmatpush1.msra.mxu0 0.0
    %3590 = vmatprep.subr.mxu0 0.0
    %3591 = vmatpush1.msra.mxu0 0.0
    %3592 = vmatprep.subr.mxu0 0.0
    %3593 = vmatpush1.msra.mxu0 0.0
    %3594 = vmatprep.subr.mxu0 0.0
    %3595 = vmatpush1.msra.mxu0 0.0
    %3596 = vmatprep.subr.mxu0 0.0
    %3597 = vmatpush1.msra.mxu0 0.0
    %3598 = vmatprep.subr.mxu0 0.0
    %3599 = vmatpush1.msra.mxu0 0.0
    %3600 = vmatprep.subr.mxu0 0.0
    %3601 = vmatpush1.msra.mxu0 0.0
    %3602 = vmatprep.subr.mxu0 0.0
    %3603 = vmatpush1.msra.mxu0 0.0
    %3604 = vmatprep.subr.mxu0 0.0
    %3605 = vmatpush1.msra.mxu0 0.0
    %3606 = vmatprep.subr.mxu0 0.0
    %3607 = vmatpush1.msra.mxu0 0.0
    %3608 = vmatprep.mubr.f32.mxu0 0.0
    %v3609 = vand.u32 %v3203, 4294901760
    %3610 = vmatmul.mubr.f32.gmra.mrb[0].mxu0 %v3609
    %v3611 = vpop.f32.mrb[0].mxu0
    %v3612 = vadd.f32 %v3529, %v3611
    %v3613 = vpop.f32.mrb[0].mxu0
    %3614 = vdwg.mxu0
    %3615 = vmatprep.subr.mxu0 0.0
    %v3616 = vand.u32 %v3197, 4294901760
    %3617 = vmatpush1.msra.mxu0 %v3616
    %3618 = vmatprep.subr.mxu0 0.0
    %v3619 = vand.u32 %v3198, 4294901760
    %3620 = vmatpush1.msra.mxu0 %v3619
    %3621 = vmatprep.subr.mxu0 0.0
    %v3622 = vand.u32 %v3199, 4294901760
    %3623 = vmatpush1.msra.mxu0 %v3622
    %3624 = vmatprep.subr.mxu0 0.0
    %v3625 = vand.u32 %v3200, 4294901760
    %3626 = vmatpush1.msra.mxu0 %v3625
    %3627 = vmatprep.subr.mxu0 0.0
    %3628 = vmatpush1.msra.mxu0 0.0
    %3629 = vmatprep.subr.mxu0 0.0
    %3630 = vmatpush1.msra.mxu0 0.0
    %3631 = vmatprep.subr.mxu0 0.0
    %3632 = vmatpush1.msra.mxu0 0.0
    %3633 = vmatprep.subr.mxu0 0.0
    %3634 = vmatpush1.msra.mxu0 0.0
    %3635 = vmatprep.subr.mxu0 0.0
    %3636 = vmatpush1.msra.mxu0 0.0
    %3637 = vmatprep.subr.mxu0 0.0
    %3638 = vmatpush1.msra.mxu0 0.0
    %3639 = vmatprep.subr.mxu0 0.0
    %3640 = vmatpush1.msra.mxu0 0.0
    %3641 = vmatprep.subr.mxu0 0.0
    %3642 = vmatpush1.msra.mxu0 0.0
    %3643 = vmatprep.subr.mxu0 0.0
    %3644 = vmatpush1.msra.mxu0 0.0
    %3645 = vmatprep.subr.mxu0 0.0
    %3646 = vmatpush1.msra.mxu0 0.0
    %3647 = vmatprep.subr.mxu0 0.0
    %3648 = vmatpush1.msra.mxu0 0.0
    %3649 = vmatprep.subr.mxu0 0.0
    %3650 = vmatpush1.msra.mxu0 0.0
    %3651 = vmatprep.subr.mxu0 0.0
    %3652 = vmatpush1.msra.mxu0 0.0
    %3653 = vmatprep.subr.mxu0 0.0
    %3654 = vmatpush1.msra.mxu0 0.0
    %3655 = vmatprep.subr.mxu0 0.0
    %3656 = vmatpush1.msra.mxu0 0.0
    %3657 = vmatprep.subr.mxu0 0.0
    %3658 = vmatpush1.msra.mxu0 0.0
    %3659 = vmatprep.subr.mxu0 0.0
    %3660 = vmatpush1.msra.mxu0 0.0
    %3661 = vmatprep.subr.mxu0 0.0
    %3662 = vmatpush1.msra.mxu0 0.0
    %3663 = vmatprep.subr.mxu0 0.0
    %3664 = vmatpush1.msra.mxu0 0.0
    %3665 = vmatprep.subr.mxu0 0.0
    %3666 = vmatpush1.msra.mxu0 0.0
    %3667 = vmatprep.subr.mxu0 0.0
    %3668 = vmatpush1.msra.mxu0 0.0
    %3669 = vmatprep.subr.mxu0 0.0
    %3670 = vmatpush1.msra.mxu0 0.0
    %3671 = vmatprep.subr.mxu0 0.0
    %3672 = vmatpush1.msra.mxu0 0.0
    %3673 = vmatprep.subr.mxu0 0.0
    %3674 = vmatpush1.msra.mxu0 0.0
    %3675 = vmatprep.subr.mxu0 0.0
    %3676 = vmatpush1.msra.mxu0 0.0
    %3677 = vmatprep.subr.mxu0 0.0
    %3678 = vmatpush1.msra.mxu0 0.0
    %3679 = vmatprep.subr.mxu0 0.0
    %3680 = vmatpush1.msra.mxu0 0.0
    %3681 = vmatprep.subr.mxu0 0.0
    %3682 = vmatpush1.msra.mxu0 0.0
    %3683 = vmatprep.mubr.f32.mxu0 0.0
    %v3684 = vand.u32 %v3203, 4294901760
    %3685 = vmatmul.mubr.f32.gmra.mrb[0].mxu0 %v3684
    %v3686 = vpop.f32.mrb[0].mxu0
    %v3687 = vadd.f32 %v3612, %v3686
    %v3688 = vpop.f32.mrb[0].mxu0
    %3689 = vdwg.mxu0
    %v3690 = vadd.f32 %v2666, %v3687
    %v3691 = vld [vmem:[#allocation10] sm:$0xff]
    %v3692 = vld [vmem:[#allocation10 + $0x8] sm:$0xff]
    %v3693 = vld [vmem:[#allocation10 + $0x10] sm:$0xff]
    %v3694 = vld [vmem:[#allocation10 + $0x18] sm:$0xff]
    %3695 = vrot.lane.b32.xlu0 %v3196, 96
    %v3696 = vpop.permute.xlu0 %3695
    %v3697 = vsel %vm3201, %v3696, 0
    %3699 = vmatprep.subr.mxu0 0.0
    %v3700 = vand.u32 %v3691, 4294901760
    %3701 = vmatpush1.msra.mxu0 %v3700
    %3702 = vmatprep.subr.mxu0 0.0
    %v3703 = vand.u32 %v3692, 4294901760
    %3704 = vmatpush1.msra.mxu0 %v3703
    %3705 = vmatprep.subr.mxu0 0.0
    %v3706 = vand.u32 %v3693, 4294901760
    %3707 = vmatpush1.msra.mxu0 %v3706
    %3708 = vmatprep.subr.mxu0 0.0
    %v3709 = vand.u32 %v3694, 4294901760
    %3710 = vmatpush1.msra.mxu0 %v3709
    %3711 = vmatprep.subr.mxu0 0.0
    %3712 = vmatpush1.msra.mxu0 0.0
    %3713 = vmatprep.subr.mxu0 0.0
    %3714 = vmatpush1.msra.mxu0 0.0
    %3715 = vmatprep.subr.mxu0 0.0
    %3716 = vmatpush1.msra.mxu0 0.0
    %3717 = vmatprep.subr.mxu0 0.0
    %3718 = vmatpush1.msra.mxu0 0.0
    %3719 = vmatprep.subr.mxu0 0.0
    %3720 = vmatpush1.msra.mxu0 0.0
    %3721 = vmatprep.subr.mxu0 0.0
    %3722 = vmatpush1.msra.mxu0 0.0
    %3723 = vmatprep.subr.mxu0 0.0
    %3724 = vmatpush1.msra.mxu0 0.0
    %3725 = vmatprep.subr.mxu0 0.0
    %3726 = vmatpush1.msra.mxu0 0.0
    %3727 = vmatprep.subr.mxu0 0.0
    %3728 = vmatpush1.msra.mxu0 0.0
    %3729 = vmatprep.subr.mxu0 0.0
    %3730 = vmatpush1.msra.mxu0 0.0
    %3731 = vmatprep.subr.mxu0 0.0
    %3732 = vmatpush1.msra.mxu0 0.0
    %3733 = vmatprep.subr.mxu0 0.0
    %3734 = vmatpush1.msra.mxu0 0.0
    %3735 = vmatprep.subr.mxu0 0.0
    %3736 = vmatpush1.msra.mxu0 0.0
    %3737 = vmatprep.subr.mxu0 0.0
    %3738 = vmatpush1.msra.mxu0 0.0
    %3739 = vmatprep.subr.mxu0 0.0
    %3740 = vmatpush1.msra.mxu0 0.0
    %3741 = vmatprep.subr.mxu0 0.0
    %3742 = vmatpush1.msra.mxu0 0.0
    %3743 = vmatprep.subr.mxu0 0.0
    %3744 = vmatpush1.msra.mxu0 0.0
    %3745 = vmatprep.subr.mxu0 0.0
    %3746 = vmatpush1.msra.mxu0 0.0
    %3747 = vmatprep.subr.mxu0 0.0
    %3748 = vmatpush1.msra.mxu0 0.0
    %3749 = vmatprep.subr.mxu0 0.0
    %3750 = vmatpush1.msra.mxu0 0.0
    %3751 = vmatprep.subr.mxu0 0.0
    %3752 = vmatpush1.msra.mxu0 0.0
    %3753 = vmatprep.subr.mxu0 0.0
    %3754 = vmatpush1.msra.mxu0 0.0
    %3755 = vmatprep.subr.mxu0 0.0
    %3756 = vmatpush1.msra.mxu0 0.0
    %3757 = vmatprep.subr.mxu0 0.0
    %3758 = vmatpush1.msra.mxu0 0.0
    %3759 = vmatprep.subr.mxu0 0.0
    %3760 = vmatpush1.msra.mxu0 0.0
    %3761 = vmatprep.subr.mxu0 0.0
    %3762 = vmatpush1.msra.mxu0 0.0
    %3763 = vmatprep.subr.mxu0 0.0
    %3764 = vmatpush1.msra.mxu0 0.0
    %3765 = vmatprep.subr.mxu0 0.0
    %3766 = vmatpush1.msra.mxu0 0.0
    %3767 = vmatprep.mubr.f32.mxu0 0.0
    %v3768 = vand.u32 %v3697, 4294901760
    %v3769 = vsub.f32 %v3697, %v3768
    %v3770 = vand.u32 %v3769, 4294901760
    %v3771 = vsub.f32 %v3769, %v3770
    %v3772 = vand.u32 %v3771, 4294901760
    %3773 = vmatmul.mubr.f32.gmra.mrb[0].mxu0 %v3772
    %v3774 = vpop.f32.mrb[0].mxu0
    %v3775 = vadd.f32 0.0, %v3774
    %v3776 = vpop.f32.mrb[0].mxu0
    %3777 = vdwg.mxu0
    %3778 = vmatprep.subr.mxu0 0.0
    %v3779 = vand.u32 %v3691, 4294901760
    %v3780 = vsub.f32 %v3691, %v3779
    %v3781 = vand.u32 %v3780, 4294901760
    %v3782 = vsub.f32 %v3780, %v3781
    %v3783 = vand.u32 %v3782, 4294901760
    %3784 = vmatpush1.msra.mxu0 %v3783
    %3785 = vmatprep.subr.mxu0 0.0
    %v3786 = vand.u32 %v3692, 4294901760
    %v3787 = vsub.f32 %v3692, %v3786
    %v3788 = vand.u32 %v3787, 4294901760
    %v3789 = vsub.f32 %v3787, %v3788
    %v3790 = vand.u32 %v3789, 4294901760
    %3791 = vmatpush1.msra.mxu0 %v3790
    %3792 = vmatprep.subr.mxu0 0.0
    %v3793 = vand.u32 %v3693, 4294901760
    %v3794 = vsub.f32 %v3693, %v3793
    %v3795 = vand.u32 %v3794, 4294901760
    %v3796 = vsub.f32 %v3794, %v3795
    %v3797 = vand.u32 %v3796, 4294901760
    %3798 = vmatpush1.msra.mxu0 %v3797
    %3799 = vmatprep.subr.mxu0 0.0
    %v3800 = vand.u32 %v3694, 4294901760
    %v3801 = vsub.f32 %v3694, %v3800
    %v3802 = vand.u32 %v3801, 4294901760
    %v3803 = vsub.f32 %v3801, %v3802
    %v3804 = vand.u32 %v3803, 4294901760
    %3805 = vmatpush1.msra.mxu0 %v3804
    %3806 = vmatprep.subr.mxu0 0.0
    %3807 = vmatpush1.msra.mxu0 0.0
    %3808 = vmatprep.subr.mxu0 0.0
    %3809 = vmatpush1.msra.mxu0 0.0
    %3810 = vmatprep.subr.mxu0 0.0
    %3811 = vmatpush1.msra.mxu0 0.0
    %3812 = vmatprep.subr.mxu0 0.0
    %3813 = vmatpush1.msra.mxu0 0.0
    %3814 = vmatprep.subr.mxu0 0.0
    %3815 = vmatpush1.msra.mxu0 0.0
    %3816 = vmatprep.subr.mxu0 0.0
    %3817 = vmatpush1.msra.mxu0 0.0
    %3818 = vmatprep.subr.mxu0 0.0
    %3819 = vmatpush1.msra.mxu0 0.0
    %3820 = vmatprep.subr.mxu0 0.0
    %3821 = vmatpush1.msra.mxu0 0.0
    %3822 = vmatprep.subr.mxu0 0.0
    %3823 = vmatpush1.msra.mxu0 0.0
    %3824 = vmatprep.subr.mxu0 0.0
    %3825 = vmatpush1.msra.mxu0 0.0
    %3826 = vmatprep.subr.mxu0 0.0
    %3827 = vmatpush1.msra.mxu0 0.0
    %3828 = vmatprep.subr.mxu0 0.0
    %3829 = vmatpush1.msra.mxu0 0.0
    %3830 = vmatprep.subr.mxu0 0.0
    %3831 = vmatpush1.msra.mxu0 0.0
    %3832 = vmatprep.subr.mxu0 0.0
    %3833 = vmatpush1.msra.mxu0 0.0
    %3834 = vmatprep.subr.mxu0 0.0
    %3835 = vmatpush1.msra.mxu0 0.0
    %3836 = vmatprep.subr.mxu0 0.0
    %3837 = vmatpush1.msra.mxu0 0.0
    %3838 = vmatprep.subr.mxu0 0.0
    %3839 = vmatpush1.msra.mxu0 0.0
    %3840 = vmatprep.subr.mxu0 0.0
    %3841 = vmatpush1.msra.mxu0 0.0
    %3842 = vmatprep.subr.mxu0 0.0
    %3843 = vmatpush1.msra.mxu0 0.0
    %3844 = vmatprep.subr.mxu0 0.0
    %3845 = vmatpush1.msra.mxu0 0.0
    %3846 = vmatprep.subr.mxu0 0.0
    %3847 = vmatpush1.msra.mxu0 0.0
    %3848 = vmatprep.subr.mxu0 0.0
    %3849 = vmatpush1.msra.mxu0 0.0
    %3850 = vmatprep.subr.mxu0 0.0
    %3851 = vmatpush1.msra.mxu0 0.0
    %3852 = vmatprep.subr.mxu0 0.0
    %3853 = vmatpush1.msra.mxu0 0.0
    %3854 = vmatprep.subr.mxu0 0.0
    %3855 = vmatpush1.msra.mxu0 0.0
    %3856 = vmatprep.subr.mxu0 0.0
    %3857 = vmatpush1.msra.mxu0 0.0
    %3858 = vmatprep.subr.mxu0 0.0
    %3859 = vmatpush1.msra.mxu0 0.0
    %3860 = vmatprep.subr.mxu0 0.0
    %3861 = vmatpush1.msra.mxu0 0.0
    %3862 = vmatprep.mubr.f32.mxu0 0.0
    %v3863 = vand.u32 %v3697, 4294901760
    %3864 = vmatmul.mubr.f32.gmra.mrb[0].mxu0 %v3863
    %v3865 = vpop.f32.mrb[0].mxu0
    %v3866 = vadd.f32 %v3775, %v3865
    %v3867 = vpop.f32.mrb[0].mxu0
    %3868 = vdwg.mxu0
    %3869 = vmatprep.subr.mxu0 0.0
    %v3870 = vand.u32 %v3691, 4294901760
    %v3871 = vsub.f32 %v3691, %v3870
    %3872 = vmatpush1.msra.mxu0 %v3871
    %3873 = vmatprep.subr.mxu0 0.0
    %v3874 = vand.u32 %v3692, 4294901760
    %v3875 = vsub.f32 %v3692, %v3874
    %3876 = vmatpush1.msra.mxu0 %v3875
    %3877 = vmatprep.subr.mxu0 0.0
    %v3878 = vand.u32 %v3693, 4294901760
    %v3879 = vsub.f32 %v3693, %v3878
    %3880 = vmatpush1.msra.mxu0 %v3879
    %3881 = vmatprep.subr.mxu0 0.0
    %v3882 = vand.u32 %v3694, 4294901760
    %v3883 = vsub.f32 %v3694, %v3882
    %3884 = vmatpush1.msra.mxu0 %v3883
    %3885 = vmatprep.subr.mxu0 0.0
    %3886 = vmatpush1.msra.mxu0 0.0
    %3887 = vmatprep.subr.mxu0 0.0
    %3888 = vmatpush1.msra.mxu0 0.0
    %3889 = vmatprep.subr.mxu0 0.0
    %3890 = vmatpush1.msra.mxu0 0.0
    %3891 = vmatprep.subr.mxu0 0.0
    %3892 = vmatpush1.msra.mxu0 0.0
    %3893 = vmatprep.subr.mxu0 0.0
    %3894 = vmatpush1.msra.mxu0 0.0
    %3895 = vmatprep.subr.mxu0 0.0
    %3896 = vmatpush1.msra.mxu0 0.0
    %3897 = vmatprep.subr.mxu0 0.0
    %3898 = vmatpush1.msra.mxu0 0.0
    %3899 = vmatprep.subr.mxu0 0.0
    %3900 = vmatpush1.msra.mxu0 0.0
    %3901 = vmatprep.subr.mxu0 0.0
    %3902 = vmatpush1.msra.mxu0 0.0
    %3903 = vmatprep.subr.mxu0 0.0
    %3904 = vmatpush1.msra.mxu0 0.0
    %3905 = vmatprep.subr.mxu0 0.0
    %3906 = vmatpush1.msra.mxu0 0.0
    %3907 = vmatprep.subr.mxu0 0.0
    %3908 = vmatpush1.msra.mxu0 0.0
    %3909 = vmatprep.subr.mxu0 0.0
    %3910 = vmatpush1.msra.mxu0 0.0
    %3911 = vmatprep.subr.mxu0 0.0
    %3912 = vmatpush1.msra.mxu0 0.0
    %3913 = vmatprep.subr.mxu0 0.0
    %3914 = vmatpush1.msra.mxu0 0.0
    %3915 = vmatprep.subr.mxu0 0.0
    %3916 = vmatpush1.msra.mxu0 0.0
    %3917 = vmatprep.subr.mxu0 0.0
    %3918 = vmatpush1.msra.mxu0 0.0
    %3919 = vmatprep.subr.mxu0 0.0
    %3920 = vmatpush1.msra.mxu0 0.0
    %3921 = vmatprep.subr.mxu0 0.0
    %3922 = vmatpush1.msra.mxu0 0.0
    %3923 = vmatprep.subr.mxu0 0.0
    %3924 = vmatpush1.msra.mxu0 0.0
    %3925 = vmatprep.subr.mxu0 0.0
    %3926 = vmatpush1.msra.mxu0 0.0
    %3927 = vmatprep.subr.mxu0 0.0
    %3928 = vmatpush1.msra.mxu0 0.0
    %3929 = vmatprep.subr.mxu0 0.0
    %3930 = vmatpush1.msra.mxu0 0.0
    %3931 = vmatprep.subr.mxu0 0.0
    %3932 = vmatpush1.msra.mxu0 0.0
    %3933 = vmatprep.subr.mxu0 0.0
    %3934 = vmatpush1.msra.mxu0 0.0
    %3935 = vmatprep.subr.mxu0 0.0
    %3936 = vmatpush1.msra.mxu0 0.0
    %3937 = vmatprep.subr.mxu0 0.0
    %3938 = vmatpush1.msra.mxu0 0.0
    %3939 = vmatprep.subr.mxu0 0.0
    %3940 = vmatpush1.msra.mxu0 0.0
    %3941 = vmatprep.mubr.f32.mxu0 0.0
    %v3942 = vand.u32 %v3697, 4294901760
    %v3943 = vsub.f32 %v3697, %v3942
    %3944 = vmatmul.mubr.f32.gmra.mrb[0].mxu0 %v3943
    %v3945 = vpop.f32.mrb[0].mxu0
    %v3946 = vadd.f32 %v3866, %v3945
    %v3947 = vpop.f32.mrb[0].mxu0
    %3948 = vdwg.mxu0
    %3949 = vmatprep.subr.mxu0 0.0
    %v3950 = vand.u32 %v3691, 4294901760
    %3951 = vmatpush1.msra.mxu0 %v3950
    %3952 = vmatprep.subr.mxu0 0.0
    %v3953 = vand.u32 %v3692, 4294901760
    %3954 = vmatpush1.msra.mxu0 %v3953
    %3955 = vmatprep.subr.mxu0 0.0
    %v3956 = vand.u32 %v3693, 4294901760
    %3957 = vmatpush1.msra.mxu0 %v3956
    %3958 = vmatprep.subr.mxu0 0.0
    %v3959 = vand.u32 %v3694, 4294901760
    %3960 = vmatpush1.msra.mxu0 %v3959
    %3961 = vmatprep.subr.mxu0 0.0
    %3962 = vmatpush1.msra.mxu0 0.0
    %3963 = vmatprep.subr.mxu0 0.0
    %3964 = vmatpush1.msra.mxu0 0.0
    %3965 = vmatprep.subr.mxu0 0.0
    %3966 = vmatpush1.msra.mxu0 0.0
    %3967 = vmatprep.subr.mxu0 0.0
    %3968 = vmatpush1.msra.mxu0 0.0
    %3969 = vmatprep.subr.mxu0 0.0
    %3970 = vmatpush1.msra.mxu0 0.0
    %3971 = vmatprep.subr.mxu0 0.0
    %3972 = vmatpush1.msra.mxu0 0.0
    %3973 = vmatprep.subr.mxu0 0.0
    %3974 = vmatpush1.msra.mxu0 0.0
    %3975 = vmatprep.subr.mxu0 0.0
    %3976 = vmatpush1.msra.mxu0 0.0
    %3977 = vmatprep.subr.mxu0 0.0
    %3978 = vmatpush1.msra.mxu0 0.0
    %3979 = vmatprep.subr.mxu0 0.0
    %3980 = vmatpush1.msra.mxu0 0.0
    %3981 = vmatprep.subr.mxu0 0.0
    %3982 = vmatpush1.msra.mxu0 0.0
    %3983 = vmatprep.subr.mxu0 0.0
    %3984 = vmatpush1.msra.mxu0 0.0
    %3985 = vmatprep.subr.mxu0 0.0
    %3986 = vmatpush1.msra.mxu0 0.0
    %3987 = vmatprep.subr.mxu0 0.0
    %3988 = vmatpush1.msra.mxu0 0.0
    %3989 = vmatprep.subr.mxu0 0.0
    %3990 = vmatpush1.msra.mxu0 0.0
    %3991 = vmatprep.subr.mxu0 0.0
    %3992 = vmatpush1.msra.mxu0 0.0
    %3993 = vmatprep.subr.mxu0 0.0
    %3994 = vmatpush1.msra.mxu0 0.0
    %3995 = vmatprep.subr.mxu0 0.0
    %3996 = vmatpush1.msra.mxu0 0.0
    %3997 = vmatprep.subr.mxu0 0.0
    %3998 = vmatpush1.msra.mxu0 0.0
    %3999 = vmatprep.subr.mxu0 0.0
    %4000 = vmatpush1.msra.mxu0 0.0
    %4001 = vmatprep.subr.mxu0 0.0
    %4002 = vmatpush1.msra.mxu0 0.0
    %4003 = vmatprep.subr.mxu0 0.0
    %4004 = vmatpush1.msra.mxu0 0.0
    %4005 = vmatprep.subr.mxu0 0.0
    %4006 = vmatpush1.msra.mxu0 0.0
    %4007 = vmatprep.subr.mxu0 0.0
    %4008 = vmatpush1.msra.mxu0 0.0
    %4009 = vmatprep.subr.mxu0 0.0
    %4010 = vmatpush1.msra.mxu0 0.0
    %4011 = vmatprep.subr.mxu0 0.0
    %4012 = vmatpush1.msra.mxu0 0.0
    %4013 = vmatprep.subr.mxu0 0.0
    %4014 = vmatpush1.msra.mxu0 0.0
    %4015 = vmatprep.subr.mxu0 0.0
    %4016 = vmatpush1.msra.mxu0 0.0
    %4017 = vmatprep.mubr.f32.mxu0 0.0
    %v4018 = vand.u32 %v3697, 4294901760
    %v4019 = vsub.f32 %v3697, %v4018
    %v4020 = vand.u32 %v4019, 4294901760
    %4021 = vmatmul.mubr.f32.gmra.mrb[0].mxu0 %v4020
    %v4022 = vpop.f32.mrb[0].mxu0
    %v4023 = vadd.f32 %v3946, %v4022
    %v4024 = vpop.f32.mrb[0].mxu0
    %4025 = vdwg.mxu0
    %4026 = vmatprep.subr.mxu0 0.0
    %v4027 = vand.u32 %v3691, 4294901760
    %v4028 = vsub.f32 %v3691, %v4027
    %v4029 = vand.u32 %v4028, 4294901760
    %4030 = vmatpush1.msra.mxu0 %v4029
    %4031 = vmatprep.subr.mxu0 0.0
    %v4032 = vand.u32 %v3692, 4294901760
    %v4033 = vsub.f32 %v3692, %v4032
    %v4034 = vand.u32 %v4033, 4294901760
    %4035 = vmatpush1.msra.mxu0 %v4034
    %4036 = vmatprep.subr.mxu0 0.0
    %v4037 = vand.u32 %v3693, 4294901760
    %v4038 = vsub.f32 %v3693, %v4037
    %v4039 = vand.u32 %v4038, 4294901760
    %4040 = vmatpush1.msra.mxu0 %v4039
    %4041 = vmatprep.subr.mxu0 0.0
    %v4042 = vand.u32 %v3694, 4294901760
    %v4043 = vsub.f32 %v3694, %v4042
    %v4044 = vand.u32 %v4043, 4294901760
    %4045 = vmatpush1.msra.mxu0 %v4044
    %4046 = vmatprep.subr.mxu0 0.0
    %4047 = vmatpush1.msra.mxu0 0.0
    %4048 = vmatprep.subr.mxu0 0.0
    %4049 = vmatpush1.msra.mxu0 0.0
    %4050 = vmatprep.subr.mxu0 0.0
    %4051 = vmatpush1.msra.mxu0 0.0
    %4052 = vmatprep.subr.mxu0 0.0
    %4053 = vmatpush1.msra.mxu0 0.0
    %4054 = vmatprep.subr.mxu0 0.0
    %4055 = vmatpush1.msra.mxu0 0.0
    %4056 = vmatprep.subr.mxu0 0.0
    %4057 = vmatpush1.msra.mxu0 0.0
    %4058 = vmatprep.subr.mxu0 0.0
    %4059 = vmatpush1.msra.mxu0 0.0
    %4060 = vmatprep.subr.mxu0 0.0
    %4061 = vmatpush1.msra.mxu0 0.0
    %4062 = vmatprep.subr.mxu0 0.0
    %4063 = vmatpush1.msra.mxu0 0.0
    %4064 = vmatprep.subr.mxu0 0.0
    %4065 = vmatpush1.msra.mxu0 0.0
    %4066 = vmatprep.subr.mxu0 0.0
    %4067 = vmatpush1.msra.mxu0 0.0
    %4068 = vmatprep.subr.mxu0 0.0
    %4069 = vmatpush1.msra.mxu0 0.0
    %4070 = vmatprep.subr.mxu0 0.0
    %4071 = vmatpush1.msra.mxu0 0.0
    %4072 = vmatprep.subr.mxu0 0.0
    %4073 = vmatpush1.msra.mxu0 0.0
    %4074 = vmatprep.subr.mxu0 0.0
    %4075 = vmatpush1.msra.mxu0 0.0
    %4076 = vmatprep.subr.mxu0 0.0
    %4077 = vmatpush1.msra.mxu0 0.0
    %4078 = vmatprep.subr.mxu0 0.0
    %4079 = vmatpush1.msra.mxu0 0.0
    %4080 = vmatprep.subr.mxu0 0.0
    %4081 = vmatpush1.msra.mxu0 0.0
    %4082 = vmatprep.subr.mxu0 0.0
    %4083 = vmatpush1.msra.mxu0 0.0
    %4084 = vmatprep.subr.mxu0 0.0
    %4085 = vmatpush1.msra.mxu0 0.0
    %4086 = vmatprep.subr.mxu0 0.0
    %4087 = vmatpush1.msra.mxu0 0.0
    %4088 = vmatprep.subr.mxu0 0.0
    %4089 = vmatpush1.msra.mxu0 0.0
    %4090 = vmatprep.subr.mxu0 0.0
    %4091 = vmatpush1.msra.mxu0 0.0
    %4092 = vmatprep.subr.mxu0 0.0
    %4093 = vmatpush1.msra.mxu0 0.0
    %4094 = vmatprep.subr.mxu0 0.0
    %4095 = vmatpush1.msra.mxu0 0.0
    %4096 = vmatprep.subr.mxu0 0.0
    %4097 = vmatpush1.msra.mxu0 0.0
    %4098 = vmatprep.subr.mxu0 0.0
    %4099 = vmatpush1.msra.mxu0 0.0
    %4100 = vmatprep.subr.mxu0 0.0
    %4101 = vmatpush1.msra.mxu0 0.0
    %4102 = vmatprep.mubr.f32.mxu0 0.0
    %v4103 = vand.u32 %v3697, 4294901760
    %4104 = vmatmul.mubr.f32.gmra.mrb[0].mxu0 %v4103
    %v4105 = vpop.f32.mrb[0].mxu0
    %v4106 = vadd.f32 %v4023, %v4105
    %v4107 = vpop.f32.mrb[0].mxu0
    %4108 = vdwg.mxu0
    %4109 = vmatprep.subr.mxu0 0.0
    %v4110 = vand.u32 %v3691, 4294901760
    %4111 = vmatpush1.msra.mxu0 %v4110
    %4112 = vmatprep.subr.mxu0 0.0
    %v4113 = vand.u32 %v3692, 4294901760
    %4114 = vmatpush1.msra.mxu0 %v4113
    %4115 = vmatprep.subr.mxu0 0.0
    %v4116 = vand.u32 %v3693, 4294901760
    %4117 = vmatpush1.msra.mxu0 %v4116
    %4118 = vmatprep.subr.mxu0 0.0
    %v4119 = vand.u32 %v3694, 4294901760
    %4120 = vmatpush1.msra.mxu0 %v4119
    %4121 = vmatprep.subr.mxu0 0.0
    %4122 = vmatpush1.msra.mxu0 0.0
    %4123 = vmatprep.subr.mxu0 0.0
    %4124 = vmatpush1.msra.mxu0 0.0
    %4125 = vmatprep.subr.mxu0 0.0
    %4126 = vmatpush1.msra.mxu0 0.0
    %4127 = vmatprep.subr.mxu0 0.0
    %4128 = vmatpush1.msra.mxu0 0.0
    %4129 = vmatprep.subr.mxu0 0.0
    %4130 = vmatpush1.msra.mxu0 0.0
    %4131 = vmatprep.subr.mxu0 0.0
    %4132 = vmatpush1.msra.mxu0 0.0
    %4133 = vmatprep.subr.mxu0 0.0
    %4134 = vmatpush1.msra.mxu0 0.0
    %4135 = vmatprep.subr.mxu0 0.0
    %4136 = vmatpush1.msra.mxu0 0.0
    %4137 = vmatprep.subr.mxu0 0.0
    %4138 = vmatpush1.msra.mxu0 0.0
    %4139 = vmatprep.subr.mxu0 0.0
    %4140 = vmatpush1.msra.mxu0 0.0
    %4141 = vmatprep.subr.mxu0 0.0
    %4142 = vmatpush1.msra.mxu0 0.0
    %4143 = vmatprep.subr.mxu0 0.0
    %4144 = vmatpush1.msra.mxu0 0.0
    %4145 = vmatprep.subr.mxu0 0.0
    %4146 = vmatpush1.msra.mxu0 0.0
    %4147 = vmatprep.subr.mxu0 0.0
    %4148 = vmatpush1.msra.mxu0 0.0
    %4149 = vmatprep.subr.mxu0 0.0
    %4150 = vmatpush1.msra.mxu0 0.0
    %4151 = vmatprep.subr.mxu0 0.0
    %4152 = vmatpush1.msra.mxu0 0.0
    %4153 = vmatprep.subr.mxu0 0.0
    %4154 = vmatpush1.msra.mxu0 0.0
    %4155 = vmatprep.subr.mxu0 0.0
    %4156 = vmatpush1.msra.mxu0 0.0
    %4157 = vmatprep.subr.mxu0 0.0
    %4158 = vmatpush1.msra.mxu0 0.0
    %4159 = vmatprep.subr.mxu0 0.0
    %4160 = vmatpush1.msra.mxu0 0.0
    %4161 = vmatprep.subr.mxu0 0.0
    %4162 = vmatpush1.msra.mxu0 0.0
    %4163 = vmatprep.subr.mxu0 0.0
    %4164 = vmatpush1.msra.mxu0 0.0
    %4165 = vmatprep.subr.mxu0 0.0
    %4166 = vmatpush1.msra.mxu0 0.0
    %4167 = vmatprep.subr.mxu0 0.0
    %4168 = vmatpush1.msra.mxu0 0.0
    %4169 = vmatprep.subr.mxu0 0.0
    %4170 = vmatpush1.msra.mxu0 0.0
    %4171 = vmatprep.subr.mxu0 0.0
    %4172 = vmatpush1.msra.mxu0 0.0
    %4173 = vmatprep.subr.mxu0 0.0
    %4174 = vmatpush1.msra.mxu0 0.0
    %4175 = vmatprep.subr.mxu0 0.0
    %4176 = vmatpush1.msra.mxu0 0.0
    %4177 = vmatprep.mubr.f32.mxu0 0.0
    %v4178 = vand.u32 %v3697, 4294901760
    %4179 = vmatmul.mubr.f32.gmra.mrb[0].mxu0 %v4178
    %v4180 = vpop.f32.mrb[0].mxu0
    %v4181 = vadd.f32 %v4106, %v4180
    %v4182 = vpop.f32.mrb[0].mxu0
    %4183 = vdwg.mxu0
    %v4184 = vadd.f32 %v3690, %v4181
    %v4185 = vround.ne.pseudo %v4184
    %v4186 = vmax.f32 %v4185, -2047.0
    %v4187 = vmin.f32 %v4186, 2047.0
    %v4188 = vmul.f32 %v4187, 0.00390625
    %4189 = vst [vmem:[%s8] sm:$0xff] %v4188
    // Predicated region
    $region58: #{forward.1} parent=1 // pred_check
      _
    $region59: #{forward.1} parent=1 // pred_check_branch
      %4191 = sbr.rel (0) target = $region61
    $region60: #{forward.1} parent=1 // pred_region
      _
    $region61: #{forward.1} parent=1 // pred_fallthru
      _
    // Predicated region
    $region62: #{forward.1} parent=1 // pred_check
      _
    $region63: #{forward.1} parent=1 // pred_check_branch
      %4193 = sbr.rel (0) target = $region65
    $region64: #{forward.1} parent=1 // pred_region
      _
    $region65: #{forward.1} parent=1 // pred_fallthru
      _
    %4194 = vsyncpa [#allocation3], 1
    %4195 = vsyncpa [#allocation5], 1
    %4196 = vsyncpa [#allocation8], 1
    %4197 = vsyncpa [#allocation11], 1

</llo_original>
